<compile_context>
chip_gen: v5e
topology: v5e:2x2
jax: 0.10.0
libtpu: 0.0.40
codegen_flags: <defaults>
</compile_context>

<pallas_src>
import functools

import jax
import jax.numpy as jnp
from jax.experimental import pallas as pl
from jax.experimental.pallas import tpu as pltpu


# ----------------------------------------------------------------------------
# Pallas kernels
# ----------------------------------------------------------------------------
def _mm_bias_kernel(x_ref, w_ref, b_ref, o_ref):
    o_ref[...] = (
        jnp.dot(x_ref[...], w_ref[...], preferred_element_type=jnp.float32)
        + b_ref[...]
    )


def pallas_linear(x, w, b):
    """(M, K) @ (K, N) + (N,) — used for the tiny fc layer (single grid step)."""
    M, K = x.shape
    N = w.shape[1]
    f = pl.pallas_call(
        _mm_bias_kernel,
        out_shape=jax.ShapeDtypeStruct((M, N), jnp.float32),
        grid_spec=pltpu.PrefetchScalarGridSpec(
            num_scalar_prefetch=0,
            grid=(1,),
            in_specs=[
                pl.BlockSpec((M, K), lambda i: (0, 0)),
                pl.BlockSpec((K, N), lambda i: (0, 0)),
                pl.BlockSpec((1, N), lambda i: (0, 0)),
            ],
            out_specs=pl.BlockSpec((M, N), lambda i: (0, 0)),
        ),
    )
    return f(x, w, b.reshape(1, N))


def _conv_mm_kernel(x_ref, w_ref, o_ref, *stat_refs, act, with_stats):
    # bf16 operands, fp32 MXU accumulation.
    y = jnp.dot(x_ref[...], w_ref[...], preferred_element_type=jnp.float32)
    if act == "tanh":
        y = jnp.tanh(y)  # fused epilogue: rides on the EUP slot
    o_ref[...] = y
    if with_stats:
        sum_ref, sq_ref = stat_refs

        @pl.when(pl.program_id(0) == 0)
        def _():
            sum_ref[...] = jnp.zeros_like(sum_ref)
            sq_ref[...] = jnp.zeros_like(sq_ref)

        # Fused BatchNorm batch statistics (per output column = phase*Cout+c).
        sum_ref[...] += jnp.sum(y, axis=0, keepdims=True)
        sq_ref[...] += jnp.sum(y * y, axis=0, keepdims=True)


def _pick_tm(M, cap=2048):
    """Largest row tile <= cap that divides M (multiple of 8 when tiled)."""
    if M <= cap:
        return M
    for t in range(cap, 7, -8):
        if M % t == 0:
            return t
    return M


def pallas_conv_matmul(x9, wblk, *, act=None, with_stats=False, tm_cap=2048):
    """Fused conv matmul: (M, 9*Cin) @ (9*Cin, 4*Cout) [+ tanh] [+ BN stats]."""
    M, K = x9.shape
    N = wblk.shape[1]
    tm = _pick_tm(M, tm_cap)
    grid = (M // tm,)

    if with_stats:
        out_shape = (
            jax.ShapeDtypeStruct((M, N), jnp.float32),
            jax.ShapeDtypeStruct((1, N), jnp.float32),
            jax.ShapeDtypeStruct((1, N), jnp.float32),
        )
        out_specs = [
            pl.BlockSpec((tm, N), lambda i: (i, 0)),
            pl.BlockSpec((1, N), lambda i: (0, 0)),
            pl.BlockSpec((1, N), lambda i: (0, 0)),
        ]
        sem = ("arbitrary",)  # stats outputs are revisited across the row axis
    else:
        out_shape = jax.ShapeDtypeStruct((M, N), jnp.float32)
        out_specs = pl.BlockSpec((tm, N), lambda i: (i, 0))
        sem = ("parallel",)

    f = pl.pallas_call(
        functools.partial(_conv_mm_kernel, act=act, with_stats=with_stats),
        out_shape=out_shape,
        grid_spec=pltpu.PrefetchScalarGridSpec(
            num_scalar_prefetch=0,
            grid=grid,
            in_specs=[
                pl.BlockSpec((tm, K), lambda i: (i, 0)),
                pl.BlockSpec((K, N), lambda i: (0, 0)),
            ],
            out_specs=out_specs,
        ),
        compiler_params=pltpu.CompilerParams(dimension_semantics=sem),
    )
    return f(x9, wblk)


# ----------------------------------------------------------------------------
# ConvTranspose2d(k=4, s=2, p=1) as a single block matmul
# ----------------------------------------------------------------------------
# For output phase r in {0,1} along one axis and padded-input tap offset d in
# {0,1,2} (relative to input index i), the contributing kernel index (or None):
#   out position 2i+r gets x[i + d - 1] * w[k]  with  2i + r = (i + d - 1)*2 - 1 + k
_TAP_TO_K = {
    (0, 0): 3, (0, 1): 1, (0, 2): None,
    (1, 0): None, (1, 1): 2, (1, 2): 0,
}


def make_block_weight(w):
    """(Cin, Cout, 4, 4) torch ConvTranspose2d weight -> (9*Cin, 4*Cout) bf16."""
    Cin, Cout = w.shape[0], w.shape[1]
    blk = jnp.zeros((9, Cin, 4, Cout), jnp.float32)
    for r in range(2):
        for s in range(2):
            for dy in range(3):
                for dx in range(3):
                    ky = _TAP_TO_K[(r, dy)]
                    kx = _TAP_TO_K[(s, dx)]
                    if ky is None or kx is None:
                        continue
                    blk = blk.at[3 * dy + dx, :, 2 * r + s, :].set(w[:, :, ky, kx])
    return blk.reshape(9 * Cin, 4 * Cout).astype(jnp.bfloat16)


def im2col_3x3(x_nhwc):
    """(B,H,W,C) -> (B*H*W, 9*C): 3x3 taps of the zero-padded input (tap-major)."""
    B, H, W, C = x_nhwc.shape
    xp = jnp.pad(x_nhwc, ((0, 0), (1, 1), (1, 1), (0, 0)))
    taps = [xp[:, dy:dy + H, dx:dx + W, :] for dy in range(3) for dx in range(3)]
    return jnp.concatenate(taps, axis=-1).reshape(B * H * W, 9 * C)


def phases_to_nhwc(y, B, H, W, Cout):
    """(B*H*W, 4*Cout) phase-major -> (B, 2H, 2W, Cout)."""
    y = y.reshape(B, H, W, 2, 2, Cout)
    y = y.transpose(0, 1, 3, 2, 4, 5)
    return y.reshape(B, 2 * H, 2 * W, Cout)


# ----------------------------------------------------------------------------
# Generator
# ----------------------------------------------------------------------------
def init_params(key, z_size, conv_dim):
    chans = [conv_dim * 32, conv_dim * 16, conv_dim * 8,
             conv_dim * 4, conv_dim * 2, conv_dim, 3]
    keys = jax.random.split(key, 8)
    fc_out = 2 * 2 * conv_dim * 32
    conv_w_raw = [
        jax.random.normal(keys[2 + li], (chans[li], chans[li + 1], 4, 4),
                          jnp.float32) * 0.05
        for li in range(6)
    ]
    params = {
        "fc_w": jax.random.normal(keys[0], (z_size, fc_out), jnp.float32) * 0.05,
        "fc_b": jax.random.normal(keys[1], (fc_out,), jnp.float32) * 0.05,
        # Block-structured per-layer weights precomputed once at init time.
        "conv_wblk": [make_block_weight(w) for w in conv_w_raw],
    }
    return params


def generator_forward(params, x, *, conv_dim):
    B = x.shape[0]
    c0 = conv_dim * 32

    # fc, then .view(-1, conv_dim*32, 2, 2) in NCHW -> NHWC
    h = pallas_linear(x, params["fc_w"], params["fc_b"])
    h = h.reshape(B, c0, 2, 2).transpose(0, 2, 3, 1)

    n_layers = len(params["conv_wblk"])
    for li in range(n_layers):
        Bh, H, W, _ = h.shape
        wblk = params["conv_wblk"][li]
        Cout = wblk.shape[1] // 4
        x9 = im2col_3x3(h).astype(jnp.bfloat16)

        if li < n_layers - 1:
            y, s4, sq4 = pallas_conv_matmul(x9, wblk, act=None, with_stats=True)
            y = phases_to_nhwc(y, Bh, H, W, Cout)
            # BatchNorm2d (training-mode batch stats, gamma=1, beta=0) + ReLU.
            # Applied lazily; XLA fuses it into the next layer's im2col gather.
            n = 4.0 * Bh * H * W
            mean = (s4.reshape(4, Cout).sum(0)) / n
            var = jnp.maximum(sq4.reshape(4, Cout).sum(0) / n - mean * mean, 0.0)
            scale = 1.0 / jnp.sqrt(var + 1e-5)
            bias = -mean * scale
            h = jnp.maximum(y * scale + bias, 0.0)
        else:
            # final layer: no BN / ReLU, tanh fused into the matmul epilogue
            y = pallas_conv_matmul(x9, wblk, act="tanh", with_stats=False)
            h = phases_to_nhwc(y, Bh, H, W, Cout)

    # back to PyTorch NCHW: (B, 3, 128, 128)
    return h.transpose(0, 3, 1, 2)


if __name__ == "__main__":
    z_size = 32
    conv_dim = 4
    batch = 2

    key = jax.random.PRNGKey(0)
    k_params, k_x = jax.random.split(key)
    params = init_params(k_params, z_size, conv_dim)
    x = jax.random.normal(k_x, (batch, z_size), jnp.float32)

    fwd = jax.jit(functools.partial(generator_forward, conv_dim=conv_dim))
    out = fwd(params, x)
    out = jax.block_until_ready(out)

    assert out.shape == (batch, 3, 128, 128), out.shape
    assert out.dtype == jnp.float32
    print("KERNEL_OK")
</pallas_src>

<mosaic_0001>
module attributes {stable_mosaic.version = 11 : i64} {
  func.func @_mm_bias_kernel(%arg0: i32, %arg1: memref<2x32xf32, #tpu.memory_space<vmem>>, %arg2: memref<32x512xf32, #tpu.memory_space<vmem>>, %arg3: memref<1x512xf32, #tpu.memory_space<vmem>>, %arg4: memref<2x512xf32, #tpu.memory_space<vmem>>) attributes {dimension_semantics = [#tpu.dimension_semantics<arbitrary>], iteration_bounds = array<i64: 1>, scalar_prefetch = 0 : i64, scratch_operands = 0 : i64, tpu.core_type = #tpu.core_type<tc>, window_params = [{pipeline_mode = #tpu.pipeline_mode<synchronous>, transform_indices = @transform_0, window_bounds = array<i64: 2, 32>}, {pipeline_mode = #tpu.pipeline_mode<synchronous>, transform_indices = @transform_1, window_bounds = array<i64: 32, 512>}, {pipeline_mode = #tpu.pipeline_mode<synchronous>, transform_indices = @transform_2, window_bounds = array<i64: 1, 512>}, {pipeline_mode = #tpu.pipeline_mode<synchronous>, transform_indices = @transform_3, window_bounds = array<i64: 2, 512>}]} {
    %c0 = arith.constant 0 : index
    %c0_0 = arith.constant 0 : index
    %0 = vector.load %arg1[%c0, %c0_0] : memref<2x32xf32, #tpu.memory_space<vmem>>, vector<2x32xf32>
    %c0_1 = arith.constant 0 : index
    %c0_2 = arith.constant 0 : index
    %1 = vector.load %arg2[%c0_1, %c0_2] : memref<32x512xf32, #tpu.memory_space<vmem>>, vector<32x512xf32>
    %cst = arith.constant dense<0.000000e+00> : vector<2x512xf32>
    %2 = tpu.matmul %0, %1, %cst {dimension_numbers = #tpu.dot_dimension_numbers<[1], [0], [0], [1], [0, 0, 1, 1], [], []>} : vector<2x32xf32>, vector<32x512xf32>, vector<2x512xf32> -> vector<2x512xf32>
    %c0_3 = arith.constant 0 : index
    %c0_4 = arith.constant 0 : index
    %3 = vector.load %arg3[%c0_3, %c0_4] : memref<1x512xf32, #tpu.memory_space<vmem>>, vector<1x512xf32>
    %4 = vector.broadcast %3 : vector<1x512xf32> to vector<2x512xf32>
    %5 = arith.addf %2, %4 : vector<2x512xf32>
    %c0_5 = arith.constant 0 : index
    %c0_6 = arith.constant 0 : index
    %6 = vector.load %arg4[%c0_5, %c0_6] : memref<2x512xf32, #tpu.memory_space<vmem>>, vector<2x512xf32>
    tpu.vector_store %arg4[%c0_5, %c0_6], %5 {strides = array<i32>} : memref<2x512xf32, #tpu.memory_space<vmem>>, vector<2x512xf32>,
    return
  }
  func.func @transform_0(%arg0: i32) -> (i32, i32) {
    %c0_i32 = arith.constant 0 : i32
    %c0_i32_0 = arith.constant 0 : i32
    %c0_i32_1 = arith.constant 0 : i32
    return %c0_i32, %c0_i32_0 : i32, i32
  }
  func.func @transform_1(%arg0: i32) -> (i32, i32) {
    %c0_i32 = arith.constant 0 : i32
    %c0_i32_0 = arith.constant 0 : i32
    %c0_i32_1 = arith.constant 0 : i32
    return %c0_i32, %c0_i32_0 : i32, i32
  }
  func.func @transform_2(%arg0: i32) -> (i32, i32) {
    %c0_i32 = arith.constant 0 : i32
    %c0_i32_0 = arith.constant 0 : i32
    %c0_i32_1 = arith.constant 0 : i32
    return %c0_i32, %c0_i32_0 : i32, i32
  }
  func.func @transform_3(%arg0: i32) -> (i32, i32) {
    %c0_i32 = arith.constant 0 : i32
    %c0_i32_0 = arith.constant 0 : i32
    %c0_i32_1 = arith.constant 0 : i32
    return %c0_i32, %c0_i32_0 : i32, i32
  }
}

module attributes {stable_mosaic.version = 11 : i64} {
  func.func @_conv_mm_kernel(%arg0: i32, %arg1: memref<8x1152xbf16, #tpu.memory_space<vmem>>, %arg2: memref<1152x256xbf16, #tpu.memory_space<vmem>>, %arg3: memref<8x256xf32, #tpu.memory_space<vmem>>, %arg4: memref<1x256xf32, #tpu.memory_space<vmem>>, %arg5: memref<1x256xf32, #tpu.memory_space<vmem>>) attributes {dimension_semantics = [#tpu.dimension_semantics<arbitrary>], iteration_bounds = array<i64: 1>, scalar_prefetch = 0 : i64, scratch_operands = 0 : i64, tpu.core_type = #tpu.core_type<tc>, window_params = [{transform_indices = @transform_0, window_bounds = array<i64: 8, 1152>}, {pipeline_mode = #tpu.pipeline_mode<synchronous>, transform_indices = @transform_1, window_bounds = array<i64: 1152, 256>}, {transform_indices = @transform_2, window_bounds = array<i64: 8, 256>}, {pipeline_mode = #tpu.pipeline_mode<synchronous>, transform_indices = @transform_3, window_bounds = array<i64: 1, 256>}, {pipeline_mode = #tpu.pipeline_mode<synchronous>, transform_indices = @transform_4, window_bounds = array<i64: 1, 256>}]} {
    %c0 = arith.constant 0 : index
    %c0_0 = arith.constant 0 : index
    %0 = vector.load %arg1[%c0, %c0_0] : memref<8x1152xbf16, #tpu.memory_space<vmem>>, vector<8x1152xbf16>
    %c0_1 = arith.constant 0 : index
    %c0_2 = arith.constant 0 : index
    %1 = vector.load %arg2[%c0_1, %c0_2] : memref<1152x256xbf16, #tpu.memory_space<vmem>>, vector<1152x256xbf16>
    %cst = arith.constant dense<0.000000e+00> : vector<8x256xf32>
    %2 = tpu.matmul %0, %1, %cst {dimension_numbers = #tpu.dot_dimension_numbers<[1], [0], [0], [1], [0, 0, 1, 1], [], []>} : vector<8x1152xbf16>, vector<1152x256xbf16>, vector<8x256xf32> -> vector<8x256xf32>
    %c0_3 = arith.constant 0 : index
    %c0_4 = arith.constant 0 : index
    %3 = vector.load %arg3[%c0_3, %c0_4] : memref<8x256xf32, #tpu.memory_space<vmem>>, vector<8x256xf32>
    tpu.vector_store %arg3[%c0_3, %c0_4], %2 {strides = array<i32>} : memref<8x256xf32, #tpu.memory_space<vmem>>, vector<8x256xf32>,
    %c0_i32 = arith.constant 0 : i32
    %4 = arith.cmpi eq, %arg0, %c0_i32 : i32
    %5 = arith.extui %4 : i1 to i32
    %c0_i32_5 = arith.constant 0 : i32
    %6 = arith.cmpi ne, %5, %c0_i32_5 : i32
    scf.if %6 {
      %cst_16 = arith.constant 0.000000e+00 : f32
      %18 = vector.broadcast %cst_16 : f32 to vector<1x256xf32>
      %c0_17 = arith.constant 0 : index
      %c0_18 = arith.constant 0 : index
      %19 = vector.load %arg4[%c0_17, %c0_18] : memref<1x256xf32, #tpu.memory_space<vmem>>, vector<1x256xf32>
      tpu.vector_store %arg4[%c0_17, %c0_18], %18 {strides = array<i32>} : memref<1x256xf32, #tpu.memory_space<vmem>>, vector<1x256xf32>,
      %cst_19 = arith.constant 0.000000e+00 : f32
      %20 = vector.broadcast %cst_19 : f32 to vector<1x256xf32>
      %c0_20 = arith.constant 0 : index
      %c0_21 = arith.constant 0 : index
      %21 = vector.load %arg5[%c0_20, %c0_21] : memref<1x256xf32, #tpu.memory_space<vmem>>, vector<1x256xf32>
      tpu.vector_store %arg5[%c0_20, %c0_21], %20 {strides = array<i32>} : memref<1x256xf32, #tpu.memory_space<vmem>>, vector<1x256xf32>,
    } else {
    }
    %c0_6 = arith.constant 0 : index
    %c0_7 = arith.constant 0 : index
    %7 = vector.load %arg4[%c0_6, %c0_7] : memref<1x256xf32, #tpu.memory_space<vmem>>, vector<1x256xf32>
    %cst_8 = arith.constant dense<0.000000e+00> : vector<256xf32>
    %8 = vector.multi_reduction <add>, %2, %cst_8 [0] : vector<8x256xf32> to vector<256xf32>
    %9 = vector.shape_cast %8 : vector<256xf32> to vector<1x256xf32>
    %10 = arith.addf %7, %9 : vector<1x256xf32>
    %c0_9 = arith.constant 0 : index
    %c0_10 = arith.constant 0 : index
    %11 = vector.load %arg4[%c0_9, %c0_10] : memref<1x256xf32, #tpu.memory_space<vmem>>, vector<1x256xf32>
    tpu.vector_store %arg4[%c0_9, %c0_10], %10 {strides = array<i32>} : memref<1x256xf32, #tpu.memory_space<vmem>>, vector<1x256xf32>,
    %c0_11 = arith.constant 0 : index
    %c0_12 = arith.constant 0 : index
    %12 = vector.load %arg5[%c0_11, %c0_12] : memref<1x256xf32, #tpu.memory_space<vmem>>, vector<1x256xf32>
    %13 = arith.mulf %2, %2 : vector<8x256xf32>
    %cst_13 = arith.constant dense<0.000000e+00> : vector<256xf32>
    %14 = vector.multi_reduction <add>, %13, %cst_13 [0] : vector<8x256xf32> to vector<256xf32>
    %15 = vector.shape_cast %14 : vector<256xf32> to vector<1x256xf32>
    %16 = arith.addf %12, %15 : vector<1x256xf32>
    %c0_14 = arith.constant 0 : index
    %c0_15 = arith.constant 0 : index
    %17 = vector.load %arg5[%c0_14, %c0_15] : memref<1x256xf32, #tpu.memory_space<vmem>>, vector<1x256xf32>
    tpu.vector_store %arg5[%c0_14, %c0_15], %16 {strides = array<i32>} : memref<1x256xf32, #tpu.memory_space<vmem>>, vector<1x256xf32>,
    return
  }
  func.func @transform_0(%arg0: i32) -> (i32, i32) {
    %c0_i32 = arith.constant 0 : i32
    %c0_i32_0 = arith.constant 0 : i32
    return %arg0, %c0_i32 : i32, i32
  }
  func.func @transform_1(%arg0: i32) -> (i32, i32) {
    %c0_i32 = arith.constant 0 : i32
    %c0_i32_0 = arith.constant 0 : i32
    %c0_i32_1 = arith.constant 0 : i32
    return %c0_i32, %c0_i32_0 : i32, i32
  }
  func.func @transform_2(%arg0: i32) -> (i32, i32) {
    %c0_i32 = arith.constant 0 : i32
    %c0_i32_0 = arith.constant 0 : i32
    return %arg0, %c0_i32 : i32, i32
  }
  func.func @transform_3(%arg0: i32) -> (i32, i32) {
    %c0_i32 = arith.constant 0 : i32
    %c0_i32_0 = arith.constant 0 : i32
    %c0_i32_1 = arith.constant 0 : i32
    return %c0_i32, %c0_i32_0 : i32, i32
  }
  func.func @transform_4(%arg0: i32) -> (i32, i32) {
    %c0_i32 = arith.constant 0 : i32
    %c0_i32_0 = arith.constant 0 : i32
    %c0_i32_1 = arith.constant 0 : i32
    return %c0_i32, %c0_i32_0 : i32, i32
  }
}

module attributes {stable_mosaic.version = 11 : i64} {
  func.func @_conv_mm_kernel(%arg0: i32, %arg1: memref<32x576xbf16, #tpu.memory_space<vmem>>, %arg2: memref<576x128xbf16, #tpu.memory_space<vmem>>, %arg3: memref<32x128xf32, #tpu.memory_space<vmem>>, %arg4: memref<1x128xf32, #tpu.memory_space<vmem>>, %arg5: memref<1x128xf32, #tpu.memory_space<vmem>>) attributes {dimension_semantics = [#tpu.dimension_semantics<arbitrary>], iteration_bounds = array<i64: 1>, scalar_prefetch = 0 : i64, scratch_operands = 0 : i64, tpu.core_type = #tpu.core_type<tc>, window_params = [{transform_indices = @transform_0, window_bounds = array<i64: 32, 576>}, {pipeline_mode = #tpu.pipeline_mode<synchronous>, transform_indices = @transform_1, window_bounds = array<i64: 576, 128>}, {transform_indices = @transform_2, window_bounds = array<i64: 32, 128>}, {pipeline_mode = #tpu.pipeline_mode<synchronous>, transform_indices = @transform_3, window_bounds = array<i64: 1, 128>}, {pipeline_mode = #tpu.pipeline_mode<synchronous>, transform_indices = @transform_4, window_bounds = array<i64: 1, 128>}]} {
    %c0 = arith.constant 0 : index
    %c0_0 = arith.constant 0 : index
    %0 = vector.load %arg1[%c0, %c0_0] : memref<32x576xbf16, #tpu.memory_space<vmem>>, vector<32x576xbf16>
    %c0_1 = arith.constant 0 : index
    %c0_2 = arith.constant 0 : index
    %1 = vector.load %arg2[%c0_1, %c0_2] : memref<576x128xbf16, #tpu.memory_space<vmem>>, vector<576x128xbf16>
    %cst = arith.constant dense<0.000000e+00> : vector<32x128xf32>
    %2 = tpu.matmul %0, %1, %cst {dimension_numbers = #tpu.dot_dimension_numbers<[1], [0], [0], [1], [0, 0, 1, 1], [], []>} : vector<32x576xbf16>, vector<576x128xbf16>, vector<32x128xf32> -> vector<32x128xf32>
    %c0_3 = arith.constant 0 : index
    %c0_4 = arith.constant 0 : index
    %3 = vector.load %arg3[%c0_3, %c0_4] : memref<32x128xf32, #tpu.memory_space<vmem>>, vector<32x128xf32>
    tpu.vector_store %arg3[%c0_3, %c0_4], %2 {strides = array<i32>} : memref<32x128xf32, #tpu.memory_space<vmem>>, vector<32x128xf32>,
    %c0_i32 = arith.constant 0 : i32
    %4 = arith.cmpi eq, %arg0, %c0_i32 : i32
    %5 = arith.extui %4 : i1 to i32
    %c0_i32_5 = arith.constant 0 : i32
    %6 = arith.cmpi ne, %5, %c0_i32_5 : i32
    scf.if %6 {
      %cst_16 = arith.constant 0.000000e+00 : f32
      %18 = vector.broadcast %cst_16 : f32 to vector<1x128xf32>
      %c0_17 = arith.constant 0 : index
      %c0_18 = arith.constant 0 : index
      %19 = vector.load %arg4[%c0_17, %c0_18] : memref<1x128xf32, #tpu.memory_space<vmem>>, vector<1x128xf32>
      tpu.vector_store %arg4[%c0_17, %c0_18], %18 {strides = array<i32>} : memref<1x128xf32, #tpu.memory_space<vmem>>, vector<1x128xf32>,
      %cst_19 = arith.constant 0.000000e+00 : f32
      %20 = vector.broadcast %cst_19 : f32 to vector<1x128xf32>
      %c0_20 = arith.constant 0 : index
      %c0_21 = arith.constant 0 : index
      %21 = vector.load %arg5[%c0_20, %c0_21] : memref<1x128xf32, #tpu.memory_space<vmem>>, vector<1x128xf32>
      tpu.vector_store %arg5[%c0_20, %c0_21], %20 {strides = array<i32>} : memref<1x128xf32, #tpu.memory_space<vmem>>, vector<1x128xf32>,
    } else {
    }
    %c0_6 = arith.constant 0 : index
    %c0_7 = arith.constant 0 : index
    %7 = vector.load %arg4[%c0_6, %c0_7] : memref<1x128xf32, #tpu.memory_space<vmem>>, vector<1x128xf32>
    %cst_8 = arith.constant dense<0.000000e+00> : vector<128xf32>
    %8 = vector.multi_reduction <add>, %2, %cst_8 [0] : vector<32x128xf32> to vector<128xf32>
    %9 = vector.shape_cast %8 : vector<128xf32> to vector<1x128xf32>
    %10 = arith.addf %7, %9 : vector<1x128xf32>
    %c0_9 = arith.constant 0 : index
    %c0_10 = arith.constant 0 : index
    %11 = vector.load %arg4[%c0_9, %c0_10] : memref<1x128xf32, #tpu.memory_space<vmem>>, vector<1x128xf32>
    tpu.vector_store %arg4[%c0_9, %c0_10], %10 {strides = array<i32>} : memref<1x128xf32, #tpu.memory_space<vmem>>, vector<1x128xf32>,
    %c0_11 = arith.constant 0 : index
    %c0_12 = arith.constant 0 : index
    %12 = vector.load %arg5[%c0_11, %c0_12] : memref<1x128xf32, #tpu.memory_space<vmem>>, vector<1x128xf32>
    %13 = arith.mulf %2, %2 : vector<32x128xf32>
    %cst_13 = arith.constant dense<0.000000e+00> : vector<128xf32>
    %14 = vector.multi_reduction <add>, %13, %cst_13 [0] : vector<32x128xf32> to vector<128xf32>
    %15 = vector.shape_cast %14 : vector<128xf32> to vector<1x128xf32>
    %16 = arith.addf %12, %15 : vector<1x128xf32>
    %c0_14 = arith.constant 0 : index
    %c0_15 = arith.constant 0 : index
    %17 = vector.load %arg5[%c0_14, %c0_15] : memref<1x128xf32, #tpu.memory_space<vmem>>, vector<1x128xf32>
    tpu.vector_store %arg5[%c0_14, %c0_15], %16 {strides = array<i32>} : memref<1x128xf32, #tpu.memory_space<vmem>>, vector<1x128xf32>,
    return
  }
  func.func @transform_0(%arg0: i32) -> (i32, i32) {
    %c0_i32 = arith.constant 0 : i32
    %c0_i32_0 = arith.constant 0 : i32
    return %arg0, %c0_i32 : i32, i32
  }
  func.func @transform_1(%arg0: i32) -> (i32, i32) {
    %c0_i32 = arith.constant 0 : i32
    %c0_i32_0 = arith.constant 0 : i32
    %c0_i32_1 = arith.constant 0 : i32
    return %c0_i32, %c0_i32_0 : i32, i32
  }
  func.func @transform_2(%arg0: i32) -> (i32, i32) {
    %c0_i32 = arith.constant 0 : i32
    %c0_i32_0 = arith.constant 0 : i32
    return %arg0, %c0_i32 : i32, i32
  }
  func.func @transform_3(%arg0: i32) -> (i32, i32) {
    %c0_i32 = arith.constant 0 : i32
    %c0_i32_0 = arith.constant 0 : i32
    %c0_i32_1 = arith.constant 0 : i32
    return %c0_i32, %c0_i32_0 : i32, i32
  }
  func.func @transform_4(%arg0: i32) -> (i32, i32) {
    %c0_i32 = arith.constant 0 : i32
    %c0_i32_0 = arith.constant 0 : i32
    %c0_i32_1 = arith.constant 0 : i32
    return %c0_i32, %c0_i32_0 : i32, i32
  }
}

module attributes {stable_mosaic.version = 11 : i64} {
  func.func @_conv_mm_kernel(%arg0: i32, %arg1: memref<128x288xbf16, #tpu.memory_space<vmem>>, %arg2: memref<288x64xbf16, #tpu.memory_space<vmem>>, %arg3: memref<128x64xf32, #tpu.memory_space<vmem>>, %arg4: memref<1x64xf32, #tpu.memory_space<vmem>>, %arg5: memref<1x64xf32, #tpu.memory_space<vmem>>) attributes {dimension_semantics = [#tpu.dimension_semantics<arbitrary>], iteration_bounds = array<i64: 1>, scalar_prefetch = 0 : i64, scratch_operands = 0 : i64, tpu.core_type = #tpu.core_type<tc>, window_params = [{transform_indices = @transform_0, window_bounds = array<i64: 128, 288>}, {pipeline_mode = #tpu.pipeline_mode<synchronous>, transform_indices = @transform_1, window_bounds = array<i64: 288, 64>}, {transform_indices = @transform_2, window_bounds = array<i64: 128, 64>}, {pipeline_mode = #tpu.pipeline_mode<synchronous>, transform_indices = @transform_3, window_bounds = array<i64: 1, 64>}, {pipeline_mode = #tpu.pipeline_mode<synchronous>, transform_indices = @transform_4, window_bounds = array<i64: 1, 64>}]} {
    %c0 = arith.constant 0 : index
    %c0_0 = arith.constant 0 : index
    %0 = vector.load %arg1[%c0, %c0_0] : memref<128x288xbf16, #tpu.memory_space<vmem>>, vector<128x288xbf16>
    %c0_1 = arith.constant 0 : index
    %c0_2 = arith.constant 0 : index
    %1 = vector.load %arg2[%c0_1, %c0_2] : memref<288x64xbf16, #tpu.memory_space<vmem>>, vector<288x64xbf16>
    %cst = arith.constant dense<0.000000e+00> : vector<128x64xf32>
    %2 = tpu.matmul %0, %1, %cst {dimension_numbers = #tpu.dot_dimension_numbers<[1], [0], [0], [1], [0, 0, 1, 1], [], []>} : vector<128x288xbf16>, vector<288x64xbf16>, vector<128x64xf32> -> vector<128x64xf32>
    %c0_3 = arith.constant 0 : index
    %c0_4 = arith.constant 0 : index
    %3 = vector.load %arg3[%c0_3, %c0_4] : memref<128x64xf32, #tpu.memory_space<vmem>>, vector<128x64xf32>
    tpu.vector_store %arg3[%c0_3, %c0_4], %2 {strides = array<i32>} : memref<128x64xf32, #tpu.memory_space<vmem>>, vector<128x64xf32>,
    %c0_i32 = arith.constant 0 : i32
    %4 = arith.cmpi eq, %arg0, %c0_i32 : i32
    %5 = arith.extui %4 : i1 to i32
    %c0_i32_5 = arith.constant 0 : i32
    %6 = arith.cmpi ne, %5, %c0_i32_5 : i32
    scf.if %6 {
      %cst_16 = arith.constant 0.000000e+00 : f32
      %18 = vector.broadcast %cst_16 : f32 to vector<1x64xf32>
      %c0_17 = arith.constant 0 : index
      %c0_18 = arith.constant 0 : index
      %19 = vector.load %arg4[%c0_17, %c0_18] : memref<1x64xf32, #tpu.memory_space<vmem>>, vector<1x64xf32>
      tpu.vector_store %arg4[%c0_17, %c0_18], %18 {strides = array<i32>} : memref<1x64xf32, #tpu.memory_space<vmem>>, vector<1x64xf32>,
      %cst_19 = arith.constant 0.000000e+00 : f32
      %20 = vector.broadcast %cst_19 : f32 to vector<1x64xf32>
      %c0_20 = arith.constant 0 : index
      %c0_21 = arith.constant 0 : index
      %21 = vector.load %arg5[%c0_20, %c0_21] : memref<1x64xf32, #tpu.memory_space<vmem>>, vector<1x64xf32>
      tpu.vector_store %arg5[%c0_20, %c0_21], %20 {strides = array<i32>} : memref<1x64xf32, #tpu.memory_space<vmem>>, vector<1x64xf32>,
    } else {
    }
    %c0_6 = arith.constant 0 : index
    %c0_7 = arith.constant 0 : index
    %7 = vector.load %arg4[%c0_6, %c0_7] : memref<1x64xf32, #tpu.memory_space<vmem>>, vector<1x64xf32>
    %cst_8 = arith.constant dense<0.000000e+00> : vector<64xf32>
    %8 = vector.multi_reduction <add>, %2, %cst_8 [0] : vector<128x64xf32> to vector<64xf32>
    %9 = vector.shape_cast %8 : vector<64xf32> to vector<1x64xf32>
    %10 = arith.addf %7, %9 : vector<1x64xf32>
    %c0_9 = arith.constant 0 : index
    %c0_10 = arith.constant 0 : index
    %11 = vector.load %arg4[%c0_9, %c0_10] : memref<1x64xf32, #tpu.memory_space<vmem>>, vector<1x64xf32>
    tpu.vector_store %arg4[%c0_9, %c0_10], %10 {strides = array<i32>} : memref<1x64xf32, #tpu.memory_space<vmem>>, vector<1x64xf32>,
    %c0_11 = arith.constant 0 : index
    %c0_12 = arith.constant 0 : index
    %12 = vector.load %arg5[%c0_11, %c0_12] : memref<1x64xf32, #tpu.memory_space<vmem>>, vector<1x64xf32>
    %13 = arith.mulf %2, %2 : vector<128x64xf32>
    %cst_13 = arith.constant dense<0.000000e+00> : vector<64xf32>
    %14 = vector.multi_reduction <add>, %13, %cst_13 [0] : vector<128x64xf32> to vector<64xf32>
    %15 = vector.shape_cast %14 : vector<64xf32> to vector<1x64xf32>
    %16 = arith.addf %12, %15 : vector<1x64xf32>
    %c0_14 = arith.constant 0 : index
    %c0_15 = arith.constant 0 : index
    %17 = vector.load %arg5[%c0_14, %c0_15] : memref<1x64xf32, #tpu.memory_space<vmem>>, vector<1x64xf32>
    tpu.vector_store %arg5[%c0_14, %c0_15], %16 {strides = array<i32>} : memref<1x64xf32, #tpu.memory_space<vmem>>, vector<1x64xf32>,
    return
  }
  func.func @transform_0(%arg0: i32) -> (i32, i32) {
    %c0_i32 = arith.constant 0 : i32
    %c0_i32_0 = arith.constant 0 : i32
    return %arg0, %c0_i32 : i32, i32
  }
  func.func @transform_1(%arg0: i32) -> (i32, i32) {
    %c0_i32 = arith.constant 0 : i32
    %c0_i32_0 = arith.constant 0 : i32
    %c0_i32_1 = arith.constant 0 : i32
    return %c0_i32, %c0_i32_0 : i32, i32
  }
  func.func @transform_2(%arg0: i32) -> (i32, i32) {
    %c0_i32 = arith.constant 0 : i32
    %c0_i32_0 = arith.constant 0 : i32
    return %arg0, %c0_i32 : i32, i32
  }
  func.func @transform_3(%arg0: i32) -> (i32, i32) {
    %c0_i32 = arith.constant 0 : i32
    %c0_i32_0 = arith.constant 0 : i32
    %c0_i32_1 = arith.constant 0 : i32
    return %c0_i32, %c0_i32_0 : i32, i32
  }
  func.func @transform_4(%arg0: i32) -> (i32, i32) {
    %c0_i32 = arith.constant 0 : i32
    %c0_i32_0 = arith.constant 0 : i32
    %c0_i32_1 = arith.constant 0 : i32
    return %c0_i32, %c0_i32_0 : i32, i32
  }
}

module attributes {stable_mosaic.version = 11 : i64} {
  func.func @_conv_mm_kernel(%arg0: i32, %arg1: memref<512x144xbf16, #tpu.memory_space<vmem>>, %arg2: memref<144x32xbf16, #tpu.memory_space<vmem>>, %arg3: memref<512x32xf32, #tpu.memory_space<vmem>>, %arg4: memref<1x32xf32, #tpu.memory_space<vmem>>, %arg5: memref<1x32xf32, #tpu.memory_space<vmem>>) attributes {dimension_semantics = [#tpu.dimension_semantics<arbitrary>], iteration_bounds = array<i64: 1>, scalar_prefetch = 0 : i64, scratch_operands = 0 : i64, tpu.core_type = #tpu.core_type<tc>, window_params = [{transform_indices = @transform_0, window_bounds = array<i64: 512, 144>}, {pipeline_mode = #tpu.pipeline_mode<synchronous>, transform_indices = @transform_1, window_bounds = array<i64: 144, 32>}, {transform_indices = @transform_2, window_bounds = array<i64: 512, 32>}, {pipeline_mode = #tpu.pipeline_mode<synchronous>, transform_indices = @transform_3, window_bounds = array<i64: 1, 32>}, {pipeline_mode = #tpu.pipeline_mode<synchronous>, transform_indices = @transform_4, window_bounds = array<i64: 1, 32>}]} {
    %c0 = arith.constant 0 : index
    %c0_0 = arith.constant 0 : index
    %0 = vector.load %arg1[%c0, %c0_0] : memref<512x144xbf16, #tpu.memory_space<vmem>>, vector<512x144xbf16>
    %c0_1 = arith.constant 0 : index
    %c0_2 = arith.constant 0 : index
    %1 = vector.load %arg2[%c0_1, %c0_2] : memref<144x32xbf16, #tpu.memory_space<vmem>>, vector<144x32xbf16>
    %cst = arith.constant dense<0.000000e+00> : vector<512x32xf32>
    %2 = tpu.matmul %0, %1, %cst {dimension_numbers = #tpu.dot_dimension_numbers<[1], [0], [0], [1], [0, 0, 1, 1], [], []>} : vector<512x144xbf16>, vector<144x32xbf16>, vector<512x32xf32> -> vector<512x32xf32>
    %c0_3 = arith.constant 0 : index
    %c0_4 = arith.constant 0 : index
    %3 = vector.load %arg3[%c0_3, %c0_4] : memref<512x32xf32, #tpu.memory_space<vmem>>, vector<512x32xf32>
    tpu.vector_store %arg3[%c0_3, %c0_4], %2 {strides = array<i32>} : memref<512x32xf32, #tpu.memory_space<vmem>>, vector<512x32xf32>,
    %c0_i32 = arith.constant 0 : i32
    %4 = arith.cmpi eq, %arg0, %c0_i32 : i32
    %5 = arith.extui %4 : i1 to i32
    %c0_i32_5 = arith.constant 0 : i32
    %6 = arith.cmpi ne, %5, %c0_i32_5 : i32
    scf.if %6 {
      %cst_16 = arith.constant 0.000000e+00 : f32
      %18 = vector.broadcast %cst_16 : f32 to vector<1x32xf32>
      %c0_17 = arith.constant 0 : index
      %c0_18 = arith.constant 0 : index
      %19 = vector.load %arg4[%c0_17, %c0_18] : memref<1x32xf32, #tpu.memory_space<vmem>>, vector<1x32xf32>
      tpu.vector_store %arg4[%c0_17, %c0_18], %18 {strides = array<i32>} : memref<1x32xf32, #tpu.memory_space<vmem>>, vector<1x32xf32>,
      %cst_19 = arith.constant 0.000000e+00 : f32
      %20 = vector.broadcast %cst_19 : f32 to vector<1x32xf32>
      %c0_20 = arith.constant 0 : index
      %c0_21 = arith.constant 0 : index
      %21 = vector.load %arg5[%c0_20, %c0_21] : memref<1x32xf32, #tpu.memory_space<vmem>>, vector<1x32xf32>
      tpu.vector_store %arg5[%c0_20, %c0_21], %20 {strides = array<i32>} : memref<1x32xf32, #tpu.memory_space<vmem>>, vector<1x32xf32>,
    } else {
    }
    %c0_6 = arith.constant 0 : index
    %c0_7 = arith.constant 0 : index
    %7 = vector.load %arg4[%c0_6, %c0_7] : memref<1x32xf32, #tpu.memory_space<vmem>>, vector<1x32xf32>
    %cst_8 = arith.constant dense<0.000000e+00> : vector<32xf32>
    %8 = vector.multi_reduction <add>, %2, %cst_8 [0] : vector<512x32xf32> to vector<32xf32>
    %9 = vector.shape_cast %8 : vector<32xf32> to vector<1x32xf32>
    %10 = arith.addf %7, %9 : vector<1x32xf32>
    %c0_9 = arith.constant 0 : index
    %c0_10 = arith.constant 0 : index
    %11 = vector.load %arg4[%c0_9, %c0_10] : memref<1x32xf32, #tpu.memory_space<vmem>>, vector<1x32xf32>
    tpu.vector_store %arg4[%c0_9, %c0_10], %10 {strides = array<i32>} : memref<1x32xf32, #tpu.memory_space<vmem>>, vector<1x32xf32>,
    %c0_11 = arith.constant 0 : index
    %c0_12 = arith.constant 0 : index
    %12 = vector.load %arg5[%c0_11, %c0_12] : memref<1x32xf32, #tpu.memory_space<vmem>>, vector<1x32xf32>
    %13 = arith.mulf %2, %2 : vector<512x32xf32>
    %cst_13 = arith.constant dense<0.000000e+00> : vector<32xf32>
    %14 = vector.multi_reduction <add>, %13, %cst_13 [0] : vector<512x32xf32> to vector<32xf32>
    %15 = vector.shape_cast %14 : vector<32xf32> to vector<1x32xf32>
    %16 = arith.addf %12, %15 : vector<1x32xf32>
    %c0_14 = arith.constant 0 : index
    %c0_15 = arith.constant 0 : index
    %17 = vector.load %arg5[%c0_14, %c0_15] : memref<1x32xf32, #tpu.memory_space<vmem>>, vector<1x32xf32>
    tpu.vector_store %arg5[%c0_14, %c0_15], %16 {strides = array<i32>} : memref<1x32xf32, #tpu.memory_space<vmem>>, vector<1x32xf32>,
    return
  }
  func.func @transform_0(%arg0: i32) -> (i32, i32) {
    %c0_i32 = arith.constant 0 : i32
    %c0_i32_0 = arith.constant 0 : i32
    return %arg0, %c0_i32 : i32, i32
  }
  func.func @transform_1(%arg0: i32) -> (i32, i32) {
    %c0_i32 = arith.constant 0 : i32
    %c0_i32_0 = arith.constant 0 : i32
    %c0_i32_1 = arith.constant 0 : i32
    return %c0_i32, %c0_i32_0 : i32, i32
  }
  func.func @transform_2(%arg0: i32) -> (i32, i32) {
    %c0_i32 = arith.constant 0 : i32
    %c0_i32_0 = arith.constant 0 : i32
    return %arg0, %c0_i32 : i32, i32
  }
  func.func @transform_3(%arg0: i32) -> (i32, i32) {
    %c0_i32 = arith.constant 0 : i32
    %c0_i32_0 = arith.constant 0 : i32
    %c0_i32_1 = arith.constant 0 : i32
    return %c0_i32, %c0_i32_0 : i32, i32
  }
  func.func @transform_4(%arg0: i32) -> (i32, i32) {
    %c0_i32 = arith.constant 0 : i32
    %c0_i32_0 = arith.constant 0 : i32
    %c0_i32_1 = arith.constant 0 : i32
    return %c0_i32, %c0_i32_0 : i32, i32
  }
}

module attributes {stable_mosaic.version = 11 : i64} {
  func.func @_conv_mm_kernel(%arg0: i32, %arg1: memref<2048x72xbf16, #tpu.memory_space<vmem>>, %arg2: memref<72x16xbf16, #tpu.memory_space<vmem>>, %arg3: memref<2048x16xf32, #tpu.memory_space<vmem>>, %arg4: memref<1x16xf32, #tpu.memory_space<vmem>>, %arg5: memref<1x16xf32, #tpu.memory_space<vmem>>) attributes {dimension_semantics = [#tpu.dimension_semantics<arbitrary>], iteration_bounds = array<i64: 1>, scalar_prefetch = 0 : i64, scratch_operands = 0 : i64, tpu.core_type = #tpu.core_type<tc>, window_params = [{transform_indices = @transform_0, window_bounds = array<i64: 2048, 72>}, {pipeline_mode = #tpu.pipeline_mode<synchronous>, transform_indices = @transform_1, window_bounds = array<i64: 72, 16>}, {transform_indices = @transform_2, window_bounds = array<i64: 2048, 16>}, {pipeline_mode = #tpu.pipeline_mode<synchronous>, transform_indices = @transform_3, window_bounds = array<i64: 1, 16>}, {pipeline_mode = #tpu.pipeline_mode<synchronous>, transform_indices = @transform_4, window_bounds = array<i64: 1, 16>}]} {
    %c0 = arith.constant 0 : index
    %c0_0 = arith.constant 0 : index
    %0 = vector.load %arg1[%c0, %c0_0] : memref<2048x72xbf16, #tpu.memory_space<vmem>>, vector<2048x72xbf16>
    %c0_1 = arith.constant 0 : index
    %c0_2 = arith.constant 0 : index
    %1 = vector.load %arg2[%c0_1, %c0_2] : memref<72x16xbf16, #tpu.memory_space<vmem>>, vector<72x16xbf16>
    %cst = arith.constant dense<0.000000e+00> : vector<2048x16xf32>
    %2 = tpu.matmul %0, %1, %cst {dimension_numbers = #tpu.dot_dimension_numbers<[1], [0], [0], [1], [0, 0, 1, 1], [], []>} : vector<2048x72xbf16>, vector<72x16xbf16>, vector<2048x16xf32> -> vector<2048x16xf32>
    %c0_3 = arith.constant 0 : index
    %c0_4 = arith.constant 0 : index
    %3 = vector.load %arg3[%c0_3, %c0_4] : memref<2048x16xf32, #tpu.memory_space<vmem>>, vector<2048x16xf32>
    tpu.vector_store %arg3[%c0_3, %c0_4], %2 {strides = array<i32>} : memref<2048x16xf32, #tpu.memory_space<vmem>>, vector<2048x16xf32>,
    %c0_i32 = arith.constant 0 : i32
    %4 = arith.cmpi eq, %arg0, %c0_i32 : i32
    %5 = arith.extui %4 : i1 to i32
    %c0_i32_5 = arith.constant 0 : i32
    %6 = arith.cmpi ne, %5, %c0_i32_5 : i32
    scf.if %6 {
      %cst_16 = arith.constant 0.000000e+00 : f32
      %18 = vector.broadcast %cst_16 : f32 to vector<1x16xf32>
      %c0_17 = arith.constant 0 : index
      %c0_18 = arith.constant 0 : index
      %19 = vector.load %arg4[%c0_17, %c0_18] : memref<1x16xf32, #tpu.memory_space<vmem>>, vector<1x16xf32>
      tpu.vector_store %arg4[%c0_17, %c0_18], %18 {strides = array<i32>} : memref<1x16xf32, #tpu.memory_space<vmem>>, vector<1x16xf32>,
      %cst_19 = arith.constant 0.000000e+00 : f32
      %20 = vector.broadcast %cst_19 : f32 to vector<1x16xf32>
      %c0_20 = arith.constant 0 : index
      %c0_21 = arith.constant 0 : index
      %21 = vector.load %arg5[%c0_20, %c0_21] : memref<1x16xf32, #tpu.memory_space<vmem>>, vector<1x16xf32>
      tpu.vector_store %arg5[%c0_20, %c0_21], %20 {strides = array<i32>} : memref<1x16xf32, #tpu.memory_space<vmem>>, vector<1x16xf32>,
    } else {
    }
    %c0_6 = arith.constant 0 : index
    %c0_7 = arith.constant 0 : index
    %7 = vector.load %arg4[%c0_6, %c0_7] : memref<1x16xf32, #tpu.memory_space<vmem>>, vector<1x16xf32>
    %cst_8 = arith.constant dense<0.000000e+00> : vector<16xf32>
    %8 = vector.multi_reduction <add>, %2, %cst_8 [0] : vector<2048x16xf32> to vector<16xf32>
    %9 = vector.shape_cast %8 : vector<16xf32> to vector<1x16xf32>
    %10 = arith.addf %7, %9 : vector<1x16xf32>
    %c0_9 = arith.constant 0 : index
    %c0_10 = arith.constant 0 : index
    %11 = vector.load %arg4[%c0_9, %c0_10] : memref<1x16xf32, #tpu.memory_space<vmem>>, vector<1x16xf32>
    tpu.vector_store %arg4[%c0_9, %c0_10], %10 {strides = array<i32>} : memref<1x16xf32, #tpu.memory_space<vmem>>, vector<1x16xf32>,
    %c0_11 = arith.constant 0 : index
    %c0_12 = arith.constant 0 : index
    %12 = vector.load %arg5[%c0_11, %c0_12] : memref<1x16xf32, #tpu.memory_space<vmem>>, vector<1x16xf32>
    %13 = arith.mulf %2, %2 : vector<2048x16xf32>
    %cst_13 = arith.constant dense<0.000000e+00> : vector<16xf32>
    %14 = vector.multi_reduction <add>, %13, %cst_13 [0] : vector<2048x16xf32> to vector<16xf32>
    %15 = vector.shape_cast %14 : vector<16xf32> to vector<1x16xf32>
    %16 = arith.addf %12, %15 : vector<1x16xf32>
    %c0_14 = arith.constant 0 : index
    %c0_15 = arith.constant 0 : index
    %17 = vector.load %arg5[%c0_14, %c0_15] : memref<1x16xf32, #tpu.memory_space<vmem>>, vector<1x16xf32>
    tpu.vector_store %arg5[%c0_14, %c0_15], %16 {strides = array<i32>} : memref<1x16xf32, #tpu.memory_space<vmem>>, vector<1x16xf32>,
    return
  }
  func.func @transform_0(%arg0: i32) -> (i32, i32) {
    %c0_i32 = arith.constant 0 : i32
    %c0_i32_0 = arith.constant 0 : i32
    return %arg0, %c0_i32 : i32, i32
  }
  func.func @transform_1(%arg0: i32) -> (i32, i32) {
    %c0_i32 = arith.constant 0 : i32
    %c0_i32_0 = arith.constant 0 : i32
    %c0_i32_1 = arith.constant 0 : i32
    return %c0_i32, %c0_i32_0 : i32, i32
  }
  func.func @transform_2(%arg0: i32) -> (i32, i32) {
    %c0_i32 = arith.constant 0 : i32
    %c0_i32_0 = arith.constant 0 : i32
    return %arg0, %c0_i32 : i32, i32
  }
  func.func @transform_3(%arg0: i32) -> (i32, i32) {
    %c0_i32 = arith.constant 0 : i32
    %c0_i32_0 = arith.constant 0 : i32
    %c0_i32_1 = arith.constant 0 : i32
    return %c0_i32, %c0_i32_0 : i32, i32
  }
  func.func @transform_4(%arg0: i32) -> (i32, i32) {
    %c0_i32 = arith.constant 0 : i32
    %c0_i32_0 = arith.constant 0 : i32
    %c0_i32_1 = arith.constant 0 : i32
    return %c0_i32, %c0_i32_0 : i32, i32
  }
}

module attributes {stable_mosaic.version = 11 : i64} {
  func.func @_conv_mm_kernel(%arg0: i32, %arg1: memref<2048x36xbf16, #tpu.memory_space<vmem>>, %arg2: memref<36x12xbf16, #tpu.memory_space<vmem>>, %arg3: memref<2048x12xf32, #tpu.memory_space<vmem>>) attributes {dimension_semantics = [#tpu.dimension_semantics<parallel>], iteration_bounds = array<i64: 4>, scalar_prefetch = 0 : i64, scratch_operands = 0 : i64, tpu.core_type = #tpu.core_type<tc>, window_params = [{transform_indices = @transform_0, window_bounds = array<i64: 2048, 36>}, {pipeline_mode = #tpu.pipeline_mode<synchronous>, transform_indices = @transform_1, window_bounds = array<i64: 36, 12>}, {transform_indices = @transform_2, window_bounds = array<i64: 2048, 12>}]} {
    %c0 = arith.constant 0 : index
    %c0_0 = arith.constant 0 : index
    %0 = vector.load %arg1[%c0, %c0_0] : memref<2048x36xbf16, #tpu.memory_space<vmem>>, vector<2048x36xbf16>
    %c0_1 = arith.constant 0 : index
    %c0_2 = arith.constant 0 : index
    %1 = vector.load %arg2[%c0_1, %c0_2] : memref<36x12xbf16, #tpu.memory_space<vmem>>, vector<36x12xbf16>
    %cst = arith.constant dense<0.000000e+00> : vector<2048x12xf32>
    %2 = tpu.matmul %0, %1, %cst {dimension_numbers = #tpu.dot_dimension_numbers<[1], [0], [0], [1], [0, 0, 1, 1], [], []>} : vector<2048x36xbf16>, vector<36x12xbf16>, vector<2048x12xf32> -> vector<2048x12xf32>
    %3 = math.tanh %2 : vector<2048x12xf32>
    %c0_3 = arith.constant 0 : index
    %c0_4 = arith.constant 0 : index
    %4 = vector.load %arg3[%c0_3, %c0_4] : memref<2048x12xf32, #tpu.memory_space<vmem>>, vector<2048x12xf32>
    tpu.vector_store %arg3[%c0_3, %c0_4], %3 {strides = array<i32>} : memref<2048x12xf32, #tpu.memory_space<vmem>>, vector<2048x12xf32>,
    return
  }
  func.func @transform_0(%arg0: i32) -> (i32, i32) {
    %c0_i32 = arith.constant 0 : i32
    %c0_i32_0 = arith.constant 0 : i32
    return %arg0, %c0_i32 : i32, i32
  }
  func.func @transform_1(%arg0: i32) -> (i32, i32) {
    %c0_i32 = arith.constant 0 : i32
    %c0_i32_0 = arith.constant 0 : i32
    %c0_i32_1 = arith.constant 0 : i32
    return %c0_i32, %c0_i32_0 : i32, i32
  }
  func.func @transform_2(%arg0: i32) -> (i32, i32) {
    %c0_i32 = arith.constant 0 : i32
    %c0_i32_0 = arith.constant 0 : i32
    return %arg0, %c0_i32 : i32, i32
  }
}

</mosaic_0001>

<llo_original>
// kernel: generator_forward.7
$region0: #{generator_forward.7}
  #allocation0 [shape = 'u32[]', space=smem, size = 0x4, offset = 0x4, fixed_abs, tag = 'smem constant byte address 0x4 - core index']
  #allocation1 [shape = 'u32[72,128]{1,0:T(1,128)}', space=vmem, size = 0x9000, scoped, tag = 'internal scratch']
  %s0 = inlined_call_operand.hbm [shape: f32[2,32], index: 0, kind: input, shape index: {}]
  %s1 = inlined_call_operand.hbm [shape: f32[32,512], index: 1, kind: input, shape index: {}]
  %s2 = inlined_call_operand.hbm [shape: f32[1,512], index: 2, kind: input, shape index: {}]
  %s3 = inlined_call_operand.vmem [shape: f32[2,512], index: 3, kind: output, shape index: {}]
  %s4 = sld [smem:[#allocation0]]
  $region34: #{generator_forward.7} parent=0
    _
  %s6 = ssub.s32 1, %s4
  %s7 = scalar_select 0, %s6, %s4
  $region1: #{generator_forward.7} parent=0
    #allocation2 [shape = 'u8[1024]{0}', space=vmem, size = 0x400, scoped, tag = 'input window, operand 0, single buffered']
    #allocation3 [shape = 's32[1]{0}', space=sflag, size = 0x4, scoped, tag = 'scoped memory for generator_forward.7']
    #allocation4 [shape = 'u8[65536]{0}', space=vmem, size = 0x10000, scoped, tag = 'input window, operand 1, single buffered']
    #allocation5 [shape = 's32[1]{0}', space=sflag, size = 0x4, scoped, tag = 'scoped memory for generator_forward.7']
    #allocation6 [shape = 'u8[2048]{0}', space=vmem, size = 0x800, scoped, tag = 'input window, operand 2, single buffered']
    %8 = vsyncpa [#allocation3], 0
    %9 = vsyncpa [#allocation5], 0
    // Predicated region
    $region2: #{generator_forward.7} parent=1 // pred_check
      _
    $region3: #{generator_forward.7} parent=1 // pred_check_branch
      %11 = sbr.rel (0) target = $region5
    $region4: #{generator_forward.7} parent=1 // pred_region
      %13 = vsyncadd [#allocation3], 0
      %s15 = sshll.u32 %s0, 4
      %s16 = int_to_ptr.hbm [resolvable:$true] %s15
      %s17 = sshll.u32 [#allocation2], 4
      %s18 = int_to_ptr.vmem [resolvable:$true] %s17
      %20 = dma.hbm_to_vmem [thread:$0]  %s16, 32, %s18, [#allocation3]
    $region5: #{generator_forward.7} parent=1 // pred_fallthru
      _
    // Predicated region
    $region6: #{generator_forward.7} parent=1 // pred_check
      _
    $region7: #{generator_forward.7} parent=1 // pred_check_branch
      %22 = sbr.rel (0) target = $region9
    $region8: #{generator_forward.7} parent=1 // pred_region
      %24 = vsyncadd [#allocation5], 0
      %s25 = sshll.u32 %s1, 4
      %s26 = int_to_ptr.hbm [resolvable:$true] %s25
      %s27 = sshll.u32 [#allocation4], 4
      %s28 = int_to_ptr.vmem [resolvable:$true] %s27
      %33 = dma.hbm_to_vmem [thread:$0]  %s26, 2048, %s28, [#allocation5], 512, 512, 32
    $region9: #{generator_forward.7} parent=1 // pred_fallthru
      _
    // Predicated region
    $region10: #{generator_forward.7} parent=1 // pred_check
      _
    $region11: #{generator_forward.7} parent=1 // pred_check_branch
      %35 = sbr.rel (0) target = $region13
    $region12: #{generator_forward.7} parent=1 // pred_region
      %37 = vsyncadd [#allocation5], 0
      %s39 = sshll.u32 %s2, 4
      %s40 = int_to_ptr.hbm [resolvable:$true] %s39
      %s41 = sshll.u32 [#allocation6], 4
      %s42 = int_to_ptr.vmem [resolvable:$true] %s41
      %44 = dma.hbm_to_vmem [thread:$0]  %s40, 64, %s42, [#allocation5]
    $region13: #{generator_forward.7} parent=1 // pred_fallthru
      _
    // Predicated region
    $region14: #{generator_forward.7} parent=1 // pred_check
      _
    $region15: #{generator_forward.7} parent=1 // pred_check_branch
      %46 = sbr.rel (0) target = $region17
    $region16: #{generator_forward.7} parent=1 // pred_region
      %48 = dma.done [#allocation3], 32
    $region17: #{generator_forward.7} parent=1 // pred_fallthru
      _
    // Predicated region
    $region18: #{generator_forward.7} parent=1 // pred_check
      _
    $region19: #{generator_forward.7} parent=1 // pred_check_branch
      %50 = sbr.rel (0) target = $region21
    $region20: #{generator_forward.7} parent=1 // pred_region
      %52 = dma.done [#allocation5], 2048
    $region21: #{generator_forward.7} parent=1 // pred_fallthru
      _
    // Predicated region
    $region22: #{generator_forward.7} parent=1 // pred_check
      _
    $region23: #{generator_forward.7} parent=1 // pred_check_branch
      %54 = sbr.rel (0) target = $region25
    $region24: #{generator_forward.7} parent=1 // pred_region
      %56 = dma.done [#allocation5], 64
    $region25: #{generator_forward.7} parent=1 // pred_fallthru
      _
    %v57 = vld [vmem:[#allocation2] sm:$0x3]
    %v58 = vld [vmem:[#allocation4] sm:$0xff]
    %v59 = vld [vmem:[#allocation4 + $0x8] sm:$0xff]
    %v60 = vld [vmem:[#allocation4 + $0x10] sm:$0xff]
    %v61 = vld [vmem:[#allocation4 + $0x18] sm:$0xff]
    %v62 = vld [vmem:[#allocation4 + $0x20] sm:$0xff]
    %v63 = vld [vmem:[#allocation4 + $0x28] sm:$0xff]
    %v64 = vld [vmem:[#allocation4 + $0x30] sm:$0xff]
    %v65 = vld [vmem:[#allocation4 + $0x38] sm:$0xff]
    %v66 = vld [vmem:[#allocation4 + $0x40] sm:$0xff]
    %v67 = vld [vmem:[#allocation4 + $0x48] sm:$0xff]
    %v68 = vld [vmem:[#allocation4 + $0x50] sm:$0xff]
    %v69 = vld [vmem:[#allocation4 + $0x58] sm:$0xff]
    %v70 = vld [vmem:[#allocation4 + $0x60] sm:$0xff]
    %v71 = vld [vmem:[#allocation4 + $0x68] sm:$0xff]
    %v72 = vld [vmem:[#allocation4 + $0x70] sm:$0xff]
    %v73 = vld [vmem:[#allocation4 + $0x78] sm:$0xff]
    %v74 = vld [vmem:[#allocation6] sm:$0xf]
    %v76 = vperm.slane %v74, 0
    %v77 = vperm.slane %v74, 1
    %v78 = vperm.slane %v74, 2
    %v79 = vperm.slane %v74, 3
    %vm84 = vcmask 261120
    %v86 = vsel %vm84, %v57, 0
    %88 = vmatpush.msra.mxu0 0.0
    %89 = vmatpush.msra.mxu0 0.0
    %90 = vmatpush.msra.mxu0 0.0
    %91 = vmatpush.msra.mxu0 0.0
    %92 = vmatpush.msra.mxu0 0.0
    %93 = vmatpush.msra.mxu0 0.0
    %94 = vmatpush.msra.mxu0 0.0
    %95 = vmatpush.msra.mxu0 0.0
    %96 = vmatpush.msra.mxu0 0.0
    %97 = vmatpush.msra.mxu0 0.0
    %98 = vmatpush.msra.mxu0 0.0
    %99 = vmatpush.msra.mxu0 0.0
    %100 = vmatpush.msra.mxu0 %v70
    %101 = vmatpush.msra.mxu0 %v66
    %102 = vmatpush.msra.mxu0 %v62
    %103 = vmatpush.msra.mxu0 %v58
    %104 = vmatmul.f32.gmra.mxu0 %v86
    %v105 = vpop.f32.mrf.mxu0
    %v106 = vadd.f32 %v76, %v105
    %107 = vdwg.mxu0
    %108 = vmatpush.msra.mxu0 0.0
    %109 = vmatpush.msra.mxu0 0.0
    %110 = vmatpush.msra.mxu0 0.0
    %111 = vmatpush.msra.mxu0 0.0
    %112 = vmatpush.msra.mxu0 0.0
    %113 = vmatpush.msra.mxu0 0.0
    %114 = vmatpush.msra.mxu0 0.0
    %115 = vmatpush.msra.mxu0 0.0
    %116 = vmatpush.msra.mxu0 0.0
    %117 = vmatpush.msra.mxu0 0.0
    %118 = vmatpush.msra.mxu0 0.0
    %119 = vmatpush.msra.mxu0 0.0
    %120 = vmatpush.msra.mxu0 %v71
    %121 = vmatpush.msra.mxu0 %v67
    %122 = vmatpush.msra.mxu0 %v63
    %123 = vmatpush.msra.mxu0 %v59
    %124 = vmatmul.f32.gmra.mxu0 %v86
    %v125 = vpop.f32.mrf.mxu0
    %v126 = vadd.f32 %v77, %v125
    %127 = vdwg.mxu0
    %128 = vmatpush.msra.mxu0 0.0
    %129 = vmatpush.msra.mxu0 0.0
    %130 = vmatpush.msra.mxu0 0.0
    %131 = vmatpush.msra.mxu0 0.0
    %132 = vmatpush.msra.mxu0 0.0
    %133 = vmatpush.msra.mxu0 0.0
    %134 = vmatpush.msra.mxu0 0.0
    %135 = vmatpush.msra.mxu0 0.0
    %136 = vmatpush.msra.mxu0 0.0
    %137 = vmatpush.msra.mxu0 0.0
    %138 = vmatpush.msra.mxu0 0.0
    %139 = vmatpush.msra.mxu0 0.0
    %140 = vmatpush.msra.mxu0 %v72
    %141 = vmatpush.msra.mxu0 %v68
    %142 = vmatpush.msra.mxu0 %v64
    %143 = vmatpush.msra.mxu0 %v60
    %144 = vmatmul.f32.gmra.mxu0 %v86
    %v145 = vpop.f32.mrf.mxu0
    %v146 = vadd.f32 %v78, %v145
    %147 = vdwg.mxu0
    %148 = vmatpush.msra.mxu0 0.0
    %149 = vmatpush.msra.mxu0 0.0
    %150 = vmatpush.msra.mxu0 0.0
    %151 = vmatpush.msra.mxu0 0.0
    %152 = vmatpush.msra.mxu0 0.0
    %153 = vmatpush.msra.mxu0 0.0
    %154 = vmatpush.msra.mxu0 0.0
    %155 = vmatpush.msra.mxu0 0.0
    %156 = vmatpush.msra.mxu0 0.0
    %157 = vmatpush.msra.mxu0 0.0
    %158 = vmatpush.msra.mxu0 0.0
    %159 = vmatpush.msra.mxu0 0.0
    %160 = vmatpush.msra.mxu0 %v73
    %161 = vmatpush.msra.mxu0 %v69
    %162 = vmatpush.msra.mxu0 %v65
    %163 = vmatpush.msra.mxu0 %v61
    %164 = vmatmul.f32.gmra.mxu0 %v86
    %v165 = vpop.f32.mrf.mxu0
    %v166 = vadd.f32 %v79, %v165
    %167 = vdwg.mxu0
    %v172 = vrot.slane %v126, 6
    %v173 = vrot.slane %v146, 4
    %v174 = vrot.slane %v166, 2
    %vm175 = vcmask 1041408
    %v176 = vsel %vm175, %v106, %v172
    %vm177 = vcmask 1045508
    %v178 = vsel %vm177, %v173, %v174
    %vm179 = vcmask 1043456
    %v180 = vsel %vm179, %v176, %v178
    %182 = vst [vmem:[%s3] sm:$0xff] %v180
    // Predicated region
    $region26: #{generator_forward.7} parent=1 // pred_check
      _
    $region27: #{generator_forward.7} parent=1 // pred_check_branch
      %184 = sbr.rel (0) target = $region29
    $region28: #{generator_forward.7} parent=1 // pred_region
      _
    $region29: #{generator_forward.7} parent=1 // pred_fallthru
      _
    // Predicated region
    $region30: #{generator_forward.7} parent=1 // pred_check
      _
    $region31: #{generator_forward.7} parent=1 // pred_check_branch
      %186 = sbr.rel (0) target = $region33
    $region32: #{generator_forward.7} parent=1 // pred_region
      _
    $region33: #{generator_forward.7} parent=1 // pred_fallthru
      _
    %187 = vsyncpa [#allocation3], 1
    %188 = vsyncpa [#allocation5], 1

// kernel: generator_forward.8
$region0: #{generator_forward.8}
  #allocation0 [shape = 'u32[]', space=smem, size = 0x4, offset = 0x4, fixed_abs, tag = 'smem constant byte address 0x4 - core index']
  #allocation1 [shape = 'u32[72,128]{1,0:T(1,128)}', space=vmem, size = 0x9000, scoped, tag = 'internal scratch']
  %s0 = inlined_call_operand.vmem [shape: bf16[8,1152], index: 0, kind: input, shape index: {}]
  %s1 = inlined_call_operand.hbm [shape: bf16[1152,256], index: 1, kind: input, shape index: {}]
  %s2 = inlined_call_operand.vmem [shape: f32[8,256], index: 2, kind: output, shape index: {0}]
  %s3 = inlined_call_operand.vmem [shape: f32[1,256], index: 3, kind: output, shape index: {1}]
  %s4 = inlined_call_operand.vmem [shape: f32[1,256], index: 4, kind: output, shape index: {2}]
  %5 = xla_tuple %s2, %s3, %s4
  %s6 = sld [smem:[#allocation0]]
  $region42: #{generator_forward.8} parent=0
    _
  %s8 = ssub.s32 1, %s6
  %s9 = scalar_select 0, %s8, %s6
  $region1: #{generator_forward.8} parent=0
    #allocation2 [shape = 'u8[589824]{0}', space=vmem, size = 0x90000, scoped, tag = 'input window, operand 1, single buffered']
    #allocation3 [shape = 's32[1]{0}', space=sflag, size = 0x4, scoped, tag = 'scoped memory for generator_forward.8']
    %10 = vsyncpa [#allocation3], 0
    // Predicated region
    $region2: #{generator_forward.8} parent=1 // pred_check
      _
    $region3: #{generator_forward.8} parent=1 // pred_check_branch
      %12 = sbr.rel (0) target = $region5
    $region4: #{generator_forward.8} parent=1 // pred_region
      _
    $region5: #{generator_forward.8} parent=1 // pred_fallthru
      _
    // Predicated region
    $region6: #{generator_forward.8} parent=1 // pred_check
      _
    $region7: #{generator_forward.8} parent=1 // pred_check_branch
      %14 = sbr.rel (0) target = $region9
    $region8: #{generator_forward.8} parent=1 // pred_region
      %16 = vsyncadd [#allocation3], 0
      %s17 = sshll.u32 %s1, 4
      %s18 = int_to_ptr.hbm [resolvable:$true] %s17
      %s19 = sshll.u32 [#allocation2], 4
      %s20 = int_to_ptr.vmem [resolvable:$true] %s19
      %25 = dma.hbm_to_vmem [thread:$0]  %s18, 18432, %s20, [#allocation3], 128, 128, 8
    $region9: #{generator_forward.8} parent=1 // pred_fallthru
      _
    // Predicated region
    $region10: #{generator_forward.8} parent=1 // pred_check
      _
    $region11: #{generator_forward.8} parent=1 // pred_check_branch
      %27 = sbr.rel (0) target = $region13
    $region12: #{generator_forward.8} parent=1 // pred_region
      %29 = dma.done [#allocation3], 18432
    $region13: #{generator_forward.8} parent=1 // pred_fallthru
      _
    %v30 = vld [vmem:[%s0] sm:$0xff]
    %v31 = vld [vmem:[%s0 + $0x8] sm:$0xff]
    %v32 = vld [vmem:[%s0 + $0x10] sm:$0xff]
    %v33 = vld [vmem:[%s0 + $0x18] sm:$0xff]
    %v34 = vld [vmem:[%s0 + $0x20] sm:$0xf]
    %v35 = vld [vmem:[#allocation2] sm:$0xff]
    %v36 = vld [vmem:[#allocation2 + $0x8] sm:$0xff]
    %v37 = vld [vmem:[#allocation2 + $0x10] sm:$0xff]
    %v38 = vld [vmem:[#allocation2 + $0x18] sm:$0xff]
    %v39 = vld [vmem:[#allocation2 + $0x20] sm:$0xff]
    %v40 = vld [vmem:[#allocation2 + $0x28] sm:$0xff]
    %v41 = vld [vmem:[#allocation2 + $0x30] sm:$0xff]
    %v42 = vld [vmem:[#allocation2 + $0x38] sm:$0xff]
    %v43 = vld [vmem:[#allocation2 + $0x40] sm:$0xff]
    %v44 = vld [vmem:[#allocation2 + $0x48] sm:$0xff]
    %v45 = vld [vmem:[#allocation2 + $0x50] sm:$0xff]
    %v46 = vld [vmem:[#allocation2 + $0x58] sm:$0xff]
    %v47 = vld [vmem:[#allocation2 + $0x60] sm:$0xff]
    %v48 = vld [vmem:[#allocation2 + $0x68] sm:$0xff]
    %v49 = vld [vmem:[#allocation2 + $0x70] sm:$0xff]
    %v50 = vld [vmem:[#allocation2 + $0x78] sm:$0xff]
    %v51 = vld [vmem:[#allocation2 + $0x80] sm:$0xff]
    %v52 = vld [vmem:[#allocation2 + $0x88] sm:$0xff]
    %v53 = vld [vmem:[#allocation2 + $0x90] sm:$0xff]
    %v54 = vld [vmem:[#allocation2 + $0x98] sm:$0xff]
    %v55 = vld [vmem:[#allocation2 + $0xa0] sm:$0xff]
    %v56 = vld [vmem:[#allocation2 + $0xa8] sm:$0xff]
    %v57 = vld [vmem:[#allocation2 + $0xb0] sm:$0xff]
    %v58 = vld [vmem:[#allocation2 + $0xb8] sm:$0xff]
    %v59 = vld [vmem:[#allocation2 + $0xc0] sm:$0xff]
    %v60 = vld [vmem:[#allocation2 + $0xc8] sm:$0xff]
    %v61 = vld [vmem:[#allocation2 + $0xd0] sm:$0xff]
    %v62 = vld [vmem:[#allocation2 + $0xd8] sm:$0xff]
    %v63 = vld [vmem:[#allocation2 + $0xe0] sm:$0xff]
    %v64 = vld [vmem:[#allocation2 + $0xe8] sm:$0xff]
    %v65 = vld [vmem:[#allocation2 + $0xf0] sm:$0xff]
    %v66 = vld [vmem:[#allocation2 + $0xf8] sm:$0xff]
    %v67 = vld [vmem:[#allocation2 + $0x100] sm:$0xff]
    %v68 = vld [vmem:[#allocation2 + $0x108] sm:$0xff]
    %v69 = vld [vmem:[#allocation2 + $0x110] sm:$0xff]
    %v70 = vld [vmem:[#allocation2 + $0x118] sm:$0xff]
    %v71 = vld [vmem:[#allocation2 + $0x120] sm:$0xff]
    %v72 = vld [vmem:[#allocation2 + $0x128] sm:$0xff]
    %v73 = vld [vmem:[#allocation2 + $0x130] sm:$0xff]
    %v74 = vld [vmem:[#allocation2 + $0x138] sm:$0xff]
    %v75 = vld [vmem:[#allocation2 + $0x140] sm:$0xff]
    %v76 = vld [vmem:[#allocation2 + $0x148] sm:$0xff]
    %v77 = vld [vmem:[#allocation2 + $0x150] sm:$0xff]
    %v78 = vld [vmem:[#allocation2 + $0x158] sm:$0xff]
    %v79 = vld [vmem:[#allocation2 + $0x160] sm:$0xff]
    %v80 = vld [vmem:[#allocation2 + $0x168] sm:$0xff]
    %v81 = vld [vmem:[#allocation2 + $0x170] sm:$0xff]
    %v82 = vld [vmem:[#allocation2 + $0x178] sm:$0xff]
    %v83 = vld [vmem:[#allocation2 + $0x180] sm:$0xff]
    %v84 = vld [vmem:[#allocation2 + $0x188] sm:$0xff]
    %v85 = vld [vmem:[#allocation2 + $0x190] sm:$0xff]
    %v86 = vld [vmem:[#allocation2 + $0x198] sm:$0xff]
    %v87 = vld [vmem:[#allocation2 + $0x1a0] sm:$0xff]
    %v88 = vld [vmem:[#allocation2 + $0x1a8] sm:$0xff]
    %v89 = vld [vmem:[#allocation2 + $0x1b0] sm:$0xff]
    %v90 = vld [vmem:[#allocation2 + $0x1b8] sm:$0xff]
    %v91 = vld [vmem:[#allocation2 + $0x1c0] sm:$0xff]
    %v92 = vld [vmem:[#allocation2 + $0x1c8] sm:$0xff]
    %v93 = vld [vmem:[#allocation2 + $0x1d0] sm:$0xff]
    %v94 = vld [vmem:[#allocation2 + $0x1d8] sm:$0xff]
    %v95 = vld [vmem:[#allocation2 + $0x1e0] sm:$0xff]
    %v96 = vld [vmem:[#allocation2 + $0x1e8] sm:$0xff]
    %v97 = vld [vmem:[#allocation2 + $0x1f0] sm:$0xff]
    %v98 = vld [vmem:[#allocation2 + $0x1f8] sm:$0xff]
    %v99 = vld [vmem:[#allocation2 + $0x200] sm:$0xff]
    %v100 = vld [vmem:[#allocation2 + $0x208] sm:$0xff]
    %v101 = vld [vmem:[#allocation2 + $0x210] sm:$0xff]
    %v102 = vld [vmem:[#allocation2 + $0x218] sm:$0xff]
    %v103 = vld [vmem:[#allocation2 + $0x220] sm:$0xff]
    %v104 = vld [vmem:[#allocation2 + $0x228] sm:$0xff]
    %v105 = vld [vmem:[#allocation2 + $0x230] sm:$0xff]
    %v106 = vld [vmem:[#allocation2 + $0x238] sm:$0xff]
    %v107 = vld [vmem:[#allocation2 + $0x240] sm:$0xff]
    %v108 = vld [vmem:[#allocation2 + $0x248] sm:$0xff]
    %v109 = vld [vmem:[#allocation2 + $0x250] sm:$0xff]
    %v110 = vld [vmem:[#allocation2 + $0x258] sm:$0xff]
    %v111 = vld [vmem:[#allocation2 + $0x260] sm:$0xff]
    %v112 = vld [vmem:[#allocation2 + $0x268] sm:$0xff]
    %v113 = vld [vmem:[#allocation2 + $0x270] sm:$0xff]
    %v114 = vld [vmem:[#allocation2 + $0x278] sm:$0xff]
    %v115 = vld [vmem:[#allocation2 + $0x280] sm:$0xff]
    %v116 = vld [vmem:[#allocation2 + $0x288] sm:$0xff]
    %v117 = vld [vmem:[#allocation2 + $0x290] sm:$0xff]
    %v118 = vld [vmem:[#allocation2 + $0x298] sm:$0xff]
    %v119 = vld [vmem:[#allocation2 + $0x2a0] sm:$0xff]
    %v120 = vld [vmem:[#allocation2 + $0x2a8] sm:$0xff]
    %v121 = vld [vmem:[#allocation2 + $0x2b0] sm:$0xff]
    %v122 = vld [vmem:[#allocation2 + $0x2b8] sm:$0xff]
    %v123 = vld [vmem:[#allocation2 + $0x2c0] sm:$0xff]
    %v124 = vld [vmem:[#allocation2 + $0x2c8] sm:$0xff]
    %v125 = vld [vmem:[#allocation2 + $0x2d0] sm:$0xff]
    %v126 = vld [vmem:[#allocation2 + $0x2d8] sm:$0xff]
    %v127 = vld [vmem:[#allocation2 + $0x2e0] sm:$0xff]
    %v128 = vld [vmem:[#allocation2 + $0x2e8] sm:$0xff]
    %v129 = vld [vmem:[#allocation2 + $0x2f0] sm:$0xff]
    %v130 = vld [vmem:[#allocation2 + $0x2f8] sm:$0xff]
    %v131 = vld [vmem:[#allocation2 + $0x300] sm:$0xff]
    %v132 = vld [vmem:[#allocation2 + $0x308] sm:$0xff]
    %v133 = vld [vmem:[#allocation2 + $0x310] sm:$0xff]
    %v134 = vld [vmem:[#allocation2 + $0x318] sm:$0xff]
    %v135 = vld [vmem:[#allocation2 + $0x320] sm:$0xff]
    %v136 = vld [vmem:[#allocation2 + $0x328] sm:$0xff]
    %v137 = vld [vmem:[#allocation2 + $0x330] sm:$0xff]
    %v138 = vld [vmem:[#allocation2 + $0x338] sm:$0xff]
    %v139 = vld [vmem:[#allocation2 + $0x340] sm:$0xff]
    %v140 = vld [vmem:[#allocation2 + $0x348] sm:$0xff]
    %v141 = vld [vmem:[#allocation2 + $0x350] sm:$0xff]
    %v142 = vld [vmem:[#allocation2 + $0x358] sm:$0xff]
    %v143 = vld [vmem:[#allocation2 + $0x360] sm:$0xff]
    %v144 = vld [vmem:[#allocation2 + $0x368] sm:$0xff]
    %v145 = vld [vmem:[#allocation2 + $0x370] sm:$0xff]
    %v146 = vld [vmem:[#allocation2 + $0x378] sm:$0xff]
    %v147 = vld [vmem:[#allocation2 + $0x380] sm:$0xff]
    %v148 = vld [vmem:[#allocation2 + $0x388] sm:$0xff]
    %v149 = vld [vmem:[#allocation2 + $0x390] sm:$0xff]
    %v150 = vld [vmem:[#allocation2 + $0x398] sm:$0xff]
    %v151 = vld [vmem:[#allocation2 + $0x3a0] sm:$0xff]
    %v152 = vld [vmem:[#allocation2 + $0x3a8] sm:$0xff]
    %v153 = vld [vmem:[#allocation2 + $0x3b0] sm:$0xff]
    %v154 = vld [vmem:[#allocation2 + $0x3b8] sm:$0xff]
    %v155 = vld [vmem:[#allocation2 + $0x3c0] sm:$0xff]
    %v156 = vld [vmem:[#allocation2 + $0x3c8] sm:$0xff]
    %v157 = vld [vmem:[#allocation2 + $0x3d0] sm:$0xff]
    %v158 = vld [vmem:[#allocation2 + $0x3d8] sm:$0xff]
    %v159 = vld [vmem:[#allocation2 + $0x3e0] sm:$0xff]
    %v160 = vld [vmem:[#allocation2 + $0x3e8] sm:$0xff]
    %v161 = vld [vmem:[#allocation2 + $0x3f0] sm:$0xff]
    %v162 = vld [vmem:[#allocation2 + $0x3f8] sm:$0xff]
    %v163 = vld [vmem:[#allocation2 + $0x400] sm:$0xff]
    %v164 = vld [vmem:[#allocation2 + $0x408] sm:$0xff]
    %v165 = vld [vmem:[#allocation2 + $0x410] sm:$0xff]
    %v166 = vld [vmem:[#allocation2 + $0x418] sm:$0xff]
    %v167 = vld [vmem:[#allocation2 + $0x420] sm:$0xff]
    %v168 = vld [vmem:[#allocation2 + $0x428] sm:$0xff]
    %v169 = vld [vmem:[#allocation2 + $0x430] sm:$0xff]
    %v170 = vld [vmem:[#allocation2 + $0x438] sm:$0xff]
    %v171 = vld [vmem:[#allocation2 + $0x440] sm:$0xff]
    %v172 = vld [vmem:[#allocation2 + $0x448] sm:$0xff]
    %v173 = vld [vmem:[#allocation2 + $0x450] sm:$0xff]
    %v174 = vld [vmem:[#allocation2 + $0x458] sm:$0xff]
    %v175 = vld [vmem:[#allocation2 + $0x460] sm:$0xff]
    %v176 = vld [vmem:[#allocation2 + $0x468] sm:$0xff]
    %v177 = vld [vmem:[#allocation2 + $0x470] sm:$0xff]
    %v178 = vld [vmem:[#allocation2 + $0x478] sm:$0xff]
    %v184 = vunpack.c.l.b16 %v30
    %v185 = vunpack.c.h.b16 %v30
    %v186 = vunpack.c.l.b16 %v31
    %v187 = vunpack.c.h.b16 %v31
    %v188 = vunpack.c.l.b16 %v32
    %v189 = vunpack.c.h.b16 %v32
    %v190 = vunpack.c.l.b16 %v33
    %v191 = vunpack.c.h.b16 %v33
    %v192 = vunpack.c.l.b16 %v34
    %v193 = vpack.c.b16 %v184, %v184
    %v194 = vpack.c.b16 %v185, %v185
    %v195 = vpack.c.b16 %v186, %v186
    %v196 = vpack.c.b16 %v187, %v187
    %v197 = vpack.c.b16 %v188, %v188
    %v198 = vpack.c.b16 %v189, %v189
    %v199 = vpack.c.b16 %v190, %v190
    %v200 = vpack.c.b16 %v191, %v191
    %v201 = vpack.c.b16 %v192, %v192
    %v355 = vunpack.c.l.b16 %v35
    %v356 = vunpack.c.h.b16 %v35
    %v357 = vunpack.c.l.b16 %v36
    %v358 = vunpack.c.h.b16 %v36
    %v359 = vunpack.c.l.b16 %v37
    %v360 = vunpack.c.h.b16 %v37
    %v361 = vunpack.c.l.b16 %v38
    %v362 = vunpack.c.h.b16 %v38
    %v363 = vunpack.c.l.b16 %v39
    %v364 = vunpack.c.h.b16 %v39
    %v365 = vunpack.c.l.b16 %v40
    %v366 = vunpack.c.h.b16 %v40
    %v367 = vunpack.c.l.b16 %v41
    %v368 = vunpack.c.h.b16 %v41
    %v369 = vunpack.c.l.b16 %v42
    %v370 = vunpack.c.h.b16 %v42
    %v371 = vunpack.c.l.b16 %v43
    %v372 = vunpack.c.h.b16 %v43
    %v373 = vunpack.c.l.b16 %v44
    %v374 = vunpack.c.h.b16 %v44
    %v375 = vunpack.c.l.b16 %v45
    %v376 = vunpack.c.h.b16 %v45
    %v377 = vunpack.c.l.b16 %v46
    %v378 = vunpack.c.h.b16 %v46
    %v379 = vunpack.c.l.b16 %v47
    %v380 = vunpack.c.h.b16 %v47
    %v381 = vunpack.c.l.b16 %v48
    %v382 = vunpack.c.h.b16 %v48
    %v383 = vunpack.c.l.b16 %v49
    %v384 = vunpack.c.h.b16 %v49
    %v385 = vunpack.c.l.b16 %v50
    %v386 = vunpack.c.h.b16 %v50
    %v387 = vunpack.c.l.b16 %v51
    %v388 = vunpack.c.h.b16 %v51
    %v389 = vunpack.c.l.b16 %v52
    %v390 = vunpack.c.h.b16 %v52
    %v391 = vunpack.c.l.b16 %v53
    %v392 = vunpack.c.h.b16 %v53
    %v393 = vunpack.c.l.b16 %v54
    %v394 = vunpack.c.h.b16 %v54
    %v395 = vunpack.c.l.b16 %v55
    %v396 = vunpack.c.h.b16 %v55
    %v397 = vunpack.c.l.b16 %v56
    %v398 = vunpack.c.h.b16 %v56
    %v399 = vunpack.c.l.b16 %v57
    %v400 = vunpack.c.h.b16 %v57
    %v401 = vunpack.c.l.b16 %v58
    %v402 = vunpack.c.h.b16 %v58
    %v403 = vunpack.c.l.b16 %v59
    %v404 = vunpack.c.h.b16 %v59
    %v405 = vunpack.c.l.b16 %v60
    %v406 = vunpack.c.h.b16 %v60
    %v407 = vunpack.c.l.b16 %v61
    %v408 = vunpack.c.h.b16 %v61
    %v409 = vunpack.c.l.b16 %v62
    %v410 = vunpack.c.h.b16 %v62
    %v411 = vunpack.c.l.b16 %v63
    %v412 = vunpack.c.h.b16 %v63
    %v413 = vunpack.c.l.b16 %v64
    %v414 = vunpack.c.h.b16 %v64
    %v415 = vunpack.c.l.b16 %v65
    %v416 = vunpack.c.h.b16 %v65
    %v417 = vunpack.c.l.b16 %v66
    %v418 = vunpack.c.h.b16 %v66
    %v419 = vunpack.c.l.b16 %v67
    %v420 = vunpack.c.h.b16 %v67
    %v421 = vunpack.c.l.b16 %v68
    %v422 = vunpack.c.h.b16 %v68
    %v423 = vunpack.c.l.b16 %v69
    %v424 = vunpack.c.h.b16 %v69
    %v425 = vunpack.c.l.b16 %v70
    %v426 = vunpack.c.h.b16 %v70
    %v427 = vunpack.c.l.b16 %v71
    %v428 = vunpack.c.h.b16 %v71
    %v429 = vunpack.c.l.b16 %v72
    %v430 = vunpack.c.h.b16 %v72
    %v431 = vunpack.c.l.b16 %v73
    %v432 = vunpack.c.h.b16 %v73
    %v433 = vunpack.c.l.b16 %v74
    %v434 = vunpack.c.h.b16 %v74
    %v435 = vunpack.c.l.b16 %v75
    %v436 = vunpack.c.h.b16 %v75
    %v437 = vunpack.c.l.b16 %v76
    %v438 = vunpack.c.h.b16 %v76
    %v439 = vunpack.c.l.b16 %v77
    %v440 = vunpack.c.h.b16 %v77
    %v441 = vunpack.c.l.b16 %v78
    %v442 = vunpack.c.h.b16 %v78
    %v443 = vunpack.c.l.b16 %v79
    %v444 = vunpack.c.h.b16 %v79
    %v445 = vunpack.c.l.b16 %v80
    %v446 = vunpack.c.h.b16 %v80
    %v447 = vunpack.c.l.b16 %v81
    %v448 = vunpack.c.h.b16 %v81
    %v449 = vunpack.c.l.b16 %v82
    %v450 = vunpack.c.h.b16 %v82
    %v451 = vunpack.c.l.b16 %v83
    %v452 = vunpack.c.h.b16 %v83
    %v453 = vunpack.c.l.b16 %v84
    %v454 = vunpack.c.h.b16 %v84
    %v455 = vunpack.c.l.b16 %v85
    %v456 = vunpack.c.h.b16 %v85
    %v457 = vunpack.c.l.b16 %v86
    %v458 = vunpack.c.h.b16 %v86
    %v459 = vunpack.c.l.b16 %v87
    %v460 = vunpack.c.h.b16 %v87
    %v461 = vunpack.c.l.b16 %v88
    %v462 = vunpack.c.h.b16 %v88
    %v463 = vunpack.c.l.b16 %v89
    %v464 = vunpack.c.h.b16 %v89
    %v465 = vunpack.c.l.b16 %v90
    %v466 = vunpack.c.h.b16 %v90
    %v467 = vunpack.c.l.b16 %v91
    %v468 = vunpack.c.h.b16 %v91
    %v469 = vunpack.c.l.b16 %v92
    %v470 = vunpack.c.h.b16 %v92
    %v471 = vunpack.c.l.b16 %v93
    %v472 = vunpack.c.h.b16 %v93
    %v473 = vunpack.c.l.b16 %v94
    %v474 = vunpack.c.h.b16 %v94
    %v475 = vunpack.c.l.b16 %v95
    %v476 = vunpack.c.h.b16 %v95
    %v477 = vunpack.c.l.b16 %v96
    %v478 = vunpack.c.h.b16 %v96
    %v479 = vunpack.c.l.b16 %v97
    %v480 = vunpack.c.h.b16 %v97
    %v481 = vunpack.c.l.b16 %v98
    %v482 = vunpack.c.h.b16 %v98
    %v483 = vunpack.c.l.b16 %v99
    %v484 = vunpack.c.h.b16 %v99
    %v485 = vunpack.c.l.b16 %v100
    %v486 = vunpack.c.h.b16 %v100
    %v487 = vunpack.c.l.b16 %v101
    %v488 = vunpack.c.h.b16 %v101
    %v489 = vunpack.c.l.b16 %v102
    %v490 = vunpack.c.h.b16 %v102
    %v491 = vunpack.c.l.b16 %v103
    %v492 = vunpack.c.h.b16 %v103
    %v493 = vunpack.c.l.b16 %v104
    %v494 = vunpack.c.h.b16 %v104
    %v495 = vunpack.c.l.b16 %v105
    %v496 = vunpack.c.h.b16 %v105
    %v497 = vunpack.c.l.b16 %v106
    %v498 = vunpack.c.h.b16 %v106
    %v499 = vunpack.c.l.b16 %v107
    %v500 = vunpack.c.h.b16 %v107
    %v501 = vunpack.c.l.b16 %v108
    %v502 = vunpack.c.h.b16 %v108
    %v503 = vunpack.c.l.b16 %v109
    %v504 = vunpack.c.h.b16 %v109
    %v505 = vunpack.c.l.b16 %v110
    %v506 = vunpack.c.h.b16 %v110
    %v507 = vunpack.c.l.b16 %v111
    %v508 = vunpack.c.h.b16 %v111
    %v509 = vunpack.c.l.b16 %v112
    %v510 = vunpack.c.h.b16 %v112
    %v511 = vunpack.c.l.b16 %v113
    %v512 = vunpack.c.h.b16 %v113
    %v513 = vunpack.c.l.b16 %v114
    %v514 = vunpack.c.h.b16 %v114
    %v515 = vunpack.c.l.b16 %v115
    %v516 = vunpack.c.h.b16 %v115
    %v517 = vunpack.c.l.b16 %v116
    %v518 = vunpack.c.h.b16 %v116
    %v519 = vunpack.c.l.b16 %v117
    %v520 = vunpack.c.h.b16 %v117
    %v521 = vunpack.c.l.b16 %v118
    %v522 = vunpack.c.h.b16 %v118
    %v523 = vunpack.c.l.b16 %v119
    %v524 = vunpack.c.h.b16 %v119
    %v525 = vunpack.c.l.b16 %v120
    %v526 = vunpack.c.h.b16 %v120
    %v527 = vunpack.c.l.b16 %v121
    %v528 = vunpack.c.h.b16 %v121
    %v529 = vunpack.c.l.b16 %v122
    %v530 = vunpack.c.h.b16 %v122
    %v531 = vunpack.c.l.b16 %v123
    %v532 = vunpack.c.h.b16 %v123
    %v533 = vunpack.c.l.b16 %v124
    %v534 = vunpack.c.h.b16 %v124
    %v535 = vunpack.c.l.b16 %v125
    %v536 = vunpack.c.h.b16 %v125
    %v537 = vunpack.c.l.b16 %v126
    %v538 = vunpack.c.h.b16 %v126
    %v539 = vunpack.c.l.b16 %v127
    %v540 = vunpack.c.h.b16 %v127
    %v541 = vunpack.c.l.b16 %v128
    %v542 = vunpack.c.h.b16 %v128
    %v543 = vunpack.c.l.b16 %v129
    %v544 = vunpack.c.h.b16 %v129
    %v545 = vunpack.c.l.b16 %v130
    %v546 = vunpack.c.h.b16 %v130
    %v547 = vunpack.c.l.b16 %v131
    %v548 = vunpack.c.h.b16 %v131
    %v549 = vunpack.c.l.b16 %v132
    %v550 = vunpack.c.h.b16 %v132
    %v551 = vunpack.c.l.b16 %v133
    %v552 = vunpack.c.h.b16 %v133
    %v553 = vunpack.c.l.b16 %v134
    %v554 = vunpack.c.h.b16 %v134
    %v555 = vunpack.c.l.b16 %v135
    %v556 = vunpack.c.h.b16 %v135
    %v557 = vunpack.c.l.b16 %v136
    %v558 = vunpack.c.h.b16 %v136
    %v559 = vunpack.c.l.b16 %v137
    %v560 = vunpack.c.h.b16 %v137
    %v561 = vunpack.c.l.b16 %v138
    %v562 = vunpack.c.h.b16 %v138
    %v563 = vunpack.c.l.b16 %v139
    %v564 = vunpack.c.h.b16 %v139
    %v565 = vunpack.c.l.b16 %v140
    %v566 = vunpack.c.h.b16 %v140
    %v567 = vunpack.c.l.b16 %v141
    %v568 = vunpack.c.h.b16 %v141
    %v569 = vunpack.c.l.b16 %v142
    %v570 = vunpack.c.h.b16 %v142
    %v571 = vunpack.c.l.b16 %v143
    %v572 = vunpack.c.h.b16 %v143
    %v573 = vunpack.c.l.b16 %v144
    %v574 = vunpack.c.h.b16 %v144
    %v575 = vunpack.c.l.b16 %v145
    %v576 = vunpack.c.h.b16 %v145
    %v577 = vunpack.c.l.b16 %v146
    %v578 = vunpack.c.h.b16 %v146
    %v579 = vunpack.c.l.b16 %v147
    %v580 = vunpack.c.h.b16 %v147
    %v581 = vunpack.c.l.b16 %v148
    %v582 = vunpack.c.h.b16 %v148
    %v583 = vunpack.c.l.b16 %v149
    %v584 = vunpack.c.h.b16 %v149
    %v585 = vunpack.c.l.b16 %v150
    %v586 = vunpack.c.h.b16 %v150
    %v587 = vunpack.c.l.b16 %v151
    %v588 = vunpack.c.h.b16 %v151
    %v589 = vunpack.c.l.b16 %v152
    %v590 = vunpack.c.h.b16 %v152
    %v591 = vunpack.c.l.b16 %v153
    %v592 = vunpack.c.h.b16 %v153
    %v593 = vunpack.c.l.b16 %v154
    %v594 = vunpack.c.h.b16 %v154
    %v595 = vunpack.c.l.b16 %v155
    %v596 = vunpack.c.h.b16 %v155
    %v597 = vunpack.c.l.b16 %v156
    %v598 = vunpack.c.h.b16 %v156
    %v599 = vunpack.c.l.b16 %v157
    %v600 = vunpack.c.h.b16 %v157
    %v601 = vunpack.c.l.b16 %v158
    %v602 = vunpack.c.h.b16 %v158
    %v603 = vunpack.c.l.b16 %v159
    %v604 = vunpack.c.h.b16 %v159
    %v605 = vunpack.c.l.b16 %v160
    %v606 = vunpack.c.h.b16 %v160
    %v607 = vunpack.c.l.b16 %v161
    %v608 = vunpack.c.h.b16 %v161
    %v609 = vunpack.c.l.b16 %v162
    %v610 = vunpack.c.h.b16 %v162
    %v611 = vunpack.c.l.b16 %v163
    %v612 = vunpack.c.h.b16 %v163
    %v613 = vunpack.c.l.b16 %v164
    %v614 = vunpack.c.h.b16 %v164
    %v615 = vunpack.c.l.b16 %v165
    %v616 = vunpack.c.h.b16 %v165
    %v617 = vunpack.c.l.b16 %v166
    %v618 = vunpack.c.h.b16 %v166
    %v619 = vunpack.c.l.b16 %v167
    %v620 = vunpack.c.h.b16 %v167
    %v621 = vunpack.c.l.b16 %v168
    %v622 = vunpack.c.h.b16 %v168
    %v623 = vunpack.c.l.b16 %v169
    %v624 = vunpack.c.h.b16 %v169
    %v625 = vunpack.c.l.b16 %v170
    %v626 = vunpack.c.h.b16 %v170
    %v627 = vunpack.c.l.b16 %v171
    %v628 = vunpack.c.h.b16 %v171
    %v629 = vunpack.c.l.b16 %v172
    %v630 = vunpack.c.h.b16 %v172
    %v631 = vunpack.c.l.b16 %v173
    %v632 = vunpack.c.h.b16 %v173
    %v633 = vunpack.c.l.b16 %v174
    %v634 = vunpack.c.h.b16 %v174
    %v635 = vunpack.c.l.b16 %v175
    %v636 = vunpack.c.h.b16 %v175
    %v637 = vunpack.c.l.b16 %v176
    %v638 = vunpack.c.h.b16 %v176
    %v639 = vunpack.c.l.b16 %v177
    %v640 = vunpack.c.h.b16 %v177
    %v641 = vunpack.c.l.b16 %v178
    %v642 = vunpack.c.h.b16 %v178
    %v643 = vpack.c.b16 %v357, %v355
    %v644 = vpack.c.b16 %v358, %v356
    %v645 = vpack.c.b16 %v361, %v359
    %v646 = vpack.c.b16 %v362, %v360
    %v647 = vpack.c.b16 %v365, %v363
    %v648 = vpack.c.b16 %v366, %v364
    %v649 = vpack.c.b16 %v369, %v367
    %v650 = vpack.c.b16 %v370, %v368
    %v651 = vpack.c.b16 %v373, %v371
    %v652 = vpack.c.b16 %v374, %v372
    %v653 = vpack.c.b16 %v377, %v375
    %v654 = vpack.c.b16 %v378, %v376
    %v655 = vpack.c.b16 %v381, %v379
    %v656 = vpack.c.b16 %v382, %v380
    %v657 = vpack.c.b16 %v385, %v383
    %v658 = vpack.c.b16 %v386, %v384
    %v659 = vpack.c.b16 %v389, %v387
    %v660 = vpack.c.b16 %v390, %v388
    %v661 = vpack.c.b16 %v393, %v391
    %v662 = vpack.c.b16 %v394, %v392
    %v663 = vpack.c.b16 %v397, %v395
    %v664 = vpack.c.b16 %v398, %v396
    %v665 = vpack.c.b16 %v401, %v399
    %v666 = vpack.c.b16 %v402, %v400
    %v667 = vpack.c.b16 %v405, %v403
    %v668 = vpack.c.b16 %v406, %v404
    %v669 = vpack.c.b16 %v409, %v407
    %v670 = vpack.c.b16 %v410, %v408
    %v671 = vpack.c.b16 %v413, %v411
    %v672 = vpack.c.b16 %v414, %v412
    %v673 = vpack.c.b16 %v417, %v415
    %v674 = vpack.c.b16 %v418, %v416
    %v675 = vpack.c.b16 %v421, %v419
    %v676 = vpack.c.b16 %v422, %v420
    %v677 = vpack.c.b16 %v425, %v423
    %v678 = vpack.c.b16 %v426, %v424
    %v679 = vpack.c.b16 %v429, %v427
    %v680 = vpack.c.b16 %v430, %v428
    %v681 = vpack.c.b16 %v433, %v431
    %v682 = vpack.c.b16 %v434, %v432
    %v683 = vpack.c.b16 %v437, %v435
    %v684 = vpack.c.b16 %v438, %v436
    %v685 = vpack.c.b16 %v441, %v439
    %v686 = vpack.c.b16 %v442, %v440
    %v687 = vpack.c.b16 %v445, %v443
    %v688 = vpack.c.b16 %v446, %v444
    %v689 = vpack.c.b16 %v449, %v447
    %v690 = vpack.c.b16 %v450, %v448
    %v691 = vpack.c.b16 %v453, %v451
    %v692 = vpack.c.b16 %v454, %v452
    %v693 = vpack.c.b16 %v457, %v455
    %v694 = vpack.c.b16 %v458, %v456
    %v695 = vpack.c.b16 %v461, %v459
    %v696 = vpack.c.b16 %v462, %v460
    %v697 = vpack.c.b16 %v465, %v463
    %v698 = vpack.c.b16 %v466, %v464
    %v699 = vpack.c.b16 %v469, %v467
    %v700 = vpack.c.b16 %v470, %v468
    %v701 = vpack.c.b16 %v473, %v471
    %v702 = vpack.c.b16 %v474, %v472
    %v703 = vpack.c.b16 %v477, %v475
    %v704 = vpack.c.b16 %v478, %v476
    %v705 = vpack.c.b16 %v481, %v479
    %v706 = vpack.c.b16 %v482, %v480
    %v707 = vpack.c.b16 %v485, %v483
    %v708 = vpack.c.b16 %v486, %v484
    %v709 = vpack.c.b16 %v489, %v487
    %v710 = vpack.c.b16 %v490, %v488
    %v711 = vpack.c.b16 %v493, %v491
    %v712 = vpack.c.b16 %v494, %v492
    %v713 = vpack.c.b16 %v497, %v495
    %v714 = vpack.c.b16 %v498, %v496
    %v715 = vpack.c.b16 %v501, %v499
    %v716 = vpack.c.b16 %v502, %v500
    %v717 = vpack.c.b16 %v505, %v503
    %v718 = vpack.c.b16 %v506, %v504
    %v719 = vpack.c.b16 %v509, %v507
    %v720 = vpack.c.b16 %v510, %v508
    %v721 = vpack.c.b16 %v513, %v511
    %v722 = vpack.c.b16 %v514, %v512
    %v723 = vpack.c.b16 %v517, %v515
    %v724 = vpack.c.b16 %v518, %v516
    %v725 = vpack.c.b16 %v521, %v519
    %v726 = vpack.c.b16 %v522, %v520
    %v727 = vpack.c.b16 %v525, %v523
    %v728 = vpack.c.b16 %v526, %v524
    %v729 = vpack.c.b16 %v529, %v527
    %v730 = vpack.c.b16 %v530, %v528
    %v731 = vpack.c.b16 %v533, %v531
    %v732 = vpack.c.b16 %v534, %v532
    %v733 = vpack.c.b16 %v537, %v535
    %v734 = vpack.c.b16 %v538, %v536
    %v735 = vpack.c.b16 %v541, %v539
    %v736 = vpack.c.b16 %v542, %v540
    %v737 = vpack.c.b16 %v545, %v543
    %v738 = vpack.c.b16 %v546, %v544
    %v739 = vpack.c.b16 %v549, %v547
    %v740 = vpack.c.b16 %v550, %v548
    %v741 = vpack.c.b16 %v553, %v551
    %v742 = vpack.c.b16 %v554, %v552
    %v743 = vpack.c.b16 %v557, %v555
    %v744 = vpack.c.b16 %v558, %v556
    %v745 = vpack.c.b16 %v561, %v559
    %v746 = vpack.c.b16 %v562, %v560
    %v747 = vpack.c.b16 %v565, %v563
    %v748 = vpack.c.b16 %v566, %v564
    %v749 = vpack.c.b16 %v569, %v567
    %v750 = vpack.c.b16 %v570, %v568
    %v751 = vpack.c.b16 %v573, %v571
    %v752 = vpack.c.b16 %v574, %v572
    %v753 = vpack.c.b16 %v577, %v575
    %v754 = vpack.c.b16 %v578, %v576
    %v755 = vpack.c.b16 %v581, %v579
    %v756 = vpack.c.b16 %v582, %v580
    %v757 = vpack.c.b16 %v585, %v583
    %v758 = vpack.c.b16 %v586, %v584
    %v759 = vpack.c.b16 %v589, %v587
    %v760 = vpack.c.b16 %v590, %v588
    %v761 = vpack.c.b16 %v593, %v591
    %v762 = vpack.c.b16 %v594, %v592
    %v763 = vpack.c.b16 %v597, %v595
    %v764 = vpack.c.b16 %v598, %v596
    %v765 = vpack.c.b16 %v601, %v599
    %v766 = vpack.c.b16 %v602, %v600
    %v767 = vpack.c.b16 %v605, %v603
    %v768 = vpack.c.b16 %v606, %v604
    %v769 = vpack.c.b16 %v609, %v607
    %v770 = vpack.c.b16 %v610, %v608
    %v771 = vpack.c.b16 %v613, %v611
    %v772 = vpack.c.b16 %v614, %v612
    %v773 = vpack.c.b16 %v617, %v615
    %v774 = vpack.c.b16 %v618, %v616
    %v775 = vpack.c.b16 %v621, %v619
    %v776 = vpack.c.b16 %v622, %v620
    %v777 = vpack.c.b16 %v625, %v623
    %v778 = vpack.c.b16 %v626, %v624
    %v779 = vpack.c.b16 %v629, %v627
    %v780 = vpack.c.b16 %v630, %v628
    %v781 = vpack.c.b16 %v633, %v631
    %v782 = vpack.c.b16 %v634, %v632
    %v783 = vpack.c.b16 %v637, %v635
    %v784 = vpack.c.b16 %v638, %v636
    %v785 = vpack.c.b16 %v641, %v639
    %v786 = vpack.c.b16 %v642, %v640
    %931 = vmatpush.bf16.msra.mxu0 %v657
    %932 = vmatpush.bf16.msra.mxu0 %v655
    %933 = vmatpush.bf16.msra.mxu0 %v653
    %934 = vmatpush.bf16.msra.mxu0 %v651
    %935 = vmatpush.bf16.msra.mxu0 %v649
    %936 = vmatpush.bf16.msra.mxu0 %v647
    %937 = vmatpush.bf16.msra.mxu0 %v645
    %938 = vmatpush.bf16.msra.mxu0 %v643
    %939 = vmatmul.bf16.gmra.mxu0 %v193
    %v940 = vpop.f32.mrf.mxu0
    %v941 = vadd.f32 0.0, %v940
    %v942 = vpop.f32.mrf.mxu0
    %943 = vdwg.mxu0
    %944 = vmatpush.bf16.msra.mxu0 %v673
    %945 = vmatpush.bf16.msra.mxu0 %v671
    %946 = vmatpush.bf16.msra.mxu0 %v669
    %947 = vmatpush.bf16.msra.mxu0 %v667
    %948 = vmatpush.bf16.msra.mxu0 %v665
    %949 = vmatpush.bf16.msra.mxu0 %v663
    %950 = vmatpush.bf16.msra.mxu0 %v661
    %951 = vmatpush.bf16.msra.mxu0 %v659
    %952 = vmatmul.bf16.gmra.mxu0 %v194
    %v953 = vpop.f32.mrf.mxu0
    %v954 = vadd.f32 %v941, %v953
    %v955 = vpop.f32.mrf.mxu0
    %956 = vdwg.mxu0
    %957 = vmatpush.bf16.msra.mxu0 %v689
    %958 = vmatpush.bf16.msra.mxu0 %v687
    %959 = vmatpush.bf16.msra.mxu0 %v685
    %960 = vmatpush.bf16.msra.mxu0 %v683
    %961 = vmatpush.bf16.msra.mxu0 %v681
    %962 = vmatpush.bf16.msra.mxu0 %v679
    %963 = vmatpush.bf16.msra.mxu0 %v677
    %964 = vmatpush.bf16.msra.mxu0 %v675
    %965 = vmatmul.bf16.gmra.mxu0 %v195
    %v966 = vpop.f32.mrf.mxu0
    %v967 = vadd.f32 %v954, %v966
    %v968 = vpop.f32.mrf.mxu0
    %969 = vdwg.mxu0
    %970 = vmatpush.bf16.msra.mxu0 %v705
    %971 = vmatpush.bf16.msra.mxu0 %v703
    %972 = vmatpush.bf16.msra.mxu0 %v701
    %973 = vmatpush.bf16.msra.mxu0 %v699
    %974 = vmatpush.bf16.msra.mxu0 %v697
    %975 = vmatpush.bf16.msra.mxu0 %v695
    %976 = vmatpush.bf16.msra.mxu0 %v693
    %977 = vmatpush.bf16.msra.mxu0 %v691
    %978 = vmatmul.bf16.gmra.mxu0 %v196
    %v979 = vpop.f32.mrf.mxu0
    %v980 = vadd.f32 %v967, %v979
    %v981 = vpop.f32.mrf.mxu0
    %982 = vdwg.mxu0
    %983 = vmatpush.bf16.msra.mxu0 %v721
    %984 = vmatpush.bf16.msra.mxu0 %v719
    %985 = vmatpush.bf16.msra.mxu0 %v717
    %986 = vmatpush.bf16.msra.mxu0 %v715
    %987 = vmatpush.bf16.msra.mxu0 %v713
    %988 = vmatpush.bf16.msra.mxu0 %v711
    %989 = vmatpush.bf16.msra.mxu0 %v709
    %990 = vmatpush.bf16.msra.mxu0 %v707
    %991 = vmatmul.bf16.gmra.mxu0 %v197
    %v992 = vpop.f32.mrf.mxu0
    %v993 = vadd.f32 %v980, %v992
    %v994 = vpop.f32.mrf.mxu0
    %995 = vdwg.mxu0
    %996 = vmatpush.bf16.msra.mxu0 %v737
    %997 = vmatpush.bf16.msra.mxu0 %v735
    %998 = vmatpush.bf16.msra.mxu0 %v733
    %999 = vmatpush.bf16.msra.mxu0 %v731
    %1000 = vmatpush.bf16.msra.mxu0 %v729
    %1001 = vmatpush.bf16.msra.mxu0 %v727
    %1002 = vmatpush.bf16.msra.mxu0 %v725
    %1003 = vmatpush.bf16.msra.mxu0 %v723
    %1004 = vmatmul.bf16.gmra.mxu0 %v198
    %v1005 = vpop.f32.mrf.mxu0
    %v1006 = vadd.f32 %v993, %v1005
    %v1007 = vpop.f32.mrf.mxu0
    %1008 = vdwg.mxu0
    %1009 = vmatpush.bf16.msra.mxu0 %v753
    %1010 = vmatpush.bf16.msra.mxu0 %v751
    %1011 = vmatpush.bf16.msra.mxu0 %v749
    %1012 = vmatpush.bf16.msra.mxu0 %v747
    %1013 = vmatpush.bf16.msra.mxu0 %v745
    %1014 = vmatpush.bf16.msra.mxu0 %v743
    %1015 = vmatpush.bf16.msra.mxu0 %v741
    %1016 = vmatpush.bf16.msra.mxu0 %v739
    %1017 = vmatmul.bf16.gmra.mxu0 %v199
    %v1018 = vpop.f32.mrf.mxu0
    %v1019 = vadd.f32 %v1006, %v1018
    %v1020 = vpop.f32.mrf.mxu0
    %1021 = vdwg.mxu0
    %1022 = vmatpush.bf16.msra.mxu0 %v769
    %1023 = vmatpush.bf16.msra.mxu0 %v767
    %1024 = vmatpush.bf16.msra.mxu0 %v765
    %1025 = vmatpush.bf16.msra.mxu0 %v763
    %1026 = vmatpush.bf16.msra.mxu0 %v761
    %1027 = vmatpush.bf16.msra.mxu0 %v759
    %1028 = vmatpush.bf16.msra.mxu0 %v757
    %1029 = vmatpush.bf16.msra.mxu0 %v755
    %1030 = vmatmul.bf16.gmra.mxu0 %v200
    %v1031 = vpop.f32.mrf.mxu0
    %v1032 = vadd.f32 %v1019, %v1031
    %v1033 = vpop.f32.mrf.mxu0
    %1034 = vdwg.mxu0
    %1035 = vmatpush.bf16.msra.mxu0 %v785
    %1036 = vmatpush.bf16.msra.mxu0 %v783
    %1037 = vmatpush.bf16.msra.mxu0 %v781
    %1038 = vmatpush.bf16.msra.mxu0 %v779
    %1039 = vmatpush.bf16.msra.mxu0 %v777
    %1040 = vmatpush.bf16.msra.mxu0 %v775
    %1041 = vmatpush.bf16.msra.mxu0 %v773
    %1042 = vmatpush.bf16.msra.mxu0 %v771
    %1043 = vmatmul.bf16.gmra.mxu0 %v201
    %v1044 = vpop.f32.mrf.mxu0
    %v1045 = vadd.f32 %v1032, %v1044
    %v1046 = vpop.f32.mrf.mxu0
    %1047 = vdwg.mxu0
    %1048 = vmatpush.bf16.msra.mxu0 %v658
    %1049 = vmatpush.bf16.msra.mxu0 %v656
    %1050 = vmatpush.bf16.msra.mxu0 %v654
    %1051 = vmatpush.bf16.msra.mxu0 %v652
    %1052 = vmatpush.bf16.msra.mxu0 %v650
    %1053 = vmatpush.bf16.msra.mxu0 %v648
    %1054 = vmatpush.bf16.msra.mxu0 %v646
    %1055 = vmatpush.bf16.msra.mxu0 %v644
    %1056 = vmatmul.bf16.gmra.mxu0 %v193
    %v1057 = vpop.f32.mrf.mxu0
    %v1058 = vadd.f32 0.0, %v1057
    %v1059 = vpop.f32.mrf.mxu0
    %1060 = vdwg.mxu0
    %1061 = vmatpush.bf16.msra.mxu0 %v674
    %1062 = vmatpush.bf16.msra.mxu0 %v672
    %1063 = vmatpush.bf16.msra.mxu0 %v670
    %1064 = vmatpush.bf16.msra.mxu0 %v668
    %1065 = vmatpush.bf16.msra.mxu0 %v666
    %1066 = vmatpush.bf16.msra.mxu0 %v664
    %1067 = vmatpush.bf16.msra.mxu0 %v662
    %1068 = vmatpush.bf16.msra.mxu0 %v660
    %1069 = vmatmul.bf16.gmra.mxu0 %v194
    %v1070 = vpop.f32.mrf.mxu0
    %v1071 = vadd.f32 %v1058, %v1070
    %v1072 = vpop.f32.mrf.mxu0
    %1073 = vdwg.mxu0
    %1074 = vmatpush.bf16.msra.mxu0 %v690
    %1075 = vmatpush.bf16.msra.mxu0 %v688
    %1076 = vmatpush.bf16.msra.mxu0 %v686
    %1077 = vmatpush.bf16.msra.mxu0 %v684
    %1078 = vmatpush.bf16.msra.mxu0 %v682
    %1079 = vmatpush.bf16.msra.mxu0 %v680
    %1080 = vmatpush.bf16.msra.mxu0 %v678
    %1081 = vmatpush.bf16.msra.mxu0 %v676
    %1082 = vmatmul.bf16.gmra.mxu0 %v195
    %v1083 = vpop.f32.mrf.mxu0
    %v1084 = vadd.f32 %v1071, %v1083
    %v1085 = vpop.f32.mrf.mxu0
    %1086 = vdwg.mxu0
    %1087 = vmatpush.bf16.msra.mxu0 %v706
    %1088 = vmatpush.bf16.msra.mxu0 %v704
    %1089 = vmatpush.bf16.msra.mxu0 %v702
    %1090 = vmatpush.bf16.msra.mxu0 %v700
    %1091 = vmatpush.bf16.msra.mxu0 %v698
    %1092 = vmatpush.bf16.msra.mxu0 %v696
    %1093 = vmatpush.bf16.msra.mxu0 %v694
    %1094 = vmatpush.bf16.msra.mxu0 %v692
    %1095 = vmatmul.bf16.gmra.mxu0 %v196
    %v1096 = vpop.f32.mrf.mxu0
    %v1097 = vadd.f32 %v1084, %v1096
    %v1098 = vpop.f32.mrf.mxu0
    %1099 = vdwg.mxu0
    %1100 = vmatpush.bf16.msra.mxu0 %v722
    %1101 = vmatpush.bf16.msra.mxu0 %v720
    %1102 = vmatpush.bf16.msra.mxu0 %v718
    %1103 = vmatpush.bf16.msra.mxu0 %v716
    %1104 = vmatpush.bf16.msra.mxu0 %v714
    %1105 = vmatpush.bf16.msra.mxu0 %v712
    %1106 = vmatpush.bf16.msra.mxu0 %v710
    %1107 = vmatpush.bf16.msra.mxu0 %v708
    %1108 = vmatmul.bf16.gmra.mxu0 %v197
    %v1109 = vpop.f32.mrf.mxu0
    %v1110 = vadd.f32 %v1097, %v1109
    %v1111 = vpop.f32.mrf.mxu0
    %1112 = vdwg.mxu0
    %1113 = vmatpush.bf16.msra.mxu0 %v738
    %1114 = vmatpush.bf16.msra.mxu0 %v736
    %1115 = vmatpush.bf16.msra.mxu0 %v734
    %1116 = vmatpush.bf16.msra.mxu0 %v732
    %1117 = vmatpush.bf16.msra.mxu0 %v730
    %1118 = vmatpush.bf16.msra.mxu0 %v728
    %1119 = vmatpush.bf16.msra.mxu0 %v726
    %1120 = vmatpush.bf16.msra.mxu0 %v724
    %1121 = vmatmul.bf16.gmra.mxu0 %v198
    %v1122 = vpop.f32.mrf.mxu0
    %v1123 = vadd.f32 %v1110, %v1122
    %v1124 = vpop.f32.mrf.mxu0
    %1125 = vdwg.mxu0
    %1126 = vmatpush.bf16.msra.mxu0 %v754
    %1127 = vmatpush.bf16.msra.mxu0 %v752
    %1128 = vmatpush.bf16.msra.mxu0 %v750
    %1129 = vmatpush.bf16.msra.mxu0 %v748
    %1130 = vmatpush.bf16.msra.mxu0 %v746
    %1131 = vmatpush.bf16.msra.mxu0 %v744
    %1132 = vmatpush.bf16.msra.mxu0 %v742
    %1133 = vmatpush.bf16.msra.mxu0 %v740
    %1134 = vmatmul.bf16.gmra.mxu0 %v199
    %v1135 = vpop.f32.mrf.mxu0
    %v1136 = vadd.f32 %v1123, %v1135
    %v1137 = vpop.f32.mrf.mxu0
    %1138 = vdwg.mxu0
    %1139 = vmatpush.bf16.msra.mxu0 %v770
    %1140 = vmatpush.bf16.msra.mxu0 %v768
    %1141 = vmatpush.bf16.msra.mxu0 %v766
    %1142 = vmatpush.bf16.msra.mxu0 %v764
    %1143 = vmatpush.bf16.msra.mxu0 %v762
    %1144 = vmatpush.bf16.msra.mxu0 %v760
    %1145 = vmatpush.bf16.msra.mxu0 %v758
    %1146 = vmatpush.bf16.msra.mxu0 %v756
    %1147 = vmatmul.bf16.gmra.mxu0 %v200
    %v1148 = vpop.f32.mrf.mxu0
    %v1149 = vadd.f32 %v1136, %v1148
    %v1150 = vpop.f32.mrf.mxu0
    %1151 = vdwg.mxu0
    %1152 = vmatpush.bf16.msra.mxu0 %v786
    %1153 = vmatpush.bf16.msra.mxu0 %v784
    %1154 = vmatpush.bf16.msra.mxu0 %v782
    %1155 = vmatpush.bf16.msra.mxu0 %v780
    %1156 = vmatpush.bf16.msra.mxu0 %v778
    %1157 = vmatpush.bf16.msra.mxu0 %v776
    %1158 = vmatpush.bf16.msra.mxu0 %v774
    %1159 = vmatpush.bf16.msra.mxu0 %v772
    %1160 = vmatmul.bf16.gmra.mxu0 %v201
    %v1161 = vpop.f32.mrf.mxu0
    %v1162 = vadd.f32 %v1149, %v1161
    %v1163 = vpop.f32.mrf.mxu0
    %1164 = vdwg.mxu0
    %1165 = vst [vmem:[%s2] sm:$0xff] %v1045
    %1166 = vst [vmem:[%s2 + $0x8] sm:$0xff] %v1162
    %p1167 = scmp.eq.s32.totalorder 0, 0
    // Predicated region
    $region14: #{generator_forward.8} parent=1 // pred_check
      %p1168 = pneg %p1167
    $region15: #{generator_forward.8} parent=1 // pred_check_branch
      %1170 = sbr.rel (%p1168) target = $region17
    $region16: #{generator_forward.8} parent=1 // pred_region
      %v1171 = vlaneseq
      %vm1172 = vcmp.ge.s32.totalorder %v1171, 0
      %vm1173 = vcmp.lt.s32.totalorder %v1171, 256
      %vm1174 = vmand %vm1172, %vm1173
      %1175 = vst.msk [vmem:[%s3] sm:$0x3] %vm1174, 0.0
      %1176 = vst.msk [vmem:[%s4] sm:$0x3] %vm1174, 0.0
    $region17: #{generator_forward.8} parent=1 // pred_fallthru
      _
    %v1177 = vld [vmem:[%s3] sm:$0x3]
    %v1178 = vrot.slane %v1045, 4
    %v1179 = vadd.f32 %v1045, %v1178
    %v1180 = vrot.slane %v1179, 2
    %v1181 = vadd.f32 %v1179, %v1180
    %v1182 = vrot.slane %v1181, 1
    %v1183 = vadd.f32 %v1181, %v1182
    %v1184 = vrot.slane %v1162, 4
    %v1185 = vadd.f32 %v1162, %v1184
    %v1186 = vrot.slane %v1185, 2
    %v1187 = vadd.f32 %v1185, %v1186
    %v1188 = vrot.slane %v1187, 1
    %v1189 = vadd.f32 %v1187, %v1188
    %v1192 = vrot.slane %v1189, 7
    %vm1193 = vcmask 1040384
    %v1194 = vsel %vm1193, %v1183, %v1192
    %v1196 = vadd.f32 %v1177, %v1194
    %v1197 = vlaneseq
    %vm1198 = vcmp.ge.s32.totalorder %v1197, 0
    %vm1199 = vcmp.lt.s32.totalorder %v1197, 256
    %vm1200 = vmand %vm1198, %vm1199
    %1201 = vst.msk [vmem:[%s3] sm:$0x3] %vm1200, %v1196
    %v1202 = vld [vmem:[%s4] sm:$0x3]
    %v1203 = vmul.f32 %v1045, %v1045
    %v1204 = vmul.f32 %v1162, %v1162
    %v1205 = vrot.slane %v1203, 4
    %v1206 = vadd.f32 %v1203, %v1205
    %v1207 = vrot.slane %v1206, 2
    %v1208 = vadd.f32 %v1206, %v1207
    %v1209 = vrot.slane %v1208, 1
    %v1210 = vadd.f32 %v1208, %v1209
    %v1211 = vrot.slane %v1204, 4
    %v1212 = vadd.f32 %v1204, %v1211
    %v1213 = vrot.slane %v1212, 2
    %v1214 = vadd.f32 %v1212, %v1213
    %v1215 = vrot.slane %v1214, 1
    %v1216 = vadd.f32 %v1214, %v1215
    %v1219 = vrot.slane %v1216, 7
    %v1220 = vsel %vm1193, %v1210, %v1219
    %v1222 = vadd.f32 %v1202, %v1220
    %1223 = vst.msk [vmem:[%s4] sm:$0x3] %vm1200, %v1222
    // Predicated region
    $region18: #{generator_forward.8} parent=1 // pred_check
      _
    $region19: #{generator_forward.8} parent=1 // pred_check_branch
      %1225 = sbr.rel (0) target = $region21
    $region20: #{generator_forward.8} parent=1 // pred_region
      _
    $region21: #{generator_forward.8} parent=1 // pred_fallthru
      _
    // Predicated region
    $region22: #{generator_forward.8} parent=1 // pred_check
      _
    $region23: #{generator_forward.8} parent=1 // pred_check_branch
      %1227 = sbr.rel (0) target = $region25
    $region24: #{generator_forward.8} parent=1 // pred_region
      _
    $region25: #{generator_forward.8} parent=1 // pred_fallthru
      _
    // Predicated region
    $region26: #{generator_forward.8} parent=1 // pred_check
      _
    $region27: #{generator_forward.8} parent=1 // pred_check_branch
      %1229 = sbr.rel (0) target = $region29
    $region28: #{generator_forward.8} parent=1 // pred_region
      _
    $region29: #{generator_forward.8} parent=1 // pred_fallthru
      _
    // Predicated region
    $region30: #{generator_forward.8} parent=1 // pred_check
      _
    $region31: #{generator_forward.8} parent=1 // pred_check_branch
      %1231 = sbr.rel (0) target = $region33
    $region32: #{generator_forward.8} parent=1 // pred_region
      _
    $region33: #{generator_forward.8} parent=1 // pred_fallthru
      _
    // Predicated region
    $region34: #{generator_forward.8} parent=1 // pred_check
      _
    $region35: #{generator_forward.8} parent=1 // pred_check_branch
      %1233 = sbr.rel (0) target = $region37
    $region36: #{generator_forward.8} parent=1 // pred_region
      _
    $region37: #{generator_forward.8} parent=1 // pred_fallthru
      _
    // Predicated region
    $region38: #{generator_forward.8} parent=1 // pred_check
      _
    $region39: #{generator_forward.8} parent=1 // pred_check_branch
      %1235 = sbr.rel (0) target = $region41
    $region40: #{generator_forward.8} parent=1 // pred_region
      _
    $region41: #{generator_forward.8} parent=1 // pred_fallthru
      _
    %1236 = vsyncpa [#allocation3], 1

// kernel: generator_forward.9
$region0: #{generator_forward.9}
  #allocation0 [shape = 'u32[]', space=smem, size = 0x4, offset = 0x4, fixed_abs, tag = 'smem constant byte address 0x4 - core index']
  #allocation1 [shape = 'u32[72,128]{1,0:T(1,128)}', space=vmem, size = 0x9000, scoped, tag = 'internal scratch']
  %s0 = inlined_call_operand.vmem [shape: bf16[32,576], index: 0, kind: input, shape index: {}]
  %s1 = inlined_call_operand.hbm [shape: bf16[576,128], index: 1, kind: input, shape index: {}]
  %s2 = inlined_call_operand.vmem [shape: f32[32,128], index: 2, kind: output, shape index: {0}]
  %s3 = inlined_call_operand.vmem [shape: f32[1,128], index: 3, kind: output, shape index: {1}]
  %s4 = inlined_call_operand.vmem [shape: f32[1,128], index: 4, kind: output, shape index: {2}]
  %5 = xla_tuple %s2, %s3, %s4
  %s6 = sld [smem:[#allocation0]]
  $region42: #{generator_forward.9} parent=0
    _
  %s8 = ssub.s32 1, %s6
  %s9 = scalar_select 0, %s8, %s6
  $region1: #{generator_forward.9} parent=0
    #allocation2 [shape = 'u8[147456]{0}', space=vmem, size = 0x24000, scoped, tag = 'input window, operand 1, single buffered']
    #allocation3 [shape = 's32[1]{0}', space=sflag, size = 0x4, scoped, tag = 'scoped memory for generator_forward.9']
    %10 = vsyncpa [#allocation3], 0
    // Predicated region
    $region2: #{generator_forward.9} parent=1 // pred_check
      _
    $region3: #{generator_forward.9} parent=1 // pred_check_branch
      %12 = sbr.rel (0) target = $region5
    $region4: #{generator_forward.9} parent=1 // pred_region
      _
    $region5: #{generator_forward.9} parent=1 // pred_fallthru
      _
    // Predicated region
    $region6: #{generator_forward.9} parent=1 // pred_check
      _
    $region7: #{generator_forward.9} parent=1 // pred_check_branch
      %14 = sbr.rel (0) target = $region9
    $region8: #{generator_forward.9} parent=1 // pred_region
      %16 = vsyncadd [#allocation3], 0
      %s17 = sshll.u32 %s1, 4
      %s18 = int_to_ptr.hbm [resolvable:$true] %s17
      %s19 = sshll.u32 [#allocation2], 4
      %s20 = int_to_ptr.vmem [resolvable:$true] %s19
      %25 = dma.hbm_to_vmem [thread:$0]  %s18, 4608, %s20, [#allocation3], 64, 64, 4
    $region9: #{generator_forward.9} parent=1 // pred_fallthru
      _
    // Predicated region
    $region10: #{generator_forward.9} parent=1 // pred_check
      _
    $region11: #{generator_forward.9} parent=1 // pred_check_branch
      %27 = sbr.rel (0) target = $region13
    $region12: #{generator_forward.9} parent=1 // pred_region
      %29 = dma.done [#allocation3], 4608
    $region13: #{generator_forward.9} parent=1 // pred_fallthru
      _
    %v31 = vld [vmem:[%s0] sm:$0xff]
    %v32 = vld [vmem:[%s0 + $0x8] sm:$0xff]
    %v33 = vld [vmem:[%s0 + $0x10] sm:$0xf]
    %v34 = vld [vmem:[%s0 + $0x14] sm:$0xff]
    %v35 = vld [vmem:[%s0 + $0x1c] sm:$0xff]
    %v36 = vld [vmem:[%s0 + $0x24] sm:$0xf]
    %v37 = vld [vmem:[%s0 + $0x28] sm:$0xff]
    %v38 = vld [vmem:[%s0 + $0x30] sm:$0xff]
    %v39 = vld [vmem:[%s0 + $0x38] sm:$0xf]
    %v40 = vld [vmem:[%s0 + $0x3c] sm:$0xff]
    %v41 = vld [vmem:[%s0 + $0x44] sm:$0xff]
    %v42 = vld [vmem:[%s0 + $0x4c] sm:$0xf]
    %v43 = vld [vmem:[#allocation2] sm:$0xf]
    %v44 = vld [vmem:[#allocation2 + $0x4] sm:$0xf]
    %v45 = vld [vmem:[#allocation2 + $0x8] sm:$0xf]
    %v46 = vld [vmem:[#allocation2 + $0xc] sm:$0xf]
    %v47 = vld [vmem:[#allocation2 + $0x10] sm:$0xf]
    %v48 = vld [vmem:[#allocation2 + $0x14] sm:$0xf]
    %v49 = vld [vmem:[#allocation2 + $0x18] sm:$0xf]
    %v50 = vld [vmem:[#allocation2 + $0x1c] sm:$0xf]
    %v51 = vld [vmem:[#allocation2 + $0x20] sm:$0xf]
    %v52 = vld [vmem:[#allocation2 + $0x24] sm:$0xf]
    %v53 = vld [vmem:[#allocation2 + $0x28] sm:$0xf]
    %v54 = vld [vmem:[#allocation2 + $0x2c] sm:$0xf]
    %v55 = vld [vmem:[#allocation2 + $0x30] sm:$0xf]
    %v56 = vld [vmem:[#allocation2 + $0x34] sm:$0xf]
    %v57 = vld [vmem:[#allocation2 + $0x38] sm:$0xf]
    %v58 = vld [vmem:[#allocation2 + $0x3c] sm:$0xf]
    %v59 = vld [vmem:[#allocation2 + $0x40] sm:$0xf]
    %v60 = vld [vmem:[#allocation2 + $0x44] sm:$0xf]
    %v61 = vld [vmem:[#allocation2 + $0x48] sm:$0xf]
    %v62 = vld [vmem:[#allocation2 + $0x4c] sm:$0xf]
    %v63 = vld [vmem:[#allocation2 + $0x50] sm:$0xf]
    %v64 = vld [vmem:[#allocation2 + $0x54] sm:$0xf]
    %v65 = vld [vmem:[#allocation2 + $0x58] sm:$0xf]
    %v66 = vld [vmem:[#allocation2 + $0x5c] sm:$0xf]
    %v67 = vld [vmem:[#allocation2 + $0x60] sm:$0xf]
    %v68 = vld [vmem:[#allocation2 + $0x64] sm:$0xf]
    %v69 = vld [vmem:[#allocation2 + $0x68] sm:$0xf]
    %v70 = vld [vmem:[#allocation2 + $0x6c] sm:$0xf]
    %v71 = vld [vmem:[#allocation2 + $0x70] sm:$0xf]
    %v72 = vld [vmem:[#allocation2 + $0x74] sm:$0xf]
    %v73 = vld [vmem:[#allocation2 + $0x78] sm:$0xf]
    %v74 = vld [vmem:[#allocation2 + $0x7c] sm:$0xf]
    %v75 = vld [vmem:[#allocation2 + $0x80] sm:$0xf]
    %v76 = vld [vmem:[#allocation2 + $0x84] sm:$0xf]
    %v77 = vld [vmem:[#allocation2 + $0x88] sm:$0xf]
    %v78 = vld [vmem:[#allocation2 + $0x8c] sm:$0xf]
    %v79 = vld [vmem:[#allocation2 + $0x90] sm:$0xf]
    %v80 = vld [vmem:[#allocation2 + $0x94] sm:$0xf]
    %v81 = vld [vmem:[#allocation2 + $0x98] sm:$0xf]
    %v82 = vld [vmem:[#allocation2 + $0x9c] sm:$0xf]
    %v83 = vld [vmem:[#allocation2 + $0xa0] sm:$0xf]
    %v84 = vld [vmem:[#allocation2 + $0xa4] sm:$0xf]
    %v85 = vld [vmem:[#allocation2 + $0xa8] sm:$0xf]
    %v86 = vld [vmem:[#allocation2 + $0xac] sm:$0xf]
    %v87 = vld [vmem:[#allocation2 + $0xb0] sm:$0xf]
    %v88 = vld [vmem:[#allocation2 + $0xb4] sm:$0xf]
    %v89 = vld [vmem:[#allocation2 + $0xb8] sm:$0xf]
    %v90 = vld [vmem:[#allocation2 + $0xbc] sm:$0xf]
    %v91 = vld [vmem:[#allocation2 + $0xc0] sm:$0xf]
    %v92 = vld [vmem:[#allocation2 + $0xc4] sm:$0xf]
    %v93 = vld [vmem:[#allocation2 + $0xc8] sm:$0xf]
    %v94 = vld [vmem:[#allocation2 + $0xcc] sm:$0xf]
    %v95 = vld [vmem:[#allocation2 + $0xd0] sm:$0xf]
    %v96 = vld [vmem:[#allocation2 + $0xd4] sm:$0xf]
    %v97 = vld [vmem:[#allocation2 + $0xd8] sm:$0xf]
    %v98 = vld [vmem:[#allocation2 + $0xdc] sm:$0xf]
    %v99 = vld [vmem:[#allocation2 + $0xe0] sm:$0xf]
    %v100 = vld [vmem:[#allocation2 + $0xe4] sm:$0xf]
    %v101 = vld [vmem:[#allocation2 + $0xe8] sm:$0xf]
    %v102 = vld [vmem:[#allocation2 + $0xec] sm:$0xf]
    %v103 = vld [vmem:[#allocation2 + $0xf0] sm:$0xf]
    %v104 = vld [vmem:[#allocation2 + $0xf4] sm:$0xf]
    %v105 = vld [vmem:[#allocation2 + $0xf8] sm:$0xf]
    %v106 = vld [vmem:[#allocation2 + $0xfc] sm:$0xf]
    %v107 = vld [vmem:[#allocation2 + $0x100] sm:$0xf]
    %v108 = vld [vmem:[#allocation2 + $0x104] sm:$0xf]
    %v109 = vld [vmem:[#allocation2 + $0x108] sm:$0xf]
    %v110 = vld [vmem:[#allocation2 + $0x10c] sm:$0xf]
    %v111 = vld [vmem:[#allocation2 + $0x110] sm:$0xf]
    %v112 = vld [vmem:[#allocation2 + $0x114] sm:$0xf]
    %v113 = vld [vmem:[#allocation2 + $0x118] sm:$0xf]
    %v114 = vld [vmem:[#allocation2 + $0x11c] sm:$0xf]
    %v127 = vunpack.c.l.b16 %v31
    %v128 = vunpack.c.h.b16 %v31
    %v129 = vunpack.c.l.b16 %v32
    %v130 = vunpack.c.h.b16 %v32
    %v131 = vunpack.c.l.b16 %v33
    %v132 = vunpack.c.l.b16 %v34
    %v133 = vunpack.c.h.b16 %v34
    %v134 = vunpack.c.l.b16 %v35
    %v135 = vunpack.c.h.b16 %v35
    %v136 = vunpack.c.l.b16 %v36
    %v137 = vunpack.c.l.b16 %v37
    %v138 = vunpack.c.h.b16 %v37
    %v139 = vunpack.c.l.b16 %v38
    %v140 = vunpack.c.h.b16 %v38
    %v141 = vunpack.c.l.b16 %v39
    %v142 = vunpack.c.l.b16 %v40
    %v143 = vunpack.c.h.b16 %v40
    %v144 = vunpack.c.l.b16 %v41
    %v145 = vunpack.c.h.b16 %v41
    %v146 = vunpack.c.l.b16 %v42
    %v147 = vpack.c.b16 %v132, %v127
    %v148 = vpack.c.b16 %v133, %v128
    %v149 = vpack.c.b16 %v134, %v129
    %v150 = vpack.c.b16 %v135, %v130
    %v151 = vpack.c.b16 %v136, %v131
    %v152 = vpack.c.b16 %v142, %v137
    %v153 = vpack.c.b16 %v143, %v138
    %v154 = vpack.c.b16 %v144, %v139
    %v155 = vpack.c.b16 %v145, %v140
    %v156 = vpack.c.b16 %v146, %v141
    %v237 = vunpack.c.l.b16 %v43
    %v238 = vunpack.c.l.b16 %v44
    %v239 = vunpack.c.l.b16 %v45
    %v240 = vunpack.c.l.b16 %v46
    %v241 = vunpack.c.l.b16 %v47
    %v242 = vunpack.c.l.b16 %v48
    %v243 = vunpack.c.l.b16 %v49
    %v244 = vunpack.c.l.b16 %v50
    %v245 = vunpack.c.l.b16 %v51
    %v246 = vunpack.c.l.b16 %v52
    %v247 = vunpack.c.l.b16 %v53
    %v248 = vunpack.c.l.b16 %v54
    %v249 = vunpack.c.l.b16 %v55
    %v250 = vunpack.c.l.b16 %v56
    %v251 = vunpack.c.l.b16 %v57
    %v252 = vunpack.c.l.b16 %v58
    %v253 = vunpack.c.l.b16 %v59
    %v254 = vunpack.c.l.b16 %v60
    %v255 = vunpack.c.l.b16 %v61
    %v256 = vunpack.c.l.b16 %v62
    %v257 = vunpack.c.l.b16 %v63
    %v258 = vunpack.c.l.b16 %v64
    %v259 = vunpack.c.l.b16 %v65
    %v260 = vunpack.c.l.b16 %v66
    %v261 = vunpack.c.l.b16 %v67
    %v262 = vunpack.c.l.b16 %v68
    %v263 = vunpack.c.l.b16 %v69
    %v264 = vunpack.c.l.b16 %v70
    %v265 = vunpack.c.l.b16 %v71
    %v266 = vunpack.c.l.b16 %v72
    %v267 = vunpack.c.l.b16 %v73
    %v268 = vunpack.c.l.b16 %v74
    %v269 = vunpack.c.l.b16 %v75
    %v270 = vunpack.c.l.b16 %v76
    %v271 = vunpack.c.l.b16 %v77
    %v272 = vunpack.c.l.b16 %v78
    %v273 = vunpack.c.l.b16 %v79
    %v274 = vunpack.c.l.b16 %v80
    %v275 = vunpack.c.l.b16 %v81
    %v276 = vunpack.c.l.b16 %v82
    %v277 = vunpack.c.l.b16 %v83
    %v278 = vunpack.c.l.b16 %v84
    %v279 = vunpack.c.l.b16 %v85
    %v280 = vunpack.c.l.b16 %v86
    %v281 = vunpack.c.l.b16 %v87
    %v282 = vunpack.c.l.b16 %v88
    %v283 = vunpack.c.l.b16 %v89
    %v284 = vunpack.c.l.b16 %v90
    %v285 = vunpack.c.l.b16 %v91
    %v286 = vunpack.c.l.b16 %v92
    %v287 = vunpack.c.l.b16 %v93
    %v288 = vunpack.c.l.b16 %v94
    %v289 = vunpack.c.l.b16 %v95
    %v290 = vunpack.c.l.b16 %v96
    %v291 = vunpack.c.l.b16 %v97
    %v292 = vunpack.c.l.b16 %v98
    %v293 = vunpack.c.l.b16 %v99
    %v294 = vunpack.c.l.b16 %v100
    %v295 = vunpack.c.l.b16 %v101
    %v296 = vunpack.c.l.b16 %v102
    %v297 = vunpack.c.l.b16 %v103
    %v298 = vunpack.c.l.b16 %v104
    %v299 = vunpack.c.l.b16 %v105
    %v300 = vunpack.c.l.b16 %v106
    %v301 = vunpack.c.l.b16 %v107
    %v302 = vunpack.c.l.b16 %v108
    %v303 = vunpack.c.l.b16 %v109
    %v304 = vunpack.c.l.b16 %v110
    %v305 = vunpack.c.l.b16 %v111
    %v306 = vunpack.c.l.b16 %v112
    %v307 = vunpack.c.l.b16 %v113
    %v308 = vunpack.c.l.b16 %v114
    %v309 = vpack.c.b16 %v238, %v237
    %v310 = vpack.c.b16 %v240, %v239
    %v311 = vpack.c.b16 %v242, %v241
    %v312 = vpack.c.b16 %v244, %v243
    %v313 = vpack.c.b16 %v246, %v245
    %v314 = vpack.c.b16 %v248, %v247
    %v315 = vpack.c.b16 %v250, %v249
    %v316 = vpack.c.b16 %v252, %v251
    %v317 = vpack.c.b16 %v254, %v253
    %v318 = vpack.c.b16 %v256, %v255
    %v319 = vpack.c.b16 %v258, %v257
    %v320 = vpack.c.b16 %v260, %v259
    %v321 = vpack.c.b16 %v262, %v261
    %v322 = vpack.c.b16 %v264, %v263
    %v323 = vpack.c.b16 %v266, %v265
    %v324 = vpack.c.b16 %v268, %v267
    %v325 = vpack.c.b16 %v270, %v269
    %v326 = vpack.c.b16 %v272, %v271
    %v327 = vpack.c.b16 %v274, %v273
    %v328 = vpack.c.b16 %v276, %v275
    %v329 = vpack.c.b16 %v278, %v277
    %v330 = vpack.c.b16 %v280, %v279
    %v331 = vpack.c.b16 %v282, %v281
    %v332 = vpack.c.b16 %v284, %v283
    %v333 = vpack.c.b16 %v286, %v285
    %v334 = vpack.c.b16 %v288, %v287
    %v335 = vpack.c.b16 %v290, %v289
    %v336 = vpack.c.b16 %v292, %v291
    %v337 = vpack.c.b16 %v294, %v293
    %v338 = vpack.c.b16 %v296, %v295
    %v339 = vpack.c.b16 %v298, %v297
    %v340 = vpack.c.b16 %v300, %v299
    %v341 = vpack.c.b16 %v302, %v301
    %v342 = vpack.c.b16 %v304, %v303
    %v343 = vpack.c.b16 %v306, %v305
    %v344 = vpack.c.b16 %v308, %v307
    %vm381 = vcmask 523264
    %v383 = vsel %vm381, %v151, 0
    %v386 = vsel %vm381, %v156, 0
    %388 = vmatpush.bf16.msra.mxu0 %v316
    %389 = vmatpush.bf16.msra.mxu0 %v315
    %390 = vmatpush.bf16.msra.mxu0 %v314
    %391 = vmatpush.bf16.msra.mxu0 %v313
    %392 = vmatpush.bf16.msra.mxu0 %v312
    %393 = vmatpush.bf16.msra.mxu0 %v311
    %394 = vmatpush.bf16.msra.mxu0 %v310
    %395 = vmatpush.bf16.msra.mxu0 %v309
    %396 = vmatmul.bf16.gmra.mxu0 %v147
    %v397 = vpop.f32.mrf.mxu0
    %v398 = vadd.f32 0.0, %v397
    %v399 = vpop.f32.mrf.mxu0
    %v400 = vadd.f32 0.0, %v399
    %401 = vmatmul.bf16.gmra.mxu0 %v152
    %v402 = vpop.f32.mrf.mxu0
    %v403 = vadd.f32 0.0, %v402
    %v404 = vpop.f32.mrf.mxu0
    %v405 = vadd.f32 0.0, %v404
    %406 = vdwg.mxu0
    %407 = vmatpush.bf16.msra.mxu0 %v324
    %408 = vmatpush.bf16.msra.mxu0 %v323
    %409 = vmatpush.bf16.msra.mxu0 %v322
    %410 = vmatpush.bf16.msra.mxu0 %v321
    %411 = vmatpush.bf16.msra.mxu0 %v320
    %412 = vmatpush.bf16.msra.mxu0 %v319
    %413 = vmatpush.bf16.msra.mxu0 %v318
    %414 = vmatpush.bf16.msra.mxu0 %v317
    %415 = vmatmul.bf16.gmra.mxu0 %v148
    %v416 = vpop.f32.mrf.mxu0
    %v417 = vadd.f32 %v398, %v416
    %v418 = vpop.f32.mrf.mxu0
    %v419 = vadd.f32 %v400, %v418
    %420 = vmatmul.bf16.gmra.mxu0 %v153
    %v421 = vpop.f32.mrf.mxu0
    %v422 = vadd.f32 %v403, %v421
    %v423 = vpop.f32.mrf.mxu0
    %v424 = vadd.f32 %v405, %v423
    %425 = vdwg.mxu0
    %426 = vmatpush.bf16.msra.mxu0 %v332
    %427 = vmatpush.bf16.msra.mxu0 %v331
    %428 = vmatpush.bf16.msra.mxu0 %v330
    %429 = vmatpush.bf16.msra.mxu0 %v329
    %430 = vmatpush.bf16.msra.mxu0 %v328
    %431 = vmatpush.bf16.msra.mxu0 %v327
    %432 = vmatpush.bf16.msra.mxu0 %v326
    %433 = vmatpush.bf16.msra.mxu0 %v325
    %434 = vmatmul.bf16.gmra.mxu0 %v149
    %v435 = vpop.f32.mrf.mxu0
    %v436 = vadd.f32 %v417, %v435
    %v437 = vpop.f32.mrf.mxu0
    %v438 = vadd.f32 %v419, %v437
    %439 = vmatmul.bf16.gmra.mxu0 %v154
    %v440 = vpop.f32.mrf.mxu0
    %v441 = vadd.f32 %v422, %v440
    %v442 = vpop.f32.mrf.mxu0
    %v443 = vadd.f32 %v424, %v442
    %444 = vdwg.mxu0
    %445 = vmatpush.bf16.msra.mxu0 %v340
    %446 = vmatpush.bf16.msra.mxu0 %v339
    %447 = vmatpush.bf16.msra.mxu0 %v338
    %448 = vmatpush.bf16.msra.mxu0 %v337
    %449 = vmatpush.bf16.msra.mxu0 %v336
    %450 = vmatpush.bf16.msra.mxu0 %v335
    %451 = vmatpush.bf16.msra.mxu0 %v334
    %452 = vmatpush.bf16.msra.mxu0 %v333
    %453 = vmatmul.bf16.gmra.mxu0 %v150
    %v454 = vpop.f32.mrf.mxu0
    %v455 = vadd.f32 %v436, %v454
    %v456 = vpop.f32.mrf.mxu0
    %v457 = vadd.f32 %v438, %v456
    %458 = vmatmul.bf16.gmra.mxu0 %v155
    %v459 = vpop.f32.mrf.mxu0
    %v460 = vadd.f32 %v441, %v459
    %v461 = vpop.f32.mrf.mxu0
    %v462 = vadd.f32 %v443, %v461
    %463 = vdwg.mxu0
    %464 = vmatpush.bf16.msra.mxu0 0
    %465 = vmatpush.bf16.msra.mxu0 0
    %466 = vmatpush.bf16.msra.mxu0 0
    %467 = vmatpush.bf16.msra.mxu0 0
    %468 = vmatpush.bf16.msra.mxu0 %v344
    %469 = vmatpush.bf16.msra.mxu0 %v343
    %470 = vmatpush.bf16.msra.mxu0 %v342
    %471 = vmatpush.bf16.msra.mxu0 %v341
    %472 = vmatmul.bf16.gmra.mxu0 %v383
    %v473 = vpop.f32.mrf.mxu0
    %v474 = vadd.f32 %v455, %v473
    %v475 = vpop.f32.mrf.mxu0
    %v476 = vadd.f32 %v457, %v475
    %477 = vmatmul.bf16.gmra.mxu0 %v386
    %v478 = vpop.f32.mrf.mxu0
    %v479 = vadd.f32 %v460, %v478
    %v480 = vpop.f32.mrf.mxu0
    %v481 = vadd.f32 %v462, %v480
    %482 = vdwg.mxu0
    %483 = vst [vmem:[%s2] sm:$0xff] %v474
    %484 = vst [vmem:[%s2 + $0x8] sm:$0xff] %v476
    %485 = vst [vmem:[%s2 + $0x10] sm:$0xff] %v479
    %486 = vst [vmem:[%s2 + $0x18] sm:$0xff] %v481
    %p487 = scmp.eq.s32.totalorder 0, 0
    // Predicated region
    $region14: #{generator_forward.9} parent=1 // pred_check
      %p488 = pneg %p487
    $region15: #{generator_forward.9} parent=1 // pred_check_branch
      %490 = sbr.rel (%p488) target = $region17
    $region16: #{generator_forward.9} parent=1 // pred_region
      %491 = vst [vmem:[%s3] sm:$0x1] 0.0
      %492 = vst [vmem:[%s4] sm:$0x1] 0.0
    $region17: #{generator_forward.9} parent=1 // pred_fallthru
      _
    %v493 = vld [vmem:[%s3] sm:$0x1]
    %v494 = vadd.f32 %v474, %v476
    %v495 = vadd.f32 %v494, %v479
    %v496 = vadd.f32 %v495, %v481
    %v497 = vrot.slane %v496, 4
    %v498 = vadd.f32 %v496, %v497
    %v499 = vrot.slane %v498, 2
    %v500 = vadd.f32 %v498, %v499
    %v501 = vrot.slane %v500, 1
    %v502 = vadd.f32 %v500, %v501
    %v503 = vadd.f32 %v493, %v502
    %504 = vst [vmem:[%s3] sm:$0x1] %v503
    %v505 = vld [vmem:[%s4] sm:$0x1]
    %v506 = vmul.f32 %v474, %v474
    %v507 = vmul.f32 %v476, %v476
    %v508 = vmul.f32 %v479, %v479
    %v509 = vmul.f32 %v481, %v481
    %v510 = vadd.f32 %v506, %v507
    %v511 = vadd.f32 %v510, %v508
    %v512 = vadd.f32 %v511, %v509
    %v513 = vrot.slane %v512, 4
    %v514 = vadd.f32 %v512, %v513
    %v515 = vrot.slane %v514, 2
    %v516 = vadd.f32 %v514, %v515
    %v517 = vrot.slane %v516, 1
    %v518 = vadd.f32 %v516, %v517
    %v519 = vadd.f32 %v505, %v518
    %520 = vst [vmem:[%s4] sm:$0x1] %v519
    // Predicated region
    $region18: #{generator_forward.9} parent=1 // pred_check
      _
    $region19: #{generator_forward.9} parent=1 // pred_check_branch
      %522 = sbr.rel (0) target = $region21
    $region20: #{generator_forward.9} parent=1 // pred_region
      _
    $region21: #{generator_forward.9} parent=1 // pred_fallthru
      _
    // Predicated region
    $region22: #{generator_forward.9} parent=1 // pred_check
      _
    $region23: #{generator_forward.9} parent=1 // pred_check_branch
      %524 = sbr.rel (0) target = $region25
    $region24: #{generator_forward.9} parent=1 // pred_region
      _
    $region25: #{generator_forward.9} parent=1 // pred_fallthru
      _
    // Predicated region
    $region26: #{generator_forward.9} parent=1 // pred_check
      _
    $region27: #{generator_forward.9} parent=1 // pred_check_branch
      %526 = sbr.rel (0) target = $region29
    $region28: #{generator_forward.9} parent=1 // pred_region
      _
    $region29: #{generator_forward.9} parent=1 // pred_fallthru
      _
    // Predicated region
    $region30: #{generator_forward.9} parent=1 // pred_check
      _
    $region31: #{generator_forward.9} parent=1 // pred_check_branch
      %528 = sbr.rel (0) target = $region33
    $region32: #{generator_forward.9} parent=1 // pred_region
      _
    $region33: #{generator_forward.9} parent=1 // pred_fallthru
      _
    // Predicated region
    $region34: #{generator_forward.9} parent=1 // pred_check
      _
    $region35: #{generator_forward.9} parent=1 // pred_check_branch
      %530 = sbr.rel (0) target = $region37
    $region36: #{generator_forward.9} parent=1 // pred_region
      _
    $region37: #{generator_forward.9} parent=1 // pred_fallthru
      _
    // Predicated region
    $region38: #{generator_forward.9} parent=1 // pred_check
      _
    $region39: #{generator_forward.9} parent=1 // pred_check_branch
      %532 = sbr.rel (0) target = $region41
    $region40: #{generator_forward.9} parent=1 // pred_region
      _
    $region41: #{generator_forward.9} parent=1 // pred_fallthru
      _
    %533 = vsyncpa [#allocation3], 1

// kernel: generator_forward.10
$region0: #{generator_forward.10}
  #allocation0 [shape = 'u32[]', space=smem, size = 0x4, offset = 0x4, fixed_abs, tag = 'smem constant byte address 0x4 - core index']
  #allocation1 [shape = 'u32[72,128]{1,0:T(1,128)}', space=vmem, size = 0x9000, scoped, tag = 'internal scratch']
  %s0 = inlined_call_operand.vmem [shape: bf16[128,288], index: 0, kind: input, shape index: {}]
  %s1 = inlined_call_operand.vmem [shape: bf16[288,64], index: 1, kind: input, shape index: {}]
  %s2 = inlined_call_operand.vmem [shape: f32[128,64], index: 2, kind: output, shape index: {0}]
  %s3 = inlined_call_operand.vmem [shape: f32[1,64], index: 3, kind: output, shape index: {1}]
  %s4 = inlined_call_operand.vmem [shape: f32[1,64], index: 4, kind: output, shape index: {2}]
  %5 = xla_tuple %s2, %s3, %s4
  %s6 = sld [smem:[#allocation0]]
  $region38: #{generator_forward.10} parent=0
    _
  %s8 = ssub.s32 1, %s6
  %s9 = scalar_select 0, %s8, %s6
  // Predicated region
  $region2: #{generator_forward.10} parent=0 // pred_check
    _
  $region3: #{generator_forward.10} parent=0 // pred_check_branch
    %11 = sbr.rel (0) target = $region5
  $region4: #{generator_forward.10} parent=0 // pred_region
    _
  $region5: #{generator_forward.10} parent=0 // pred_fallthru
    _
  // Predicated region
  $region6: #{generator_forward.10} parent=0 // pred_check
    _
  $region7: #{generator_forward.10} parent=0 // pred_check_branch
    %13 = sbr.rel (0) target = $region9
  $region8: #{generator_forward.10} parent=0 // pred_region
    _
  $region9: #{generator_forward.10} parent=0 // pred_fallthru
    _
  %v15 = vld [vmem:[%s0] sm:$0xff]
  %v16 = vld [vmem:[%s0 + $0x8] sm:$0xf]
  %v17 = vld [vmem:[%s0 + $0xc] sm:$0xff]
  %v18 = vld [vmem:[%s0 + $0x14] sm:$0xf]
  %v19 = vld [vmem:[%s0 + $0x18] sm:$0xff]
  %v20 = vld [vmem:[%s0 + $0x20] sm:$0xf]
  %v21 = vld [vmem:[%s0 + $0x24] sm:$0xff]
  %v22 = vld [vmem:[%s0 + $0x2c] sm:$0xf]
  %v23 = vld [vmem:[%s0 + $0x30] sm:$0xff]
  %v24 = vld [vmem:[%s0 + $0x38] sm:$0xf]
  %v25 = vld [vmem:[%s0 + $0x3c] sm:$0xff]
  %v26 = vld [vmem:[%s0 + $0x44] sm:$0xf]
  %v27 = vld [vmem:[%s0 + $0x48] sm:$0xff]
  %v28 = vld [vmem:[%s0 + $0x50] sm:$0xf]
  %v29 = vld [vmem:[%s0 + $0x54] sm:$0xff]
  %v30 = vld [vmem:[%s0 + $0x5c] sm:$0xf]
  %v31 = vld [vmem:[%s0 + $0x60] sm:$0xff]
  %v32 = vld [vmem:[%s0 + $0x68] sm:$0xf]
  %v33 = vld [vmem:[%s0 + $0x6c] sm:$0xff]
  %v34 = vld [vmem:[%s0 + $0x74] sm:$0xf]
  %v35 = vld [vmem:[%s0 + $0x78] sm:$0xff]
  %v36 = vld [vmem:[%s0 + $0x80] sm:$0xf]
  %v37 = vld [vmem:[%s0 + $0x84] sm:$0xff]
  %v38 = vld [vmem:[%s0 + $0x8c] sm:$0xf]
  %v39 = vld [vmem:[%s0 + $0x90] sm:$0xff]
  %v40 = vld [vmem:[%s0 + $0x98] sm:$0xf]
  %v41 = vld [vmem:[%s0 + $0x9c] sm:$0xff]
  %v42 = vld [vmem:[%s0 + $0xa4] sm:$0xf]
  %v43 = vld [vmem:[%s0 + $0xa8] sm:$0xff]
  %v44 = vld [vmem:[%s0 + $0xb0] sm:$0xf]
  %v45 = vld [vmem:[%s0 + $0xb4] sm:$0xff]
  %v46 = vld [vmem:[%s0 + $0xbc] sm:$0xf]
  %v47 = vld [vmem:[%s1] sm:$0xf]
  %v48 = vld [vmem:[%s1 + $0x4] sm:$0xf]
  %v49 = vld [vmem:[%s1 + $0x8] sm:$0xf]
  %v50 = vld [vmem:[%s1 + $0xc] sm:$0xf]
  %v51 = vld [vmem:[%s1 + $0x10] sm:$0xf]
  %v52 = vld [vmem:[%s1 + $0x14] sm:$0xf]
  %v53 = vld [vmem:[%s1 + $0x18] sm:$0xf]
  %v54 = vld [vmem:[%s1 + $0x1c] sm:$0xf]
  %v55 = vld [vmem:[%s1 + $0x20] sm:$0xf]
  %v56 = vld [vmem:[%s1 + $0x24] sm:$0xf]
  %v57 = vld [vmem:[%s1 + $0x28] sm:$0xf]
  %v58 = vld [vmem:[%s1 + $0x2c] sm:$0xf]
  %v59 = vld [vmem:[%s1 + $0x30] sm:$0xf]
  %v60 = vld [vmem:[%s1 + $0x34] sm:$0xf]
  %v61 = vld [vmem:[%s1 + $0x38] sm:$0xf]
  %v62 = vld [vmem:[%s1 + $0x3c] sm:$0xf]
  %v63 = vld [vmem:[%s1 + $0x40] sm:$0xf]
  %v64 = vld [vmem:[%s1 + $0x44] sm:$0xf]
  %v65 = vld [vmem:[%s1 + $0x48] sm:$0xf]
  %v66 = vld [vmem:[%s1 + $0x4c] sm:$0xf]
  %v67 = vld [vmem:[%s1 + $0x50] sm:$0xf]
  %v68 = vld [vmem:[%s1 + $0x54] sm:$0xf]
  %v69 = vld [vmem:[%s1 + $0x58] sm:$0xf]
  %v70 = vld [vmem:[%s1 + $0x5c] sm:$0xf]
  %v71 = vld [vmem:[%s1 + $0x60] sm:$0xf]
  %v72 = vld [vmem:[%s1 + $0x64] sm:$0xf]
  %v73 = vld [vmem:[%s1 + $0x68] sm:$0xf]
  %v74 = vld [vmem:[%s1 + $0x6c] sm:$0xf]
  %v75 = vld [vmem:[%s1 + $0x70] sm:$0xf]
  %v76 = vld [vmem:[%s1 + $0x74] sm:$0xf]
  %v77 = vld [vmem:[%s1 + $0x78] sm:$0xf]
  %v78 = vld [vmem:[%s1 + $0x7c] sm:$0xf]
  %v79 = vld [vmem:[%s1 + $0x80] sm:$0xf]
  %v80 = vld [vmem:[%s1 + $0x84] sm:$0xf]
  %v81 = vld [vmem:[%s1 + $0x88] sm:$0xf]
  %v82 = vld [vmem:[%s1 + $0x8c] sm:$0xf]
  %v115 = vunpack.c.l.b16 %v15
  %v116 = vunpack.c.h.b16 %v15
  %v117 = vunpack.c.l.b16 %v16
  %v118 = vunpack.c.l.b16 %v17
  %v119 = vunpack.c.h.b16 %v17
  %v120 = vunpack.c.l.b16 %v18
  %v121 = vunpack.c.l.b16 %v19
  %v122 = vunpack.c.h.b16 %v19
  %v123 = vunpack.c.l.b16 %v20
  %v124 = vunpack.c.l.b16 %v21
  %v125 = vunpack.c.h.b16 %v21
  %v126 = vunpack.c.l.b16 %v22
  %v127 = vunpack.c.l.b16 %v23
  %v128 = vunpack.c.h.b16 %v23
  %v129 = vunpack.c.l.b16 %v24
  %v130 = vunpack.c.l.b16 %v25
  %v131 = vunpack.c.h.b16 %v25
  %v132 = vunpack.c.l.b16 %v26
  %v133 = vunpack.c.l.b16 %v27
  %v134 = vunpack.c.h.b16 %v27
  %v135 = vunpack.c.l.b16 %v28
  %v136 = vunpack.c.l.b16 %v29
  %v137 = vunpack.c.h.b16 %v29
  %v138 = vunpack.c.l.b16 %v30
  %v139 = vunpack.c.l.b16 %v31
  %v140 = vunpack.c.h.b16 %v31
  %v141 = vunpack.c.l.b16 %v32
  %v142 = vunpack.c.l.b16 %v33
  %v143 = vunpack.c.h.b16 %v33
  %v144 = vunpack.c.l.b16 %v34
  %v145 = vunpack.c.l.b16 %v35
  %v146 = vunpack.c.h.b16 %v35
  %v147 = vunpack.c.l.b16 %v36
  %v148 = vunpack.c.l.b16 %v37
  %v149 = vunpack.c.h.b16 %v37
  %v150 = vunpack.c.l.b16 %v38
  %v151 = vunpack.c.l.b16 %v39
  %v152 = vunpack.c.h.b16 %v39
  %v153 = vunpack.c.l.b16 %v40
  %v154 = vunpack.c.l.b16 %v41
  %v155 = vunpack.c.h.b16 %v41
  %v156 = vunpack.c.l.b16 %v42
  %v157 = vunpack.c.l.b16 %v43
  %v158 = vunpack.c.h.b16 %v43
  %v159 = vunpack.c.l.b16 %v44
  %v160 = vunpack.c.l.b16 %v45
  %v161 = vunpack.c.h.b16 %v45
  %v162 = vunpack.c.l.b16 %v46
  %v163 = vpack.c.b16 %v118, %v115
  %v164 = vpack.c.b16 %v119, %v116
  %v165 = vpack.c.b16 %v120, %v117
  %v166 = vpack.c.b16 %v124, %v121
  %v167 = vpack.c.b16 %v125, %v122
  %v168 = vpack.c.b16 %v126, %v123
  %v169 = vpack.c.b16 %v130, %v127
  %v170 = vpack.c.b16 %v131, %v128
  %v171 = vpack.c.b16 %v132, %v129
  %v172 = vpack.c.b16 %v136, %v133
  %v173 = vpack.c.b16 %v137, %v134
  %v174 = vpack.c.b16 %v138, %v135
  %v175 = vpack.c.b16 %v142, %v139
  %v176 = vpack.c.b16 %v143, %v140
  %v177 = vpack.c.b16 %v144, %v141
  %v178 = vpack.c.b16 %v148, %v145
  %v179 = vpack.c.b16 %v149, %v146
  %v180 = vpack.c.b16 %v150, %v147
  %v181 = vpack.c.b16 %v154, %v151
  %v182 = vpack.c.b16 %v155, %v152
  %v183 = vpack.c.b16 %v156, %v153
  %v184 = vpack.c.b16 %v160, %v157
  %v185 = vpack.c.b16 %v161, %v158
  %v186 = vpack.c.b16 %v162, %v159
  %v239 = vunpack.c.l.b16 %v47
  %v240 = vunpack.c.l.b16 %v48
  %v241 = vunpack.c.l.b16 %v49
  %v242 = vunpack.c.l.b16 %v50
  %v243 = vunpack.c.l.b16 %v51
  %v244 = vunpack.c.l.b16 %v52
  %v245 = vunpack.c.l.b16 %v53
  %v246 = vunpack.c.l.b16 %v54
  %v247 = vunpack.c.l.b16 %v55
  %v248 = vunpack.c.l.b16 %v56
  %v249 = vunpack.c.l.b16 %v57
  %v250 = vunpack.c.l.b16 %v58
  %v251 = vunpack.c.l.b16 %v59
  %v252 = vunpack.c.l.b16 %v60
  %v253 = vunpack.c.l.b16 %v61
  %v254 = vunpack.c.l.b16 %v62
  %v255 = vunpack.c.l.b16 %v63
  %v256 = vunpack.c.l.b16 %v64
  %v257 = vunpack.c.l.b16 %v65
  %v258 = vunpack.c.l.b16 %v66
  %v259 = vunpack.c.l.b16 %v67
  %v260 = vunpack.c.l.b16 %v68
  %v261 = vunpack.c.l.b16 %v69
  %v262 = vunpack.c.l.b16 %v70
  %v263 = vunpack.c.l.b16 %v71
  %v264 = vunpack.c.l.b16 %v72
  %v265 = vunpack.c.l.b16 %v73
  %v266 = vunpack.c.l.b16 %v74
  %v267 = vunpack.c.l.b16 %v75
  %v268 = vunpack.c.l.b16 %v76
  %v269 = vunpack.c.l.b16 %v77
  %v270 = vunpack.c.l.b16 %v78
  %v271 = vunpack.c.l.b16 %v79
  %v272 = vunpack.c.l.b16 %v80
  %v273 = vunpack.c.l.b16 %v81
  %v274 = vunpack.c.l.b16 %v82
  %v275 = vpack.c.b16 %v240, %v239
  %v276 = vpack.c.b16 %v242, %v241
  %v277 = vpack.c.b16 %v244, %v243
  %v278 = vpack.c.b16 %v246, %v245
  %v279 = vpack.c.b16 %v248, %v247
  %v280 = vpack.c.b16 %v250, %v249
  %v281 = vpack.c.b16 %v252, %v251
  %v282 = vpack.c.b16 %v254, %v253
  %v283 = vpack.c.b16 %v256, %v255
  %v284 = vpack.c.b16 %v258, %v257
  %v285 = vpack.c.b16 %v260, %v259
  %v286 = vpack.c.b16 %v262, %v261
  %v287 = vpack.c.b16 %v264, %v263
  %v288 = vpack.c.b16 %v266, %v265
  %v289 = vpack.c.b16 %v268, %v267
  %v290 = vpack.c.b16 %v270, %v269
  %v291 = vpack.c.b16 %v272, %v271
  %v292 = vpack.c.b16 %v274, %v273
  %vm311 = vcmask 261120
  %v313 = vsel %vm311, %v165, 0
  %v316 = vsel %vm311, %v168, 0
  %v319 = vsel %vm311, %v171, 0
  %v322 = vsel %vm311, %v174, 0
  %v325 = vsel %vm311, %v177, 0
  %v328 = vsel %vm311, %v180, 0
  %v331 = vsel %vm311, %v183, 0
  %v334 = vsel %vm311, %v186, 0
  %336 = vmatpush.bf16.msra.mxu0 %v282
  %337 = vmatpush.bf16.msra.mxu0 %v281
  %338 = vmatpush.bf16.msra.mxu0 %v280
  %339 = vmatpush.bf16.msra.mxu0 %v279
  %340 = vmatpush.bf16.msra.mxu0 %v278
  %341 = vmatpush.bf16.msra.mxu0 %v277
  %342 = vmatpush.bf16.msra.mxu0 %v276
  %343 = vmatpush.bf16.msra.mxu0 %v275
  %344 = vmatmul.bf16.gmra.mxu0 %v163
  %v345 = vpop.f32.mrf.mxu0
  %v346 = vadd.f32 0.0, %v345
  %v347 = vpop.f32.mrf.mxu0
  %v348 = vadd.f32 0.0, %v347
  %349 = vmatmul.bf16.gmra.mxu0 %v166
  %v350 = vpop.f32.mrf.mxu0
  %v351 = vadd.f32 0.0, %v350
  %v352 = vpop.f32.mrf.mxu0
  %v353 = vadd.f32 0.0, %v352
  %354 = vmatmul.bf16.gmra.mxu0 %v169
  %v355 = vpop.f32.mrf.mxu0
  %v356 = vadd.f32 0.0, %v355
  %v357 = vpop.f32.mrf.mxu0
  %v358 = vadd.f32 0.0, %v357
  %359 = vmatmul.bf16.gmra.mxu0 %v172
  %v360 = vpop.f32.mrf.mxu0
  %v361 = vadd.f32 0.0, %v360
  %v362 = vpop.f32.mrf.mxu0
  %v363 = vadd.f32 0.0, %v362
  %364 = vmatmul.bf16.gmra.mxu0 %v175
  %v365 = vpop.f32.mrf.mxu0
  %v366 = vadd.f32 0.0, %v365
  %v367 = vpop.f32.mrf.mxu0
  %v368 = vadd.f32 0.0, %v367
  %369 = vmatmul.bf16.gmra.mxu0 %v178
  %v370 = vpop.f32.mrf.mxu0
  %v371 = vadd.f32 0.0, %v370
  %v372 = vpop.f32.mrf.mxu0
  %v373 = vadd.f32 0.0, %v372
  %374 = vmatmul.bf16.gmra.mxu0 %v181
  %v375 = vpop.f32.mrf.mxu0
  %v376 = vadd.f32 0.0, %v375
  %v377 = vpop.f32.mrf.mxu0
  %v378 = vadd.f32 0.0, %v377
  %379 = vmatmul.bf16.gmra.mxu0 %v184
  %v380 = vpop.f32.mrf.mxu0
  %v381 = vadd.f32 0.0, %v380
  %v382 = vpop.f32.mrf.mxu0
  %v383 = vadd.f32 0.0, %v382
  %384 = vdwg.mxu0
  %385 = vmatpush.bf16.msra.mxu0 %v290
  %386 = vmatpush.bf16.msra.mxu0 %v289
  %387 = vmatpush.bf16.msra.mxu0 %v288
  %388 = vmatpush.bf16.msra.mxu0 %v287
  %389 = vmatpush.bf16.msra.mxu0 %v286
  %390 = vmatpush.bf16.msra.mxu0 %v285
  %391 = vmatpush.bf16.msra.mxu0 %v284
  %392 = vmatpush.bf16.msra.mxu0 %v283
  %393 = vmatmul.bf16.gmra.mxu0 %v164
  %v394 = vpop.f32.mrf.mxu0
  %v395 = vadd.f32 %v346, %v394
  %v396 = vpop.f32.mrf.mxu0
  %v397 = vadd.f32 %v348, %v396
  %398 = vmatmul.bf16.gmra.mxu0 %v167
  %v399 = vpop.f32.mrf.mxu0
  %v400 = vadd.f32 %v351, %v399
  %v401 = vpop.f32.mrf.mxu0
  %v402 = vadd.f32 %v353, %v401
  %403 = vmatmul.bf16.gmra.mxu0 %v170
  %v404 = vpop.f32.mrf.mxu0
  %v405 = vadd.f32 %v356, %v404
  %v406 = vpop.f32.mrf.mxu0
  %v407 = vadd.f32 %v358, %v406
  %408 = vmatmul.bf16.gmra.mxu0 %v173
  %v409 = vpop.f32.mrf.mxu0
  %v410 = vadd.f32 %v361, %v409
  %v411 = vpop.f32.mrf.mxu0
  %v412 = vadd.f32 %v363, %v411
  %413 = vmatmul.bf16.gmra.mxu0 %v176
  %v414 = vpop.f32.mrf.mxu0
  %v415 = vadd.f32 %v366, %v414
  %v416 = vpop.f32.mrf.mxu0
  %v417 = vadd.f32 %v368, %v416
  %418 = vmatmul.bf16.gmra.mxu0 %v179
  %v419 = vpop.f32.mrf.mxu0
  %v420 = vadd.f32 %v371, %v419
  %v421 = vpop.f32.mrf.mxu0
  %v422 = vadd.f32 %v373, %v421
  %423 = vmatmul.bf16.gmra.mxu0 %v182
  %v424 = vpop.f32.mrf.mxu0
  %v425 = vadd.f32 %v376, %v424
  %v426 = vpop.f32.mrf.mxu0
  %v427 = vadd.f32 %v378, %v426
  %428 = vmatmul.bf16.gmra.mxu0 %v185
  %v429 = vpop.f32.mrf.mxu0
  %v430 = vadd.f32 %v381, %v429
  %v431 = vpop.f32.mrf.mxu0
  %v432 = vadd.f32 %v383, %v431
  %433 = vdwg.mxu0
  %434 = vmatpush.bf16.msra.mxu0 0
  %435 = vmatpush.bf16.msra.mxu0 0
  %436 = vmatpush.bf16.msra.mxu0 0
  %437 = vmatpush.bf16.msra.mxu0 0
  %438 = vmatpush.bf16.msra.mxu0 0
  %439 = vmatpush.bf16.msra.mxu0 0
  %440 = vmatpush.bf16.msra.mxu0 %v292
  %441 = vmatpush.bf16.msra.mxu0 %v291
  %442 = vmatmul.bf16.gmra.mxu0 %v313
  %v443 = vpop.f32.mrf.mxu0
  %v444 = vadd.f32 %v395, %v443
  %v445 = vpop.f32.mrf.mxu0
  %v446 = vadd.f32 %v397, %v445
  %447 = vmatmul.bf16.gmra.mxu0 %v316
  %v448 = vpop.f32.mrf.mxu0
  %v449 = vadd.f32 %v400, %v448
  %v450 = vpop.f32.mrf.mxu0
  %v451 = vadd.f32 %v402, %v450
  %452 = vmatmul.bf16.gmra.mxu0 %v319
  %v453 = vpop.f32.mrf.mxu0
  %v454 = vadd.f32 %v405, %v453
  %v455 = vpop.f32.mrf.mxu0
  %v456 = vadd.f32 %v407, %v455
  %457 = vmatmul.bf16.gmra.mxu0 %v322
  %v458 = vpop.f32.mrf.mxu0
  %v459 = vadd.f32 %v410, %v458
  %v460 = vpop.f32.mrf.mxu0
  %v461 = vadd.f32 %v412, %v460
  %462 = vmatmul.bf16.gmra.mxu0 %v325
  %v463 = vpop.f32.mrf.mxu0
  %v464 = vadd.f32 %v415, %v463
  %v465 = vpop.f32.mrf.mxu0
  %v466 = vadd.f32 %v417, %v465
  %467 = vmatmul.bf16.gmra.mxu0 %v328
  %v468 = vpop.f32.mrf.mxu0
  %v469 = vadd.f32 %v420, %v468
  %v470 = vpop.f32.mrf.mxu0
  %v471 = vadd.f32 %v422, %v470
  %472 = vmatmul.bf16.gmra.mxu0 %v331
  %v473 = vpop.f32.mrf.mxu0
  %v474 = vadd.f32 %v425, %v473
  %v475 = vpop.f32.mrf.mxu0
  %v476 = vadd.f32 %v427, %v475
  %477 = vmatmul.bf16.gmra.mxu0 %v334
  %v478 = vpop.f32.mrf.mxu0
  %v479 = vadd.f32 %v430, %v478
  %v480 = vpop.f32.mrf.mxu0
  %v481 = vadd.f32 %v432, %v480
  %482 = vdwg.mxu0
  %vm483 = vcmask 523264
  %484 = vst.msk [vmem:[%s2] sm:$0xff] %vm483, %v444
  %485 = vst.msk [vmem:[%s2 + $0x8] sm:$0xff] %vm483, %v446
  %486 = vst.msk [vmem:[%s2 + $0x10] sm:$0xff] %vm483, %v449
  %487 = vst.msk [vmem:[%s2 + $0x18] sm:$0xff] %vm483, %v451
  %488 = vst.msk [vmem:[%s2 + $0x20] sm:$0xff] %vm483, %v454
  %489 = vst.msk [vmem:[%s2 + $0x28] sm:$0xff] %vm483, %v456
  %490 = vst.msk [vmem:[%s2 + $0x30] sm:$0xff] %vm483, %v459
  %491 = vst.msk [vmem:[%s2 + $0x38] sm:$0xff] %vm483, %v461
  %492 = vst.msk [vmem:[%s2 + $0x40] sm:$0xff] %vm483, %v464
  %493 = vst.msk [vmem:[%s2 + $0x48] sm:$0xff] %vm483, %v466
  %494 = vst.msk [vmem:[%s2 + $0x50] sm:$0xff] %vm483, %v469
  %495 = vst.msk [vmem:[%s2 + $0x58] sm:$0xff] %vm483, %v471
  %496 = vst.msk [vmem:[%s2 + $0x60] sm:$0xff] %vm483, %v474
  %497 = vst.msk [vmem:[%s2 + $0x68] sm:$0xff] %vm483, %v476
  %498 = vst.msk [vmem:[%s2 + $0x70] sm:$0xff] %vm483, %v479
  %499 = vst.msk [vmem:[%s2 + $0x78] sm:$0xff] %vm483, %v481
  %p500 = scmp.eq.s32.totalorder 0, 0
  // Predicated region
  $region10: #{generator_forward.10} parent=0 // pred_check
    %p501 = pneg %p500
  $region11: #{generator_forward.10} parent=0 // pred_check_branch
    %503 = sbr.rel (%p501) target = $region13
  $region12: #{generator_forward.10} parent=0 // pred_region
    %vm504 = vcmask 516096
    %505 = vst.msk [vmem:[%s3] sm:$0x1] %vm504, 0.0
    %506 = vst.msk [vmem:[%s4] sm:$0x1] %vm504, 0.0
  $region13: #{generator_forward.10} parent=0 // pred_fallthru
    _
  %v507 = vld [vmem:[%s3] sm:$0x1]
  %v508 = vsel %vm483, %v444, 0.0
  %v509 = vsel %vm483, %v446, 0.0
  %v510 = vadd.f32 %v508, %v509
  %v511 = vsel %vm483, %v449, 0.0
  %v512 = vadd.f32 %v510, %v511
  %v513 = vsel %vm483, %v451, 0.0
  %v514 = vadd.f32 %v512, %v513
  %v515 = vsel %vm483, %v454, 0.0
  %v516 = vadd.f32 %v514, %v515
  %v517 = vsel %vm483, %v456, 0.0
  %v518 = vadd.f32 %v516, %v517
  %v519 = vsel %vm483, %v459, 0.0
  %v520 = vadd.f32 %v518, %v519
  %v521 = vsel %vm483, %v461, 0.0
  %v522 = vadd.f32 %v520, %v521
  %v523 = vsel %vm483, %v464, 0.0
  %v524 = vadd.f32 %v522, %v523
  %v525 = vsel %vm483, %v466, 0.0
  %v526 = vadd.f32 %v524, %v525
  %v527 = vsel %vm483, %v469, 0.0
  %v528 = vadd.f32 %v526, %v527
  %v529 = vsel %vm483, %v471, 0.0
  %v530 = vadd.f32 %v528, %v529
  %v531 = vsel %vm483, %v474, 0.0
  %v532 = vadd.f32 %v530, %v531
  %v533 = vsel %vm483, %v476, 0.0
  %v534 = vadd.f32 %v532, %v533
  %v535 = vsel %vm483, %v479, 0.0
  %v536 = vadd.f32 %v534, %v535
  %v537 = vsel %vm483, %v481, 0.0
  %v538 = vadd.f32 %v536, %v537
  %v539 = vrot.slane %v538, 4
  %v540 = vadd.f32 %v538, %v539
  %v541 = vrot.slane %v540, 2
  %v542 = vadd.f32 %v540, %v541
  %v543 = vrot.slane %v542, 1
  %v544 = vadd.f32 %v542, %v543
  %v545 = vadd.f32 %v507, %v544
  %vm546 = vcmask 516096
  %547 = vst.msk [vmem:[%s3] sm:$0x1] %vm546, %v545
  %v548 = vld [vmem:[%s4] sm:$0x1]
  %v549 = vmul.f32 %v444, %v444
  %v550 = vmul.f32 %v446, %v446
  %v551 = vmul.f32 %v449, %v449
  %v552 = vmul.f32 %v451, %v451
  %v553 = vmul.f32 %v454, %v454
  %v554 = vmul.f32 %v456, %v456
  %v555 = vmul.f32 %v459, %v459
  %v556 = vmul.f32 %v461, %v461
  %v557 = vmul.f32 %v464, %v464
  %v558 = vmul.f32 %v466, %v466
  %v559 = vmul.f32 %v469, %v469
  %v560 = vmul.f32 %v471, %v471
  %v561 = vmul.f32 %v474, %v474
  %v562 = vmul.f32 %v476, %v476
  %v563 = vmul.f32 %v479, %v479
  %v564 = vmul.f32 %v481, %v481
  %v565 = vsel %vm483, %v549, 0.0
  %v566 = vsel %vm483, %v550, 0.0
  %v567 = vadd.f32 %v565, %v566
  %v568 = vsel %vm483, %v551, 0.0
  %v569 = vadd.f32 %v567, %v568
  %v570 = vsel %vm483, %v552, 0.0
  %v571 = vadd.f32 %v569, %v570
  %v572 = vsel %vm483, %v553, 0.0
  %v573 = vadd.f32 %v571, %v572
  %v574 = vsel %vm483, %v554, 0.0
  %v575 = vadd.f32 %v573, %v574
  %v576 = vsel %vm483, %v555, 0.0
  %v577 = vadd.f32 %v575, %v576
  %v578 = vsel %vm483, %v556, 0.0
  %v579 = vadd.f32 %v577, %v578
  %v580 = vsel %vm483, %v557, 0.0
  %v581 = vadd.f32 %v579, %v580
  %v582 = vsel %vm483, %v558, 0.0
  %v583 = vadd.f32 %v581, %v582
  %v584 = vsel %vm483, %v559, 0.0
  %v585 = vadd.f32 %v583, %v584
  %v586 = vsel %vm483, %v560, 0.0
  %v587 = vadd.f32 %v585, %v586
  %v588 = vsel %vm483, %v561, 0.0
  %v589 = vadd.f32 %v587, %v588
  %v590 = vsel %vm483, %v562, 0.0
  %v591 = vadd.f32 %v589, %v590
  %v592 = vsel %vm483, %v563, 0.0
  %v593 = vadd.f32 %v591, %v592
  %v594 = vsel %vm483, %v564, 0.0
  %v595 = vadd.f32 %v593, %v594
  %v596 = vrot.slane %v595, 4
  %v597 = vadd.f32 %v595, %v596
  %v598 = vrot.slane %v597, 2
  %v599 = vadd.f32 %v597, %v598
  %v600 = vrot.slane %v599, 1
  %v601 = vadd.f32 %v599, %v600
  %v602 = vadd.f32 %v548, %v601
  %603 = vst.msk [vmem:[%s4] sm:$0x1] %vm546, %v602
  // Predicated region
  $region14: #{generator_forward.10} parent=0 // pred_check
    _
  $region15: #{generator_forward.10} parent=0 // pred_check_branch
    %605 = sbr.rel (0) target = $region17
  $region16: #{generator_forward.10} parent=0 // pred_region
    _
  $region17: #{generator_forward.10} parent=0 // pred_fallthru
    _
  // Predicated region
  $region18: #{generator_forward.10} parent=0 // pred_check
    _
  $region19: #{generator_forward.10} parent=0 // pred_check_branch
    %607 = sbr.rel (0) target = $region21
  $region20: #{generator_forward.10} parent=0 // pred_region
    _
  $region21: #{generator_forward.10} parent=0 // pred_fallthru
    _
  // Predicated region
  $region22: #{generator_forward.10} parent=0 // pred_check
    _
  $region23: #{generator_forward.10} parent=0 // pred_check_branch
    %609 = sbr.rel (0) target = $region25
  $region24: #{generator_forward.10} parent=0 // pred_region
    _
  $region25: #{generator_forward.10} parent=0 // pred_fallthru
    _
  // Predicated region
  $region26: #{generator_forward.10} parent=0 // pred_check
    _
  $region27: #{generator_forward.10} parent=0 // pred_check_branch
    %611 = sbr.rel (0) target = $region29
  $region28: #{generator_forward.10} parent=0 // pred_region
    _
  $region29: #{generator_forward.10} parent=0 // pred_fallthru
    _
  // Predicated region
  $region30: #{generator_forward.10} parent=0 // pred_check
    _
  $region31: #{generator_forward.10} parent=0 // pred_check_branch
    %613 = sbr.rel (0) target = $region33
  $region32: #{generator_forward.10} parent=0 // pred_region
    _
  $region33: #{generator_forward.10} parent=0 // pred_fallthru
    _
  // Predicated region
  $region34: #{generator_forward.10} parent=0 // pred_check
    _
  $region35: #{generator_forward.10} parent=0 // pred_check_branch
    %615 = sbr.rel (0) target = $region37
  $region36: #{generator_forward.10} parent=0 // pred_region
    _
  $region37: #{generator_forward.10} parent=0 // pred_fallthru
    _

// kernel: generator_forward.11
$region0: #{generator_forward.11}
  #allocation0 [shape = 'u32[]', space=smem, size = 0x4, offset = 0x4, fixed_abs, tag = 'smem constant byte address 0x4 - core index']
  #allocation1 [shape = 'u32[72,128]{1,0:T(1,128)}', space=vmem, size = 0x9000, scoped, tag = 'internal scratch']
  %s0 = inlined_call_operand.vmem [shape: bf16[512,144], index: 0, kind: input, shape index: {}]
  %s1 = inlined_call_operand.vmem [shape: bf16[144,32], index: 1, kind: input, shape index: {}]
  %s2 = inlined_call_operand.vmem [shape: f32[512,32], index: 2, kind: output, shape index: {0}]
  %s3 = inlined_call_operand.vmem [shape: f32[1,32], index: 3, kind: output, shape index: {1}]
  %s4 = inlined_call_operand.vmem [shape: f32[1,32], index: 4, kind: output, shape index: {2}]
  %5 = xla_tuple %s2, %s3, %s4
  %s6 = sld [smem:[#allocation0]]
  $region38: #{generator_forward.11} parent=0
    _
  %s8 = ssub.s32 1, %s6
  %s9 = scalar_select 0, %s8, %s6
  // Predicated region
  $region2: #{generator_forward.11} parent=0 // pred_check
    _
  $region3: #{generator_forward.11} parent=0 // pred_check_branch
    %11 = sbr.rel (0) target = $region5
  $region4: #{generator_forward.11} parent=0 // pred_region
    _
  $region5: #{generator_forward.11} parent=0 // pred_fallthru
    _
  // Predicated region
  $region6: #{generator_forward.11} parent=0 // pred_check
    _
  $region7: #{generator_forward.11} parent=0 // pred_check_branch
    %13 = sbr.rel (0) target = $region9
  $region8: #{generator_forward.11} parent=0 // pred_region
    _
  $region9: #{generator_forward.11} parent=0 // pred_fallthru
    _
  %v15 = vld [vmem:[%s0] sm:$0xff]
  %v16 = vld [vmem:[%s0 + $0x8] sm:$0xff]
  %v17 = vld [vmem:[%s0 + $0x10] sm:$0xff]
  %v18 = vld [vmem:[%s0 + $0x18] sm:$0xff]
  %v19 = vld [vmem:[%s0 + $0x20] sm:$0xff]
  %v20 = vld [vmem:[%s0 + $0x28] sm:$0xff]
  %v21 = vld [vmem:[%s0 + $0x30] sm:$0xff]
  %v22 = vld [vmem:[%s0 + $0x38] sm:$0xff]
  %v23 = vld [vmem:[%s0 + $0x40] sm:$0xff]
  %v24 = vld [vmem:[%s0 + $0x48] sm:$0xff]
  %v25 = vld [vmem:[%s0 + $0x50] sm:$0xff]
  %v26 = vld [vmem:[%s0 + $0x58] sm:$0xff]
  %v27 = vld [vmem:[%s0 + $0x60] sm:$0xff]
  %v28 = vld [vmem:[%s0 + $0x68] sm:$0xff]
  %v29 = vld [vmem:[%s0 + $0x70] sm:$0xff]
  %v30 = vld [vmem:[%s0 + $0x78] sm:$0xff]
  %v31 = vld [vmem:[%s0 + $0x80] sm:$0xff]
  %v32 = vld [vmem:[%s0 + $0x88] sm:$0xff]
  %v33 = vld [vmem:[%s0 + $0x90] sm:$0xff]
  %v34 = vld [vmem:[%s0 + $0x98] sm:$0xff]
  %v35 = vld [vmem:[%s0 + $0xa0] sm:$0xff]
  %v36 = vld [vmem:[%s0 + $0xa8] sm:$0xff]
  %v37 = vld [vmem:[%s0 + $0xb0] sm:$0xff]
  %v38 = vld [vmem:[%s0 + $0xb8] sm:$0xff]
  %v39 = vld [vmem:[%s0 + $0xc0] sm:$0xff]
  %v40 = vld [vmem:[%s0 + $0xc8] sm:$0xff]
  %v41 = vld [vmem:[%s0 + $0xd0] sm:$0xff]
  %v42 = vld [vmem:[%s0 + $0xd8] sm:$0xff]
  %v43 = vld [vmem:[%s0 + $0xe0] sm:$0xff]
  %v44 = vld [vmem:[%s0 + $0xe8] sm:$0xff]
  %v45 = vld [vmem:[%s0 + $0xf0] sm:$0xff]
  %v46 = vld [vmem:[%s0 + $0xf8] sm:$0xff]
  %v47 = vld [vmem:[%s0 + $0x100] sm:$0xff]
  %v48 = vld [vmem:[%s0 + $0x108] sm:$0xff]
  %v49 = vld [vmem:[%s0 + $0x110] sm:$0xff]
  %v50 = vld [vmem:[%s0 + $0x118] sm:$0xff]
  %v51 = vld [vmem:[%s0 + $0x120] sm:$0xff]
  %v52 = vld [vmem:[%s0 + $0x128] sm:$0xff]
  %v53 = vld [vmem:[%s0 + $0x130] sm:$0xff]
  %v54 = vld [vmem:[%s0 + $0x138] sm:$0xff]
  %v55 = vld [vmem:[%s0 + $0x140] sm:$0xff]
  %v56 = vld [vmem:[%s0 + $0x148] sm:$0xff]
  %v57 = vld [vmem:[%s0 + $0x150] sm:$0xff]
  %v58 = vld [vmem:[%s0 + $0x158] sm:$0xff]
  %v59 = vld [vmem:[%s0 + $0x160] sm:$0xff]
  %v60 = vld [vmem:[%s0 + $0x168] sm:$0xff]
  %v61 = vld [vmem:[%s0 + $0x170] sm:$0xff]
  %v62 = vld [vmem:[%s0 + $0x178] sm:$0xff]
  %v63 = vld [vmem:[%s0 + $0x180] sm:$0xff]
  %v64 = vld [vmem:[%s0 + $0x188] sm:$0xff]
  %v65 = vld [vmem:[%s0 + $0x190] sm:$0xff]
  %v66 = vld [vmem:[%s0 + $0x198] sm:$0xff]
  %v67 = vld [vmem:[%s0 + $0x1a0] sm:$0xff]
  %v68 = vld [vmem:[%s0 + $0x1a8] sm:$0xff]
  %v69 = vld [vmem:[%s0 + $0x1b0] sm:$0xff]
  %v70 = vld [vmem:[%s0 + $0x1b8] sm:$0xff]
  %v71 = vld [vmem:[%s0 + $0x1c0] sm:$0xff]
  %v72 = vld [vmem:[%s0 + $0x1c8] sm:$0xff]
  %v73 = vld [vmem:[%s0 + $0x1d0] sm:$0xff]
  %v74 = vld [vmem:[%s0 + $0x1d8] sm:$0xff]
  %v75 = vld [vmem:[%s0 + $0x1e0] sm:$0xff]
  %v76 = vld [vmem:[%s0 + $0x1e8] sm:$0xff]
  %v77 = vld [vmem:[%s0 + $0x1f0] sm:$0xff]
  %v78 = vld [vmem:[%s0 + $0x1f8] sm:$0xff]
  %v79 = vld [vmem:[%s1] sm:$0xf]
  %v80 = vld [vmem:[%s1 + $0x4] sm:$0xf]
  %v81 = vld [vmem:[%s1 + $0x8] sm:$0xf]
  %v82 = vld [vmem:[%s1 + $0xc] sm:$0xf]
  %v83 = vld [vmem:[%s1 + $0x10] sm:$0xf]
  %v84 = vld [vmem:[%s1 + $0x14] sm:$0xf]
  %v85 = vld [vmem:[%s1 + $0x18] sm:$0xf]
  %v86 = vld [vmem:[%s1 + $0x1c] sm:$0xf]
  %v87 = vld [vmem:[%s1 + $0x20] sm:$0xf]
  %v88 = vld [vmem:[%s1 + $0x24] sm:$0xf]
  %v89 = vld [vmem:[%s1 + $0x28] sm:$0xf]
  %v90 = vld [vmem:[%s1 + $0x2c] sm:$0xf]
  %v91 = vld [vmem:[%s1 + $0x30] sm:$0xf]
  %v92 = vld [vmem:[%s1 + $0x34] sm:$0xf]
  %v93 = vld [vmem:[%s1 + $0x38] sm:$0xf]
  %v94 = vld [vmem:[%s1 + $0x3c] sm:$0xf]
  %v95 = vld [vmem:[%s1 + $0x40] sm:$0xf]
  %v96 = vld [vmem:[%s1 + $0x44] sm:$0xf]
  %v161 = vunpack.c.l.b16 %v15
  %v162 = vunpack.c.h.b16 %v15
  %v163 = vunpack.c.l.b16 %v16
  %v164 = vunpack.c.h.b16 %v16
  %v165 = vunpack.c.l.b16 %v17
  %v166 = vunpack.c.h.b16 %v17
  %v167 = vunpack.c.l.b16 %v18
  %v168 = vunpack.c.h.b16 %v18
  %v169 = vunpack.c.l.b16 %v19
  %v170 = vunpack.c.h.b16 %v19
  %v171 = vunpack.c.l.b16 %v20
  %v172 = vunpack.c.h.b16 %v20
  %v173 = vunpack.c.l.b16 %v21
  %v174 = vunpack.c.h.b16 %v21
  %v175 = vunpack.c.l.b16 %v22
  %v176 = vunpack.c.h.b16 %v22
  %v177 = vunpack.c.l.b16 %v23
  %v178 = vunpack.c.h.b16 %v23
  %v179 = vunpack.c.l.b16 %v24
  %v180 = vunpack.c.h.b16 %v24
  %v181 = vunpack.c.l.b16 %v25
  %v182 = vunpack.c.h.b16 %v25
  %v183 = vunpack.c.l.b16 %v26
  %v184 = vunpack.c.h.b16 %v26
  %v185 = vunpack.c.l.b16 %v27
  %v186 = vunpack.c.h.b16 %v27
  %v187 = vunpack.c.l.b16 %v28
  %v188 = vunpack.c.h.b16 %v28
  %v189 = vunpack.c.l.b16 %v29
  %v190 = vunpack.c.h.b16 %v29
  %v191 = vunpack.c.l.b16 %v30
  %v192 = vunpack.c.h.b16 %v30
  %v193 = vunpack.c.l.b16 %v31
  %v194 = vunpack.c.h.b16 %v31
  %v195 = vunpack.c.l.b16 %v32
  %v196 = vunpack.c.h.b16 %v32
  %v197 = vunpack.c.l.b16 %v33
  %v198 = vunpack.c.h.b16 %v33
  %v199 = vunpack.c.l.b16 %v34
  %v200 = vunpack.c.h.b16 %v34
  %v201 = vunpack.c.l.b16 %v35
  %v202 = vunpack.c.h.b16 %v35
  %v203 = vunpack.c.l.b16 %v36
  %v204 = vunpack.c.h.b16 %v36
  %v205 = vunpack.c.l.b16 %v37
  %v206 = vunpack.c.h.b16 %v37
  %v207 = vunpack.c.l.b16 %v38
  %v208 = vunpack.c.h.b16 %v38
  %v209 = vunpack.c.l.b16 %v39
  %v210 = vunpack.c.h.b16 %v39
  %v211 = vunpack.c.l.b16 %v40
  %v212 = vunpack.c.h.b16 %v40
  %v213 = vunpack.c.l.b16 %v41
  %v214 = vunpack.c.h.b16 %v41
  %v215 = vunpack.c.l.b16 %v42
  %v216 = vunpack.c.h.b16 %v42
  %v217 = vunpack.c.l.b16 %v43
  %v218 = vunpack.c.h.b16 %v43
  %v219 = vunpack.c.l.b16 %v44
  %v220 = vunpack.c.h.b16 %v44
  %v221 = vunpack.c.l.b16 %v45
  %v222 = vunpack.c.h.b16 %v45
  %v223 = vunpack.c.l.b16 %v46
  %v224 = vunpack.c.h.b16 %v46
  %v225 = vunpack.c.l.b16 %v47
  %v226 = vunpack.c.h.b16 %v47
  %v227 = vunpack.c.l.b16 %v48
  %v228 = vunpack.c.h.b16 %v48
  %v229 = vunpack.c.l.b16 %v49
  %v230 = vunpack.c.h.b16 %v49
  %v231 = vunpack.c.l.b16 %v50
  %v232 = vunpack.c.h.b16 %v50
  %v233 = vunpack.c.l.b16 %v51
  %v234 = vunpack.c.h.b16 %v51
  %v235 = vunpack.c.l.b16 %v52
  %v236 = vunpack.c.h.b16 %v52
  %v237 = vunpack.c.l.b16 %v53
  %v238 = vunpack.c.h.b16 %v53
  %v239 = vunpack.c.l.b16 %v54
  %v240 = vunpack.c.h.b16 %v54
  %v241 = vunpack.c.l.b16 %v55
  %v242 = vunpack.c.h.b16 %v55
  %v243 = vunpack.c.l.b16 %v56
  %v244 = vunpack.c.h.b16 %v56
  %v245 = vunpack.c.l.b16 %v57
  %v246 = vunpack.c.h.b16 %v57
  %v247 = vunpack.c.l.b16 %v58
  %v248 = vunpack.c.h.b16 %v58
  %v249 = vunpack.c.l.b16 %v59
  %v250 = vunpack.c.h.b16 %v59
  %v251 = vunpack.c.l.b16 %v60
  %v252 = vunpack.c.h.b16 %v60
  %v253 = vunpack.c.l.b16 %v61
  %v254 = vunpack.c.h.b16 %v61
  %v255 = vunpack.c.l.b16 %v62
  %v256 = vunpack.c.h.b16 %v62
  %v257 = vunpack.c.l.b16 %v63
  %v258 = vunpack.c.h.b16 %v63
  %v259 = vunpack.c.l.b16 %v64
  %v260 = vunpack.c.h.b16 %v64
  %v261 = vunpack.c.l.b16 %v65
  %v262 = vunpack.c.h.b16 %v65
  %v263 = vunpack.c.l.b16 %v66
  %v264 = vunpack.c.h.b16 %v66
  %v265 = vunpack.c.l.b16 %v67
  %v266 = vunpack.c.h.b16 %v67
  %v267 = vunpack.c.l.b16 %v68
  %v268 = vunpack.c.h.b16 %v68
  %v269 = vunpack.c.l.b16 %v69
  %v270 = vunpack.c.h.b16 %v69
  %v271 = vunpack.c.l.b16 %v70
  %v272 = vunpack.c.h.b16 %v70
  %v273 = vunpack.c.l.b16 %v71
  %v274 = vunpack.c.h.b16 %v71
  %v275 = vunpack.c.l.b16 %v72
  %v276 = vunpack.c.h.b16 %v72
  %v277 = vunpack.c.l.b16 %v73
  %v278 = vunpack.c.h.b16 %v73
  %v279 = vunpack.c.l.b16 %v74
  %v280 = vunpack.c.h.b16 %v74
  %v281 = vunpack.c.l.b16 %v75
  %v282 = vunpack.c.h.b16 %v75
  %v283 = vunpack.c.l.b16 %v76
  %v284 = vunpack.c.h.b16 %v76
  %v285 = vunpack.c.l.b16 %v77
  %v286 = vunpack.c.h.b16 %v77
  %v287 = vunpack.c.l.b16 %v78
  %v288 = vunpack.c.h.b16 %v78
  %v289 = vpack.c.b16 %v163, %v161
  %v290 = vpack.c.b16 %v164, %v162
  %v291 = vpack.c.b16 %v167, %v165
  %v292 = vpack.c.b16 %v168, %v166
  %v293 = vpack.c.b16 %v171, %v169
  %v294 = vpack.c.b16 %v172, %v170
  %v295 = vpack.c.b16 %v175, %v173
  %v296 = vpack.c.b16 %v176, %v174
  %v297 = vpack.c.b16 %v179, %v177
  %v298 = vpack.c.b16 %v180, %v178
  %v299 = vpack.c.b16 %v183, %v181
  %v300 = vpack.c.b16 %v184, %v182
  %v301 = vpack.c.b16 %v187, %v185
  %v302 = vpack.c.b16 %v188, %v186
  %v303 = vpack.c.b16 %v191, %v189
  %v304 = vpack.c.b16 %v192, %v190
  %v305 = vpack.c.b16 %v195, %v193
  %v306 = vpack.c.b16 %v196, %v194
  %v307 = vpack.c.b16 %v199, %v197
  %v308 = vpack.c.b16 %v200, %v198
  %v309 = vpack.c.b16 %v203, %v201
  %v310 = vpack.c.b16 %v204, %v202
  %v311 = vpack.c.b16 %v207, %v205
  %v312 = vpack.c.b16 %v208, %v206
  %v313 = vpack.c.b16 %v211, %v209
  %v314 = vpack.c.b16 %v212, %v210
  %v315 = vpack.c.b16 %v215, %v213
  %v316 = vpack.c.b16 %v216, %v214
  %v317 = vpack.c.b16 %v219, %v217
  %v318 = vpack.c.b16 %v220, %v218
  %v319 = vpack.c.b16 %v223, %v221
  %v320 = vpack.c.b16 %v224, %v222
  %v321 = vpack.c.b16 %v227, %v225
  %v322 = vpack.c.b16 %v228, %v226
  %v323 = vpack.c.b16 %v231, %v229
  %v324 = vpack.c.b16 %v232, %v230
  %v325 = vpack.c.b16 %v235, %v233
  %v326 = vpack.c.b16 %v236, %v234
  %v327 = vpack.c.b16 %v239, %v237
  %v328 = vpack.c.b16 %v240, %v238
  %v329 = vpack.c.b16 %v243, %v241
  %v330 = vpack.c.b16 %v244, %v242
  %v331 = vpack.c.b16 %v247, %v245
  %v332 = vpack.c.b16 %v248, %v246
  %v333 = vpack.c.b16 %v251, %v249
  %v334 = vpack.c.b16 %v252, %v250
  %v335 = vpack.c.b16 %v255, %v253
  %v336 = vpack.c.b16 %v256, %v254
  %v337 = vpack.c.b16 %v259, %v257
  %v338 = vpack.c.b16 %v260, %v258
  %v339 = vpack.c.b16 %v263, %v261
  %v340 = vpack.c.b16 %v264, %v262
  %v341 = vpack.c.b16 %v267, %v265
  %v342 = vpack.c.b16 %v268, %v266
  %v343 = vpack.c.b16 %v271, %v269
  %v344 = vpack.c.b16 %v272, %v270
  %v345 = vpack.c.b16 %v275, %v273
  %v346 = vpack.c.b16 %v276, %v274
  %v347 = vpack.c.b16 %v279, %v277
  %v348 = vpack.c.b16 %v280, %v278
  %v349 = vpack.c.b16 %v283, %v281
  %v350 = vpack.c.b16 %v284, %v282
  %v351 = vpack.c.b16 %v287, %v285
  %v352 = vpack.c.b16 %v288, %v286
  %v403 = vunpack.c.l.b16 %v79
  %v404 = vunpack.c.l.b16 %v80
  %v405 = vunpack.c.l.b16 %v81
  %v406 = vunpack.c.l.b16 %v82
  %v407 = vunpack.c.l.b16 %v83
  %v408 = vunpack.c.l.b16 %v84
  %v409 = vunpack.c.l.b16 %v85
  %v410 = vunpack.c.l.b16 %v86
  %v411 = vunpack.c.l.b16 %v87
  %v412 = vunpack.c.l.b16 %v88
  %v413 = vunpack.c.l.b16 %v89
  %v414 = vunpack.c.l.b16 %v90
  %v415 = vunpack.c.l.b16 %v91
  %v416 = vunpack.c.l.b16 %v92
  %v417 = vunpack.c.l.b16 %v93
  %v418 = vunpack.c.l.b16 %v94
  %v419 = vunpack.c.l.b16 %v95
  %v420 = vunpack.c.l.b16 %v96
  %v421 = vpack.c.b16 %v404, %v403
  %v422 = vpack.c.b16 %v406, %v405
  %v423 = vpack.c.b16 %v408, %v407
  %v424 = vpack.c.b16 %v410, %v409
  %v425 = vpack.c.b16 %v412, %v411
  %v426 = vpack.c.b16 %v414, %v413
  %v427 = vpack.c.b16 %v416, %v415
  %v428 = vpack.c.b16 %v418, %v417
  %v429 = vpack.c.b16 %v420, %v419
  %vm439 = vcmask 130048
  %v441 = vsel %vm439, %v290, 0
  %v444 = vsel %vm439, %v292, 0
  %v447 = vsel %vm439, %v294, 0
  %v450 = vsel %vm439, %v296, 0
  %v453 = vsel %vm439, %v298, 0
  %v456 = vsel %vm439, %v300, 0
  %v459 = vsel %vm439, %v302, 0
  %v462 = vsel %vm439, %v304, 0
  %v465 = vsel %vm439, %v306, 0
  %v468 = vsel %vm439, %v308, 0
  %v471 = vsel %vm439, %v310, 0
  %v474 = vsel %vm439, %v312, 0
  %v477 = vsel %vm439, %v314, 0
  %v480 = vsel %vm439, %v316, 0
  %v483 = vsel %vm439, %v318, 0
  %v486 = vsel %vm439, %v320, 0
  %v489 = vsel %vm439, %v322, 0
  %v492 = vsel %vm439, %v324, 0
  %v495 = vsel %vm439, %v326, 0
  %v498 = vsel %vm439, %v328, 0
  %v501 = vsel %vm439, %v330, 0
  %v504 = vsel %vm439, %v332, 0
  %v507 = vsel %vm439, %v334, 0
  %v510 = vsel %vm439, %v336, 0
  %v513 = vsel %vm439, %v338, 0
  %v516 = vsel %vm439, %v340, 0
  %v519 = vsel %vm439, %v342, 0
  %v522 = vsel %vm439, %v344, 0
  %v525 = vsel %vm439, %v346, 0
  %v528 = vsel %vm439, %v348, 0
  %v531 = vsel %vm439, %v350, 0
  %v534 = vsel %vm439, %v352, 0
  %536 = vmatpush.bf16.msra.mxu0 %v428
  %537 = vmatpush.bf16.msra.mxu0 %v427
  %538 = vmatpush.bf16.msra.mxu0 %v426
  %539 = vmatpush.bf16.msra.mxu0 %v425
  %540 = vmatpush.bf16.msra.mxu0 %v424
  %541 = vmatpush.bf16.msra.mxu0 %v423
  %542 = vmatpush.bf16.msra.mxu0 %v422
  %543 = vmatpush.bf16.msra.mxu0 %v421
  %544 = vmatmul.bf16.gmra.mxu0 %v289
  %v545 = vpop.f32.mrf.mxu0
  %v546 = vadd.f32 0.0, %v545
  %v547 = vpop.f32.mrf.mxu0
  %v548 = vadd.f32 0.0, %v547
  %549 = vmatmul.bf16.gmra.mxu0 %v291
  %v550 = vpop.f32.mrf.mxu0
  %v551 = vadd.f32 0.0, %v550
  %v552 = vpop.f32.mrf.mxu0
  %v553 = vadd.f32 0.0, %v552
  %554 = vmatmul.bf16.gmra.mxu0 %v293
  %v555 = vpop.f32.mrf.mxu0
  %v556 = vadd.f32 0.0, %v555
  %v557 = vpop.f32.mrf.mxu0
  %v558 = vadd.f32 0.0, %v557
  %559 = vmatmul.bf16.gmra.mxu0 %v295
  %v560 = vpop.f32.mrf.mxu0
  %v561 = vadd.f32 0.0, %v560
  %v562 = vpop.f32.mrf.mxu0
  %v563 = vadd.f32 0.0, %v562
  %564 = vmatmul.bf16.gmra.mxu0 %v297
  %v565 = vpop.f32.mrf.mxu0
  %v566 = vadd.f32 0.0, %v565
  %v567 = vpop.f32.mrf.mxu0
  %v568 = vadd.f32 0.0, %v567
  %569 = vmatmul.bf16.gmra.mxu0 %v299
  %v570 = vpop.f32.mrf.mxu0
  %v571 = vadd.f32 0.0, %v570
  %v572 = vpop.f32.mrf.mxu0
  %v573 = vadd.f32 0.0, %v572
  %574 = vmatmul.bf16.gmra.mxu0 %v301
  %v575 = vpop.f32.mrf.mxu0
  %v576 = vadd.f32 0.0, %v575
  %v577 = vpop.f32.mrf.mxu0
  %v578 = vadd.f32 0.0, %v577
  %579 = vmatmul.bf16.gmra.mxu0 %v303
  %v580 = vpop.f32.mrf.mxu0
  %v581 = vadd.f32 0.0, %v580
  %v582 = vpop.f32.mrf.mxu0
  %v583 = vadd.f32 0.0, %v582
  %584 = vmatmul.bf16.gmra.mxu0 %v305
  %v585 = vpop.f32.mrf.mxu0
  %v586 = vadd.f32 0.0, %v585
  %v587 = vpop.f32.mrf.mxu0
  %v588 = vadd.f32 0.0, %v587
  %589 = vmatmul.bf16.gmra.mxu0 %v307
  %v590 = vpop.f32.mrf.mxu0
  %v591 = vadd.f32 0.0, %v590
  %v592 = vpop.f32.mrf.mxu0
  %v593 = vadd.f32 0.0, %v592
  %594 = vmatmul.bf16.gmra.mxu0 %v309
  %v595 = vpop.f32.mrf.mxu0
  %v596 = vadd.f32 0.0, %v595
  %v597 = vpop.f32.mrf.mxu0
  %v598 = vadd.f32 0.0, %v597
  %599 = vmatmul.bf16.gmra.mxu0 %v311
  %v600 = vpop.f32.mrf.mxu0
  %v601 = vadd.f32 0.0, %v600
  %v602 = vpop.f32.mrf.mxu0
  %v603 = vadd.f32 0.0, %v602
  %604 = vmatmul.bf16.gmra.mxu0 %v313
  %v605 = vpop.f32.mrf.mxu0
  %v606 = vadd.f32 0.0, %v605
  %v607 = vpop.f32.mrf.mxu0
  %v608 = vadd.f32 0.0, %v607
  %609 = vmatmul.bf16.gmra.mxu0 %v315
  %v610 = vpop.f32.mrf.mxu0
  %v611 = vadd.f32 0.0, %v610
  %v612 = vpop.f32.mrf.mxu0
  %v613 = vadd.f32 0.0, %v612
  %614 = vmatmul.bf16.gmra.mxu0 %v317
  %v615 = vpop.f32.mrf.mxu0
  %v616 = vadd.f32 0.0, %v615
  %v617 = vpop.f32.mrf.mxu0
  %v618 = vadd.f32 0.0, %v617
  %619 = vmatmul.bf16.gmra.mxu0 %v319
  %v620 = vpop.f32.mrf.mxu0
  %v621 = vadd.f32 0.0, %v620
  %v622 = vpop.f32.mrf.mxu0
  %v623 = vadd.f32 0.0, %v622
  %624 = vmatmul.bf16.gmra.mxu0 %v321
  %v625 = vpop.f32.mrf.mxu0
  %v626 = vadd.f32 0.0, %v625
  %v627 = vpop.f32.mrf.mxu0
  %v628 = vadd.f32 0.0, %v627
  %629 = vmatmul.bf16.gmra.mxu0 %v323
  %v630 = vpop.f32.mrf.mxu0
  %v631 = vadd.f32 0.0, %v630
  %v632 = vpop.f32.mrf.mxu0
  %v633 = vadd.f32 0.0, %v632
  %634 = vmatmul.bf16.gmra.mxu0 %v325
  %v635 = vpop.f32.mrf.mxu0
  %v636 = vadd.f32 0.0, %v635
  %v637 = vpop.f32.mrf.mxu0
  %v638 = vadd.f32 0.0, %v637
  %639 = vmatmul.bf16.gmra.mxu0 %v327
  %v640 = vpop.f32.mrf.mxu0
  %v641 = vadd.f32 0.0, %v640
  %v642 = vpop.f32.mrf.mxu0
  %v643 = vadd.f32 0.0, %v642
  %644 = vmatmul.bf16.gmra.mxu0 %v329
  %v645 = vpop.f32.mrf.mxu0
  %v646 = vadd.f32 0.0, %v645
  %v647 = vpop.f32.mrf.mxu0
  %v648 = vadd.f32 0.0, %v647
  %649 = vmatmul.bf16.gmra.mxu0 %v331
  %v650 = vpop.f32.mrf.mxu0
  %v651 = vadd.f32 0.0, %v650
  %v652 = vpop.f32.mrf.mxu0
  %v653 = vadd.f32 0.0, %v652
  %654 = vmatmul.bf16.gmra.mxu0 %v333
  %v655 = vpop.f32.mrf.mxu0
  %v656 = vadd.f32 0.0, %v655
  %v657 = vpop.f32.mrf.mxu0
  %v658 = vadd.f32 0.0, %v657
  %659 = vmatmul.bf16.gmra.mxu0 %v335
  %v660 = vpop.f32.mrf.mxu0
  %v661 = vadd.f32 0.0, %v660
  %v662 = vpop.f32.mrf.mxu0
  %v663 = vadd.f32 0.0, %v662
  %664 = vmatmul.bf16.gmra.mxu0 %v337
  %v665 = vpop.f32.mrf.mxu0
  %v666 = vadd.f32 0.0, %v665
  %v667 = vpop.f32.mrf.mxu0
  %v668 = vadd.f32 0.0, %v667
  %669 = vmatmul.bf16.gmra.mxu0 %v339
  %v670 = vpop.f32.mrf.mxu0
  %v671 = vadd.f32 0.0, %v670
  %v672 = vpop.f32.mrf.mxu0
  %v673 = vadd.f32 0.0, %v672
  %674 = vmatmul.bf16.gmra.mxu0 %v341
  %v675 = vpop.f32.mrf.mxu0
  %v676 = vadd.f32 0.0, %v675
  %v677 = vpop.f32.mrf.mxu0
  %v678 = vadd.f32 0.0, %v677
  %679 = vmatmul.bf16.gmra.mxu0 %v343
  %v680 = vpop.f32.mrf.mxu0
  %v681 = vadd.f32 0.0, %v680
  %v682 = vpop.f32.mrf.mxu0
  %v683 = vadd.f32 0.0, %v682
  %684 = vmatmul.bf16.gmra.mxu0 %v345
  %v685 = vpop.f32.mrf.mxu0
  %v686 = vadd.f32 0.0, %v685
  %v687 = vpop.f32.mrf.mxu0
  %v688 = vadd.f32 0.0, %v687
  %689 = vmatmul.bf16.gmra.mxu0 %v347
  %v690 = vpop.f32.mrf.mxu0
  %v691 = vadd.f32 0.0, %v690
  %v692 = vpop.f32.mrf.mxu0
  %v693 = vadd.f32 0.0, %v692
  %694 = vmatmul.bf16.gmra.mxu0 %v349
  %v695 = vpop.f32.mrf.mxu0
  %v696 = vadd.f32 0.0, %v695
  %v697 = vpop.f32.mrf.mxu0
  %v698 = vadd.f32 0.0, %v697
  %699 = vmatmul.bf16.gmra.mxu0 %v351
  %v700 = vpop.f32.mrf.mxu0
  %v701 = vadd.f32 0.0, %v700
  %v702 = vpop.f32.mrf.mxu0
  %v703 = vadd.f32 0.0, %v702
  %704 = vdwg.mxu0
  %705 = vmatpush.bf16.msra.mxu0 0
  %706 = vmatpush.bf16.msra.mxu0 0
  %707 = vmatpush.bf16.msra.mxu0 0
  %708 = vmatpush.bf16.msra.mxu0 0
  %709 = vmatpush.bf16.msra.mxu0 0
  %710 = vmatpush.bf16.msra.mxu0 0
  %711 = vmatpush.bf16.msra.mxu0 0
  %712 = vmatpush.bf16.msra.mxu0 %v429
  %713 = vmatmul.bf16.gmra.mxu0 %v441
  %v714 = vpop.f32.mrf.mxu0
  %v715 = vadd.f32 %v546, %v714
  %v716 = vpop.f32.mrf.mxu0
  %v717 = vadd.f32 %v548, %v716
  %718 = vmatmul.bf16.gmra.mxu0 %v444
  %v719 = vpop.f32.mrf.mxu0
  %v720 = vadd.f32 %v551, %v719
  %v721 = vpop.f32.mrf.mxu0
  %v722 = vadd.f32 %v553, %v721
  %723 = vmatmul.bf16.gmra.mxu0 %v447
  %v724 = vpop.f32.mrf.mxu0
  %v725 = vadd.f32 %v556, %v724
  %v726 = vpop.f32.mrf.mxu0
  %v727 = vadd.f32 %v558, %v726
  %728 = vmatmul.bf16.gmra.mxu0 %v450
  %v729 = vpop.f32.mrf.mxu0
  %v730 = vadd.f32 %v561, %v729
  %v731 = vpop.f32.mrf.mxu0
  %v732 = vadd.f32 %v563, %v731
  %733 = vmatmul.bf16.gmra.mxu0 %v453
  %v734 = vpop.f32.mrf.mxu0
  %v735 = vadd.f32 %v566, %v734
  %v736 = vpop.f32.mrf.mxu0
  %v737 = vadd.f32 %v568, %v736
  %738 = vmatmul.bf16.gmra.mxu0 %v456
  %v739 = vpop.f32.mrf.mxu0
  %v740 = vadd.f32 %v571, %v739
  %v741 = vpop.f32.mrf.mxu0
  %v742 = vadd.f32 %v573, %v741
  %743 = vmatmul.bf16.gmra.mxu0 %v459
  %v744 = vpop.f32.mrf.mxu0
  %v745 = vadd.f32 %v576, %v744
  %v746 = vpop.f32.mrf.mxu0
  %v747 = vadd.f32 %v578, %v746
  %748 = vmatmul.bf16.gmra.mxu0 %v462
  %v749 = vpop.f32.mrf.mxu0
  %v750 = vadd.f32 %v581, %v749
  %v751 = vpop.f32.mrf.mxu0
  %v752 = vadd.f32 %v583, %v751
  %753 = vmatmul.bf16.gmra.mxu0 %v465
  %v754 = vpop.f32.mrf.mxu0
  %v755 = vadd.f32 %v586, %v754
  %v756 = vpop.f32.mrf.mxu0
  %v757 = vadd.f32 %v588, %v756
  %758 = vmatmul.bf16.gmra.mxu0 %v468
  %v759 = vpop.f32.mrf.mxu0
  %v760 = vadd.f32 %v591, %v759
  %v761 = vpop.f32.mrf.mxu0
  %v762 = vadd.f32 %v593, %v761
  %763 = vmatmul.bf16.gmra.mxu0 %v471
  %v764 = vpop.f32.mrf.mxu0
  %v765 = vadd.f32 %v596, %v764
  %v766 = vpop.f32.mrf.mxu0
  %v767 = vadd.f32 %v598, %v766
  %768 = vmatmul.bf16.gmra.mxu0 %v474
  %v769 = vpop.f32.mrf.mxu0
  %v770 = vadd.f32 %v601, %v769
  %v771 = vpop.f32.mrf.mxu0
  %v772 = vadd.f32 %v603, %v771
  %773 = vmatmul.bf16.gmra.mxu0 %v477
  %v774 = vpop.f32.mrf.mxu0
  %v775 = vadd.f32 %v606, %v774
  %v776 = vpop.f32.mrf.mxu0
  %v777 = vadd.f32 %v608, %v776
  %778 = vmatmul.bf16.gmra.mxu0 %v480
  %v779 = vpop.f32.mrf.mxu0
  %v780 = vadd.f32 %v611, %v779
  %v781 = vpop.f32.mrf.mxu0
  %v782 = vadd.f32 %v613, %v781
  %783 = vmatmul.bf16.gmra.mxu0 %v483
  %v784 = vpop.f32.mrf.mxu0
  %v785 = vadd.f32 %v616, %v784
  %v786 = vpop.f32.mrf.mxu0
  %v787 = vadd.f32 %v618, %v786
  %788 = vmatmul.bf16.gmra.mxu0 %v486
  %v789 = vpop.f32.mrf.mxu0
  %v790 = vadd.f32 %v621, %v789
  %v791 = vpop.f32.mrf.mxu0
  %v792 = vadd.f32 %v623, %v791
  %793 = vmatmul.bf16.gmra.mxu0 %v489
  %v794 = vpop.f32.mrf.mxu0
  %v795 = vadd.f32 %v626, %v794
  %v796 = vpop.f32.mrf.mxu0
  %v797 = vadd.f32 %v628, %v796
  %798 = vmatmul.bf16.gmra.mxu0 %v492
  %v799 = vpop.f32.mrf.mxu0
  %v800 = vadd.f32 %v631, %v799
  %v801 = vpop.f32.mrf.mxu0
  %v802 = vadd.f32 %v633, %v801
  %803 = vmatmul.bf16.gmra.mxu0 %v495
  %v804 = vpop.f32.mrf.mxu0
  %v805 = vadd.f32 %v636, %v804
  %v806 = vpop.f32.mrf.mxu0
  %v807 = vadd.f32 %v638, %v806
  %808 = vmatmul.bf16.gmra.mxu0 %v498
  %v809 = vpop.f32.mrf.mxu0
  %v810 = vadd.f32 %v641, %v809
  %v811 = vpop.f32.mrf.mxu0
  %v812 = vadd.f32 %v643, %v811
  %813 = vmatmul.bf16.gmra.mxu0 %v501
  %v814 = vpop.f32.mrf.mxu0
  %v815 = vadd.f32 %v646, %v814
  %v816 = vpop.f32.mrf.mxu0
  %v817 = vadd.f32 %v648, %v816
  %818 = vmatmul.bf16.gmra.mxu0 %v504
  %v819 = vpop.f32.mrf.mxu0
  %v820 = vadd.f32 %v651, %v819
  %v821 = vpop.f32.mrf.mxu0
  %v822 = vadd.f32 %v653, %v821
  %823 = vmatmul.bf16.gmra.mxu0 %v507
  %v824 = vpop.f32.mrf.mxu0
  %v825 = vadd.f32 %v656, %v824
  %v826 = vpop.f32.mrf.mxu0
  %v827 = vadd.f32 %v658, %v826
  %828 = vmatmul.bf16.gmra.mxu0 %v510
  %v829 = vpop.f32.mrf.mxu0
  %v830 = vadd.f32 %v661, %v829
  %v831 = vpop.f32.mrf.mxu0
  %v832 = vadd.f32 %v663, %v831
  %833 = vmatmul.bf16.gmra.mxu0 %v513
  %v834 = vpop.f32.mrf.mxu0
  %v835 = vadd.f32 %v666, %v834
  %v836 = vpop.f32.mrf.mxu0
  %v837 = vadd.f32 %v668, %v836
  %838 = vmatmul.bf16.gmra.mxu0 %v516
  %v839 = vpop.f32.mrf.mxu0
  %v840 = vadd.f32 %v671, %v839
  %v841 = vpop.f32.mrf.mxu0
  %v842 = vadd.f32 %v673, %v841
  %843 = vmatmul.bf16.gmra.mxu0 %v519
  %v844 = vpop.f32.mrf.mxu0
  %v845 = vadd.f32 %v676, %v844
  %v846 = vpop.f32.mrf.mxu0
  %v847 = vadd.f32 %v678, %v846
  %848 = vmatmul.bf16.gmra.mxu0 %v522
  %v849 = vpop.f32.mrf.mxu0
  %v850 = vadd.f32 %v681, %v849
  %v851 = vpop.f32.mrf.mxu0
  %v852 = vadd.f32 %v683, %v851
  %853 = vmatmul.bf16.gmra.mxu0 %v525
  %v854 = vpop.f32.mrf.mxu0
  %v855 = vadd.f32 %v686, %v854
  %v856 = vpop.f32.mrf.mxu0
  %v857 = vadd.f32 %v688, %v856
  %858 = vmatmul.bf16.gmra.mxu0 %v528
  %v859 = vpop.f32.mrf.mxu0
  %v860 = vadd.f32 %v691, %v859
  %v861 = vpop.f32.mrf.mxu0
  %v862 = vadd.f32 %v693, %v861
  %863 = vmatmul.bf16.gmra.mxu0 %v531
  %v864 = vpop.f32.mrf.mxu0
  %v865 = vadd.f32 %v696, %v864
  %v866 = vpop.f32.mrf.mxu0
  %v867 = vadd.f32 %v698, %v866
  %868 = vmatmul.bf16.gmra.mxu0 %v534
  %v869 = vpop.f32.mrf.mxu0
  %v870 = vadd.f32 %v701, %v869
  %v871 = vpop.f32.mrf.mxu0
  %v872 = vadd.f32 %v703, %v871
  %873 = vdwg.mxu0
  %vm874 = vcmask 261120
  %875 = vst.msk [vmem:[%s2] sm:$0xff] %vm874, %v715
  %876 = vst.msk [vmem:[%s2 + $0x8] sm:$0xff] %vm874, %v717
  %877 = vst.msk [vmem:[%s2 + $0x10] sm:$0xff] %vm874, %v720
  %878 = vst.msk [vmem:[%s2 + $0x18] sm:$0xff] %vm874, %v722
  %879 = vst.msk [vmem:[%s2 + $0x20] sm:$0xff] %vm874, %v725
  %880 = vst.msk [vmem:[%s2 + $0x28] sm:$0xff] %vm874, %v727
  %881 = vst.msk [vmem:[%s2 + $0x30] sm:$0xff] %vm874, %v730
  %882 = vst.msk [vmem:[%s2 + $0x38] sm:$0xff] %vm874, %v732
  %883 = vst.msk [vmem:[%s2 + $0x40] sm:$0xff] %vm874, %v735
  %884 = vst.msk [vmem:[%s2 + $0x48] sm:$0xff] %vm874, %v737
  %885 = vst.msk [vmem:[%s2 + $0x50] sm:$0xff] %vm874, %v740
  %886 = vst.msk [vmem:[%s2 + $0x58] sm:$0xff] %vm874, %v742
  %887 = vst.msk [vmem:[%s2 + $0x60] sm:$0xff] %vm874, %v745
  %888 = vst.msk [vmem:[%s2 + $0x68] sm:$0xff] %vm874, %v747
  %889 = vst.msk [vmem:[%s2 + $0x70] sm:$0xff] %vm874, %v750
  %890 = vst.msk [vmem:[%s2 + $0x78] sm:$0xff] %vm874, %v752
  %891 = vst.msk [vmem:[%s2 + $0x80] sm:$0xff] %vm874, %v755
  %892 = vst.msk [vmem:[%s2 + $0x88] sm:$0xff] %vm874, %v757
  %893 = vst.msk [vmem:[%s2 + $0x90] sm:$0xff] %vm874, %v760
  %894 = vst.msk [vmem:[%s2 + $0x98] sm:$0xff] %vm874, %v762
  %895 = vst.msk [vmem:[%s2 + $0xa0] sm:$0xff] %vm874, %v765
  %896 = vst.msk [vmem:[%s2 + $0xa8] sm:$0xff] %vm874, %v767
  %897 = vst.msk [vmem:[%s2 + $0xb0] sm:$0xff] %vm874, %v770
  %898 = vst.msk [vmem:[%s2 + $0xb8] sm:$0xff] %vm874, %v772
  %899 = vst.msk [vmem:[%s2 + $0xc0] sm:$0xff] %vm874, %v775
  %900 = vst.msk [vmem:[%s2 + $0xc8] sm:$0xff] %vm874, %v777
  %901 = vst.msk [vmem:[%s2 + $0xd0] sm:$0xff] %vm874, %v780
  %902 = vst.msk [vmem:[%s2 + $0xd8] sm:$0xff] %vm874, %v782
  %903 = vst.msk [vmem:[%s2 + $0xe0] sm:$0xff] %vm874, %v785
  %904 = vst.msk [vmem:[%s2 + $0xe8] sm:$0xff] %vm874, %v787
  %905 = vst.msk [vmem:[%s2 + $0xf0] sm:$0xff] %vm874, %v790
  %906 = vst.msk [vmem:[%s2 + $0xf8] sm:$0xff] %vm874, %v792
  %907 = vst.msk [vmem:[%s2 + $0x100] sm:$0xff] %vm874, %v795
  %908 = vst.msk [vmem:[%s2 + $0x108] sm:$0xff] %vm874, %v797
  %909 = vst.msk [vmem:[%s2 + $0x110] sm:$0xff] %vm874, %v800
  %910 = vst.msk [vmem:[%s2 + $0x118] sm:$0xff] %vm874, %v802
  %911 = vst.msk [vmem:[%s2 + $0x120] sm:$0xff] %vm874, %v805
  %912 = vst.msk [vmem:[%s2 + $0x128] sm:$0xff] %vm874, %v807
  %913 = vst.msk [vmem:[%s2 + $0x130] sm:$0xff] %vm874, %v810
  %914 = vst.msk [vmem:[%s2 + $0x138] sm:$0xff] %vm874, %v812
  %915 = vst.msk [vmem:[%s2 + $0x140] sm:$0xff] %vm874, %v815
  %916 = vst.msk [vmem:[%s2 + $0x148] sm:$0xff] %vm874, %v817
  %917 = vst.msk [vmem:[%s2 + $0x150] sm:$0xff] %vm874, %v820
  %918 = vst.msk [vmem:[%s2 + $0x158] sm:$0xff] %vm874, %v822
  %919 = vst.msk [vmem:[%s2 + $0x160] sm:$0xff] %vm874, %v825
  %920 = vst.msk [vmem:[%s2 + $0x168] sm:$0xff] %vm874, %v827
  %921 = vst.msk [vmem:[%s2 + $0x170] sm:$0xff] %vm874, %v830
  %922 = vst.msk [vmem:[%s2 + $0x178] sm:$0xff] %vm874, %v832
  %923 = vst.msk [vmem:[%s2 + $0x180] sm:$0xff] %vm874, %v835
  %924 = vst.msk [vmem:[%s2 + $0x188] sm:$0xff] %vm874, %v837
  %925 = vst.msk [vmem:[%s2 + $0x190] sm:$0xff] %vm874, %v840
  %926 = vst.msk [vmem:[%s2 + $0x198] sm:$0xff] %vm874, %v842
  %927 = vst.msk [vmem:[%s2 + $0x1a0] sm:$0xff] %vm874, %v845
  %928 = vst.msk [vmem:[%s2 + $0x1a8] sm:$0xff] %vm874, %v847
  %929 = vst.msk [vmem:[%s2 + $0x1b0] sm:$0xff] %vm874, %v850
  %930 = vst.msk [vmem:[%s2 + $0x1b8] sm:$0xff] %vm874, %v852
  %931 = vst.msk [vmem:[%s2 + $0x1c0] sm:$0xff] %vm874, %v855
  %932 = vst.msk [vmem:[%s2 + $0x1c8] sm:$0xff] %vm874, %v857
  %933 = vst.msk [vmem:[%s2 + $0x1d0] sm:$0xff] %vm874, %v860
  %934 = vst.msk [vmem:[%s2 + $0x1d8] sm:$0xff] %vm874, %v862
  %935 = vst.msk [vmem:[%s2 + $0x1e0] sm:$0xff] %vm874, %v865
  %936 = vst.msk [vmem:[%s2 + $0x1e8] sm:$0xff] %vm874, %v867
  %937 = vst.msk [vmem:[%s2 + $0x1f0] sm:$0xff] %vm874, %v870
  %938 = vst.msk [vmem:[%s2 + $0x1f8] sm:$0xff] %vm874, %v872
  %p939 = scmp.eq.s32.totalorder 0, 0
  // Predicated region
  $region10: #{generator_forward.11} parent=0 // pred_check
    %p940 = pneg %p939
  $region11: #{generator_forward.11} parent=0 // pred_check_branch
    %942 = sbr.rel (%p940) target = $region13
  $region12: #{generator_forward.11} parent=0 // pred_region
    %vm943 = vcmask 253952
    %944 = vst.msk [vmem:[%s3] sm:$0x1] %vm943, 0.0
    %945 = vst.msk [vmem:[%s4] sm:$0x1] %vm943, 0.0
  $region13: #{generator_forward.11} parent=0 // pred_fallthru
    _
  %v946 = vld [vmem:[%s3] sm:$0x1]
  %v947 = vsel %vm874, %v715, 0.0
  %v948 = vsel %vm874, %v717, 0.0
  %v949 = vadd.f32 %v947, %v948
  %v950 = vsel %vm874, %v720, 0.0
  %v951 = vadd.f32 %v949, %v950
  %v952 = vsel %vm874, %v722, 0.0
  %v953 = vadd.f32 %v951, %v952
  %v954 = vsel %vm874, %v725, 0.0
  %v955 = vadd.f32 %v953, %v954
  %v956 = vsel %vm874, %v727, 0.0
  %v957 = vadd.f32 %v955, %v956
  %v958 = vsel %vm874, %v730, 0.0
  %v959 = vadd.f32 %v957, %v958
  %v960 = vsel %vm874, %v732, 0.0
  %v961 = vadd.f32 %v959, %v960
  %v962 = vsel %vm874, %v735, 0.0
  %v963 = vadd.f32 %v961, %v962
  %v964 = vsel %vm874, %v737, 0.0
  %v965 = vadd.f32 %v963, %v964
  %v966 = vsel %vm874, %v740, 0.0
  %v967 = vadd.f32 %v965, %v966
  %v968 = vsel %vm874, %v742, 0.0
  %v969 = vadd.f32 %v967, %v968
  %v970 = vsel %vm874, %v745, 0.0
  %v971 = vadd.f32 %v969, %v970
  %v972 = vsel %vm874, %v747, 0.0
  %v973 = vadd.f32 %v971, %v972
  %v974 = vsel %vm874, %v750, 0.0
  %v975 = vadd.f32 %v973, %v974
  %v976 = vsel %vm874, %v752, 0.0
  %v977 = vadd.f32 %v975, %v976
  %v978 = vsel %vm874, %v755, 0.0
  %v979 = vadd.f32 %v977, %v978
  %v980 = vsel %vm874, %v757, 0.0
  %v981 = vadd.f32 %v979, %v980
  %v982 = vsel %vm874, %v760, 0.0
  %v983 = vadd.f32 %v981, %v982
  %v984 = vsel %vm874, %v762, 0.0
  %v985 = vadd.f32 %v983, %v984
  %v986 = vsel %vm874, %v765, 0.0
  %v987 = vadd.f32 %v985, %v986
  %v988 = vsel %vm874, %v767, 0.0
  %v989 = vadd.f32 %v987, %v988
  %v990 = vsel %vm874, %v770, 0.0
  %v991 = vadd.f32 %v989, %v990
  %v992 = vsel %vm874, %v772, 0.0
  %v993 = vadd.f32 %v991, %v992
  %v994 = vsel %vm874, %v775, 0.0
  %v995 = vadd.f32 %v993, %v994
  %v996 = vsel %vm874, %v777, 0.0
  %v997 = vadd.f32 %v995, %v996
  %v998 = vsel %vm874, %v780, 0.0
  %v999 = vadd.f32 %v997, %v998
  %v1000 = vsel %vm874, %v782, 0.0
  %v1001 = vadd.f32 %v999, %v1000
  %v1002 = vsel %vm874, %v785, 0.0
  %v1003 = vadd.f32 %v1001, %v1002
  %v1004 = vsel %vm874, %v787, 0.0
  %v1005 = vadd.f32 %v1003, %v1004
  %v1006 = vsel %vm874, %v790, 0.0
  %v1007 = vadd.f32 %v1005, %v1006
  %v1008 = vsel %vm874, %v792, 0.0
  %v1009 = vadd.f32 %v1007, %v1008
  %v1010 = vsel %vm874, %v795, 0.0
  %v1011 = vadd.f32 %v1009, %v1010
  %v1012 = vsel %vm874, %v797, 0.0
  %v1013 = vadd.f32 %v1011, %v1012
  %v1014 = vsel %vm874, %v800, 0.0
  %v1015 = vadd.f32 %v1013, %v1014
  %v1016 = vsel %vm874, %v802, 0.0
  %v1017 = vadd.f32 %v1015, %v1016
  %v1018 = vsel %vm874, %v805, 0.0
  %v1019 = vadd.f32 %v1017, %v1018
  %v1020 = vsel %vm874, %v807, 0.0
  %v1021 = vadd.f32 %v1019, %v1020
  %v1022 = vsel %vm874, %v810, 0.0
  %v1023 = vadd.f32 %v1021, %v1022
  %v1024 = vsel %vm874, %v812, 0.0
  %v1025 = vadd.f32 %v1023, %v1024
  %v1026 = vsel %vm874, %v815, 0.0
  %v1027 = vadd.f32 %v1025, %v1026
  %v1028 = vsel %vm874, %v817, 0.0
  %v1029 = vadd.f32 %v1027, %v1028
  %v1030 = vsel %vm874, %v820, 0.0
  %v1031 = vadd.f32 %v1029, %v1030
  %v1032 = vsel %vm874, %v822, 0.0
  %v1033 = vadd.f32 %v1031, %v1032
  %v1034 = vsel %vm874, %v825, 0.0
  %v1035 = vadd.f32 %v1033, %v1034
  %v1036 = vsel %vm874, %v827, 0.0
  %v1037 = vadd.f32 %v1035, %v1036
  %v1038 = vsel %vm874, %v830, 0.0
  %v1039 = vadd.f32 %v1037, %v1038
  %v1040 = vsel %vm874, %v832, 0.0
  %v1041 = vadd.f32 %v1039, %v1040
  %v1042 = vsel %vm874, %v835, 0.0
  %v1043 = vadd.f32 %v1041, %v1042
  %v1044 = vsel %vm874, %v837, 0.0
  %v1045 = vadd.f32 %v1043, %v1044
  %v1046 = vsel %vm874, %v840, 0.0
  %v1047 = vadd.f32 %v1045, %v1046
  %v1048 = vsel %vm874, %v842, 0.0
  %v1049 = vadd.f32 %v1047, %v1048
  %v1050 = vsel %vm874, %v845, 0.0
  %v1051 = vadd.f32 %v1049, %v1050
  %v1052 = vsel %vm874, %v847, 0.0
  %v1053 = vadd.f32 %v1051, %v1052
  %v1054 = vsel %vm874, %v850, 0.0
  %v1055 = vadd.f32 %v1053, %v1054
  %v1056 = vsel %vm874, %v852, 0.0
  %v1057 = vadd.f32 %v1055, %v1056
  %v1058 = vsel %vm874, %v855, 0.0
  %v1059 = vadd.f32 %v1057, %v1058
  %v1060 = vsel %vm874, %v857, 0.0
  %v1061 = vadd.f32 %v1059, %v1060
  %v1062 = vsel %vm874, %v860, 0.0
  %v1063 = vadd.f32 %v1061, %v1062
  %v1064 = vsel %vm874, %v862, 0.0
  %v1065 = vadd.f32 %v1063, %v1064
  %v1066 = vsel %vm874, %v865, 0.0
  %v1067 = vadd.f32 %v1065, %v1066
  %v1068 = vsel %vm874, %v867, 0.0
  %v1069 = vadd.f32 %v1067, %v1068
  %v1070 = vsel %vm874, %v870, 0.0
  %v1071 = vadd.f32 %v1069, %v1070
  %v1072 = vsel %vm874, %v872, 0.0
  %v1073 = vadd.f32 %v1071, %v1072
  %v1074 = vrot.slane %v1073, 4
  %v1075 = vadd.f32 %v1073, %v1074
  %v1076 = vrot.slane %v1075, 2
  %v1077 = vadd.f32 %v1075, %v1076
  %v1078 = vrot.slane %v1077, 1
  %v1079 = vadd.f32 %v1077, %v1078
  %v1080 = vadd.f32 %v946, %v1079
  %vm1081 = vcmask 253952
  %1082 = vst.msk [vmem:[%s3] sm:$0x1] %vm1081, %v1080
  %v1083 = vld [vmem:[%s4] sm:$0x1]
  %v1084 = vmul.f32 %v715, %v715
  %v1085 = vmul.f32 %v717, %v717
  %v1086 = vmul.f32 %v720, %v720
  %v1087 = vmul.f32 %v722, %v722
  %v1088 = vmul.f32 %v725, %v725
  %v1089 = vmul.f32 %v727, %v727
  %v1090 = vmul.f32 %v730, %v730
  %v1091 = vmul.f32 %v732, %v732
  %v1092 = vmul.f32 %v735, %v735
  %v1093 = vmul.f32 %v737, %v737
  %v1094 = vmul.f32 %v740, %v740
  %v1095 = vmul.f32 %v742, %v742
  %v1096 = vmul.f32 %v745, %v745
  %v1097 = vmul.f32 %v747, %v747
  %v1098 = vmul.f32 %v750, %v750
  %v1099 = vmul.f32 %v752, %v752
  %v1100 = vmul.f32 %v755, %v755
  %v1101 = vmul.f32 %v757, %v757
  %v1102 = vmul.f32 %v760, %v760
  %v1103 = vmul.f32 %v762, %v762
  %v1104 = vmul.f32 %v765, %v765
  %v1105 = vmul.f32 %v767, %v767
  %v1106 = vmul.f32 %v770, %v770
  %v1107 = vmul.f32 %v772, %v772
  %v1108 = vmul.f32 %v775, %v775
  %v1109 = vmul.f32 %v777, %v777
  %v1110 = vmul.f32 %v780, %v780
  %v1111 = vmul.f32 %v782, %v782
  %v1112 = vmul.f32 %v785, %v785
  %v1113 = vmul.f32 %v787, %v787
  %v1114 = vmul.f32 %v790, %v790
  %v1115 = vmul.f32 %v792, %v792
  %v1116 = vmul.f32 %v795, %v795
  %v1117 = vmul.f32 %v797, %v797
  %v1118 = vmul.f32 %v800, %v800
  %v1119 = vmul.f32 %v802, %v802
  %v1120 = vmul.f32 %v805, %v805
  %v1121 = vmul.f32 %v807, %v807
  %v1122 = vmul.f32 %v810, %v810
  %v1123 = vmul.f32 %v812, %v812
  %v1124 = vmul.f32 %v815, %v815
  %v1125 = vmul.f32 %v817, %v817
  %v1126 = vmul.f32 %v820, %v820
  %v1127 = vmul.f32 %v822, %v822
  %v1128 = vmul.f32 %v825, %v825
  %v1129 = vmul.f32 %v827, %v827
  %v1130 = vmul.f32 %v830, %v830
  %v1131 = vmul.f32 %v832, %v832
  %v1132 = vmul.f32 %v835, %v835
  %v1133 = vmul.f32 %v837, %v837
  %v1134 = vmul.f32 %v840, %v840
  %v1135 = vmul.f32 %v842, %v842
  %v1136 = vmul.f32 %v845, %v845
  %v1137 = vmul.f32 %v847, %v847
  %v1138 = vmul.f32 %v850, %v850
  %v1139 = vmul.f32 %v852, %v852
  %v1140 = vmul.f32 %v855, %v855
  %v1141 = vmul.f32 %v857, %v857
  %v1142 = vmul.f32 %v860, %v860
  %v1143 = vmul.f32 %v862, %v862
  %v1144 = vmul.f32 %v865, %v865
  %v1145 = vmul.f32 %v867, %v867
  %v1146 = vmul.f32 %v870, %v870
  %v1147 = vmul.f32 %v872, %v872
  %v1148 = vsel %vm874, %v1084, 0.0
  %v1149 = vsel %vm874, %v1085, 0.0
  %v1150 = vadd.f32 %v1148, %v1149
  %v1151 = vsel %vm874, %v1086, 0.0
  %v1152 = vadd.f32 %v1150, %v1151
  %v1153 = vsel %vm874, %v1087, 0.0
  %v1154 = vadd.f32 %v1152, %v1153
  %v1155 = vsel %vm874, %v1088, 0.0
  %v1156 = vadd.f32 %v1154, %v1155
  %v1157 = vsel %vm874, %v1089, 0.0
  %v1158 = vadd.f32 %v1156, %v1157
  %v1159 = vsel %vm874, %v1090, 0.0
  %v1160 = vadd.f32 %v1158, %v1159
  %v1161 = vsel %vm874, %v1091, 0.0
  %v1162 = vadd.f32 %v1160, %v1161
  %v1163 = vsel %vm874, %v1092, 0.0
  %v1164 = vadd.f32 %v1162, %v1163
  %v1165 = vsel %vm874, %v1093, 0.0
  %v1166 = vadd.f32 %v1164, %v1165
  %v1167 = vsel %vm874, %v1094, 0.0
  %v1168 = vadd.f32 %v1166, %v1167
  %v1169 = vsel %vm874, %v1095, 0.0
  %v1170 = vadd.f32 %v1168, %v1169
  %v1171 = vsel %vm874, %v1096, 0.0
  %v1172 = vadd.f32 %v1170, %v1171
  %v1173 = vsel %vm874, %v1097, 0.0
  %v1174 = vadd.f32 %v1172, %v1173
  %v1175 = vsel %vm874, %v1098, 0.0
  %v1176 = vadd.f32 %v1174, %v1175
  %v1177 = vsel %vm874, %v1099, 0.0
  %v1178 = vadd.f32 %v1176, %v1177
  %v1179 = vsel %vm874, %v1100, 0.0
  %v1180 = vadd.f32 %v1178, %v1179
  %v1181 = vsel %vm874, %v1101, 0.0
  %v1182 = vadd.f32 %v1180, %v1181
  %v1183 = vsel %vm874, %v1102, 0.0
  %v1184 = vadd.f32 %v1182, %v1183
  %v1185 = vsel %vm874, %v1103, 0.0
  %v1186 = vadd.f32 %v1184, %v1185
  %v1187 = vsel %vm874, %v1104, 0.0
  %v1188 = vadd.f32 %v1186, %v1187
  %v1189 = vsel %vm874, %v1105, 0.0
  %v1190 = vadd.f32 %v1188, %v1189
  %v1191 = vsel %vm874, %v1106, 0.0
  %v1192 = vadd.f32 %v1190, %v1191
  %v1193 = vsel %vm874, %v1107, 0.0
  %v1194 = vadd.f32 %v1192, %v1193
  %v1195 = vsel %vm874, %v1108, 0.0
  %v1196 = vadd.f32 %v1194, %v1195
  %v1197 = vsel %vm874, %v1109, 0.0
  %v1198 = vadd.f32 %v1196, %v1197
  %v1199 = vsel %vm874, %v1110, 0.0
  %v1200 = vadd.f32 %v1198, %v1199
  %v1201 = vsel %vm874, %v1111, 0.0
  %v1202 = vadd.f32 %v1200, %v1201
  %v1203 = vsel %vm874, %v1112, 0.0
  %v1204 = vadd.f32 %v1202, %v1203
  %v1205 = vsel %vm874, %v1113, 0.0
  %v1206 = vadd.f32 %v1204, %v1205
  %v1207 = vsel %vm874, %v1114, 0.0
  %v1208 = vadd.f32 %v1206, %v1207
  %v1209 = vsel %vm874, %v1115, 0.0
  %v1210 = vadd.f32 %v1208, %v1209
  %v1211 = vsel %vm874, %v1116, 0.0
  %v1212 = vadd.f32 %v1210, %v1211
  %v1213 = vsel %vm874, %v1117, 0.0
  %v1214 = vadd.f32 %v1212, %v1213
  %v1215 = vsel %vm874, %v1118, 0.0
  %v1216 = vadd.f32 %v1214, %v1215
  %v1217 = vsel %vm874, %v1119, 0.0
  %v1218 = vadd.f32 %v1216, %v1217
  %v1219 = vsel %vm874, %v1120, 0.0
  %v1220 = vadd.f32 %v1218, %v1219
  %v1221 = vsel %vm874, %v1121, 0.0
  %v1222 = vadd.f32 %v1220, %v1221
  %v1223 = vsel %vm874, %v1122, 0.0
  %v1224 = vadd.f32 %v1222, %v1223
  %v1225 = vsel %vm874, %v1123, 0.0
  %v1226 = vadd.f32 %v1224, %v1225
  %v1227 = vsel %vm874, %v1124, 0.0
  %v1228 = vadd.f32 %v1226, %v1227
  %v1229 = vsel %vm874, %v1125, 0.0
  %v1230 = vadd.f32 %v1228, %v1229
  %v1231 = vsel %vm874, %v1126, 0.0
  %v1232 = vadd.f32 %v1230, %v1231
  %v1233 = vsel %vm874, %v1127, 0.0
  %v1234 = vadd.f32 %v1232, %v1233
  %v1235 = vsel %vm874, %v1128, 0.0
  %v1236 = vadd.f32 %v1234, %v1235
  %v1237 = vsel %vm874, %v1129, 0.0
  %v1238 = vadd.f32 %v1236, %v1237
  %v1239 = vsel %vm874, %v1130, 0.0
  %v1240 = vadd.f32 %v1238, %v1239
  %v1241 = vsel %vm874, %v1131, 0.0
  %v1242 = vadd.f32 %v1240, %v1241
  %v1243 = vsel %vm874, %v1132, 0.0
  %v1244 = vadd.f32 %v1242, %v1243
  %v1245 = vsel %vm874, %v1133, 0.0
  %v1246 = vadd.f32 %v1244, %v1245
  %v1247 = vsel %vm874, %v1134, 0.0
  %v1248 = vadd.f32 %v1246, %v1247
  %v1249 = vsel %vm874, %v1135, 0.0
  %v1250 = vadd.f32 %v1248, %v1249
  %v1251 = vsel %vm874, %v1136, 0.0
  %v1252 = vadd.f32 %v1250, %v1251
  %v1253 = vsel %vm874, %v1137, 0.0
  %v1254 = vadd.f32 %v1252, %v1253
  %v1255 = vsel %vm874, %v1138, 0.0
  %v1256 = vadd.f32 %v1254, %v1255
  %v1257 = vsel %vm874, %v1139, 0.0
  %v1258 = vadd.f32 %v1256, %v1257
  %v1259 = vsel %vm874, %v1140, 0.0
  %v1260 = vadd.f32 %v1258, %v1259
  %v1261 = vsel %vm874, %v1141, 0.0
  %v1262 = vadd.f32 %v1260, %v1261
  %v1263 = vsel %vm874, %v1142, 0.0
  %v1264 = vadd.f32 %v1262, %v1263
  %v1265 = vsel %vm874, %v1143, 0.0
  %v1266 = vadd.f32 %v1264, %v1265
  %v1267 = vsel %vm874, %v1144, 0.0
  %v1268 = vadd.f32 %v1266, %v1267
  %v1269 = vsel %vm874, %v1145, 0.0
  %v1270 = vadd.f32 %v1268, %v1269
  %v1271 = vsel %vm874, %v1146, 0.0
  %v1272 = vadd.f32 %v1270, %v1271
  %v1273 = vsel %vm874, %v1147, 0.0
  %v1274 = vadd.f32 %v1272, %v1273
  %v1275 = vrot.slane %v1274, 4
  %v1276 = vadd.f32 %v1274, %v1275
  %v1277 = vrot.slane %v1276, 2
  %v1278 = vadd.f32 %v1276, %v1277
  %v1279 = vrot.slane %v1278, 1
  %v1280 = vadd.f32 %v1278, %v1279
  %v1281 = vadd.f32 %v1083, %v1280
  %1282 = vst.msk [vmem:[%s4] sm:$0x1] %vm1081, %v1281
  // Predicated region
  $region14: #{generator_forward.11} parent=0 // pred_check
    _
  $region15: #{generator_forward.11} parent=0 // pred_check_branch
    %1284 = sbr.rel (0) target = $region17
  $region16: #{generator_forward.11} parent=0 // pred_region
    _
  $region17: #{generator_forward.11} parent=0 // pred_fallthru
    _
  // Predicated region
  $region18: #{generator_forward.11} parent=0 // pred_check
    _
  $region19: #{generator_forward.11} parent=0 // pred_check_branch
    %1286 = sbr.rel (0) target = $region21
  $region20: #{generator_forward.11} parent=0 // pred_region
    _
  $region21: #{generator_forward.11} parent=0 // pred_fallthru
    _
  // Predicated region
  $region22: #{generator_forward.11} parent=0 // pred_check
    _
  $region23: #{generator_forward.11} parent=0 // pred_check_branch
    %1288 = sbr.rel (0) target = $region25
  $region24: #{generator_forward.11} parent=0 // pred_region
    _
  $region25: #{generator_forward.11} parent=0 // pred_fallthru
    _
  // Predicated region
  $region26: #{generator_forward.11} parent=0 // pred_check
    _
  $region27: #{generator_forward.11} parent=0 // pred_check_branch
    %1290 = sbr.rel (0) target = $region29
  $region28: #{generator_forward.11} parent=0 // pred_region
    _
  $region29: #{generator_forward.11} parent=0 // pred_fallthru
    _
  // Predicated region
  $region30: #{generator_forward.11} parent=0 // pred_check
    _
  $region31: #{generator_forward.11} parent=0 // pred_check_branch
    %1292 = sbr.rel (0) target = $region33
  $region32: #{generator_forward.11} parent=0 // pred_region
    _
  $region33: #{generator_forward.11} parent=0 // pred_fallthru
    _
  // Predicated region
  $region34: #{generator_forward.11} parent=0 // pred_check
    _
  $region35: #{generator_forward.11} parent=0 // pred_check_branch
    %1294 = sbr.rel (0) target = $region37
  $region36: #{generator_forward.11} parent=0 // pred_region
    _
  $region37: #{generator_forward.11} parent=0 // pred_fallthru
    _

// kernel: generator_forward.12
$region0: #{generator_forward.12}
  #allocation0 [shape = 'u32[]', space=smem, size = 0x4, offset = 0x4, fixed_abs, tag = 'smem constant byte address 0x4 - core index']
  #allocation1 [shape = 'u32[72,128]{1,0:T(1,128)}', space=vmem, size = 0x9000, scoped, tag = 'internal scratch']
  %s0 = inlined_call_operand.vmem [shape: bf16[2048,72], index: 0, kind: input, shape index: {}]
  %s1 = inlined_call_operand.vmem [shape: bf16[72,16], index: 1, kind: input, shape index: {}]
  %s2 = inlined_call_operand.vmem [shape: f32[2048,16], index: 2, kind: output, shape index: {0}]
  %s3 = inlined_call_operand.vmem [shape: f32[1,16], index: 3, kind: output, shape index: {1}]
  %s4 = inlined_call_operand.vmem [shape: f32[1,16], index: 4, kind: output, shape index: {2}]
  %5 = xla_tuple %s2, %s3, %s4
  %s6 = sld [smem:[#allocation0]]
  $region38: #{generator_forward.12} parent=0
    _
  %s8 = ssub.s32 1, %s6
  %s9 = scalar_select 0, %s8, %s6
  // Predicated region
  $region2: #{generator_forward.12} parent=0 // pred_check
    _
  $region3: #{generator_forward.12} parent=0 // pred_check_branch
    %11 = sbr.rel (0) target = $region5
  $region4: #{generator_forward.12} parent=0 // pred_region
    _
  $region5: #{generator_forward.12} parent=0 // pred_fallthru
    _
  // Predicated region
  $region6: #{generator_forward.12} parent=0 // pred_check
    _
  $region7: #{generator_forward.12} parent=0 // pred_check_branch
    %13 = sbr.rel (0) target = $region9
  $region8: #{generator_forward.12} parent=0 // pred_region
    _
  $region9: #{generator_forward.12} parent=0 // pred_fallthru
    _
  %v15 = vld [vmem:[%s0] sm:$0xf]
  %v16 = vld [vmem:[%s0 + $0x4] sm:$0xf]
  %v17 = vld [vmem:[%s0 + $0x8] sm:$0xf]
  %v18 = vld [vmem:[%s0 + $0xc] sm:$0xf]
  %v19 = vld [vmem:[%s0 + $0x10] sm:$0xf]
  %v20 = vld [vmem:[%s0 + $0x14] sm:$0xf]
  %v21 = vld [vmem:[%s0 + $0x18] sm:$0xf]
  %v22 = vld [vmem:[%s0 + $0x1c] sm:$0xf]
  %v23 = vld [vmem:[%s0 + $0x20] sm:$0xf]
  %v24 = vld [vmem:[%s0 + $0x24] sm:$0xf]
  %v25 = vld [vmem:[%s0 + $0x28] sm:$0xf]
  %v26 = vld [vmem:[%s0 + $0x2c] sm:$0xf]
  %v27 = vld [vmem:[%s0 + $0x30] sm:$0xf]
  %v28 = vld [vmem:[%s0 + $0x34] sm:$0xf]
  %v29 = vld [vmem:[%s0 + $0x38] sm:$0xf]
  %v30 = vld [vmem:[%s0 + $0x3c] sm:$0xf]
  %v31 = vld [vmem:[%s0 + $0x40] sm:$0xf]
  %v32 = vld [vmem:[%s0 + $0x44] sm:$0xf]
  %v33 = vld [vmem:[%s0 + $0x48] sm:$0xf]
  %v34 = vld [vmem:[%s0 + $0x4c] sm:$0xf]
  %v35 = vld [vmem:[%s0 + $0x50] sm:$0xf]
  %v36 = vld [vmem:[%s0 + $0x54] sm:$0xf]
  %v37 = vld [vmem:[%s0 + $0x58] sm:$0xf]
  %v38 = vld [vmem:[%s0 + $0x5c] sm:$0xf]
  %v39 = vld [vmem:[%s0 + $0x60] sm:$0xf]
  %v40 = vld [vmem:[%s0 + $0x64] sm:$0xf]
  %v41 = vld [vmem:[%s0 + $0x68] sm:$0xf]
  %v42 = vld [vmem:[%s0 + $0x6c] sm:$0xf]
  %v43 = vld [vmem:[%s0 + $0x70] sm:$0xf]
  %v44 = vld [vmem:[%s0 + $0x74] sm:$0xf]
  %v45 = vld [vmem:[%s0 + $0x78] sm:$0xf]
  %v46 = vld [vmem:[%s0 + $0x7c] sm:$0xf]
  %v47 = vld [vmem:[%s0 + $0x80] sm:$0xf]
  %v48 = vld [vmem:[%s0 + $0x84] sm:$0xf]
  %v49 = vld [vmem:[%s0 + $0x88] sm:$0xf]
  %v50 = vld [vmem:[%s0 + $0x8c] sm:$0xf]
  %v51 = vld [vmem:[%s0 + $0x90] sm:$0xf]
  %v52 = vld [vmem:[%s0 + $0x94] sm:$0xf]
  %v53 = vld [vmem:[%s0 + $0x98] sm:$0xf]
  %v54 = vld [vmem:[%s0 + $0x9c] sm:$0xf]
  %v55 = vld [vmem:[%s0 + $0xa0] sm:$0xf]
  %v56 = vld [vmem:[%s0 + $0xa4] sm:$0xf]
  %v57 = vld [vmem:[%s0 + $0xa8] sm:$0xf]
  %v58 = vld [vmem:[%s0 + $0xac] sm:$0xf]
  %v59 = vld [vmem:[%s0 + $0xb0] sm:$0xf]
  %v60 = vld [vmem:[%s0 + $0xb4] sm:$0xf]
  %v61 = vld [vmem:[%s0 + $0xb8] sm:$0xf]
  %v62 = vld [vmem:[%s0 + $0xbc] sm:$0xf]
  %v63 = vld [vmem:[%s0 + $0xc0] sm:$0xf]
  %v64 = vld [vmem:[%s0 + $0xc4] sm:$0xf]
  %v65 = vld [vmem:[%s0 + $0xc8] sm:$0xf]
  %v66 = vld [vmem:[%s0 + $0xcc] sm:$0xf]
  %v67 = vld [vmem:[%s0 + $0xd0] sm:$0xf]
  %v68 = vld [vmem:[%s0 + $0xd4] sm:$0xf]
  %v69 = vld [vmem:[%s0 + $0xd8] sm:$0xf]
  %v70 = vld [vmem:[%s0 + $0xdc] sm:$0xf]
  %v71 = vld [vmem:[%s0 + $0xe0] sm:$0xf]
  %v72 = vld [vmem:[%s0 + $0xe4] sm:$0xf]
  %v73 = vld [vmem:[%s0 + $0xe8] sm:$0xf]
  %v74 = vld [vmem:[%s0 + $0xec] sm:$0xf]
  %v75 = vld [vmem:[%s0 + $0xf0] sm:$0xf]
  %v76 = vld [vmem:[%s0 + $0xf4] sm:$0xf]
  %v77 = vld [vmem:[%s0 + $0xf8] sm:$0xf]
  %v78 = vld [vmem:[%s0 + $0xfc] sm:$0xf]
  %v79 = vld [vmem:[%s0 + $0x100] sm:$0xf]
  %v80 = vld [vmem:[%s0 + $0x104] sm:$0xf]
  %v81 = vld [vmem:[%s0 + $0x108] sm:$0xf]
  %v82 = vld [vmem:[%s0 + $0x10c] sm:$0xf]
  %v83 = vld [vmem:[%s0 + $0x110] sm:$0xf]
  %v84 = vld [vmem:[%s0 + $0x114] sm:$0xf]
  %v85 = vld [vmem:[%s0 + $0x118] sm:$0xf]
  %v86 = vld [vmem:[%s0 + $0x11c] sm:$0xf]
  %v87 = vld [vmem:[%s0 + $0x120] sm:$0xf]
  %v88 = vld [vmem:[%s0 + $0x124] sm:$0xf]
  %v89 = vld [vmem:[%s0 + $0x128] sm:$0xf]
  %v90 = vld [vmem:[%s0 + $0x12c] sm:$0xf]
  %v91 = vld [vmem:[%s0 + $0x130] sm:$0xf]
  %v92 = vld [vmem:[%s0 + $0x134] sm:$0xf]
  %v93 = vld [vmem:[%s0 + $0x138] sm:$0xf]
  %v94 = vld [vmem:[%s0 + $0x13c] sm:$0xf]
  %v95 = vld [vmem:[%s0 + $0x140] sm:$0xf]
  %v96 = vld [vmem:[%s0 + $0x144] sm:$0xf]
  %v97 = vld [vmem:[%s0 + $0x148] sm:$0xf]
  %v98 = vld [vmem:[%s0 + $0x14c] sm:$0xf]
  %v99 = vld [vmem:[%s0 + $0x150] sm:$0xf]
  %v100 = vld [vmem:[%s0 + $0x154] sm:$0xf]
  %v101 = vld [vmem:[%s0 + $0x158] sm:$0xf]
  %v102 = vld [vmem:[%s0 + $0x15c] sm:$0xf]
  %v103 = vld [vmem:[%s0 + $0x160] sm:$0xf]
  %v104 = vld [vmem:[%s0 + $0x164] sm:$0xf]
  %v105 = vld [vmem:[%s0 + $0x168] sm:$0xf]
  %v106 = vld [vmem:[%s0 + $0x16c] sm:$0xf]
  %v107 = vld [vmem:[%s0 + $0x170] sm:$0xf]
  %v108 = vld [vmem:[%s0 + $0x174] sm:$0xf]
  %v109 = vld [vmem:[%s0 + $0x178] sm:$0xf]
  %v110 = vld [vmem:[%s0 + $0x17c] sm:$0xf]
  %v111 = vld [vmem:[%s0 + $0x180] sm:$0xf]
  %v112 = vld [vmem:[%s0 + $0x184] sm:$0xf]
  %v113 = vld [vmem:[%s0 + $0x188] sm:$0xf]
  %v114 = vld [vmem:[%s0 + $0x18c] sm:$0xf]
  %v115 = vld [vmem:[%s0 + $0x190] sm:$0xf]
  %v116 = vld [vmem:[%s0 + $0x194] sm:$0xf]
  %v117 = vld [vmem:[%s0 + $0x198] sm:$0xf]
  %v118 = vld [vmem:[%s0 + $0x19c] sm:$0xf]
  %v119 = vld [vmem:[%s0 + $0x1a0] sm:$0xf]
  %v120 = vld [vmem:[%s0 + $0x1a4] sm:$0xf]
  %v121 = vld [vmem:[%s0 + $0x1a8] sm:$0xf]
  %v122 = vld [vmem:[%s0 + $0x1ac] sm:$0xf]
  %v123 = vld [vmem:[%s0 + $0x1b0] sm:$0xf]
  %v124 = vld [vmem:[%s0 + $0x1b4] sm:$0xf]
  %v125 = vld [vmem:[%s0 + $0x1b8] sm:$0xf]
  %v126 = vld [vmem:[%s0 + $0x1bc] sm:$0xf]
  %v127 = vld [vmem:[%s0 + $0x1c0] sm:$0xf]
  %v128 = vld [vmem:[%s0 + $0x1c4] sm:$0xf]
  %v129 = vld [vmem:[%s0 + $0x1c8] sm:$0xf]
  %v130 = vld [vmem:[%s0 + $0x1cc] sm:$0xf]
  %v131 = vld [vmem:[%s0 + $0x1d0] sm:$0xf]
  %v132 = vld [vmem:[%s0 + $0x1d4] sm:$0xf]
  %v133 = vld [vmem:[%s0 + $0x1d8] sm:$0xf]
  %v134 = vld [vmem:[%s0 + $0x1dc] sm:$0xf]
  %v135 = vld [vmem:[%s0 + $0x1e0] sm:$0xf]
  %v136 = vld [vmem:[%s0 + $0x1e4] sm:$0xf]
  %v137 = vld [vmem:[%s0 + $0x1e8] sm:$0xf]
  %v138 = vld [vmem:[%s0 + $0x1ec] sm:$0xf]
  %v139 = vld [vmem:[%s0 + $0x1f0] sm:$0xf]
  %v140 = vld [vmem:[%s0 + $0x1f4] sm:$0xf]
  %v141 = vld [vmem:[%s0 + $0x1f8] sm:$0xf]
  %v142 = vld [vmem:[%s0 + $0x1fc] sm:$0xf]
  %v143 = vld [vmem:[%s0 + $0x200] sm:$0xf]
  %v144 = vld [vmem:[%s0 + $0x204] sm:$0xf]
  %v145 = vld [vmem:[%s0 + $0x208] sm:$0xf]
  %v146 = vld [vmem:[%s0 + $0x20c] sm:$0xf]
  %v147 = vld [vmem:[%s0 + $0x210] sm:$0xf]
  %v148 = vld [vmem:[%s0 + $0x214] sm:$0xf]
  %v149 = vld [vmem:[%s0 + $0x218] sm:$0xf]
  %v150 = vld [vmem:[%s0 + $0x21c] sm:$0xf]
  %v151 = vld [vmem:[%s0 + $0x220] sm:$0xf]
  %v152 = vld [vmem:[%s0 + $0x224] sm:$0xf]
  %v153 = vld [vmem:[%s0 + $0x228] sm:$0xf]
  %v154 = vld [vmem:[%s0 + $0x22c] sm:$0xf]
  %v155 = vld [vmem:[%s0 + $0x230] sm:$0xf]
  %v156 = vld [vmem:[%s0 + $0x234] sm:$0xf]
  %v157 = vld [vmem:[%s0 + $0x238] sm:$0xf]
  %v158 = vld [vmem:[%s0 + $0x23c] sm:$0xf]
  %v159 = vld [vmem:[%s0 + $0x240] sm:$0xf]
  %v160 = vld [vmem:[%s0 + $0x244] sm:$0xf]
  %v161 = vld [vmem:[%s0 + $0x248] sm:$0xf]
  %v162 = vld [vmem:[%s0 + $0x24c] sm:$0xf]
  %v163 = vld [vmem:[%s0 + $0x250] sm:$0xf]
  %v164 = vld [vmem:[%s0 + $0x254] sm:$0xf]
  %v165 = vld [vmem:[%s0 + $0x258] sm:$0xf]
  %v166 = vld [vmem:[%s0 + $0x25c] sm:$0xf]
  %v167 = vld [vmem:[%s0 + $0x260] sm:$0xf]
  %v168 = vld [vmem:[%s0 + $0x264] sm:$0xf]
  %v169 = vld [vmem:[%s0 + $0x268] sm:$0xf]
  %v170 = vld [vmem:[%s0 + $0x26c] sm:$0xf]
  %v171 = vld [vmem:[%s0 + $0x270] sm:$0xf]
  %v172 = vld [vmem:[%s0 + $0x274] sm:$0xf]
  %v173 = vld [vmem:[%s0 + $0x278] sm:$0xf]
  %v174 = vld [vmem:[%s0 + $0x27c] sm:$0xf]
  %v175 = vld [vmem:[%s0 + $0x280] sm:$0xf]
  %v176 = vld [vmem:[%s0 + $0x284] sm:$0xf]
  %v177 = vld [vmem:[%s0 + $0x288] sm:$0xf]
  %v178 = vld [vmem:[%s0 + $0x28c] sm:$0xf]
  %v179 = vld [vmem:[%s0 + $0x290] sm:$0xf]
  %v180 = vld [vmem:[%s0 + $0x294] sm:$0xf]
  %v181 = vld [vmem:[%s0 + $0x298] sm:$0xf]
  %v182 = vld [vmem:[%s0 + $0x29c] sm:$0xf]
  %v183 = vld [vmem:[%s0 + $0x2a0] sm:$0xf]
  %v184 = vld [vmem:[%s0 + $0x2a4] sm:$0xf]
  %v185 = vld [vmem:[%s0 + $0x2a8] sm:$0xf]
  %v186 = vld [vmem:[%s0 + $0x2ac] sm:$0xf]
  %v187 = vld [vmem:[%s0 + $0x2b0] sm:$0xf]
  %v188 = vld [vmem:[%s0 + $0x2b4] sm:$0xf]
  %v189 = vld [vmem:[%s0 + $0x2b8] sm:$0xf]
  %v190 = vld [vmem:[%s0 + $0x2bc] sm:$0xf]
  %v191 = vld [vmem:[%s0 + $0x2c0] sm:$0xf]
  %v192 = vld [vmem:[%s0 + $0x2c4] sm:$0xf]
  %v193 = vld [vmem:[%s0 + $0x2c8] sm:$0xf]
  %v194 = vld [vmem:[%s0 + $0x2cc] sm:$0xf]
  %v195 = vld [vmem:[%s0 + $0x2d0] sm:$0xf]
  %v196 = vld [vmem:[%s0 + $0x2d4] sm:$0xf]
  %v197 = vld [vmem:[%s0 + $0x2d8] sm:$0xf]
  %v198 = vld [vmem:[%s0 + $0x2dc] sm:$0xf]
  %v199 = vld [vmem:[%s0 + $0x2e0] sm:$0xf]
  %v200 = vld [vmem:[%s0 + $0x2e4] sm:$0xf]
  %v201 = vld [vmem:[%s0 + $0x2e8] sm:$0xf]
  %v202 = vld [vmem:[%s0 + $0x2ec] sm:$0xf]
  %v203 = vld [vmem:[%s0 + $0x2f0] sm:$0xf]
  %v204 = vld [vmem:[%s0 + $0x2f4] sm:$0xf]
  %v205 = vld [vmem:[%s0 + $0x2f8] sm:$0xf]
  %v206 = vld [vmem:[%s0 + $0x2fc] sm:$0xf]
  %v207 = vld [vmem:[%s0 + $0x300] sm:$0xf]
  %v208 = vld [vmem:[%s0 + $0x304] sm:$0xf]
  %v209 = vld [vmem:[%s0 + $0x308] sm:$0xf]
  %v210 = vld [vmem:[%s0 + $0x30c] sm:$0xf]
  %v211 = vld [vmem:[%s0 + $0x310] sm:$0xf]
  %v212 = vld [vmem:[%s0 + $0x314] sm:$0xf]
  %v213 = vld [vmem:[%s0 + $0x318] sm:$0xf]
  %v214 = vld [vmem:[%s0 + $0x31c] sm:$0xf]
  %v215 = vld [vmem:[%s0 + $0x320] sm:$0xf]
  %v216 = vld [vmem:[%s0 + $0x324] sm:$0xf]
  %v217 = vld [vmem:[%s0 + $0x328] sm:$0xf]
  %v218 = vld [vmem:[%s0 + $0x32c] sm:$0xf]
  %v219 = vld [vmem:[%s0 + $0x330] sm:$0xf]
  %v220 = vld [vmem:[%s0 + $0x334] sm:$0xf]
  %v221 = vld [vmem:[%s0 + $0x338] sm:$0xf]
  %v222 = vld [vmem:[%s0 + $0x33c] sm:$0xf]
  %v223 = vld [vmem:[%s0 + $0x340] sm:$0xf]
  %v224 = vld [vmem:[%s0 + $0x344] sm:$0xf]
  %v225 = vld [vmem:[%s0 + $0x348] sm:$0xf]
  %v226 = vld [vmem:[%s0 + $0x34c] sm:$0xf]
  %v227 = vld [vmem:[%s0 + $0x350] sm:$0xf]
  %v228 = vld [vmem:[%s0 + $0x354] sm:$0xf]
  %v229 = vld [vmem:[%s0 + $0x358] sm:$0xf]
  %v230 = vld [vmem:[%s0 + $0x35c] sm:$0xf]
  %v231 = vld [vmem:[%s0 + $0x360] sm:$0xf]
  %v232 = vld [vmem:[%s0 + $0x364] sm:$0xf]
  %v233 = vld [vmem:[%s0 + $0x368] sm:$0xf]
  %v234 = vld [vmem:[%s0 + $0x36c] sm:$0xf]
  %v235 = vld [vmem:[%s0 + $0x370] sm:$0xf]
  %v236 = vld [vmem:[%s0 + $0x374] sm:$0xf]
  %v237 = vld [vmem:[%s0 + $0x378] sm:$0xf]
  %v238 = vld [vmem:[%s0 + $0x37c] sm:$0xf]
  %v239 = vld [vmem:[%s0 + $0x380] sm:$0xf]
  %v240 = vld [vmem:[%s0 + $0x384] sm:$0xf]
  %v241 = vld [vmem:[%s0 + $0x388] sm:$0xf]
  %v242 = vld [vmem:[%s0 + $0x38c] sm:$0xf]
  %v243 = vld [vmem:[%s0 + $0x390] sm:$0xf]
  %v244 = vld [vmem:[%s0 + $0x394] sm:$0xf]
  %v245 = vld [vmem:[%s0 + $0x398] sm:$0xf]
  %v246 = vld [vmem:[%s0 + $0x39c] sm:$0xf]
  %v247 = vld [vmem:[%s0 + $0x3a0] sm:$0xf]
  %v248 = vld [vmem:[%s0 + $0x3a4] sm:$0xf]
  %v249 = vld [vmem:[%s0 + $0x3a8] sm:$0xf]
  %v250 = vld [vmem:[%s0 + $0x3ac] sm:$0xf]
  %v251 = vld [vmem:[%s0 + $0x3b0] sm:$0xf]
  %v252 = vld [vmem:[%s0 + $0x3b4] sm:$0xf]
  %v253 = vld [vmem:[%s0 + $0x3b8] sm:$0xf]
  %v254 = vld [vmem:[%s0 + $0x3bc] sm:$0xf]
  %v255 = vld [vmem:[%s0 + $0x3c0] sm:$0xf]
  %v256 = vld [vmem:[%s0 + $0x3c4] sm:$0xf]
  %v257 = vld [vmem:[%s0 + $0x3c8] sm:$0xf]
  %v258 = vld [vmem:[%s0 + $0x3cc] sm:$0xf]
  %v259 = vld [vmem:[%s0 + $0x3d0] sm:$0xf]
  %v260 = vld [vmem:[%s0 + $0x3d4] sm:$0xf]
  %v261 = vld [vmem:[%s0 + $0x3d8] sm:$0xf]
  %v262 = vld [vmem:[%s0 + $0x3dc] sm:$0xf]
  %v263 = vld [vmem:[%s0 + $0x3e0] sm:$0xf]
  %v264 = vld [vmem:[%s0 + $0x3e4] sm:$0xf]
  %v265 = vld [vmem:[%s0 + $0x3e8] sm:$0xf]
  %v266 = vld [vmem:[%s0 + $0x3ec] sm:$0xf]
  %v267 = vld [vmem:[%s0 + $0x3f0] sm:$0xf]
  %v268 = vld [vmem:[%s0 + $0x3f4] sm:$0xf]
  %v269 = vld [vmem:[%s0 + $0x3f8] sm:$0xf]
  %v270 = vld [vmem:[%s0 + $0x3fc] sm:$0xf]
  %v271 = vld [vmem:[%s1] sm:$0xf]
  %v272 = vld [vmem:[%s1 + $0x4] sm:$0xf]
  %v273 = vld [vmem:[%s1 + $0x8] sm:$0xf]
  %v274 = vld [vmem:[%s1 + $0xc] sm:$0xf]
  %v275 = vld [vmem:[%s1 + $0x10] sm:$0xf]
  %v276 = vld [vmem:[%s1 + $0x14] sm:$0xf]
  %v277 = vld [vmem:[%s1 + $0x18] sm:$0xf]
  %v278 = vld [vmem:[%s1 + $0x1c] sm:$0xf]
  %v279 = vld [vmem:[%s1 + $0x20] sm:$0xf]
  %v536 = vunpack.c.l.b16 %v15
  %v537 = vunpack.c.l.b16 %v16
  %v538 = vunpack.c.l.b16 %v17
  %v539 = vunpack.c.l.b16 %v18
  %v540 = vunpack.c.l.b16 %v19
  %v541 = vunpack.c.l.b16 %v20
  %v542 = vunpack.c.l.b16 %v21
  %v543 = vunpack.c.l.b16 %v22
  %v544 = vunpack.c.l.b16 %v23
  %v545 = vunpack.c.l.b16 %v24
  %v546 = vunpack.c.l.b16 %v25
  %v547 = vunpack.c.l.b16 %v26
  %v548 = vunpack.c.l.b16 %v27
  %v549 = vunpack.c.l.b16 %v28
  %v550 = vunpack.c.l.b16 %v29
  %v551 = vunpack.c.l.b16 %v30
  %v552 = vunpack.c.l.b16 %v31
  %v553 = vunpack.c.l.b16 %v32
  %v554 = vunpack.c.l.b16 %v33
  %v555 = vunpack.c.l.b16 %v34
  %v556 = vunpack.c.l.b16 %v35
  %v557 = vunpack.c.l.b16 %v36
  %v558 = vunpack.c.l.b16 %v37
  %v559 = vunpack.c.l.b16 %v38
  %v560 = vunpack.c.l.b16 %v39
  %v561 = vunpack.c.l.b16 %v40
  %v562 = vunpack.c.l.b16 %v41
  %v563 = vunpack.c.l.b16 %v42
  %v564 = vunpack.c.l.b16 %v43
  %v565 = vunpack.c.l.b16 %v44
  %v566 = vunpack.c.l.b16 %v45
  %v567 = vunpack.c.l.b16 %v46
  %v568 = vunpack.c.l.b16 %v47
  %v569 = vunpack.c.l.b16 %v48
  %v570 = vunpack.c.l.b16 %v49
  %v571 = vunpack.c.l.b16 %v50
  %v572 = vunpack.c.l.b16 %v51
  %v573 = vunpack.c.l.b16 %v52
  %v574 = vunpack.c.l.b16 %v53
  %v575 = vunpack.c.l.b16 %v54
  %v576 = vunpack.c.l.b16 %v55
  %v577 = vunpack.c.l.b16 %v56
  %v578 = vunpack.c.l.b16 %v57
  %v579 = vunpack.c.l.b16 %v58
  %v580 = vunpack.c.l.b16 %v59
  %v581 = vunpack.c.l.b16 %v60
  %v582 = vunpack.c.l.b16 %v61
  %v583 = vunpack.c.l.b16 %v62
  %v584 = vunpack.c.l.b16 %v63
  %v585 = vunpack.c.l.b16 %v64
  %v586 = vunpack.c.l.b16 %v65
  %v587 = vunpack.c.l.b16 %v66
  %v588 = vunpack.c.l.b16 %v67
  %v589 = vunpack.c.l.b16 %v68
  %v590 = vunpack.c.l.b16 %v69
  %v591 = vunpack.c.l.b16 %v70
  %v592 = vunpack.c.l.b16 %v71
  %v593 = vunpack.c.l.b16 %v72
  %v594 = vunpack.c.l.b16 %v73
  %v595 = vunpack.c.l.b16 %v74
  %v596 = vunpack.c.l.b16 %v75
  %v597 = vunpack.c.l.b16 %v76
  %v598 = vunpack.c.l.b16 %v77
  %v599 = vunpack.c.l.b16 %v78
  %v600 = vunpack.c.l.b16 %v79
  %v601 = vunpack.c.l.b16 %v80
  %v602 = vunpack.c.l.b16 %v81
  %v603 = vunpack.c.l.b16 %v82
  %v604 = vunpack.c.l.b16 %v83
  %v605 = vunpack.c.l.b16 %v84
  %v606 = vunpack.c.l.b16 %v85
  %v607 = vunpack.c.l.b16 %v86
  %v608 = vunpack.c.l.b16 %v87
  %v609 = vunpack.c.l.b16 %v88
  %v610 = vunpack.c.l.b16 %v89
  %v611 = vunpack.c.l.b16 %v90
  %v612 = vunpack.c.l.b16 %v91
  %v613 = vunpack.c.l.b16 %v92
  %v614 = vunpack.c.l.b16 %v93
  %v615 = vunpack.c.l.b16 %v94
  %v616 = vunpack.c.l.b16 %v95
  %v617 = vunpack.c.l.b16 %v96
  %v618 = vunpack.c.l.b16 %v97
  %v619 = vunpack.c.l.b16 %v98
  %v620 = vunpack.c.l.b16 %v99
  %v621 = vunpack.c.l.b16 %v100
  %v622 = vunpack.c.l.b16 %v101
  %v623 = vunpack.c.l.b16 %v102
  %v624 = vunpack.c.l.b16 %v103
  %v625 = vunpack.c.l.b16 %v104
  %v626 = vunpack.c.l.b16 %v105
  %v627 = vunpack.c.l.b16 %v106
  %v628 = vunpack.c.l.b16 %v107
  %v629 = vunpack.c.l.b16 %v108
  %v630 = vunpack.c.l.b16 %v109
  %v631 = vunpack.c.l.b16 %v110
  %v632 = vunpack.c.l.b16 %v111
  %v633 = vunpack.c.l.b16 %v112
  %v634 = vunpack.c.l.b16 %v113
  %v635 = vunpack.c.l.b16 %v114
  %v636 = vunpack.c.l.b16 %v115
  %v637 = vunpack.c.l.b16 %v116
  %v638 = vunpack.c.l.b16 %v117
  %v639 = vunpack.c.l.b16 %v118
  %v640 = vunpack.c.l.b16 %v119
  %v641 = vunpack.c.l.b16 %v120
  %v642 = vunpack.c.l.b16 %v121
  %v643 = vunpack.c.l.b16 %v122
  %v644 = vunpack.c.l.b16 %v123
  %v645 = vunpack.c.l.b16 %v124
  %v646 = vunpack.c.l.b16 %v125
  %v647 = vunpack.c.l.b16 %v126
  %v648 = vunpack.c.l.b16 %v127
  %v649 = vunpack.c.l.b16 %v128
  %v650 = vunpack.c.l.b16 %v129
  %v651 = vunpack.c.l.b16 %v130
  %v652 = vunpack.c.l.b16 %v131
  %v653 = vunpack.c.l.b16 %v132
  %v654 = vunpack.c.l.b16 %v133
  %v655 = vunpack.c.l.b16 %v134
  %v656 = vunpack.c.l.b16 %v135
  %v657 = vunpack.c.l.b16 %v136
  %v658 = vunpack.c.l.b16 %v137
  %v659 = vunpack.c.l.b16 %v138
  %v660 = vunpack.c.l.b16 %v139
  %v661 = vunpack.c.l.b16 %v140
  %v662 = vunpack.c.l.b16 %v141
  %v663 = vunpack.c.l.b16 %v142
  %v664 = vunpack.c.l.b16 %v143
  %v665 = vunpack.c.l.b16 %v144
  %v666 = vunpack.c.l.b16 %v145
  %v667 = vunpack.c.l.b16 %v146
  %v668 = vunpack.c.l.b16 %v147
  %v669 = vunpack.c.l.b16 %v148
  %v670 = vunpack.c.l.b16 %v149
  %v671 = vunpack.c.l.b16 %v150
  %v672 = vunpack.c.l.b16 %v151
  %v673 = vunpack.c.l.b16 %v152
  %v674 = vunpack.c.l.b16 %v153
  %v675 = vunpack.c.l.b16 %v154
  %v676 = vunpack.c.l.b16 %v155
  %v677 = vunpack.c.l.b16 %v156
  %v678 = vunpack.c.l.b16 %v157
  %v679 = vunpack.c.l.b16 %v158
  %v680 = vunpack.c.l.b16 %v159
  %v681 = vunpack.c.l.b16 %v160
  %v682 = vunpack.c.l.b16 %v161
  %v683 = vunpack.c.l.b16 %v162
  %v684 = vunpack.c.l.b16 %v163
  %v685 = vunpack.c.l.b16 %v164
  %v686 = vunpack.c.l.b16 %v165
  %v687 = vunpack.c.l.b16 %v166
  %v688 = vunpack.c.l.b16 %v167
  %v689 = vunpack.c.l.b16 %v168
  %v690 = vunpack.c.l.b16 %v169
  %v691 = vunpack.c.l.b16 %v170
  %v692 = vunpack.c.l.b16 %v171
  %v693 = vunpack.c.l.b16 %v172
  %v694 = vunpack.c.l.b16 %v173
  %v695 = vunpack.c.l.b16 %v174
  %v696 = vunpack.c.l.b16 %v175
  %v697 = vunpack.c.l.b16 %v176
  %v698 = vunpack.c.l.b16 %v177
  %v699 = vunpack.c.l.b16 %v178
  %v700 = vunpack.c.l.b16 %v179
  %v701 = vunpack.c.l.b16 %v180
  %v702 = vunpack.c.l.b16 %v181
  %v703 = vunpack.c.l.b16 %v182
  %v704 = vunpack.c.l.b16 %v183
  %v705 = vunpack.c.l.b16 %v184
  %v706 = vunpack.c.l.b16 %v185
  %v707 = vunpack.c.l.b16 %v186
  %v708 = vunpack.c.l.b16 %v187
  %v709 = vunpack.c.l.b16 %v188
  %v710 = vunpack.c.l.b16 %v189
  %v711 = vunpack.c.l.b16 %v190
  %v712 = vunpack.c.l.b16 %v191
  %v713 = vunpack.c.l.b16 %v192
  %v714 = vunpack.c.l.b16 %v193
  %v715 = vunpack.c.l.b16 %v194
  %v716 = vunpack.c.l.b16 %v195
  %v717 = vunpack.c.l.b16 %v196
  %v718 = vunpack.c.l.b16 %v197
  %v719 = vunpack.c.l.b16 %v198
  %v720 = vunpack.c.l.b16 %v199
  %v721 = vunpack.c.l.b16 %v200
  %v722 = vunpack.c.l.b16 %v201
  %v723 = vunpack.c.l.b16 %v202
  %v724 = vunpack.c.l.b16 %v203
  %v725 = vunpack.c.l.b16 %v204
  %v726 = vunpack.c.l.b16 %v205
  %v727 = vunpack.c.l.b16 %v206
  %v728 = vunpack.c.l.b16 %v207
  %v729 = vunpack.c.l.b16 %v208
  %v730 = vunpack.c.l.b16 %v209
  %v731 = vunpack.c.l.b16 %v210
  %v732 = vunpack.c.l.b16 %v211
  %v733 = vunpack.c.l.b16 %v212
  %v734 = vunpack.c.l.b16 %v213
  %v735 = vunpack.c.l.b16 %v214
  %v736 = vunpack.c.l.b16 %v215
  %v737 = vunpack.c.l.b16 %v216
  %v738 = vunpack.c.l.b16 %v217
  %v739 = vunpack.c.l.b16 %v218
  %v740 = vunpack.c.l.b16 %v219
  %v741 = vunpack.c.l.b16 %v220
  %v742 = vunpack.c.l.b16 %v221
  %v743 = vunpack.c.l.b16 %v222
  %v744 = vunpack.c.l.b16 %v223
  %v745 = vunpack.c.l.b16 %v224
  %v746 = vunpack.c.l.b16 %v225
  %v747 = vunpack.c.l.b16 %v226
  %v748 = vunpack.c.l.b16 %v227
  %v749 = vunpack.c.l.b16 %v228
  %v750 = vunpack.c.l.b16 %v229
  %v751 = vunpack.c.l.b16 %v230
  %v752 = vunpack.c.l.b16 %v231
  %v753 = vunpack.c.l.b16 %v232
  %v754 = vunpack.c.l.b16 %v233
  %v755 = vunpack.c.l.b16 %v234
  %v756 = vunpack.c.l.b16 %v235
  %v757 = vunpack.c.l.b16 %v236
  %v758 = vunpack.c.l.b16 %v237
  %v759 = vunpack.c.l.b16 %v238
  %v760 = vunpack.c.l.b16 %v239
  %v761 = vunpack.c.l.b16 %v240
  %v762 = vunpack.c.l.b16 %v241
  %v763 = vunpack.c.l.b16 %v242
  %v764 = vunpack.c.l.b16 %v243
  %v765 = vunpack.c.l.b16 %v244
  %v766 = vunpack.c.l.b16 %v245
  %v767 = vunpack.c.l.b16 %v246
  %v768 = vunpack.c.l.b16 %v247
  %v769 = vunpack.c.l.b16 %v248
  %v770 = vunpack.c.l.b16 %v249
  %v771 = vunpack.c.l.b16 %v250
  %v772 = vunpack.c.l.b16 %v251
  %v773 = vunpack.c.l.b16 %v252
  %v774 = vunpack.c.l.b16 %v253
  %v775 = vunpack.c.l.b16 %v254
  %v776 = vunpack.c.l.b16 %v255
  %v777 = vunpack.c.l.b16 %v256
  %v778 = vunpack.c.l.b16 %v257
  %v779 = vunpack.c.l.b16 %v258
  %v780 = vunpack.c.l.b16 %v259
  %v781 = vunpack.c.l.b16 %v260
  %v782 = vunpack.c.l.b16 %v261
  %v783 = vunpack.c.l.b16 %v262
  %v784 = vunpack.c.l.b16 %v263
  %v785 = vunpack.c.l.b16 %v264
  %v786 = vunpack.c.l.b16 %v265
  %v787 = vunpack.c.l.b16 %v266
  %v788 = vunpack.c.l.b16 %v267
  %v789 = vunpack.c.l.b16 %v268
  %v790 = vunpack.c.l.b16 %v269
  %v791 = vunpack.c.l.b16 %v270
  %v792 = vpack.c.b16 %v537, %v536
  %v793 = vpack.c.b16 %v539, %v538
  %v794 = vpack.c.b16 %v541, %v540
  %v795 = vpack.c.b16 %v543, %v542
  %v796 = vpack.c.b16 %v545, %v544
  %v797 = vpack.c.b16 %v547, %v546
  %v798 = vpack.c.b16 %v549, %v548
  %v799 = vpack.c.b16 %v551, %v550
  %v800 = vpack.c.b16 %v553, %v552
  %v801 = vpack.c.b16 %v555, %v554
  %v802 = vpack.c.b16 %v557, %v556
  %v803 = vpack.c.b16 %v559, %v558
  %v804 = vpack.c.b16 %v561, %v560
  %v805 = vpack.c.b16 %v563, %v562
  %v806 = vpack.c.b16 %v565, %v564
  %v807 = vpack.c.b16 %v567, %v566
  %v808 = vpack.c.b16 %v569, %v568
  %v809 = vpack.c.b16 %v571, %v570
  %v810 = vpack.c.b16 %v573, %v572
  %v811 = vpack.c.b16 %v575, %v574
  %v812 = vpack.c.b16 %v577, %v576
  %v813 = vpack.c.b16 %v579, %v578
  %v814 = vpack.c.b16 %v581, %v580
  %v815 = vpack.c.b16 %v583, %v582
  %v816 = vpack.c.b16 %v585, %v584
  %v817 = vpack.c.b16 %v587, %v586
  %v818 = vpack.c.b16 %v589, %v588
  %v819 = vpack.c.b16 %v591, %v590
  %v820 = vpack.c.b16 %v593, %v592
  %v821 = vpack.c.b16 %v595, %v594
  %v822 = vpack.c.b16 %v597, %v596
  %v823 = vpack.c.b16 %v599, %v598
  %v824 = vpack.c.b16 %v601, %v600
  %v825 = vpack.c.b16 %v603, %v602
  %v826 = vpack.c.b16 %v605, %v604
  %v827 = vpack.c.b16 %v607, %v606
  %v828 = vpack.c.b16 %v609, %v608
  %v829 = vpack.c.b16 %v611, %v610
  %v830 = vpack.c.b16 %v613, %v612
  %v831 = vpack.c.b16 %v615, %v614
  %v832 = vpack.c.b16 %v617, %v616
  %v833 = vpack.c.b16 %v619, %v618
  %v834 = vpack.c.b16 %v621, %v620
  %v835 = vpack.c.b16 %v623, %v622
  %v836 = vpack.c.b16 %v625, %v624
  %v837 = vpack.c.b16 %v627, %v626
  %v838 = vpack.c.b16 %v629, %v628
  %v839 = vpack.c.b16 %v631, %v630
  %v840 = vpack.c.b16 %v633, %v632
  %v841 = vpack.c.b16 %v635, %v634
  %v842 = vpack.c.b16 %v637, %v636
  %v843 = vpack.c.b16 %v639, %v638
  %v844 = vpack.c.b16 %v641, %v640
  %v845 = vpack.c.b16 %v643, %v642
  %v846 = vpack.c.b16 %v645, %v644
  %v847 = vpack.c.b16 %v647, %v646
  %v848 = vpack.c.b16 %v649, %v648
  %v849 = vpack.c.b16 %v651, %v650
  %v850 = vpack.c.b16 %v653, %v652
  %v851 = vpack.c.b16 %v655, %v654
  %v852 = vpack.c.b16 %v657, %v656
  %v853 = vpack.c.b16 %v659, %v658
  %v854 = vpack.c.b16 %v661, %v660
  %v855 = vpack.c.b16 %v663, %v662
  %v856 = vpack.c.b16 %v665, %v664
  %v857 = vpack.c.b16 %v667, %v666
  %v858 = vpack.c.b16 %v669, %v668
  %v859 = vpack.c.b16 %v671, %v670
  %v860 = vpack.c.b16 %v673, %v672
  %v861 = vpack.c.b16 %v675, %v674
  %v862 = vpack.c.b16 %v677, %v676
  %v863 = vpack.c.b16 %v679, %v678
  %v864 = vpack.c.b16 %v681, %v680
  %v865 = vpack.c.b16 %v683, %v682
  %v866 = vpack.c.b16 %v685, %v684
  %v867 = vpack.c.b16 %v687, %v686
  %v868 = vpack.c.b16 %v689, %v688
  %v869 = vpack.c.b16 %v691, %v690
  %v870 = vpack.c.b16 %v693, %v692
  %v871 = vpack.c.b16 %v695, %v694
  %v872 = vpack.c.b16 %v697, %v696
  %v873 = vpack.c.b16 %v699, %v698
  %v874 = vpack.c.b16 %v701, %v700
  %v875 = vpack.c.b16 %v703, %v702
  %v876 = vpack.c.b16 %v705, %v704
  %v877 = vpack.c.b16 %v707, %v706
  %v878 = vpack.c.b16 %v709, %v708
  %v879 = vpack.c.b16 %v711, %v710
  %v880 = vpack.c.b16 %v713, %v712
  %v881 = vpack.c.b16 %v715, %v714
  %v882 = vpack.c.b16 %v717, %v716
  %v883 = vpack.c.b16 %v719, %v718
  %v884 = vpack.c.b16 %v721, %v720
  %v885 = vpack.c.b16 %v723, %v722
  %v886 = vpack.c.b16 %v725, %v724
  %v887 = vpack.c.b16 %v727, %v726
  %v888 = vpack.c.b16 %v729, %v728
  %v889 = vpack.c.b16 %v731, %v730
  %v890 = vpack.c.b16 %v733, %v732
  %v891 = vpack.c.b16 %v735, %v734
  %v892 = vpack.c.b16 %v737, %v736
  %v893 = vpack.c.b16 %v739, %v738
  %v894 = vpack.c.b16 %v741, %v740
  %v895 = vpack.c.b16 %v743, %v742
  %v896 = vpack.c.b16 %v745, %v744
  %v897 = vpack.c.b16 %v747, %v746
  %v898 = vpack.c.b16 %v749, %v748
  %v899 = vpack.c.b16 %v751, %v750
  %v900 = vpack.c.b16 %v753, %v752
  %v901 = vpack.c.b16 %v755, %v754
  %v902 = vpack.c.b16 %v757, %v756
  %v903 = vpack.c.b16 %v759, %v758
  %v904 = vpack.c.b16 %v761, %v760
  %v905 = vpack.c.b16 %v763, %v762
  %v906 = vpack.c.b16 %v765, %v764
  %v907 = vpack.c.b16 %v767, %v766
  %v908 = vpack.c.b16 %v769, %v768
  %v909 = vpack.c.b16 %v771, %v770
  %v910 = vpack.c.b16 %v773, %v772
  %v911 = vpack.c.b16 %v775, %v774
  %v912 = vpack.c.b16 %v777, %v776
  %v913 = vpack.c.b16 %v779, %v778
  %v914 = vpack.c.b16 %v781, %v780
  %v915 = vpack.c.b16 %v783, %v782
  %v916 = vpack.c.b16 %v785, %v784
  %v917 = vpack.c.b16 %v787, %v786
  %v918 = vpack.c.b16 %v789, %v788
  %v919 = vpack.c.b16 %v791, %v790
  %v929 = vunpack.c.l.b16 %v271
  %v930 = vunpack.c.l.b16 %v272
  %v931 = vunpack.c.l.b16 %v273
  %v932 = vunpack.c.l.b16 %v274
  %v933 = vunpack.c.l.b16 %v275
  %v934 = vunpack.c.l.b16 %v276
  %v935 = vunpack.c.l.b16 %v277
  %v936 = vunpack.c.l.b16 %v278
  %v937 = vunpack.c.l.b16 %v279
  %v938 = vpack.c.b16 %v930, %v929
  %v939 = vpack.c.b16 %v932, %v931
  %v940 = vpack.c.b16 %v934, %v933
  %v941 = vpack.c.b16 %v936, %v935
  %v942 = vpack.c.b16 %v937, %v937
  %vm947 = vcmask 588800
  %v949 = vsel %vm947, %v792, 0
  %v952 = vsel %vm947, %v793, 0
  %v955 = vsel %vm947, %v794, 0
  %v958 = vsel %vm947, %v795, 0
  %v961 = vsel %vm947, %v796, 0
  %v964 = vsel %vm947, %v797, 0
  %v967 = vsel %vm947, %v798, 0
  %v970 = vsel %vm947, %v799, 0
  %v973 = vsel %vm947, %v800, 0
  %v976 = vsel %vm947, %v801, 0
  %v979 = vsel %vm947, %v802, 0
  %v982 = vsel %vm947, %v803, 0
  %v985 = vsel %vm947, %v804, 0
  %v988 = vsel %vm947, %v805, 0
  %v991 = vsel %vm947, %v806, 0
  %v994 = vsel %vm947, %v807, 0
  %v997 = vsel %vm947, %v808, 0
  %v1000 = vsel %vm947, %v809, 0
  %v1003 = vsel %vm947, %v810, 0
  %v1006 = vsel %vm947, %v811, 0
  %v1009 = vsel %vm947, %v812, 0
  %v1012 = vsel %vm947, %v813, 0
  %v1015 = vsel %vm947, %v814, 0
  %v1018 = vsel %vm947, %v815, 0
  %v1021 = vsel %vm947, %v816, 0
  %v1024 = vsel %vm947, %v817, 0
  %v1027 = vsel %vm947, %v818, 0
  %v1030 = vsel %vm947, %v819, 0
  %v1033 = vsel %vm947, %v820, 0
  %v1036 = vsel %vm947, %v821, 0
  %v1039 = vsel %vm947, %v822, 0
  %v1042 = vsel %vm947, %v823, 0
  %v1045 = vsel %vm947, %v824, 0
  %v1048 = vsel %vm947, %v825, 0
  %v1051 = vsel %vm947, %v826, 0
  %v1054 = vsel %vm947, %v827, 0
  %v1057 = vsel %vm947, %v828, 0
  %v1060 = vsel %vm947, %v829, 0
  %v1063 = vsel %vm947, %v830, 0
  %v1066 = vsel %vm947, %v831, 0
  %v1069 = vsel %vm947, %v832, 0
  %v1072 = vsel %vm947, %v833, 0
  %v1075 = vsel %vm947, %v834, 0
  %v1078 = vsel %vm947, %v835, 0
  %v1081 = vsel %vm947, %v836, 0
  %v1084 = vsel %vm947, %v837, 0
  %v1087 = vsel %vm947, %v838, 0
  %v1090 = vsel %vm947, %v839, 0
  %v1093 = vsel %vm947, %v840, 0
  %v1096 = vsel %vm947, %v841, 0
  %v1099 = vsel %vm947, %v842, 0
  %v1102 = vsel %vm947, %v843, 0
  %v1105 = vsel %vm947, %v844, 0
  %v1108 = vsel %vm947, %v845, 0
  %v1111 = vsel %vm947, %v846, 0
  %v1114 = vsel %vm947, %v847, 0
  %v1117 = vsel %vm947, %v848, 0
  %v1120 = vsel %vm947, %v849, 0
  %v1123 = vsel %vm947, %v850, 0
  %v1126 = vsel %vm947, %v851, 0
  %v1129 = vsel %vm947, %v852, 0
  %v1132 = vsel %vm947, %v853, 0
  %v1135 = vsel %vm947, %v854, 0
  %v1138 = vsel %vm947, %v855, 0
  %v1141 = vsel %vm947, %v856, 0
  %v1144 = vsel %vm947, %v857, 0
  %v1147 = vsel %vm947, %v858, 0
  %v1150 = vsel %vm947, %v859, 0
  %v1153 = vsel %vm947, %v860, 0
  %v1156 = vsel %vm947, %v861, 0
  %v1159 = vsel %vm947, %v862, 0
  %v1162 = vsel %vm947, %v863, 0
  %v1165 = vsel %vm947, %v864, 0
  %v1168 = vsel %vm947, %v865, 0
  %v1171 = vsel %vm947, %v866, 0
  %v1174 = vsel %vm947, %v867, 0
  %v1177 = vsel %vm947, %v868, 0
  %v1180 = vsel %vm947, %v869, 0
  %v1183 = vsel %vm947, %v870, 0
  %v1186 = vsel %vm947, %v871, 0
  %v1189 = vsel %vm947, %v872, 0
  %v1192 = vsel %vm947, %v873, 0
  %v1195 = vsel %vm947, %v874, 0
  %v1198 = vsel %vm947, %v875, 0
  %v1201 = vsel %vm947, %v876, 0
  %v1204 = vsel %vm947, %v877, 0
  %v1207 = vsel %vm947, %v878, 0
  %v1210 = vsel %vm947, %v879, 0
  %v1213 = vsel %vm947, %v880, 0
  %v1216 = vsel %vm947, %v881, 0
  %v1219 = vsel %vm947, %v882, 0
  %v1222 = vsel %vm947, %v883, 0
  %v1225 = vsel %vm947, %v884, 0
  %v1228 = vsel %vm947, %v885, 0
  %v1231 = vsel %vm947, %v886, 0
  %v1234 = vsel %vm947, %v887, 0
  %v1237 = vsel %vm947, %v888, 0
  %v1240 = vsel %vm947, %v889, 0
  %v1243 = vsel %vm947, %v890, 0
  %v1246 = vsel %vm947, %v891, 0
  %v1249 = vsel %vm947, %v892, 0
  %v1252 = vsel %vm947, %v893, 0
  %v1255 = vsel %vm947, %v894, 0
  %v1258 = vsel %vm947, %v895, 0
  %v1261 = vsel %vm947, %v896, 0
  %v1264 = vsel %vm947, %v897, 0
  %v1267 = vsel %vm947, %v898, 0
  %v1270 = vsel %vm947, %v899, 0
  %v1273 = vsel %vm947, %v900, 0
  %v1276 = vsel %vm947, %v901, 0
  %v1279 = vsel %vm947, %v902, 0
  %v1282 = vsel %vm947, %v903, 0
  %v1285 = vsel %vm947, %v904, 0
  %v1288 = vsel %vm947, %v905, 0
  %v1291 = vsel %vm947, %v906, 0
  %v1294 = vsel %vm947, %v907, 0
  %v1297 = vsel %vm947, %v908, 0
  %v1300 = vsel %vm947, %v909, 0
  %v1303 = vsel %vm947, %v910, 0
  %v1306 = vsel %vm947, %v911, 0
  %v1309 = vsel %vm947, %v912, 0
  %v1312 = vsel %vm947, %v913, 0
  %v1315 = vsel %vm947, %v914, 0
  %v1318 = vsel %vm947, %v915, 0
  %v1321 = vsel %vm947, %v916, 0
  %v1324 = vsel %vm947, %v917, 0
  %v1327 = vsel %vm947, %v918, 0
  %v1330 = vsel %vm947, %v919, 0
  %vm1332 = vcmask 1043456
  %v1334 = vsel %vm1332, %v942, 0
  %1336 = vmatpush.bf16.msra.mxu0 0
  %1337 = vmatpush.bf16.msra.mxu0 0
  %1338 = vmatpush.bf16.msra.mxu0 0
  %1339 = vmatpush.bf16.msra.mxu0 %v1334
  %1340 = vmatpush.bf16.msra.mxu0 %v941
  %1341 = vmatpush.bf16.msra.mxu0 %v940
  %1342 = vmatpush.bf16.msra.mxu0 %v939
  %1343 = vmatpush.bf16.msra.mxu0 %v938
  %1344 = vmatmul.bf16.gmra.mxu0 %v949
  %v1345 = vpop.f32.mrf.mxu0
  %v1346 = vadd.f32 0.0, %v1345
  %v1347 = vpop.f32.mrf.mxu0
  %v1348 = vadd.f32 0.0, %v1347
  %1349 = vmatmul.bf16.gmra.mxu0 %v952
  %v1350 = vpop.f32.mrf.mxu0
  %v1351 = vadd.f32 0.0, %v1350
  %v1352 = vpop.f32.mrf.mxu0
  %v1353 = vadd.f32 0.0, %v1352
  %1354 = vmatmul.bf16.gmra.mxu0 %v955
  %v1355 = vpop.f32.mrf.mxu0
  %v1356 = vadd.f32 0.0, %v1355
  %v1357 = vpop.f32.mrf.mxu0
  %v1358 = vadd.f32 0.0, %v1357
  %1359 = vmatmul.bf16.gmra.mxu0 %v958
  %v1360 = vpop.f32.mrf.mxu0
  %v1361 = vadd.f32 0.0, %v1360
  %v1362 = vpop.f32.mrf.mxu0
  %v1363 = vadd.f32 0.0, %v1362
  %1364 = vmatmul.bf16.gmra.mxu0 %v961
  %v1365 = vpop.f32.mrf.mxu0
  %v1366 = vadd.f32 0.0, %v1365
  %v1367 = vpop.f32.mrf.mxu0
  %v1368 = vadd.f32 0.0, %v1367
  %1369 = vmatmul.bf16.gmra.mxu0 %v964
  %v1370 = vpop.f32.mrf.mxu0
  %v1371 = vadd.f32 0.0, %v1370
  %v1372 = vpop.f32.mrf.mxu0
  %v1373 = vadd.f32 0.0, %v1372
  %1374 = vmatmul.bf16.gmra.mxu0 %v967
  %v1375 = vpop.f32.mrf.mxu0
  %v1376 = vadd.f32 0.0, %v1375
  %v1377 = vpop.f32.mrf.mxu0
  %v1378 = vadd.f32 0.0, %v1377
  %1379 = vmatmul.bf16.gmra.mxu0 %v970
  %v1380 = vpop.f32.mrf.mxu0
  %v1381 = vadd.f32 0.0, %v1380
  %v1382 = vpop.f32.mrf.mxu0
  %v1383 = vadd.f32 0.0, %v1382
  %1384 = vmatmul.bf16.gmra.mxu0 %v973
  %v1385 = vpop.f32.mrf.mxu0
  %v1386 = vadd.f32 0.0, %v1385
  %v1387 = vpop.f32.mrf.mxu0
  %v1388 = vadd.f32 0.0, %v1387
  %1389 = vmatmul.bf16.gmra.mxu0 %v976
  %v1390 = vpop.f32.mrf.mxu0
  %v1391 = vadd.f32 0.0, %v1390
  %v1392 = vpop.f32.mrf.mxu0
  %v1393 = vadd.f32 0.0, %v1392
  %1394 = vmatmul.bf16.gmra.mxu0 %v979
  %v1395 = vpop.f32.mrf.mxu0
  %v1396 = vadd.f32 0.0, %v1395
  %v1397 = vpop.f32.mrf.mxu0
  %v1398 = vadd.f32 0.0, %v1397
  %1399 = vmatmul.bf16.gmra.mxu0 %v982
  %v1400 = vpop.f32.mrf.mxu0
  %v1401 = vadd.f32 0.0, %v1400
  %v1402 = vpop.f32.mrf.mxu0
  %v1403 = vadd.f32 0.0, %v1402
  %1404 = vmatmul.bf16.gmra.mxu0 %v985
  %v1405 = vpop.f32.mrf.mxu0
  %v1406 = vadd.f32 0.0, %v1405
  %v1407 = vpop.f32.mrf.mxu0
  %v1408 = vadd.f32 0.0, %v1407
  %1409 = vmatmul.bf16.gmra.mxu0 %v988
  %v1410 = vpop.f32.mrf.mxu0
  %v1411 = vadd.f32 0.0, %v1410
  %v1412 = vpop.f32.mrf.mxu0
  %v1413 = vadd.f32 0.0, %v1412
  %1414 = vmatmul.bf16.gmra.mxu0 %v991
  %v1415 = vpop.f32.mrf.mxu0
  %v1416 = vadd.f32 0.0, %v1415
  %v1417 = vpop.f32.mrf.mxu0
  %v1418 = vadd.f32 0.0, %v1417
  %1419 = vmatmul.bf16.gmra.mxu0 %v994
  %v1420 = vpop.f32.mrf.mxu0
  %v1421 = vadd.f32 0.0, %v1420
  %v1422 = vpop.f32.mrf.mxu0
  %v1423 = vadd.f32 0.0, %v1422
  %1424 = vmatmul.bf16.gmra.mxu0 %v997
  %v1425 = vpop.f32.mrf.mxu0
  %v1426 = vadd.f32 0.0, %v1425
  %v1427 = vpop.f32.mrf.mxu0
  %v1428 = vadd.f32 0.0, %v1427
  %1429 = vmatmul.bf16.gmra.mxu0 %v1000
  %v1430 = vpop.f32.mrf.mxu0
  %v1431 = vadd.f32 0.0, %v1430
  %v1432 = vpop.f32.mrf.mxu0
  %v1433 = vadd.f32 0.0, %v1432
  %1434 = vmatmul.bf16.gmra.mxu0 %v1003
  %v1435 = vpop.f32.mrf.mxu0
  %v1436 = vadd.f32 0.0, %v1435
  %v1437 = vpop.f32.mrf.mxu0
  %v1438 = vadd.f32 0.0, %v1437
  %1439 = vmatmul.bf16.gmra.mxu0 %v1006
  %v1440 = vpop.f32.mrf.mxu0
  %v1441 = vadd.f32 0.0, %v1440
  %v1442 = vpop.f32.mrf.mxu0
  %v1443 = vadd.f32 0.0, %v1442
  %1444 = vmatmul.bf16.gmra.mxu0 %v1009
  %v1445 = vpop.f32.mrf.mxu0
  %v1446 = vadd.f32 0.0, %v1445
  %v1447 = vpop.f32.mrf.mxu0
  %v1448 = vadd.f32 0.0, %v1447
  %1449 = vmatmul.bf16.gmra.mxu0 %v1012
  %v1450 = vpop.f32.mrf.mxu0
  %v1451 = vadd.f32 0.0, %v1450
  %v1452 = vpop.f32.mrf.mxu0
  %v1453 = vadd.f32 0.0, %v1452
  %1454 = vmatmul.bf16.gmra.mxu0 %v1015
  %v1455 = vpop.f32.mrf.mxu0
  %v1456 = vadd.f32 0.0, %v1455
  %v1457 = vpop.f32.mrf.mxu0
  %v1458 = vadd.f32 0.0, %v1457
  %1459 = vmatmul.bf16.gmra.mxu0 %v1018
  %v1460 = vpop.f32.mrf.mxu0
  %v1461 = vadd.f32 0.0, %v1460
  %v1462 = vpop.f32.mrf.mxu0
  %v1463 = vadd.f32 0.0, %v1462
  %1464 = vmatmul.bf16.gmra.mxu0 %v1021
  %v1465 = vpop.f32.mrf.mxu0
  %v1466 = vadd.f32 0.0, %v1465
  %v1467 = vpop.f32.mrf.mxu0
  %v1468 = vadd.f32 0.0, %v1467
  %1469 = vmatmul.bf16.gmra.mxu0 %v1024
  %v1470 = vpop.f32.mrf.mxu0
  %v1471 = vadd.f32 0.0, %v1470
  %v1472 = vpop.f32.mrf.mxu0
  %v1473 = vadd.f32 0.0, %v1472
  %1474 = vmatmul.bf16.gmra.mxu0 %v1027
  %v1475 = vpop.f32.mrf.mxu0
  %v1476 = vadd.f32 0.0, %v1475
  %v1477 = vpop.f32.mrf.mxu0
  %v1478 = vadd.f32 0.0, %v1477
  %1479 = vmatmul.bf16.gmra.mxu0 %v1030
  %v1480 = vpop.f32.mrf.mxu0
  %v1481 = vadd.f32 0.0, %v1480
  %v1482 = vpop.f32.mrf.mxu0
  %v1483 = vadd.f32 0.0, %v1482
  %1484 = vmatmul.bf16.gmra.mxu0 %v1033
  %v1485 = vpop.f32.mrf.mxu0
  %v1486 = vadd.f32 0.0, %v1485
  %v1487 = vpop.f32.mrf.mxu0
  %v1488 = vadd.f32 0.0, %v1487
  %1489 = vmatmul.bf16.gmra.mxu0 %v1036
  %v1490 = vpop.f32.mrf.mxu0
  %v1491 = vadd.f32 0.0, %v1490
  %v1492 = vpop.f32.mrf.mxu0
  %v1493 = vadd.f32 0.0, %v1492
  %1494 = vmatmul.bf16.gmra.mxu0 %v1039
  %v1495 = vpop.f32.mrf.mxu0
  %v1496 = vadd.f32 0.0, %v1495
  %v1497 = vpop.f32.mrf.mxu0
  %v1498 = vadd.f32 0.0, %v1497
  %1499 = vmatmul.bf16.gmra.mxu0 %v1042
  %v1500 = vpop.f32.mrf.mxu0
  %v1501 = vadd.f32 0.0, %v1500
  %v1502 = vpop.f32.mrf.mxu0
  %v1503 = vadd.f32 0.0, %v1502
  %1504 = vmatmul.bf16.gmra.mxu0 %v1045
  %v1505 = vpop.f32.mrf.mxu0
  %v1506 = vadd.f32 0.0, %v1505
  %v1507 = vpop.f32.mrf.mxu0
  %v1508 = vadd.f32 0.0, %v1507
  %1509 = vmatmul.bf16.gmra.mxu0 %v1048
  %v1510 = vpop.f32.mrf.mxu0
  %v1511 = vadd.f32 0.0, %v1510
  %v1512 = vpop.f32.mrf.mxu0
  %v1513 = vadd.f32 0.0, %v1512
  %1514 = vmatmul.bf16.gmra.mxu0 %v1051
  %v1515 = vpop.f32.mrf.mxu0
  %v1516 = vadd.f32 0.0, %v1515
  %v1517 = vpop.f32.mrf.mxu0
  %v1518 = vadd.f32 0.0, %v1517
  %1519 = vmatmul.bf16.gmra.mxu0 %v1054
  %v1520 = vpop.f32.mrf.mxu0
  %v1521 = vadd.f32 0.0, %v1520
  %v1522 = vpop.f32.mrf.mxu0
  %v1523 = vadd.f32 0.0, %v1522
  %1524 = vmatmul.bf16.gmra.mxu0 %v1057
  %v1525 = vpop.f32.mrf.mxu0
  %v1526 = vadd.f32 0.0, %v1525
  %v1527 = vpop.f32.mrf.mxu0
  %v1528 = vadd.f32 0.0, %v1527
  %1529 = vmatmul.bf16.gmra.mxu0 %v1060
  %v1530 = vpop.f32.mrf.mxu0
  %v1531 = vadd.f32 0.0, %v1530
  %v1532 = vpop.f32.mrf.mxu0
  %v1533 = vadd.f32 0.0, %v1532
  %1534 = vmatmul.bf16.gmra.mxu0 %v1063
  %v1535 = vpop.f32.mrf.mxu0
  %v1536 = vadd.f32 0.0, %v1535
  %v1537 = vpop.f32.mrf.mxu0
  %v1538 = vadd.f32 0.0, %v1537
  %1539 = vmatmul.bf16.gmra.mxu0 %v1066
  %v1540 = vpop.f32.mrf.mxu0
  %v1541 = vadd.f32 0.0, %v1540
  %v1542 = vpop.f32.mrf.mxu0
  %v1543 = vadd.f32 0.0, %v1542
  %1544 = vmatmul.bf16.gmra.mxu0 %v1069
  %v1545 = vpop.f32.mrf.mxu0
  %v1546 = vadd.f32 0.0, %v1545
  %v1547 = vpop.f32.mrf.mxu0
  %v1548 = vadd.f32 0.0, %v1547
  %1549 = vmatmul.bf16.gmra.mxu0 %v1072
  %v1550 = vpop.f32.mrf.mxu0
  %v1551 = vadd.f32 0.0, %v1550
  %v1552 = vpop.f32.mrf.mxu0
  %v1553 = vadd.f32 0.0, %v1552
  %1554 = vmatmul.bf16.gmra.mxu0 %v1075
  %v1555 = vpop.f32.mrf.mxu0
  %v1556 = vadd.f32 0.0, %v1555
  %v1557 = vpop.f32.mrf.mxu0
  %v1558 = vadd.f32 0.0, %v1557
  %1559 = vmatmul.bf16.gmra.mxu0 %v1078
  %v1560 = vpop.f32.mrf.mxu0
  %v1561 = vadd.f32 0.0, %v1560
  %v1562 = vpop.f32.mrf.mxu0
  %v1563 = vadd.f32 0.0, %v1562
  %1564 = vmatmul.bf16.gmra.mxu0 %v1081
  %v1565 = vpop.f32.mrf.mxu0
  %v1566 = vadd.f32 0.0, %v1565
  %v1567 = vpop.f32.mrf.mxu0
  %v1568 = vadd.f32 0.0, %v1567
  %1569 = vmatmul.bf16.gmra.mxu0 %v1084
  %v1570 = vpop.f32.mrf.mxu0
  %v1571 = vadd.f32 0.0, %v1570
  %v1572 = vpop.f32.mrf.mxu0
  %v1573 = vadd.f32 0.0, %v1572
  %1574 = vmatmul.bf16.gmra.mxu0 %v1087
  %v1575 = vpop.f32.mrf.mxu0
  %v1576 = vadd.f32 0.0, %v1575
  %v1577 = vpop.f32.mrf.mxu0
  %v1578 = vadd.f32 0.0, %v1577
  %1579 = vmatmul.bf16.gmra.mxu0 %v1090
  %v1580 = vpop.f32.mrf.mxu0
  %v1581 = vadd.f32 0.0, %v1580
  %v1582 = vpop.f32.mrf.mxu0
  %v1583 = vadd.f32 0.0, %v1582
  %1584 = vmatmul.bf16.gmra.mxu0 %v1093
  %v1585 = vpop.f32.mrf.mxu0
  %v1586 = vadd.f32 0.0, %v1585
  %v1587 = vpop.f32.mrf.mxu0
  %v1588 = vadd.f32 0.0, %v1587
  %1589 = vmatmul.bf16.gmra.mxu0 %v1096
  %v1590 = vpop.f32.mrf.mxu0
  %v1591 = vadd.f32 0.0, %v1590
  %v1592 = vpop.f32.mrf.mxu0
  %v1593 = vadd.f32 0.0, %v1592
  %1594 = vmatmul.bf16.gmra.mxu0 %v1099
  %v1595 = vpop.f32.mrf.mxu0
  %v1596 = vadd.f32 0.0, %v1595
  %v1597 = vpop.f32.mrf.mxu0
  %v1598 = vadd.f32 0.0, %v1597
  %1599 = vmatmul.bf16.gmra.mxu0 %v1102
  %v1600 = vpop.f32.mrf.mxu0
  %v1601 = vadd.f32 0.0, %v1600
  %v1602 = vpop.f32.mrf.mxu0
  %v1603 = vadd.f32 0.0, %v1602
  %1604 = vmatmul.bf16.gmra.mxu0 %v1105
  %v1605 = vpop.f32.mrf.mxu0
  %v1606 = vadd.f32 0.0, %v1605
  %v1607 = vpop.f32.mrf.mxu0
  %v1608 = vadd.f32 0.0, %v1607
  %1609 = vmatmul.bf16.gmra.mxu0 %v1108
  %v1610 = vpop.f32.mrf.mxu0
  %v1611 = vadd.f32 0.0, %v1610
  %v1612 = vpop.f32.mrf.mxu0
  %v1613 = vadd.f32 0.0, %v1612
  %1614 = vmatmul.bf16.gmra.mxu0 %v1111
  %v1615 = vpop.f32.mrf.mxu0
  %v1616 = vadd.f32 0.0, %v1615
  %v1617 = vpop.f32.mrf.mxu0
  %v1618 = vadd.f32 0.0, %v1617
  %1619 = vmatmul.bf16.gmra.mxu0 %v1114
  %v1620 = vpop.f32.mrf.mxu0
  %v1621 = vadd.f32 0.0, %v1620
  %v1622 = vpop.f32.mrf.mxu0
  %v1623 = vadd.f32 0.0, %v1622
  %1624 = vmatmul.bf16.gmra.mxu0 %v1117
  %v1625 = vpop.f32.mrf.mxu0
  %v1626 = vadd.f32 0.0, %v1625
  %v1627 = vpop.f32.mrf.mxu0
  %v1628 = vadd.f32 0.0, %v1627
  %1629 = vmatmul.bf16.gmra.mxu0 %v1120
  %v1630 = vpop.f32.mrf.mxu0
  %v1631 = vadd.f32 0.0, %v1630
  %v1632 = vpop.f32.mrf.mxu0
  %v1633 = vadd.f32 0.0, %v1632
  %1634 = vmatmul.bf16.gmra.mxu0 %v1123
  %v1635 = vpop.f32.mrf.mxu0
  %v1636 = vadd.f32 0.0, %v1635
  %v1637 = vpop.f32.mrf.mxu0
  %v1638 = vadd.f32 0.0, %v1637
  %1639 = vmatmul.bf16.gmra.mxu0 %v1126
  %v1640 = vpop.f32.mrf.mxu0
  %v1641 = vadd.f32 0.0, %v1640
  %v1642 = vpop.f32.mrf.mxu0
  %v1643 = vadd.f32 0.0, %v1642
  %1644 = vmatmul.bf16.gmra.mxu0 %v1129
  %v1645 = vpop.f32.mrf.mxu0
  %v1646 = vadd.f32 0.0, %v1645
  %v1647 = vpop.f32.mrf.mxu0
  %v1648 = vadd.f32 0.0, %v1647
  %1649 = vmatmul.bf16.gmra.mxu0 %v1132
  %v1650 = vpop.f32.mrf.mxu0
  %v1651 = vadd.f32 0.0, %v1650
  %v1652 = vpop.f32.mrf.mxu0
  %v1653 = vadd.f32 0.0, %v1652
  %1654 = vmatmul.bf16.gmra.mxu0 %v1135
  %v1655 = vpop.f32.mrf.mxu0
  %v1656 = vadd.f32 0.0, %v1655
  %v1657 = vpop.f32.mrf.mxu0
  %v1658 = vadd.f32 0.0, %v1657
  %1659 = vmatmul.bf16.gmra.mxu0 %v1138
  %v1660 = vpop.f32.mrf.mxu0
  %v1661 = vadd.f32 0.0, %v1660
  %v1662 = vpop.f32.mrf.mxu0
  %v1663 = vadd.f32 0.0, %v1662
  %1664 = vmatmul.bf16.gmra.mxu0 %v1141
  %v1665 = vpop.f32.mrf.mxu0
  %v1666 = vadd.f32 0.0, %v1665
  %v1667 = vpop.f32.mrf.mxu0
  %v1668 = vadd.f32 0.0, %v1667
  %1669 = vmatmul.bf16.gmra.mxu0 %v1144
  %v1670 = vpop.f32.mrf.mxu0
  %v1671 = vadd.f32 0.0, %v1670
  %v1672 = vpop.f32.mrf.mxu0
  %v1673 = vadd.f32 0.0, %v1672
  %1674 = vmatmul.bf16.gmra.mxu0 %v1147
  %v1675 = vpop.f32.mrf.mxu0
  %v1676 = vadd.f32 0.0, %v1675
  %v1677 = vpop.f32.mrf.mxu0
  %v1678 = vadd.f32 0.0, %v1677
  %1679 = vmatmul.bf16.gmra.mxu0 %v1150
  %v1680 = vpop.f32.mrf.mxu0
  %v1681 = vadd.f32 0.0, %v1680
  %v1682 = vpop.f32.mrf.mxu0
  %v1683 = vadd.f32 0.0, %v1682
  %1684 = vmatmul.bf16.gmra.mxu0 %v1153
  %v1685 = vpop.f32.mrf.mxu0
  %v1686 = vadd.f32 0.0, %v1685
  %v1687 = vpop.f32.mrf.mxu0
  %v1688 = vadd.f32 0.0, %v1687
  %1689 = vmatmul.bf16.gmra.mxu0 %v1156
  %v1690 = vpop.f32.mrf.mxu0
  %v1691 = vadd.f32 0.0, %v1690
  %v1692 = vpop.f32.mrf.mxu0
  %v1693 = vadd.f32 0.0, %v1692
  %1694 = vmatmul.bf16.gmra.mxu0 %v1159
  %v1695 = vpop.f32.mrf.mxu0
  %v1696 = vadd.f32 0.0, %v1695
  %v1697 = vpop.f32.mrf.mxu0
  %v1698 = vadd.f32 0.0, %v1697
  %1699 = vmatmul.bf16.gmra.mxu0 %v1162
  %v1700 = vpop.f32.mrf.mxu0
  %v1701 = vadd.f32 0.0, %v1700
  %v1702 = vpop.f32.mrf.mxu0
  %v1703 = vadd.f32 0.0, %v1702
  %1704 = vmatmul.bf16.gmra.mxu0 %v1165
  %v1705 = vpop.f32.mrf.mxu0
  %v1706 = vadd.f32 0.0, %v1705
  %v1707 = vpop.f32.mrf.mxu0
  %v1708 = vadd.f32 0.0, %v1707
  %1709 = vmatmul.bf16.gmra.mxu0 %v1168
  %v1710 = vpop.f32.mrf.mxu0
  %v1711 = vadd.f32 0.0, %v1710
  %v1712 = vpop.f32.mrf.mxu0
  %v1713 = vadd.f32 0.0, %v1712
  %1714 = vmatmul.bf16.gmra.mxu0 %v1171
  %v1715 = vpop.f32.mrf.mxu0
  %v1716 = vadd.f32 0.0, %v1715
  %v1717 = vpop.f32.mrf.mxu0
  %v1718 = vadd.f32 0.0, %v1717
  %1719 = vmatmul.bf16.gmra.mxu0 %v1174
  %v1720 = vpop.f32.mrf.mxu0
  %v1721 = vadd.f32 0.0, %v1720
  %v1722 = vpop.f32.mrf.mxu0
  %v1723 = vadd.f32 0.0, %v1722
  %1724 = vmatmul.bf16.gmra.mxu0 %v1177
  %v1725 = vpop.f32.mrf.mxu0
  %v1726 = vadd.f32 0.0, %v1725
  %v1727 = vpop.f32.mrf.mxu0
  %v1728 = vadd.f32 0.0, %v1727
  %1729 = vmatmul.bf16.gmra.mxu0 %v1180
  %v1730 = vpop.f32.mrf.mxu0
  %v1731 = vadd.f32 0.0, %v1730
  %v1732 = vpop.f32.mrf.mxu0
  %v1733 = vadd.f32 0.0, %v1732
  %1734 = vmatmul.bf16.gmra.mxu0 %v1183
  %v1735 = vpop.f32.mrf.mxu0
  %v1736 = vadd.f32 0.0, %v1735
  %v1737 = vpop.f32.mrf.mxu0
  %v1738 = vadd.f32 0.0, %v1737
  %1739 = vmatmul.bf16.gmra.mxu0 %v1186
  %v1740 = vpop.f32.mrf.mxu0
  %v1741 = vadd.f32 0.0, %v1740
  %v1742 = vpop.f32.mrf.mxu0
  %v1743 = vadd.f32 0.0, %v1742
  %1744 = vmatmul.bf16.gmra.mxu0 %v1189
  %v1745 = vpop.f32.mrf.mxu0
  %v1746 = vadd.f32 0.0, %v1745
  %v1747 = vpop.f32.mrf.mxu0
  %v1748 = vadd.f32 0.0, %v1747
  %1749 = vmatmul.bf16.gmra.mxu0 %v1192
  %v1750 = vpop.f32.mrf.mxu0
  %v1751 = vadd.f32 0.0, %v1750
  %v1752 = vpop.f32.mrf.mxu0
  %v1753 = vadd.f32 0.0, %v1752
  %1754 = vmatmul.bf16.gmra.mxu0 %v1195
  %v1755 = vpop.f32.mrf.mxu0
  %v1756 = vadd.f32 0.0, %v1755
  %v1757 = vpop.f32.mrf.mxu0
  %v1758 = vadd.f32 0.0, %v1757
  %1759 = vmatmul.bf16.gmra.mxu0 %v1198
  %v1760 = vpop.f32.mrf.mxu0
  %v1761 = vadd.f32 0.0, %v1760
  %v1762 = vpop.f32.mrf.mxu0
  %v1763 = vadd.f32 0.0, %v1762
  %1764 = vmatmul.bf16.gmra.mxu0 %v1201
  %v1765 = vpop.f32.mrf.mxu0
  %v1766 = vadd.f32 0.0, %v1765
  %v1767 = vpop.f32.mrf.mxu0
  %v1768 = vadd.f32 0.0, %v1767
  %1769 = vmatmul.bf16.gmra.mxu0 %v1204
  %v1770 = vpop.f32.mrf.mxu0
  %v1771 = vadd.f32 0.0, %v1770
  %v1772 = vpop.f32.mrf.mxu0
  %v1773 = vadd.f32 0.0, %v1772
  %1774 = vmatmul.bf16.gmra.mxu0 %v1207
  %v1775 = vpop.f32.mrf.mxu0
  %v1776 = vadd.f32 0.0, %v1775
  %v1777 = vpop.f32.mrf.mxu0
  %v1778 = vadd.f32 0.0, %v1777
  %1779 = vmatmul.bf16.gmra.mxu0 %v1210
  %v1780 = vpop.f32.mrf.mxu0
  %v1781 = vadd.f32 0.0, %v1780
  %v1782 = vpop.f32.mrf.mxu0
  %v1783 = vadd.f32 0.0, %v1782
  %1784 = vmatmul.bf16.gmra.mxu0 %v1213
  %v1785 = vpop.f32.mrf.mxu0
  %v1786 = vadd.f32 0.0, %v1785
  %v1787 = vpop.f32.mrf.mxu0
  %v1788 = vadd.f32 0.0, %v1787
  %1789 = vmatmul.bf16.gmra.mxu0 %v1216
  %v1790 = vpop.f32.mrf.mxu0
  %v1791 = vadd.f32 0.0, %v1790
  %v1792 = vpop.f32.mrf.mxu0
  %v1793 = vadd.f32 0.0, %v1792
  %1794 = vmatmul.bf16.gmra.mxu0 %v1219
  %v1795 = vpop.f32.mrf.mxu0
  %v1796 = vadd.f32 0.0, %v1795
  %v1797 = vpop.f32.mrf.mxu0
  %v1798 = vadd.f32 0.0, %v1797
  %1799 = vmatmul.bf16.gmra.mxu0 %v1222
  %v1800 = vpop.f32.mrf.mxu0
  %v1801 = vadd.f32 0.0, %v1800
  %v1802 = vpop.f32.mrf.mxu0
  %v1803 = vadd.f32 0.0, %v1802
  %1804 = vmatmul.bf16.gmra.mxu0 %v1225
  %v1805 = vpop.f32.mrf.mxu0
  %v1806 = vadd.f32 0.0, %v1805
  %v1807 = vpop.f32.mrf.mxu0
  %v1808 = vadd.f32 0.0, %v1807
  %1809 = vmatmul.bf16.gmra.mxu0 %v1228
  %v1810 = vpop.f32.mrf.mxu0
  %v1811 = vadd.f32 0.0, %v1810
  %v1812 = vpop.f32.mrf.mxu0
  %v1813 = vadd.f32 0.0, %v1812
  %1814 = vmatmul.bf16.gmra.mxu0 %v1231
  %v1815 = vpop.f32.mrf.mxu0
  %v1816 = vadd.f32 0.0, %v1815
  %v1817 = vpop.f32.mrf.mxu0
  %v1818 = vadd.f32 0.0, %v1817
  %1819 = vmatmul.bf16.gmra.mxu0 %v1234
  %v1820 = vpop.f32.mrf.mxu0
  %v1821 = vadd.f32 0.0, %v1820
  %v1822 = vpop.f32.mrf.mxu0
  %v1823 = vadd.f32 0.0, %v1822
  %1824 = vmatmul.bf16.gmra.mxu0 %v1237
  %v1825 = vpop.f32.mrf.mxu0
  %v1826 = vadd.f32 0.0, %v1825
  %v1827 = vpop.f32.mrf.mxu0
  %v1828 = vadd.f32 0.0, %v1827
  %1829 = vmatmul.bf16.gmra.mxu0 %v1240
  %v1830 = vpop.f32.mrf.mxu0
  %v1831 = vadd.f32 0.0, %v1830
  %v1832 = vpop.f32.mrf.mxu0
  %v1833 = vadd.f32 0.0, %v1832
  %1834 = vmatmul.bf16.gmra.mxu0 %v1243
  %v1835 = vpop.f32.mrf.mxu0
  %v1836 = vadd.f32 0.0, %v1835
  %v1837 = vpop.f32.mrf.mxu0
  %v1838 = vadd.f32 0.0, %v1837
  %1839 = vmatmul.bf16.gmra.mxu0 %v1246
  %v1840 = vpop.f32.mrf.mxu0
  %v1841 = vadd.f32 0.0, %v1840
  %v1842 = vpop.f32.mrf.mxu0
  %v1843 = vadd.f32 0.0, %v1842
  %1844 = vmatmul.bf16.gmra.mxu0 %v1249
  %v1845 = vpop.f32.mrf.mxu0
  %v1846 = vadd.f32 0.0, %v1845
  %v1847 = vpop.f32.mrf.mxu0
  %v1848 = vadd.f32 0.0, %v1847
  %1849 = vmatmul.bf16.gmra.mxu0 %v1252
  %v1850 = vpop.f32.mrf.mxu0
  %v1851 = vadd.f32 0.0, %v1850
  %v1852 = vpop.f32.mrf.mxu0
  %v1853 = vadd.f32 0.0, %v1852
  %1854 = vmatmul.bf16.gmra.mxu0 %v1255
  %v1855 = vpop.f32.mrf.mxu0
  %v1856 = vadd.f32 0.0, %v1855
  %v1857 = vpop.f32.mrf.mxu0
  %v1858 = vadd.f32 0.0, %v1857
  %1859 = vmatmul.bf16.gmra.mxu0 %v1258
  %v1860 = vpop.f32.mrf.mxu0
  %v1861 = vadd.f32 0.0, %v1860
  %v1862 = vpop.f32.mrf.mxu0
  %v1863 = vadd.f32 0.0, %v1862
  %1864 = vmatmul.bf16.gmra.mxu0 %v1261
  %v1865 = vpop.f32.mrf.mxu0
  %v1866 = vadd.f32 0.0, %v1865
  %v1867 = vpop.f32.mrf.mxu0
  %v1868 = vadd.f32 0.0, %v1867
  %1869 = vmatmul.bf16.gmra.mxu0 %v1264
  %v1870 = vpop.f32.mrf.mxu0
  %v1871 = vadd.f32 0.0, %v1870
  %v1872 = vpop.f32.mrf.mxu0
  %v1873 = vadd.f32 0.0, %v1872
  %1874 = vmatmul.bf16.gmra.mxu0 %v1267
  %v1875 = vpop.f32.mrf.mxu0
  %v1876 = vadd.f32 0.0, %v1875
  %v1877 = vpop.f32.mrf.mxu0
  %v1878 = vadd.f32 0.0, %v1877
  %1879 = vmatmul.bf16.gmra.mxu0 %v1270
  %v1880 = vpop.f32.mrf.mxu0
  %v1881 = vadd.f32 0.0, %v1880
  %v1882 = vpop.f32.mrf.mxu0
  %v1883 = vadd.f32 0.0, %v1882
  %1884 = vmatmul.bf16.gmra.mxu0 %v1273
  %v1885 = vpop.f32.mrf.mxu0
  %v1886 = vadd.f32 0.0, %v1885
  %v1887 = vpop.f32.mrf.mxu0
  %v1888 = vadd.f32 0.0, %v1887
  %1889 = vmatmul.bf16.gmra.mxu0 %v1276
  %v1890 = vpop.f32.mrf.mxu0
  %v1891 = vadd.f32 0.0, %v1890
  %v1892 = vpop.f32.mrf.mxu0
  %v1893 = vadd.f32 0.0, %v1892
  %1894 = vmatmul.bf16.gmra.mxu0 %v1279
  %v1895 = vpop.f32.mrf.mxu0
  %v1896 = vadd.f32 0.0, %v1895
  %v1897 = vpop.f32.mrf.mxu0
  %v1898 = vadd.f32 0.0, %v1897
  %1899 = vmatmul.bf16.gmra.mxu0 %v1282
  %v1900 = vpop.f32.mrf.mxu0
  %v1901 = vadd.f32 0.0, %v1900
  %v1902 = vpop.f32.mrf.mxu0
  %v1903 = vadd.f32 0.0, %v1902
  %1904 = vmatmul.bf16.gmra.mxu0 %v1285
  %v1905 = vpop.f32.mrf.mxu0
  %v1906 = vadd.f32 0.0, %v1905
  %v1907 = vpop.f32.mrf.mxu0
  %v1908 = vadd.f32 0.0, %v1907
  %1909 = vmatmul.bf16.gmra.mxu0 %v1288
  %v1910 = vpop.f32.mrf.mxu0
  %v1911 = vadd.f32 0.0, %v1910
  %v1912 = vpop.f32.mrf.mxu0
  %v1913 = vadd.f32 0.0, %v1912
  %1914 = vmatmul.bf16.gmra.mxu0 %v1291
  %v1915 = vpop.f32.mrf.mxu0
  %v1916 = vadd.f32 0.0, %v1915
  %v1917 = vpop.f32.mrf.mxu0
  %v1918 = vadd.f32 0.0, %v1917
  %1919 = vmatmul.bf16.gmra.mxu0 %v1294
  %v1920 = vpop.f32.mrf.mxu0
  %v1921 = vadd.f32 0.0, %v1920
  %v1922 = vpop.f32.mrf.mxu0
  %v1923 = vadd.f32 0.0, %v1922
  %1924 = vmatmul.bf16.gmra.mxu0 %v1297
  %v1925 = vpop.f32.mrf.mxu0
  %v1926 = vadd.f32 0.0, %v1925
  %v1927 = vpop.f32.mrf.mxu0
  %v1928 = vadd.f32 0.0, %v1927
  %1929 = vmatmul.bf16.gmra.mxu0 %v1300
  %v1930 = vpop.f32.mrf.mxu0
  %v1931 = vadd.f32 0.0, %v1930
  %v1932 = vpop.f32.mrf.mxu0
  %v1933 = vadd.f32 0.0, %v1932
  %1934 = vmatmul.bf16.gmra.mxu0 %v1303
  %v1935 = vpop.f32.mrf.mxu0
  %v1936 = vadd.f32 0.0, %v1935
  %v1937 = vpop.f32.mrf.mxu0
  %v1938 = vadd.f32 0.0, %v1937
  %1939 = vmatmul.bf16.gmra.mxu0 %v1306
  %v1940 = vpop.f32.mrf.mxu0
  %v1941 = vadd.f32 0.0, %v1940
  %v1942 = vpop.f32.mrf.mxu0
  %v1943 = vadd.f32 0.0, %v1942
  %1944 = vmatmul.bf16.gmra.mxu0 %v1309
  %v1945 = vpop.f32.mrf.mxu0
  %v1946 = vadd.f32 0.0, %v1945
  %v1947 = vpop.f32.mrf.mxu0
  %v1948 = vadd.f32 0.0, %v1947
  %1949 = vmatmul.bf16.gmra.mxu0 %v1312
  %v1950 = vpop.f32.mrf.mxu0
  %v1951 = vadd.f32 0.0, %v1950
  %v1952 = vpop.f32.mrf.mxu0
  %v1953 = vadd.f32 0.0, %v1952
  %1954 = vmatmul.bf16.gmra.mxu0 %v1315
  %v1955 = vpop.f32.mrf.mxu0
  %v1956 = vadd.f32 0.0, %v1955
  %v1957 = vpop.f32.mrf.mxu0
  %v1958 = vadd.f32 0.0, %v1957
  %1959 = vmatmul.bf16.gmra.mxu0 %v1318
  %v1960 = vpop.f32.mrf.mxu0
  %v1961 = vadd.f32 0.0, %v1960
  %v1962 = vpop.f32.mrf.mxu0
  %v1963 = vadd.f32 0.0, %v1962
  %1964 = vmatmul.bf16.gmra.mxu0 %v1321
  %v1965 = vpop.f32.mrf.mxu0
  %v1966 = vadd.f32 0.0, %v1965
  %v1967 = vpop.f32.mrf.mxu0
  %v1968 = vadd.f32 0.0, %v1967
  %1969 = vmatmul.bf16.gmra.mxu0 %v1324
  %v1970 = vpop.f32.mrf.mxu0
  %v1971 = vadd.f32 0.0, %v1970
  %v1972 = vpop.f32.mrf.mxu0
  %v1973 = vadd.f32 0.0, %v1972
  %1974 = vmatmul.bf16.gmra.mxu0 %v1327
  %v1975 = vpop.f32.mrf.mxu0
  %v1976 = vadd.f32 0.0, %v1975
  %v1977 = vpop.f32.mrf.mxu0
  %v1978 = vadd.f32 0.0, %v1977
  %1979 = vmatmul.bf16.gmra.mxu0 %v1330
  %v1980 = vpop.f32.mrf.mxu0
  %v1981 = vadd.f32 0.0, %v1980
  %v1982 = vpop.f32.mrf.mxu0
  %v1983 = vadd.f32 0.0, %v1982
  %1984 = vdwg.mxu0
  %vm1985 = vcmask 130048
  %1986 = vst.msk [vmem:[%s2] sm:$0xff] %vm1985, %v1346
  %1987 = vst.msk [vmem:[%s2 + $0x8] sm:$0xff] %vm1985, %v1348
  %1988 = vst.msk [vmem:[%s2 + $0x10] sm:$0xff] %vm1985, %v1351
  %1989 = vst.msk [vmem:[%s2 + $0x18] sm:$0xff] %vm1985, %v1353
  %1990 = vst.msk [vmem:[%s2 + $0x20] sm:$0xff] %vm1985, %v1356
  %1991 = vst.msk [vmem:[%s2 + $0x28] sm:$0xff] %vm1985, %v1358
  %1992 = vst.msk [vmem:[%s2 + $0x30] sm:$0xff] %vm1985, %v1361
  %1993 = vst.msk [vmem:[%s2 + $0x38] sm:$0xff] %vm1985, %v1363
  %1994 = vst.msk [vmem:[%s2 + $0x40] sm:$0xff] %vm1985, %v1366
  %1995 = vst.msk [vmem:[%s2 + $0x48] sm:$0xff] %vm1985, %v1368
  %1996 = vst.msk [vmem:[%s2 + $0x50] sm:$0xff] %vm1985, %v1371
  %1997 = vst.msk [vmem:[%s2 + $0x58] sm:$0xff] %vm1985, %v1373
  %1998 = vst.msk [vmem:[%s2 + $0x60] sm:$0xff] %vm1985, %v1376
  %1999 = vst.msk [vmem:[%s2 + $0x68] sm:$0xff] %vm1985, %v1378
  %2000 = vst.msk [vmem:[%s2 + $0x70] sm:$0xff] %vm1985, %v1381
  %2001 = vst.msk [vmem:[%s2 + $0x78] sm:$0xff] %vm1985, %v1383
  %2002 = vst.msk [vmem:[%s2 + $0x80] sm:$0xff] %vm1985, %v1386
  %2003 = vst.msk [vmem:[%s2 + $0x88] sm:$0xff] %vm1985, %v1388
  %2004 = vst.msk [vmem:[%s2 + $0x90] sm:$0xff] %vm1985, %v1391
  %2005 = vst.msk [vmem:[%s2 + $0x98] sm:$0xff] %vm1985, %v1393
  %2006 = vst.msk [vmem:[%s2 + $0xa0] sm:$0xff] %vm1985, %v1396
  %2007 = vst.msk [vmem:[%s2 + $0xa8] sm:$0xff] %vm1985, %v1398
  %2008 = vst.msk [vmem:[%s2 + $0xb0] sm:$0xff] %vm1985, %v1401
  %2009 = vst.msk [vmem:[%s2 + $0xb8] sm:$0xff] %vm1985, %v1403
  %2010 = vst.msk [vmem:[%s2 + $0xc0] sm:$0xff] %vm1985, %v1406
  %2011 = vst.msk [vmem:[%s2 + $0xc8] sm:$0xff] %vm1985, %v1408
  %2012 = vst.msk [vmem:[%s2 + $0xd0] sm:$0xff] %vm1985, %v1411
  %2013 = vst.msk [vmem:[%s2 + $0xd8] sm:$0xff] %vm1985, %v1413
  %2014 = vst.msk [vmem:[%s2 + $0xe0] sm:$0xff] %vm1985, %v1416
  %2015 = vst.msk [vmem:[%s2 + $0xe8] sm:$0xff] %vm1985, %v1418
  %2016 = vst.msk [vmem:[%s2 + $0xf0] sm:$0xff] %vm1985, %v1421
  %2017 = vst.msk [vmem:[%s2 + $0xf8] sm:$0xff] %vm1985, %v1423
  %2018 = vst.msk [vmem:[%s2 + $0x100] sm:$0xff] %vm1985, %v1426
  %2019 = vst.msk [vmem:[%s2 + $0x108] sm:$0xff] %vm1985, %v1428
  %2020 = vst.msk [vmem:[%s2 + $0x110] sm:$0xff] %vm1985, %v1431
  %2021 = vst.msk [vmem:[%s2 + $0x118] sm:$0xff] %vm1985, %v1433
  %2022 = vst.msk [vmem:[%s2 + $0x120] sm:$0xff] %vm1985, %v1436
  %2023 = vst.msk [vmem:[%s2 + $0x128] sm:$0xff] %vm1985, %v1438
  %2024 = vst.msk [vmem:[%s2 + $0x130] sm:$0xff] %vm1985, %v1441
  %2025 = vst.msk [vmem:[%s2 + $0x138] sm:$0xff] %vm1985, %v1443
  %2026 = vst.msk [vmem:[%s2 + $0x140] sm:$0xff] %vm1985, %v1446
  %2027 = vst.msk [vmem:[%s2 + $0x148] sm:$0xff] %vm1985, %v1448
  %2028 = vst.msk [vmem:[%s2 + $0x150] sm:$0xff] %vm1985, %v1451
  %2029 = vst.msk [vmem:[%s2 + $0x158] sm:$0xff] %vm1985, %v1453
  %2030 = vst.msk [vmem:[%s2 + $0x160] sm:$0xff] %vm1985, %v1456
  %2031 = vst.msk [vmem:[%s2 + $0x168] sm:$0xff] %vm1985, %v1458
  %2032 = vst.msk [vmem:[%s2 + $0x170] sm:$0xff] %vm1985, %v1461
  %2033 = vst.msk [vmem:[%s2 + $0x178] sm:$0xff] %vm1985, %v1463
  %2034 = vst.msk [vmem:[%s2 + $0x180] sm:$0xff] %vm1985, %v1466
  %2035 = vst.msk [vmem:[%s2 + $0x188] sm:$0xff] %vm1985, %v1468
  %2036 = vst.msk [vmem:[%s2 + $0x190] sm:$0xff] %vm1985, %v1471
  %2037 = vst.msk [vmem:[%s2 + $0x198] sm:$0xff] %vm1985, %v1473
  %2038 = vst.msk [vmem:[%s2 + $0x1a0] sm:$0xff] %vm1985, %v1476
  %2039 = vst.msk [vmem:[%s2 + $0x1a8] sm:$0xff] %vm1985, %v1478
  %2040 = vst.msk [vmem:[%s2 + $0x1b0] sm:$0xff] %vm1985, %v1481
  %2041 = vst.msk [vmem:[%s2 + $0x1b8] sm:$0xff] %vm1985, %v1483
  %2042 = vst.msk [vmem:[%s2 + $0x1c0] sm:$0xff] %vm1985, %v1486
  %2043 = vst.msk [vmem:[%s2 + $0x1c8] sm:$0xff] %vm1985, %v1488
  %2044 = vst.msk [vmem:[%s2 + $0x1d0] sm:$0xff] %vm1985, %v1491
  %2045 = vst.msk [vmem:[%s2 + $0x1d8] sm:$0xff] %vm1985, %v1493
  %2046 = vst.msk [vmem:[%s2 + $0x1e0] sm:$0xff] %vm1985, %v1496
  %2047 = vst.msk [vmem:[%s2 + $0x1e8] sm:$0xff] %vm1985, %v1498
  %2048 = vst.msk [vmem:[%s2 + $0x1f0] sm:$0xff] %vm1985, %v1501
  %2049 = vst.msk [vmem:[%s2 + $0x1f8] sm:$0xff] %vm1985, %v1503
  %2050 = vst.msk [vmem:[%s2 + $0x200] sm:$0xff] %vm1985, %v1506
  %2051 = vst.msk [vmem:[%s2 + $0x208] sm:$0xff] %vm1985, %v1508
  %2052 = vst.msk [vmem:[%s2 + $0x210] sm:$0xff] %vm1985, %v1511
  %2053 = vst.msk [vmem:[%s2 + $0x218] sm:$0xff] %vm1985, %v1513
  %2054 = vst.msk [vmem:[%s2 + $0x220] sm:$0xff] %vm1985, %v1516
  %2055 = vst.msk [vmem:[%s2 + $0x228] sm:$0xff] %vm1985, %v1518
  %2056 = vst.msk [vmem:[%s2 + $0x230] sm:$0xff] %vm1985, %v1521
  %2057 = vst.msk [vmem:[%s2 + $0x238] sm:$0xff] %vm1985, %v1523
  %2058 = vst.msk [vmem:[%s2 + $0x240] sm:$0xff] %vm1985, %v1526
  %2059 = vst.msk [vmem:[%s2 + $0x248] sm:$0xff] %vm1985, %v1528
  %2060 = vst.msk [vmem:[%s2 + $0x250] sm:$0xff] %vm1985, %v1531
  %2061 = vst.msk [vmem:[%s2 + $0x258] sm:$0xff] %vm1985, %v1533
  %2062 = vst.msk [vmem:[%s2 + $0x260] sm:$0xff] %vm1985, %v1536
  %2063 = vst.msk [vmem:[%s2 + $0x268] sm:$0xff] %vm1985, %v1538
  %2064 = vst.msk [vmem:[%s2 + $0x270] sm:$0xff] %vm1985, %v1541
  %2065 = vst.msk [vmem:[%s2 + $0x278] sm:$0xff] %vm1985, %v1543
  %2066 = vst.msk [vmem:[%s2 + $0x280] sm:$0xff] %vm1985, %v1546
  %2067 = vst.msk [vmem:[%s2 + $0x288] sm:$0xff] %vm1985, %v1548
  %2068 = vst.msk [vmem:[%s2 + $0x290] sm:$0xff] %vm1985, %v1551
  %2069 = vst.msk [vmem:[%s2 + $0x298] sm:$0xff] %vm1985, %v1553
  %2070 = vst.msk [vmem:[%s2 + $0x2a0] sm:$0xff] %vm1985, %v1556
  %2071 = vst.msk [vmem:[%s2 + $0x2a8] sm:$0xff] %vm1985, %v1558
  %2072 = vst.msk [vmem:[%s2 + $0x2b0] sm:$0xff] %vm1985, %v1561
  %2073 = vst.msk [vmem:[%s2 + $0x2b8] sm:$0xff] %vm1985, %v1563
  %2074 = vst.msk [vmem:[%s2 + $0x2c0] sm:$0xff] %vm1985, %v1566
  %2075 = vst.msk [vmem:[%s2 + $0x2c8] sm:$0xff] %vm1985, %v1568
  %2076 = vst.msk [vmem:[%s2 + $0x2d0] sm:$0xff] %vm1985, %v1571
  %2077 = vst.msk [vmem:[%s2 + $0x2d8] sm:$0xff] %vm1985, %v1573
  %2078 = vst.msk [vmem:[%s2 + $0x2e0] sm:$0xff] %vm1985, %v1576
  %2079 = vst.msk [vmem:[%s2 + $0x2e8] sm:$0xff] %vm1985, %v1578
  %2080 = vst.msk [vmem:[%s2 + $0x2f0] sm:$0xff] %vm1985, %v1581
  %2081 = vst.msk [vmem:[%s2 + $0x2f8] sm:$0xff] %vm1985, %v1583
  %2082 = vst.msk [vmem:[%s2 + $0x300] sm:$0xff] %vm1985, %v1586
  %2083 = vst.msk [vmem:[%s2 + $0x308] sm:$0xff] %vm1985, %v1588
  %2084 = vst.msk [vmem:[%s2 + $0x310] sm:$0xff] %vm1985, %v1591
  %2085 = vst.msk [vmem:[%s2 + $0x318] sm:$0xff] %vm1985, %v1593
  %2086 = vst.msk [vmem:[%s2 + $0x320] sm:$0xff] %vm1985, %v1596
  %2087 = vst.msk [vmem:[%s2 + $0x328] sm:$0xff] %vm1985, %v1598
  %2088 = vst.msk [vmem:[%s2 + $0x330] sm:$0xff] %vm1985, %v1601
  %2089 = vst.msk [vmem:[%s2 + $0x338] sm:$0xff] %vm1985, %v1603
  %2090 = vst.msk [vmem:[%s2 + $0x340] sm:$0xff] %vm1985, %v1606
  %2091 = vst.msk [vmem:[%s2 + $0x348] sm:$0xff] %vm1985, %v1608
  %2092 = vst.msk [vmem:[%s2 + $0x350] sm:$0xff] %vm1985, %v1611
  %2093 = vst.msk [vmem:[%s2 + $0x358] sm:$0xff] %vm1985, %v1613
  %2094 = vst.msk [vmem:[%s2 + $0x360] sm:$0xff] %vm1985, %v1616
  %2095 = vst.msk [vmem:[%s2 + $0x368] sm:$0xff] %vm1985, %v1618
  %2096 = vst.msk [vmem:[%s2 + $0x370] sm:$0xff] %vm1985, %v1621
  %2097 = vst.msk [vmem:[%s2 + $0x378] sm:$0xff] %vm1985, %v1623
  %2098 = vst.msk [vmem:[%s2 + $0x380] sm:$0xff] %vm1985, %v1626
  %2099 = vst.msk [vmem:[%s2 + $0x388] sm:$0xff] %vm1985, %v1628
  %2100 = vst.msk [vmem:[%s2 + $0x390] sm:$0xff] %vm1985, %v1631
  %2101 = vst.msk [vmem:[%s2 + $0x398] sm:$0xff] %vm1985, %v1633
  %2102 = vst.msk [vmem:[%s2 + $0x3a0] sm:$0xff] %vm1985, %v1636
  %2103 = vst.msk [vmem:[%s2 + $0x3a8] sm:$0xff] %vm1985, %v1638
  %2104 = vst.msk [vmem:[%s2 + $0x3b0] sm:$0xff] %vm1985, %v1641
  %2105 = vst.msk [vmem:[%s2 + $0x3b8] sm:$0xff] %vm1985, %v1643
  %2106 = vst.msk [vmem:[%s2 + $0x3c0] sm:$0xff] %vm1985, %v1646
  %2107 = vst.msk [vmem:[%s2 + $0x3c8] sm:$0xff] %vm1985, %v1648
  %2108 = vst.msk [vmem:[%s2 + $0x3d0] sm:$0xff] %vm1985, %v1651
  %2109 = vst.msk [vmem:[%s2 + $0x3d8] sm:$0xff] %vm1985, %v1653
  %2110 = vst.msk [vmem:[%s2 + $0x3e0] sm:$0xff] %vm1985, %v1656
  %2111 = vst.msk [vmem:[%s2 + $0x3e8] sm:$0xff] %vm1985, %v1658
  %2112 = vst.msk [vmem:[%s2 + $0x3f0] sm:$0xff] %vm1985, %v1661
  %2113 = vst.msk [vmem:[%s2 + $0x3f8] sm:$0xff] %vm1985, %v1663
  %2114 = vst.msk [vmem:[%s2 + $0x400] sm:$0xff] %vm1985, %v1666
  %2115 = vst.msk [vmem:[%s2 + $0x408] sm:$0xff] %vm1985, %v1668
  %2116 = vst.msk [vmem:[%s2 + $0x410] sm:$0xff] %vm1985, %v1671
  %2117 = vst.msk [vmem:[%s2 + $0x418] sm:$0xff] %vm1985, %v1673
  %2118 = vst.msk [vmem:[%s2 + $0x420] sm:$0xff] %vm1985, %v1676
  %2119 = vst.msk [vmem:[%s2 + $0x428] sm:$0xff] %vm1985, %v1678
  %2120 = vst.msk [vmem:[%s2 + $0x430] sm:$0xff] %vm1985, %v1681
  %2121 = vst.msk [vmem:[%s2 + $0x438] sm:$0xff] %vm1985, %v1683
  %2122 = vst.msk [vmem:[%s2 + $0x440] sm:$0xff] %vm1985, %v1686
  %2123 = vst.msk [vmem:[%s2 + $0x448] sm:$0xff] %vm1985, %v1688
  %2124 = vst.msk [vmem:[%s2 + $0x450] sm:$0xff] %vm1985, %v1691
  %2125 = vst.msk [vmem:[%s2 + $0x458] sm:$0xff] %vm1985, %v1693
  %2126 = vst.msk [vmem:[%s2 + $0x460] sm:$0xff] %vm1985, %v1696
  %2127 = vst.msk [vmem:[%s2 + $0x468] sm:$0xff] %vm1985, %v1698
  %2128 = vst.msk [vmem:[%s2 + $0x470] sm:$0xff] %vm1985, %v1701
  %2129 = vst.msk [vmem:[%s2 + $0x478] sm:$0xff] %vm1985, %v1703
  %2130 = vst.msk [vmem:[%s2 + $0x480] sm:$0xff] %vm1985, %v1706
  %2131 = vst.msk [vmem:[%s2 + $0x488] sm:$0xff] %vm1985, %v1708
  %2132 = vst.msk [vmem:[%s2 + $0x490] sm:$0xff] %vm1985, %v1711
  %2133 = vst.msk [vmem:[%s2 + $0x498] sm:$0xff] %vm1985, %v1713
  %2134 = vst.msk [vmem:[%s2 + $0x4a0] sm:$0xff] %vm1985, %v1716
  %2135 = vst.msk [vmem:[%s2 + $0x4a8] sm:$0xff] %vm1985, %v1718
  %2136 = vst.msk [vmem:[%s2 + $0x4b0] sm:$0xff] %vm1985, %v1721
  %2137 = vst.msk [vmem:[%s2 + $0x4b8] sm:$0xff] %vm1985, %v1723
  %2138 = vst.msk [vmem:[%s2 + $0x4c0] sm:$0xff] %vm1985, %v1726
  %2139 = vst.msk [vmem:[%s2 + $0x4c8] sm:$0xff] %vm1985, %v1728
  %2140 = vst.msk [vmem:[%s2 + $0x4d0] sm:$0xff] %vm1985, %v1731
  %2141 = vst.msk [vmem:[%s2 + $0x4d8] sm:$0xff] %vm1985, %v1733
  %2142 = vst.msk [vmem:[%s2 + $0x4e0] sm:$0xff] %vm1985, %v1736
  %2143 = vst.msk [vmem:[%s2 + $0x4e8] sm:$0xff] %vm1985, %v1738
  %2144 = vst.msk [vmem:[%s2 + $0x4f0] sm:$0xff] %vm1985, %v1741
  %2145 = vst.msk [vmem:[%s2 + $0x4f8] sm:$0xff] %vm1985, %v1743
  %2146 = vst.msk [vmem:[%s2 + $0x500] sm:$0xff] %vm1985, %v1746
  %2147 = vst.msk [vmem:[%s2 + $0x508] sm:$0xff] %vm1985, %v1748
  %2148 = vst.msk [vmem:[%s2 + $0x510] sm:$0xff] %vm1985, %v1751
  %2149 = vst.msk [vmem:[%s2 + $0x518] sm:$0xff] %vm1985, %v1753
  %2150 = vst.msk [vmem:[%s2 + $0x520] sm:$0xff] %vm1985, %v1756
  %2151 = vst.msk [vmem:[%s2 + $0x528] sm:$0xff] %vm1985, %v1758
  %2152 = vst.msk [vmem:[%s2 + $0x530] sm:$0xff] %vm1985, %v1761
  %2153 = vst.msk [vmem:[%s2 + $0x538] sm:$0xff] %vm1985, %v1763
  %2154 = vst.msk [vmem:[%s2 + $0x540] sm:$0xff] %vm1985, %v1766
  %2155 = vst.msk [vmem:[%s2 + $0x548] sm:$0xff] %vm1985, %v1768
  %2156 = vst.msk [vmem:[%s2 + $0x550] sm:$0xff] %vm1985, %v1771
  %2157 = vst.msk [vmem:[%s2 + $0x558] sm:$0xff] %vm1985, %v1773
  %2158 = vst.msk [vmem:[%s2 + $0x560] sm:$0xff] %vm1985, %v1776
  %2159 = vst.msk [vmem:[%s2 + $0x568] sm:$0xff] %vm1985, %v1778
  %2160 = vst.msk [vmem:[%s2 + $0x570] sm:$0xff] %vm1985, %v1781
  %2161 = vst.msk [vmem:[%s2 + $0x578] sm:$0xff] %vm1985, %v1783
  %2162 = vst.msk [vmem:[%s2 + $0x580] sm:$0xff] %vm1985, %v1786
  %2163 = vst.msk [vmem:[%s2 + $0x588] sm:$0xff] %vm1985, %v1788
  %2164 = vst.msk [vmem:[%s2 + $0x590] sm:$0xff] %vm1985, %v1791
  %2165 = vst.msk [vmem:[%s2 + $0x598] sm:$0xff] %vm1985, %v1793
  %2166 = vst.msk [vmem:[%s2 + $0x5a0] sm:$0xff] %vm1985, %v1796
  %2167 = vst.msk [vmem:[%s2 + $0x5a8] sm:$0xff] %vm1985, %v1798
  %2168 = vst.msk [vmem:[%s2 + $0x5b0] sm:$0xff] %vm1985, %v1801
  %2169 = vst.msk [vmem:[%s2 + $0x5b8] sm:$0xff] %vm1985, %v1803
  %2170 = vst.msk [vmem:[%s2 + $0x5c0] sm:$0xff] %vm1985, %v1806
  %2171 = vst.msk [vmem:[%s2 + $0x5c8] sm:$0xff] %vm1985, %v1808
  %2172 = vst.msk [vmem:[%s2 + $0x5d0] sm:$0xff] %vm1985, %v1811
  %2173 = vst.msk [vmem:[%s2 + $0x5d8] sm:$0xff] %vm1985, %v1813
  %2174 = vst.msk [vmem:[%s2 + $0x5e0] sm:$0xff] %vm1985, %v1816
  %2175 = vst.msk [vmem:[%s2 + $0x5e8] sm:$0xff] %vm1985, %v1818
  %2176 = vst.msk [vmem:[%s2 + $0x5f0] sm:$0xff] %vm1985, %v1821
  %2177 = vst.msk [vmem:[%s2 + $0x5f8] sm:$0xff] %vm1985, %v1823
  %2178 = vst.msk [vmem:[%s2 + $0x600] sm:$0xff] %vm1985, %v1826
  %2179 = vst.msk [vmem:[%s2 + $0x608] sm:$0xff] %vm1985, %v1828
  %2180 = vst.msk [vmem:[%s2 + $0x610] sm:$0xff] %vm1985, %v1831
  %2181 = vst.msk [vmem:[%s2 + $0x618] sm:$0xff] %vm1985, %v1833
  %2182 = vst.msk [vmem:[%s2 + $0x620] sm:$0xff] %vm1985, %v1836
  %2183 = vst.msk [vmem:[%s2 + $0x628] sm:$0xff] %vm1985, %v1838
  %2184 = vst.msk [vmem:[%s2 + $0x630] sm:$0xff] %vm1985, %v1841
  %2185 = vst.msk [vmem:[%s2 + $0x638] sm:$0xff] %vm1985, %v1843
  %2186 = vst.msk [vmem:[%s2 + $0x640] sm:$0xff] %vm1985, %v1846
  %2187 = vst.msk [vmem:[%s2 + $0x648] sm:$0xff] %vm1985, %v1848
  %2188 = vst.msk [vmem:[%s2 + $0x650] sm:$0xff] %vm1985, %v1851
  %2189 = vst.msk [vmem:[%s2 + $0x658] sm:$0xff] %vm1985, %v1853
  %2190 = vst.msk [vmem:[%s2 + $0x660] sm:$0xff] %vm1985, %v1856
  %2191 = vst.msk [vmem:[%s2 + $0x668] sm:$0xff] %vm1985, %v1858
  %2192 = vst.msk [vmem:[%s2 + $0x670] sm:$0xff] %vm1985, %v1861
  %2193 = vst.msk [vmem:[%s2 + $0x678] sm:$0xff] %vm1985, %v1863
  %2194 = vst.msk [vmem:[%s2 + $0x680] sm:$0xff] %vm1985, %v1866
  %2195 = vst.msk [vmem:[%s2 + $0x688] sm:$0xff] %vm1985, %v1868
  %2196 = vst.msk [vmem:[%s2 + $0x690] sm:$0xff] %vm1985, %v1871
  %2197 = vst.msk [vmem:[%s2 + $0x698] sm:$0xff] %vm1985, %v1873
  %2198 = vst.msk [vmem:[%s2 + $0x6a0] sm:$0xff] %vm1985, %v1876
  %2199 = vst.msk [vmem:[%s2 + $0x6a8] sm:$0xff] %vm1985, %v1878
  %2200 = vst.msk [vmem:[%s2 + $0x6b0] sm:$0xff] %vm1985, %v1881
  %2201 = vst.msk [vmem:[%s2 + $0x6b8] sm:$0xff] %vm1985, %v1883
  %2202 = vst.msk [vmem:[%s2 + $0x6c0] sm:$0xff] %vm1985, %v1886
  %2203 = vst.msk [vmem:[%s2 + $0x6c8] sm:$0xff] %vm1985, %v1888
  %2204 = vst.msk [vmem:[%s2 + $0x6d0] sm:$0xff] %vm1985, %v1891
  %2205 = vst.msk [vmem:[%s2 + $0x6d8] sm:$0xff] %vm1985, %v1893
  %2206 = vst.msk [vmem:[%s2 + $0x6e0] sm:$0xff] %vm1985, %v1896
  %2207 = vst.msk [vmem:[%s2 + $0x6e8] sm:$0xff] %vm1985, %v1898
  %2208 = vst.msk [vmem:[%s2 + $0x6f0] sm:$0xff] %vm1985, %v1901
  %2209 = vst.msk [vmem:[%s2 + $0x6f8] sm:$0xff] %vm1985, %v1903
  %2210 = vst.msk [vmem:[%s2 + $0x700] sm:$0xff] %vm1985, %v1906
  %2211 = vst.msk [vmem:[%s2 + $0x708] sm:$0xff] %vm1985, %v1908
  %2212 = vst.msk [vmem:[%s2 + $0x710] sm:$0xff] %vm1985, %v1911
  %2213 = vst.msk [vmem:[%s2 + $0x718] sm:$0xff] %vm1985, %v1913
  %2214 = vst.msk [vmem:[%s2 + $0x720] sm:$0xff] %vm1985, %v1916
  %2215 = vst.msk [vmem:[%s2 + $0x728] sm:$0xff] %vm1985, %v1918
  %2216 = vst.msk [vmem:[%s2 + $0x730] sm:$0xff] %vm1985, %v1921
  %2217 = vst.msk [vmem:[%s2 + $0x738] sm:$0xff] %vm1985, %v1923
  %2218 = vst.msk [vmem:[%s2 + $0x740] sm:$0xff] %vm1985, %v1926
  %2219 = vst.msk [vmem:[%s2 + $0x748] sm:$0xff] %vm1985, %v1928
  %2220 = vst.msk [vmem:[%s2 + $0x750] sm:$0xff] %vm1985, %v1931
  %2221 = vst.msk [vmem:[%s2 + $0x758] sm:$0xff] %vm1985, %v1933
  %2222 = vst.msk [vmem:[%s2 + $0x760] sm:$0xff] %vm1985, %v1936
  %2223 = vst.msk [vmem:[%s2 + $0x768] sm:$0xff] %vm1985, %v1938
  %2224 = vst.msk [vmem:[%s2 + $0x770] sm:$0xff] %vm1985, %v1941
  %2225 = vst.msk [vmem:[%s2 + $0x778] sm:$0xff] %vm1985, %v1943
  %2226 = vst.msk [vmem:[%s2 + $0x780] sm:$0xff] %vm1985, %v1946
  %2227 = vst.msk [vmem:[%s2 + $0x788] sm:$0xff] %vm1985, %v1948
  %2228 = vst.msk [vmem:[%s2 + $0x790] sm:$0xff] %vm1985, %v1951
  %2229 = vst.msk [vmem:[%s2 + $0x798] sm:$0xff] %vm1985, %v1953
  %2230 = vst.msk [vmem:[%s2 + $0x7a0] sm:$0xff] %vm1985, %v1956
  %2231 = vst.msk [vmem:[%s2 + $0x7a8] sm:$0xff] %vm1985, %v1958
  %2232 = vst.msk [vmem:[%s2 + $0x7b0] sm:$0xff] %vm1985, %v1961
  %2233 = vst.msk [vmem:[%s2 + $0x7b8] sm:$0xff] %vm1985, %v1963
  %2234 = vst.msk [vmem:[%s2 + $0x7c0] sm:$0xff] %vm1985, %v1966
  %2235 = vst.msk [vmem:[%s2 + $0x7c8] sm:$0xff] %vm1985, %v1968
  %2236 = vst.msk [vmem:[%s2 + $0x7d0] sm:$0xff] %vm1985, %v1971
  %2237 = vst.msk [vmem:[%s2 + $0x7d8] sm:$0xff] %vm1985, %v1973
  %2238 = vst.msk [vmem:[%s2 + $0x7e0] sm:$0xff] %vm1985, %v1976
  %2239 = vst.msk [vmem:[%s2 + $0x7e8] sm:$0xff] %vm1985, %v1978
  %2240 = vst.msk [vmem:[%s2 + $0x7f0] sm:$0xff] %vm1985, %v1981
  %2241 = vst.msk [vmem:[%s2 + $0x7f8] sm:$0xff] %vm1985, %v1983
  %p2242 = scmp.eq.s32.totalorder 0, 0
  // Predicated region
  $region10: #{generator_forward.12} parent=0 // pred_check
    %p2243 = pneg %p2242
  $region11: #{generator_forward.12} parent=0 // pred_check_branch
    %2245 = sbr.rel (%p2243) target = $region13
  $region12: #{generator_forward.12} parent=0 // pred_region
    %vm2246 = vcmask 122880
    %2247 = vst.msk [vmem:[%s3] sm:$0x1] %vm2246, 0.0
    %2248 = vst.msk [vmem:[%s4] sm:$0x1] %vm2246, 0.0
  $region13: #{generator_forward.12} parent=0 // pred_fallthru
    _
  %v2249 = vld [vmem:[%s3] sm:$0x1]
  %v2250 = vsel %vm1985, %v1346, 0.0
  %v2251 = vsel %vm1985, %v1348, 0.0
  %v2252 = vadd.f32 %v2250, %v2251
  %v2253 = vsel %vm1985, %v1351, 0.0
  %v2254 = vadd.f32 %v2252, %v2253
  %v2255 = vsel %vm1985, %v1353, 0.0
  %v2256 = vadd.f32 %v2254, %v2255
  %v2257 = vsel %vm1985, %v1356, 0.0
  %v2258 = vadd.f32 %v2256, %v2257
  %v2259 = vsel %vm1985, %v1358, 0.0
  %v2260 = vadd.f32 %v2258, %v2259
  %v2261 = vsel %vm1985, %v1361, 0.0
  %v2262 = vadd.f32 %v2260, %v2261
  %v2263 = vsel %vm1985, %v1363, 0.0
  %v2264 = vadd.f32 %v2262, %v2263
  %v2265 = vsel %vm1985, %v1366, 0.0
  %v2266 = vadd.f32 %v2264, %v2265
  %v2267 = vsel %vm1985, %v1368, 0.0
  %v2268 = vadd.f32 %v2266, %v2267
  %v2269 = vsel %vm1985, %v1371, 0.0
  %v2270 = vadd.f32 %v2268, %v2269
  %v2271 = vsel %vm1985, %v1373, 0.0
  %v2272 = vadd.f32 %v2270, %v2271
  %v2273 = vsel %vm1985, %v1376, 0.0
  %v2274 = vadd.f32 %v2272, %v2273
  %v2275 = vsel %vm1985, %v1378, 0.0
  %v2276 = vadd.f32 %v2274, %v2275
  %v2277 = vsel %vm1985, %v1381, 0.0
  %v2278 = vadd.f32 %v2276, %v2277
  %v2279 = vsel %vm1985, %v1383, 0.0
  %v2280 = vadd.f32 %v2278, %v2279
  %v2281 = vsel %vm1985, %v1386, 0.0
  %v2282 = vadd.f32 %v2280, %v2281
  %v2283 = vsel %vm1985, %v1388, 0.0
  %v2284 = vadd.f32 %v2282, %v2283
  %v2285 = vsel %vm1985, %v1391, 0.0
  %v2286 = vadd.f32 %v2284, %v2285
  %v2287 = vsel %vm1985, %v1393, 0.0
  %v2288 = vadd.f32 %v2286, %v2287
  %v2289 = vsel %vm1985, %v1396, 0.0
  %v2290 = vadd.f32 %v2288, %v2289
  %v2291 = vsel %vm1985, %v1398, 0.0
  %v2292 = vadd.f32 %v2290, %v2291
  %v2293 = vsel %vm1985, %v1401, 0.0
  %v2294 = vadd.f32 %v2292, %v2293
  %v2295 = vsel %vm1985, %v1403, 0.0
  %v2296 = vadd.f32 %v2294, %v2295
  %v2297 = vsel %vm1985, %v1406, 0.0
  %v2298 = vadd.f32 %v2296, %v2297
  %v2299 = vsel %vm1985, %v1408, 0.0
  %v2300 = vadd.f32 %v2298, %v2299
  %v2301 = vsel %vm1985, %v1411, 0.0
  %v2302 = vadd.f32 %v2300, %v2301
  %v2303 = vsel %vm1985, %v1413, 0.0
  %v2304 = vadd.f32 %v2302, %v2303
  %v2305 = vsel %vm1985, %v1416, 0.0
  %v2306 = vadd.f32 %v2304, %v2305
  %v2307 = vsel %vm1985, %v1418, 0.0
  %v2308 = vadd.f32 %v2306, %v2307
  %v2309 = vsel %vm1985, %v1421, 0.0
  %v2310 = vadd.f32 %v2308, %v2309
  %v2311 = vsel %vm1985, %v1423, 0.0
  %v2312 = vadd.f32 %v2310, %v2311
  %v2313 = vsel %vm1985, %v1426, 0.0
  %v2314 = vadd.f32 %v2312, %v2313
  %v2315 = vsel %vm1985, %v1428, 0.0
  %v2316 = vadd.f32 %v2314, %v2315
  %v2317 = vsel %vm1985, %v1431, 0.0
  %v2318 = vadd.f32 %v2316, %v2317
  %v2319 = vsel %vm1985, %v1433, 0.0
  %v2320 = vadd.f32 %v2318, %v2319
  %v2321 = vsel %vm1985, %v1436, 0.0
  %v2322 = vadd.f32 %v2320, %v2321
  %v2323 = vsel %vm1985, %v1438, 0.0
  %v2324 = vadd.f32 %v2322, %v2323
  %v2325 = vsel %vm1985, %v1441, 0.0
  %v2326 = vadd.f32 %v2324, %v2325
  %v2327 = vsel %vm1985, %v1443, 0.0
  %v2328 = vadd.f32 %v2326, %v2327
  %v2329 = vsel %vm1985, %v1446, 0.0
  %v2330 = vadd.f32 %v2328, %v2329
  %v2331 = vsel %vm1985, %v1448, 0.0
  %v2332 = vadd.f32 %v2330, %v2331
  %v2333 = vsel %vm1985, %v1451, 0.0
  %v2334 = vadd.f32 %v2332, %v2333
  %v2335 = vsel %vm1985, %v1453, 0.0
  %v2336 = vadd.f32 %v2334, %v2335
  %v2337 = vsel %vm1985, %v1456, 0.0
  %v2338 = vadd.f32 %v2336, %v2337
  %v2339 = vsel %vm1985, %v1458, 0.0
  %v2340 = vadd.f32 %v2338, %v2339
  %v2341 = vsel %vm1985, %v1461, 0.0
  %v2342 = vadd.f32 %v2340, %v2341
  %v2343 = vsel %vm1985, %v1463, 0.0
  %v2344 = vadd.f32 %v2342, %v2343
  %v2345 = vsel %vm1985, %v1466, 0.0
  %v2346 = vadd.f32 %v2344, %v2345
  %v2347 = vsel %vm1985, %v1468, 0.0
  %v2348 = vadd.f32 %v2346, %v2347
  %v2349 = vsel %vm1985, %v1471, 0.0
  %v2350 = vadd.f32 %v2348, %v2349
  %v2351 = vsel %vm1985, %v1473, 0.0
  %v2352 = vadd.f32 %v2350, %v2351
  %v2353 = vsel %vm1985, %v1476, 0.0
  %v2354 = vadd.f32 %v2352, %v2353
  %v2355 = vsel %vm1985, %v1478, 0.0
  %v2356 = vadd.f32 %v2354, %v2355
  %v2357 = vsel %vm1985, %v1481, 0.0
  %v2358 = vadd.f32 %v2356, %v2357
  %v2359 = vsel %vm1985, %v1483, 0.0
  %v2360 = vadd.f32 %v2358, %v2359
  %v2361 = vsel %vm1985, %v1486, 0.0
  %v2362 = vadd.f32 %v2360, %v2361
  %v2363 = vsel %vm1985, %v1488, 0.0
  %v2364 = vadd.f32 %v2362, %v2363
  %v2365 = vsel %vm1985, %v1491, 0.0
  %v2366 = vadd.f32 %v2364, %v2365
  %v2367 = vsel %vm1985, %v1493, 0.0
  %v2368 = vadd.f32 %v2366, %v2367
  %v2369 = vsel %vm1985, %v1496, 0.0
  %v2370 = vadd.f32 %v2368, %v2369
  %v2371 = vsel %vm1985, %v1498, 0.0
  %v2372 = vadd.f32 %v2370, %v2371
  %v2373 = vsel %vm1985, %v1501, 0.0
  %v2374 = vadd.f32 %v2372, %v2373
  %v2375 = vsel %vm1985, %v1503, 0.0
  %v2376 = vadd.f32 %v2374, %v2375
  %v2377 = vsel %vm1985, %v1506, 0.0
  %v2378 = vadd.f32 %v2376, %v2377
  %v2379 = vsel %vm1985, %v1508, 0.0
  %v2380 = vadd.f32 %v2378, %v2379
  %v2381 = vsel %vm1985, %v1511, 0.0
  %v2382 = vadd.f32 %v2380, %v2381
  %v2383 = vsel %vm1985, %v1513, 0.0
  %v2384 = vadd.f32 %v2382, %v2383
  %v2385 = vsel %vm1985, %v1516, 0.0
  %v2386 = vadd.f32 %v2384, %v2385
  %v2387 = vsel %vm1985, %v1518, 0.0
  %v2388 = vadd.f32 %v2386, %v2387
  %v2389 = vsel %vm1985, %v1521, 0.0
  %v2390 = vadd.f32 %v2388, %v2389
  %v2391 = vsel %vm1985, %v1523, 0.0
  %v2392 = vadd.f32 %v2390, %v2391
  %v2393 = vsel %vm1985, %v1526, 0.0
  %v2394 = vadd.f32 %v2392, %v2393
  %v2395 = vsel %vm1985, %v1528, 0.0
  %v2396 = vadd.f32 %v2394, %v2395
  %v2397 = vsel %vm1985, %v1531, 0.0
  %v2398 = vadd.f32 %v2396, %v2397
  %v2399 = vsel %vm1985, %v1533, 0.0
  %v2400 = vadd.f32 %v2398, %v2399
  %v2401 = vsel %vm1985, %v1536, 0.0
  %v2402 = vadd.f32 %v2400, %v2401
  %v2403 = vsel %vm1985, %v1538, 0.0
  %v2404 = vadd.f32 %v2402, %v2403
  %v2405 = vsel %vm1985, %v1541, 0.0
  %v2406 = vadd.f32 %v2404, %v2405
  %v2407 = vsel %vm1985, %v1543, 0.0
  %v2408 = vadd.f32 %v2406, %v2407
  %v2409 = vsel %vm1985, %v1546, 0.0
  %v2410 = vadd.f32 %v2408, %v2409
  %v2411 = vsel %vm1985, %v1548, 0.0
  %v2412 = vadd.f32 %v2410, %v2411
  %v2413 = vsel %vm1985, %v1551, 0.0
  %v2414 = vadd.f32 %v2412, %v2413
  %v2415 = vsel %vm1985, %v1553, 0.0
  %v2416 = vadd.f32 %v2414, %v2415
  %v2417 = vsel %vm1985, %v1556, 0.0
  %v2418 = vadd.f32 %v2416, %v2417
  %v2419 = vsel %vm1985, %v1558, 0.0
  %v2420 = vadd.f32 %v2418, %v2419
  %v2421 = vsel %vm1985, %v1561, 0.0
  %v2422 = vadd.f32 %v2420, %v2421
  %v2423 = vsel %vm1985, %v1563, 0.0
  %v2424 = vadd.f32 %v2422, %v2423
  %v2425 = vsel %vm1985, %v1566, 0.0
  %v2426 = vadd.f32 %v2424, %v2425
  %v2427 = vsel %vm1985, %v1568, 0.0
  %v2428 = vadd.f32 %v2426, %v2427
  %v2429 = vsel %vm1985, %v1571, 0.0
  %v2430 = vadd.f32 %v2428, %v2429
  %v2431 = vsel %vm1985, %v1573, 0.0
  %v2432 = vadd.f32 %v2430, %v2431
  %v2433 = vsel %vm1985, %v1576, 0.0
  %v2434 = vadd.f32 %v2432, %v2433
  %v2435 = vsel %vm1985, %v1578, 0.0
  %v2436 = vadd.f32 %v2434, %v2435
  %v2437 = vsel %vm1985, %v1581, 0.0
  %v2438 = vadd.f32 %v2436, %v2437
  %v2439 = vsel %vm1985, %v1583, 0.0
  %v2440 = vadd.f32 %v2438, %v2439
  %v2441 = vsel %vm1985, %v1586, 0.0
  %v2442 = vadd.f32 %v2440, %v2441
  %v2443 = vsel %vm1985, %v1588, 0.0
  %v2444 = vadd.f32 %v2442, %v2443
  %v2445 = vsel %vm1985, %v1591, 0.0
  %v2446 = vadd.f32 %v2444, %v2445
  %v2447 = vsel %vm1985, %v1593, 0.0
  %v2448 = vadd.f32 %v2446, %v2447
  %v2449 = vsel %vm1985, %v1596, 0.0
  %v2450 = vadd.f32 %v2448, %v2449
  %v2451 = vsel %vm1985, %v1598, 0.0
  %v2452 = vadd.f32 %v2450, %v2451
  %v2453 = vsel %vm1985, %v1601, 0.0
  %v2454 = vadd.f32 %v2452, %v2453
  %v2455 = vsel %vm1985, %v1603, 0.0
  %v2456 = vadd.f32 %v2454, %v2455
  %v2457 = vsel %vm1985, %v1606, 0.0
  %v2458 = vadd.f32 %v2456, %v2457
  %v2459 = vsel %vm1985, %v1608, 0.0
  %v2460 = vadd.f32 %v2458, %v2459
  %v2461 = vsel %vm1985, %v1611, 0.0
  %v2462 = vadd.f32 %v2460, %v2461
  %v2463 = vsel %vm1985, %v1613, 0.0
  %v2464 = vadd.f32 %v2462, %v2463
  %v2465 = vsel %vm1985, %v1616, 0.0
  %v2466 = vadd.f32 %v2464, %v2465
  %v2467 = vsel %vm1985, %v1618, 0.0
  %v2468 = vadd.f32 %v2466, %v2467
  %v2469 = vsel %vm1985, %v1621, 0.0
  %v2470 = vadd.f32 %v2468, %v2469
  %v2471 = vsel %vm1985, %v1623, 0.0
  %v2472 = vadd.f32 %v2470, %v2471
  %v2473 = vsel %vm1985, %v1626, 0.0
  %v2474 = vadd.f32 %v2472, %v2473
  %v2475 = vsel %vm1985, %v1628, 0.0
  %v2476 = vadd.f32 %v2474, %v2475
  %v2477 = vsel %vm1985, %v1631, 0.0
  %v2478 = vadd.f32 %v2476, %v2477
  %v2479 = vsel %vm1985, %v1633, 0.0
  %v2480 = vadd.f32 %v2478, %v2479
  %v2481 = vsel %vm1985, %v1636, 0.0
  %v2482 = vadd.f32 %v2480, %v2481
  %v2483 = vsel %vm1985, %v1638, 0.0
  %v2484 = vadd.f32 %v2482, %v2483
  %v2485 = vsel %vm1985, %v1641, 0.0
  %v2486 = vadd.f32 %v2484, %v2485
  %v2487 = vsel %vm1985, %v1643, 0.0
  %v2488 = vadd.f32 %v2486, %v2487
  %v2489 = vsel %vm1985, %v1646, 0.0
  %v2490 = vadd.f32 %v2488, %v2489
  %v2491 = vsel %vm1985, %v1648, 0.0
  %v2492 = vadd.f32 %v2490, %v2491
  %v2493 = vsel %vm1985, %v1651, 0.0
  %v2494 = vadd.f32 %v2492, %v2493
  %v2495 = vsel %vm1985, %v1653, 0.0
  %v2496 = vadd.f32 %v2494, %v2495
  %v2497 = vsel %vm1985, %v1656, 0.0
  %v2498 = vadd.f32 %v2496, %v2497
  %v2499 = vsel %vm1985, %v1658, 0.0
  %v2500 = vadd.f32 %v2498, %v2499
  %v2501 = vsel %vm1985, %v1661, 0.0
  %v2502 = vadd.f32 %v2500, %v2501
  %v2503 = vsel %vm1985, %v1663, 0.0
  %v2504 = vadd.f32 %v2502, %v2503
  %v2505 = vsel %vm1985, %v1666, 0.0
  %v2506 = vadd.f32 %v2504, %v2505
  %v2507 = vsel %vm1985, %v1668, 0.0
  %v2508 = vadd.f32 %v2506, %v2507
  %v2509 = vsel %vm1985, %v1671, 0.0
  %v2510 = vadd.f32 %v2508, %v2509
  %v2511 = vsel %vm1985, %v1673, 0.0
  %v2512 = vadd.f32 %v2510, %v2511
  %v2513 = vsel %vm1985, %v1676, 0.0
  %v2514 = vadd.f32 %v2512, %v2513
  %v2515 = vsel %vm1985, %v1678, 0.0
  %v2516 = vadd.f32 %v2514, %v2515
  %v2517 = vsel %vm1985, %v1681, 0.0
  %v2518 = vadd.f32 %v2516, %v2517
  %v2519 = vsel %vm1985, %v1683, 0.0
  %v2520 = vadd.f32 %v2518, %v2519
  %v2521 = vsel %vm1985, %v1686, 0.0
  %v2522 = vadd.f32 %v2520, %v2521
  %v2523 = vsel %vm1985, %v1688, 0.0
  %v2524 = vadd.f32 %v2522, %v2523
  %v2525 = vsel %vm1985, %v1691, 0.0
  %v2526 = vadd.f32 %v2524, %v2525
  %v2527 = vsel %vm1985, %v1693, 0.0
  %v2528 = vadd.f32 %v2526, %v2527
  %v2529 = vsel %vm1985, %v1696, 0.0
  %v2530 = vadd.f32 %v2528, %v2529
  %v2531 = vsel %vm1985, %v1698, 0.0
  %v2532 = vadd.f32 %v2530, %v2531
  %v2533 = vsel %vm1985, %v1701, 0.0
  %v2534 = vadd.f32 %v2532, %v2533
  %v2535 = vsel %vm1985, %v1703, 0.0
  %v2536 = vadd.f32 %v2534, %v2535
  %v2537 = vsel %vm1985, %v1706, 0.0
  %v2538 = vadd.f32 %v2536, %v2537
  %v2539 = vsel %vm1985, %v1708, 0.0
  %v2540 = vadd.f32 %v2538, %v2539
  %v2541 = vsel %vm1985, %v1711, 0.0
  %v2542 = vadd.f32 %v2540, %v2541
  %v2543 = vsel %vm1985, %v1713, 0.0
  %v2544 = vadd.f32 %v2542, %v2543
  %v2545 = vsel %vm1985, %v1716, 0.0
  %v2546 = vadd.f32 %v2544, %v2545
  %v2547 = vsel %vm1985, %v1718, 0.0
  %v2548 = vadd.f32 %v2546, %v2547
  %v2549 = vsel %vm1985, %v1721, 0.0
  %v2550 = vadd.f32 %v2548, %v2549
  %v2551 = vsel %vm1985, %v1723, 0.0
  %v2552 = vadd.f32 %v2550, %v2551
  %v2553 = vsel %vm1985, %v1726, 0.0
  %v2554 = vadd.f32 %v2552, %v2553
  %v2555 = vsel %vm1985, %v1728, 0.0
  %v2556 = vadd.f32 %v2554, %v2555
  %v2557 = vsel %vm1985, %v1731, 0.0
  %v2558 = vadd.f32 %v2556, %v2557
  %v2559 = vsel %vm1985, %v1733, 0.0
  %v2560 = vadd.f32 %v2558, %v2559
  %v2561 = vsel %vm1985, %v1736, 0.0
  %v2562 = vadd.f32 %v2560, %v2561
  %v2563 = vsel %vm1985, %v1738, 0.0
  %v2564 = vadd.f32 %v2562, %v2563
  %v2565 = vsel %vm1985, %v1741, 0.0
  %v2566 = vadd.f32 %v2564, %v2565
  %v2567 = vsel %vm1985, %v1743, 0.0
  %v2568 = vadd.f32 %v2566, %v2567
  %v2569 = vsel %vm1985, %v1746, 0.0
  %v2570 = vadd.f32 %v2568, %v2569
  %v2571 = vsel %vm1985, %v1748, 0.0
  %v2572 = vadd.f32 %v2570, %v2571
  %v2573 = vsel %vm1985, %v1751, 0.0
  %v2574 = vadd.f32 %v2572, %v2573
  %v2575 = vsel %vm1985, %v1753, 0.0
  %v2576 = vadd.f32 %v2574, %v2575
  %v2577 = vsel %vm1985, %v1756, 0.0
  %v2578 = vadd.f32 %v2576, %v2577
  %v2579 = vsel %vm1985, %v1758, 0.0
  %v2580 = vadd.f32 %v2578, %v2579
  %v2581 = vsel %vm1985, %v1761, 0.0
  %v2582 = vadd.f32 %v2580, %v2581
  %v2583 = vsel %vm1985, %v1763, 0.0
  %v2584 = vadd.f32 %v2582, %v2583
  %v2585 = vsel %vm1985, %v1766, 0.0
  %v2586 = vadd.f32 %v2584, %v2585
  %v2587 = vsel %vm1985, %v1768, 0.0
  %v2588 = vadd.f32 %v2586, %v2587
  %v2589 = vsel %vm1985, %v1771, 0.0
  %v2590 = vadd.f32 %v2588, %v2589
  %v2591 = vsel %vm1985, %v1773, 0.0
  %v2592 = vadd.f32 %v2590, %v2591
  %v2593 = vsel %vm1985, %v1776, 0.0
  %v2594 = vadd.f32 %v2592, %v2593
  %v2595 = vsel %vm1985, %v1778, 0.0
  %v2596 = vadd.f32 %v2594, %v2595
  %v2597 = vsel %vm1985, %v1781, 0.0
  %v2598 = vadd.f32 %v2596, %v2597
  %v2599 = vsel %vm1985, %v1783, 0.0
  %v2600 = vadd.f32 %v2598, %v2599
  %v2601 = vsel %vm1985, %v1786, 0.0
  %v2602 = vadd.f32 %v2600, %v2601
  %v2603 = vsel %vm1985, %v1788, 0.0
  %v2604 = vadd.f32 %v2602, %v2603
  %v2605 = vsel %vm1985, %v1791, 0.0
  %v2606 = vadd.f32 %v2604, %v2605
  %v2607 = vsel %vm1985, %v1793, 0.0
  %v2608 = vadd.f32 %v2606, %v2607
  %v2609 = vsel %vm1985, %v1796, 0.0
  %v2610 = vadd.f32 %v2608, %v2609
  %v2611 = vsel %vm1985, %v1798, 0.0
  %v2612 = vadd.f32 %v2610, %v2611
  %v2613 = vsel %vm1985, %v1801, 0.0
  %v2614 = vadd.f32 %v2612, %v2613
  %v2615 = vsel %vm1985, %v1803, 0.0
  %v2616 = vadd.f32 %v2614, %v2615
  %v2617 = vsel %vm1985, %v1806, 0.0
  %v2618 = vadd.f32 %v2616, %v2617
  %v2619 = vsel %vm1985, %v1808, 0.0
  %v2620 = vadd.f32 %v2618, %v2619
  %v2621 = vsel %vm1985, %v1811, 0.0
  %v2622 = vadd.f32 %v2620, %v2621
  %v2623 = vsel %vm1985, %v1813, 0.0
  %v2624 = vadd.f32 %v2622, %v2623
  %v2625 = vsel %vm1985, %v1816, 0.0
  %v2626 = vadd.f32 %v2624, %v2625
  %v2627 = vsel %vm1985, %v1818, 0.0
  %v2628 = vadd.f32 %v2626, %v2627
  %v2629 = vsel %vm1985, %v1821, 0.0
  %v2630 = vadd.f32 %v2628, %v2629
  %v2631 = vsel %vm1985, %v1823, 0.0
  %v2632 = vadd.f32 %v2630, %v2631
  %v2633 = vsel %vm1985, %v1826, 0.0
  %v2634 = vadd.f32 %v2632, %v2633
  %v2635 = vsel %vm1985, %v1828, 0.0
  %v2636 = vadd.f32 %v2634, %v2635
  %v2637 = vsel %vm1985, %v1831, 0.0
  %v2638 = vadd.f32 %v2636, %v2637
  %v2639 = vsel %vm1985, %v1833, 0.0
  %v2640 = vadd.f32 %v2638, %v2639
  %v2641 = vsel %vm1985, %v1836, 0.0
  %v2642 = vadd.f32 %v2640, %v2641
  %v2643 = vsel %vm1985, %v1838, 0.0
  %v2644 = vadd.f32 %v2642, %v2643
  %v2645 = vsel %vm1985, %v1841, 0.0
  %v2646 = vadd.f32 %v2644, %v2645
  %v2647 = vsel %vm1985, %v1843, 0.0
  %v2648 = vadd.f32 %v2646, %v2647
  %v2649 = vsel %vm1985, %v1846, 0.0
  %v2650 = vadd.f32 %v2648, %v2649
  %v2651 = vsel %vm1985, %v1848, 0.0
  %v2652 = vadd.f32 %v2650, %v2651
  %v2653 = vsel %vm1985, %v1851, 0.0
  %v2654 = vadd.f32 %v2652, %v2653
  %v2655 = vsel %vm1985, %v1853, 0.0
  %v2656 = vadd.f32 %v2654, %v2655
  %v2657 = vsel %vm1985, %v1856, 0.0
  %v2658 = vadd.f32 %v2656, %v2657
  %v2659 = vsel %vm1985, %v1858, 0.0
  %v2660 = vadd.f32 %v2658, %v2659
  %v2661 = vsel %vm1985, %v1861, 0.0
  %v2662 = vadd.f32 %v2660, %v2661
  %v2663 = vsel %vm1985, %v1863, 0.0
  %v2664 = vadd.f32 %v2662, %v2663
  %v2665 = vsel %vm1985, %v1866, 0.0
  %v2666 = vadd.f32 %v2664, %v2665
  %v2667 = vsel %vm1985, %v1868, 0.0
  %v2668 = vadd.f32 %v2666, %v2667
  %v2669 = vsel %vm1985, %v1871, 0.0
  %v2670 = vadd.f32 %v2668, %v2669
  %v2671 = vsel %vm1985, %v1873, 0.0
  %v2672 = vadd.f32 %v2670, %v2671
  %v2673 = vsel %vm1985, %v1876, 0.0
  %v2674 = vadd.f32 %v2672, %v2673
  %v2675 = vsel %vm1985, %v1878, 0.0
  %v2676 = vadd.f32 %v2674, %v2675
  %v2677 = vsel %vm1985, %v1881, 0.0
  %v2678 = vadd.f32 %v2676, %v2677
  %v2679 = vsel %vm1985, %v1883, 0.0
  %v2680 = vadd.f32 %v2678, %v2679
  %v2681 = vsel %vm1985, %v1886, 0.0
  %v2682 = vadd.f32 %v2680, %v2681
  %v2683 = vsel %vm1985, %v1888, 0.0
  %v2684 = vadd.f32 %v2682, %v2683
  %v2685 = vsel %vm1985, %v1891, 0.0
  %v2686 = vadd.f32 %v2684, %v2685
  %v2687 = vsel %vm1985, %v1893, 0.0
  %v2688 = vadd.f32 %v2686, %v2687
  %v2689 = vsel %vm1985, %v1896, 0.0
  %v2690 = vadd.f32 %v2688, %v2689
  %v2691 = vsel %vm1985, %v1898, 0.0
  %v2692 = vadd.f32 %v2690, %v2691
  %v2693 = vsel %vm1985, %v1901, 0.0
  %v2694 = vadd.f32 %v2692, %v2693
  %v2695 = vsel %vm1985, %v1903, 0.0
  %v2696 = vadd.f32 %v2694, %v2695
  %v2697 = vsel %vm1985, %v1906, 0.0
  %v2698 = vadd.f32 %v2696, %v2697
  %v2699 = vsel %vm1985, %v1908, 0.0
  %v2700 = vadd.f32 %v2698, %v2699
  %v2701 = vsel %vm1985, %v1911, 0.0
  %v2702 = vadd.f32 %v2700, %v2701
  %v2703 = vsel %vm1985, %v1913, 0.0
  %v2704 = vadd.f32 %v2702, %v2703
  %v2705 = vsel %vm1985, %v1916, 0.0
  %v2706 = vadd.f32 %v2704, %v2705
  %v2707 = vsel %vm1985, %v1918, 0.0
  %v2708 = vadd.f32 %v2706, %v2707
  %v2709 = vsel %vm1985, %v1921, 0.0
  %v2710 = vadd.f32 %v2708, %v2709
  %v2711 = vsel %vm1985, %v1923, 0.0
  %v2712 = vadd.f32 %v2710, %v2711
  %v2713 = vsel %vm1985, %v1926, 0.0
  %v2714 = vadd.f32 %v2712, %v2713
  %v2715 = vsel %vm1985, %v1928, 0.0
  %v2716 = vadd.f32 %v2714, %v2715
  %v2717 = vsel %vm1985, %v1931, 0.0
  %v2718 = vadd.f32 %v2716, %v2717
  %v2719 = vsel %vm1985, %v1933, 0.0
  %v2720 = vadd.f32 %v2718, %v2719
  %v2721 = vsel %vm1985, %v1936, 0.0
  %v2722 = vadd.f32 %v2720, %v2721
  %v2723 = vsel %vm1985, %v1938, 0.0
  %v2724 = vadd.f32 %v2722, %v2723
  %v2725 = vsel %vm1985, %v1941, 0.0
  %v2726 = vadd.f32 %v2724, %v2725
  %v2727 = vsel %vm1985, %v1943, 0.0
  %v2728 = vadd.f32 %v2726, %v2727
  %v2729 = vsel %vm1985, %v1946, 0.0
  %v2730 = vadd.f32 %v2728, %v2729
  %v2731 = vsel %vm1985, %v1948, 0.0
  %v2732 = vadd.f32 %v2730, %v2731
  %v2733 = vsel %vm1985, %v1951, 0.0
  %v2734 = vadd.f32 %v2732, %v2733
  %v2735 = vsel %vm1985, %v1953, 0.0
  %v2736 = vadd.f32 %v2734, %v2735
  %v2737 = vsel %vm1985, %v1956, 0.0
  %v2738 = vadd.f32 %v2736, %v2737
  %v2739 = vsel %vm1985, %v1958, 0.0
  %v2740 = vadd.f32 %v2738, %v2739
  %v2741 = vsel %vm1985, %v1961, 0.0
  %v2742 = vadd.f32 %v2740, %v2741
  %v2743 = vsel %vm1985, %v1963, 0.0
  %v2744 = vadd.f32 %v2742, %v2743
  %v2745 = vsel %vm1985, %v1966, 0.0
  %v2746 = vadd.f32 %v2744, %v2745
  %v2747 = vsel %vm1985, %v1968, 0.0
  %v2748 = vadd.f32 %v2746, %v2747
  %v2749 = vsel %vm1985, %v1971, 0.0
  %v2750 = vadd.f32 %v2748, %v2749
  %v2751 = vsel %vm1985, %v1973, 0.0
  %v2752 = vadd.f32 %v2750, %v2751
  %v2753 = vsel %vm1985, %v1976, 0.0
  %v2754 = vadd.f32 %v2752, %v2753
  %v2755 = vsel %vm1985, %v1978, 0.0
  %v2756 = vadd.f32 %v2754, %v2755
  %v2757 = vsel %vm1985, %v1981, 0.0
  %v2758 = vadd.f32 %v2756, %v2757
  %v2759 = vsel %vm1985, %v1983, 0.0
  %v2760 = vadd.f32 %v2758, %v2759
  %v2761 = vrot.slane %v2760, 4
  %v2762 = vadd.f32 %v2760, %v2761
  %v2763 = vrot.slane %v2762, 2
  %v2764 = vadd.f32 %v2762, %v2763
  %v2765 = vrot.slane %v2764, 1
  %v2766 = vadd.f32 %v2764, %v2765
  %v2767 = vadd.f32 %v2249, %v2766
  %vm2768 = vcmask 122880
  %2769 = vst.msk [vmem:[%s3] sm:$0x1] %vm2768, %v2767
  %v2770 = vld [vmem:[%s4] sm:$0x1]
  %v2771 = vmul.f32 %v1346, %v1346
  %v2772 = vmul.f32 %v1348, %v1348
  %v2773 = vmul.f32 %v1351, %v1351
  %v2774 = vmul.f32 %v1353, %v1353
  %v2775 = vmul.f32 %v1356, %v1356
  %v2776 = vmul.f32 %v1358, %v1358
  %v2777 = vmul.f32 %v1361, %v1361
  %v2778 = vmul.f32 %v1363, %v1363
  %v2779 = vmul.f32 %v1366, %v1366
  %v2780 = vmul.f32 %v1368, %v1368
  %v2781 = vmul.f32 %v1371, %v1371
  %v2782 = vmul.f32 %v1373, %v1373
  %v2783 = vmul.f32 %v1376, %v1376
  %v2784 = vmul.f32 %v1378, %v1378
  %v2785 = vmul.f32 %v1381, %v1381
  %v2786 = vmul.f32 %v1383, %v1383
  %v2787 = vmul.f32 %v1386, %v1386
  %v2788 = vmul.f32 %v1388, %v1388
  %v2789 = vmul.f32 %v1391, %v1391
  %v2790 = vmul.f32 %v1393, %v1393
  %v2791 = vmul.f32 %v1396, %v1396
  %v2792 = vmul.f32 %v1398, %v1398
  %v2793 = vmul.f32 %v1401, %v1401
  %v2794 = vmul.f32 %v1403, %v1403
  %v2795 = vmul.f32 %v1406, %v1406
  %v2796 = vmul.f32 %v1408, %v1408
  %v2797 = vmul.f32 %v1411, %v1411
  %v2798 = vmul.f32 %v1413, %v1413
  %v2799 = vmul.f32 %v1416, %v1416
  %v2800 = vmul.f32 %v1418, %v1418
  %v2801 = vmul.f32 %v1421, %v1421
  %v2802 = vmul.f32 %v1423, %v1423
  %v2803 = vmul.f32 %v1426, %v1426
  %v2804 = vmul.f32 %v1428, %v1428
  %v2805 = vmul.f32 %v1431, %v1431
  %v2806 = vmul.f32 %v1433, %v1433
  %v2807 = vmul.f32 %v1436, %v1436
  %v2808 = vmul.f32 %v1438, %v1438
  %v2809 = vmul.f32 %v1441, %v1441
  %v2810 = vmul.f32 %v1443, %v1443
  %v2811 = vmul.f32 %v1446, %v1446
  %v2812 = vmul.f32 %v1448, %v1448
  %v2813 = vmul.f32 %v1451, %v1451
  %v2814 = vmul.f32 %v1453, %v1453
  %v2815 = vmul.f32 %v1456, %v1456
  %v2816 = vmul.f32 %v1458, %v1458
  %v2817 = vmul.f32 %v1461, %v1461
  %v2818 = vmul.f32 %v1463, %v1463
  %v2819 = vmul.f32 %v1466, %v1466
  %v2820 = vmul.f32 %v1468, %v1468
  %v2821 = vmul.f32 %v1471, %v1471
  %v2822 = vmul.f32 %v1473, %v1473
  %v2823 = vmul.f32 %v1476, %v1476
  %v2824 = vmul.f32 %v1478, %v1478
  %v2825 = vmul.f32 %v1481, %v1481
  %v2826 = vmul.f32 %v1483, %v1483
  %v2827 = vmul.f32 %v1486, %v1486
  %v2828 = vmul.f32 %v1488, %v1488
  %v2829 = vmul.f32 %v1491, %v1491
  %v2830 = vmul.f32 %v1493, %v1493
  %v2831 = vmul.f32 %v1496, %v1496
  %v2832 = vmul.f32 %v1498, %v1498
  %v2833 = vmul.f32 %v1501, %v1501
  %v2834 = vmul.f32 %v1503, %v1503
  %v2835 = vmul.f32 %v1506, %v1506
  %v2836 = vmul.f32 %v1508, %v1508
  %v2837 = vmul.f32 %v1511, %v1511
  %v2838 = vmul.f32 %v1513, %v1513
  %v2839 = vmul.f32 %v1516, %v1516
  %v2840 = vmul.f32 %v1518, %v1518
  %v2841 = vmul.f32 %v1521, %v1521
  %v2842 = vmul.f32 %v1523, %v1523
  %v2843 = vmul.f32 %v1526, %v1526
  %v2844 = vmul.f32 %v1528, %v1528
  %v2845 = vmul.f32 %v1531, %v1531
  %v2846 = vmul.f32 %v1533, %v1533
  %v2847 = vmul.f32 %v1536, %v1536
  %v2848 = vmul.f32 %v1538, %v1538
  %v2849 = vmul.f32 %v1541, %v1541
  %v2850 = vmul.f32 %v1543, %v1543
  %v2851 = vmul.f32 %v1546, %v1546
  %v2852 = vmul.f32 %v1548, %v1548
  %v2853 = vmul.f32 %v1551, %v1551
  %v2854 = vmul.f32 %v1553, %v1553
  %v2855 = vmul.f32 %v1556, %v1556
  %v2856 = vmul.f32 %v1558, %v1558
  %v2857 = vmul.f32 %v1561, %v1561
  %v2858 = vmul.f32 %v1563, %v1563
  %v2859 = vmul.f32 %v1566, %v1566
  %v2860 = vmul.f32 %v1568, %v1568
  %v2861 = vmul.f32 %v1571, %v1571
  %v2862 = vmul.f32 %v1573, %v1573
  %v2863 = vmul.f32 %v1576, %v1576
  %v2864 = vmul.f32 %v1578, %v1578
  %v2865 = vmul.f32 %v1581, %v1581
  %v2866 = vmul.f32 %v1583, %v1583
  %v2867 = vmul.f32 %v1586, %v1586
  %v2868 = vmul.f32 %v1588, %v1588
  %v2869 = vmul.f32 %v1591, %v1591
  %v2870 = vmul.f32 %v1593, %v1593
  %v2871 = vmul.f32 %v1596, %v1596
  %v2872 = vmul.f32 %v1598, %v1598
  %v2873 = vmul.f32 %v1601, %v1601
  %v2874 = vmul.f32 %v1603, %v1603
  %v2875 = vmul.f32 %v1606, %v1606
  %v2876 = vmul.f32 %v1608, %v1608
  %v2877 = vmul.f32 %v1611, %v1611
  %v2878 = vmul.f32 %v1613, %v1613
  %v2879 = vmul.f32 %v1616, %v1616
  %v2880 = vmul.f32 %v1618, %v1618
  %v2881 = vmul.f32 %v1621, %v1621
  %v2882 = vmul.f32 %v1623, %v1623
  %v2883 = vmul.f32 %v1626, %v1626
  %v2884 = vmul.f32 %v1628, %v1628
  %v2885 = vmul.f32 %v1631, %v1631
  %v2886 = vmul.f32 %v1633, %v1633
  %v2887 = vmul.f32 %v1636, %v1636
  %v2888 = vmul.f32 %v1638, %v1638
  %v2889 = vmul.f32 %v1641, %v1641
  %v2890 = vmul.f32 %v1643, %v1643
  %v2891 = vmul.f32 %v1646, %v1646
  %v2892 = vmul.f32 %v1648, %v1648
  %v2893 = vmul.f32 %v1651, %v1651
  %v2894 = vmul.f32 %v1653, %v1653
  %v2895 = vmul.f32 %v1656, %v1656
  %v2896 = vmul.f32 %v1658, %v1658
  %v2897 = vmul.f32 %v1661, %v1661
  %v2898 = vmul.f32 %v1663, %v1663
  %v2899 = vmul.f32 %v1666, %v1666
  %v2900 = vmul.f32 %v1668, %v1668
  %v2901 = vmul.f32 %v1671, %v1671
  %v2902 = vmul.f32 %v1673, %v1673
  %v2903 = vmul.f32 %v1676, %v1676
  %v2904 = vmul.f32 %v1678, %v1678
  %v2905 = vmul.f32 %v1681, %v1681
  %v2906 = vmul.f32 %v1683, %v1683
  %v2907 = vmul.f32 %v1686, %v1686
  %v2908 = vmul.f32 %v1688, %v1688
  %v2909 = vmul.f32 %v1691, %v1691
  %v2910 = vmul.f32 %v1693, %v1693
  %v2911 = vmul.f32 %v1696, %v1696
  %v2912 = vmul.f32 %v1698, %v1698
  %v2913 = vmul.f32 %v1701, %v1701
  %v2914 = vmul.f32 %v1703, %v1703
  %v2915 = vmul.f32 %v1706, %v1706
  %v2916 = vmul.f32 %v1708, %v1708
  %v2917 = vmul.f32 %v1711, %v1711
  %v2918 = vmul.f32 %v1713, %v1713
  %v2919 = vmul.f32 %v1716, %v1716
  %v2920 = vmul.f32 %v1718, %v1718
  %v2921 = vmul.f32 %v1721, %v1721
  %v2922 = vmul.f32 %v1723, %v1723
  %v2923 = vmul.f32 %v1726, %v1726
  %v2924 = vmul.f32 %v1728, %v1728
  %v2925 = vmul.f32 %v1731, %v1731
  %v2926 = vmul.f32 %v1733, %v1733
  %v2927 = vmul.f32 %v1736, %v1736
  %v2928 = vmul.f32 %v1738, %v1738
  %v2929 = vmul.f32 %v1741, %v1741
  %v2930 = vmul.f32 %v1743, %v1743
  %v2931 = vmul.f32 %v1746, %v1746
  %v2932 = vmul.f32 %v1748, %v1748
  %v2933 = vmul.f32 %v1751, %v1751
  %v2934 = vmul.f32 %v1753, %v1753
  %v2935 = vmul.f32 %v1756, %v1756
  %v2936 = vmul.f32 %v1758, %v1758
  %v2937 = vmul.f32 %v1761, %v1761
  %v2938 = vmul.f32 %v1763, %v1763
  %v2939 = vmul.f32 %v1766, %v1766
  %v2940 = vmul.f32 %v1768, %v1768
  %v2941 = vmul.f32 %v1771, %v1771
  %v2942 = vmul.f32 %v1773, %v1773
  %v2943 = vmul.f32 %v1776, %v1776
  %v2944 = vmul.f32 %v1778, %v1778
  %v2945 = vmul.f32 %v1781, %v1781
  %v2946 = vmul.f32 %v1783, %v1783
  %v2947 = vmul.f32 %v1786, %v1786
  %v2948 = vmul.f32 %v1788, %v1788
  %v2949 = vmul.f32 %v1791, %v1791
  %v2950 = vmul.f32 %v1793, %v1793
  %v2951 = vmul.f32 %v1796, %v1796
  %v2952 = vmul.f32 %v1798, %v1798
  %v2953 = vmul.f32 %v1801, %v1801
  %v2954 = vmul.f32 %v1803, %v1803
  %v2955 = vmul.f32 %v1806, %v1806
  %v2956 = vmul.f32 %v1808, %v1808
  %v2957 = vmul.f32 %v1811, %v1811
  %v2958 = vmul.f32 %v1813, %v1813
  %v2959 = vmul.f32 %v1816, %v1816
  %v2960 = vmul.f32 %v1818, %v1818
  %v2961 = vmul.f32 %v1821, %v1821
  %v2962 = vmul.f32 %v1823, %v1823
  %v2963 = vmul.f32 %v1826, %v1826
  %v2964 = vmul.f32 %v1828, %v1828
  %v2965 = vmul.f32 %v1831, %v1831
  %v2966 = vmul.f32 %v1833, %v1833
  %v2967 = vmul.f32 %v1836, %v1836
  %v2968 = vmul.f32 %v1838, %v1838
  %v2969 = vmul.f32 %v1841, %v1841
  %v2970 = vmul.f32 %v1843, %v1843
  %v2971 = vmul.f32 %v1846, %v1846
  %v2972 = vmul.f32 %v1848, %v1848
  %v2973 = vmul.f32 %v1851, %v1851
  %v2974 = vmul.f32 %v1853, %v1853
  %v2975 = vmul.f32 %v1856, %v1856
  %v2976 = vmul.f32 %v1858, %v1858
  %v2977 = vmul.f32 %v1861, %v1861
  %v2978 = vmul.f32 %v1863, %v1863
  %v2979 = vmul.f32 %v1866, %v1866
  %v2980 = vmul.f32 %v1868, %v1868
  %v2981 = vmul.f32 %v1871, %v1871
  %v2982 = vmul.f32 %v1873, %v1873
  %v2983 = vmul.f32 %v1876, %v1876
  %v2984 = vmul.f32 %v1878, %v1878
  %v2985 = vmul.f32 %v1881, %v1881
  %v2986 = vmul.f32 %v1883, %v1883
  %v2987 = vmul.f32 %v1886, %v1886
  %v2988 = vmul.f32 %v1888, %v1888
  %v2989 = vmul.f32 %v1891, %v1891
  %v2990 = vmul.f32 %v1893, %v1893
  %v2991 = vmul.f32 %v1896, %v1896
  %v2992 = vmul.f32 %v1898, %v1898
  %v2993 = vmul.f32 %v1901, %v1901
  %v2994 = vmul.f32 %v1903, %v1903
  %v2995 = vmul.f32 %v1906, %v1906
  %v2996 = vmul.f32 %v1908, %v1908
  %v2997 = vmul.f32 %v1911, %v1911
  %v2998 = vmul.f32 %v1913, %v1913
  %v2999 = vmul.f32 %v1916, %v1916
  %v3000 = vmul.f32 %v1918, %v1918
  %v3001 = vmul.f32 %v1921, %v1921
  %v3002 = vmul.f32 %v1923, %v1923
  %v3003 = vmul.f32 %v1926, %v1926
  %v3004 = vmul.f32 %v1928, %v1928
  %v3005 = vmul.f32 %v1931, %v1931
  %v3006 = vmul.f32 %v1933, %v1933
  %v3007 = vmul.f32 %v1936, %v1936
  %v3008 = vmul.f32 %v1938, %v1938
  %v3009 = vmul.f32 %v1941, %v1941
  %v3010 = vmul.f32 %v1943, %v1943
  %v3011 = vmul.f32 %v1946, %v1946
  %v3012 = vmul.f32 %v1948, %v1948
  %v3013 = vmul.f32 %v1951, %v1951
  %v3014 = vmul.f32 %v1953, %v1953
  %v3015 = vmul.f32 %v1956, %v1956
  %v3016 = vmul.f32 %v1958, %v1958
  %v3017 = vmul.f32 %v1961, %v1961
  %v3018 = vmul.f32 %v1963, %v1963
  %v3019 = vmul.f32 %v1966, %v1966
  %v3020 = vmul.f32 %v1968, %v1968
  %v3021 = vmul.f32 %v1971, %v1971
  %v3022 = vmul.f32 %v1973, %v1973
  %v3023 = vmul.f32 %v1976, %v1976
  %v3024 = vmul.f32 %v1978, %v1978
  %v3025 = vmul.f32 %v1981, %v1981
  %v3026 = vmul.f32 %v1983, %v1983
  %v3027 = vsel %vm1985, %v2771, 0.0
  %v3028 = vsel %vm1985, %v2772, 0.0
  %v3029 = vadd.f32 %v3027, %v3028
  %v3030 = vsel %vm1985, %v2773, 0.0
  %v3031 = vadd.f32 %v3029, %v3030
  %v3032 = vsel %vm1985, %v2774, 0.0
  %v3033 = vadd.f32 %v3031, %v3032
  %v3034 = vsel %vm1985, %v2775, 0.0
  %v3035 = vadd.f32 %v3033, %v3034
  %v3036 = vsel %vm1985, %v2776, 0.0
  %v3037 = vadd.f32 %v3035, %v3036
  %v3038 = vsel %vm1985, %v2777, 0.0
  %v3039 = vadd.f32 %v3037, %v3038
  %v3040 = vsel %vm1985, %v2778, 0.0
  %v3041 = vadd.f32 %v3039, %v3040
  %v3042 = vsel %vm1985, %v2779, 0.0
  %v3043 = vadd.f32 %v3041, %v3042
  %v3044 = vsel %vm1985, %v2780, 0.0
  %v3045 = vadd.f32 %v3043, %v3044
  %v3046 = vsel %vm1985, %v2781, 0.0
  %v3047 = vadd.f32 %v3045, %v3046
  %v3048 = vsel %vm1985, %v2782, 0.0
  %v3049 = vadd.f32 %v3047, %v3048
  %v3050 = vsel %vm1985, %v2783, 0.0
  %v3051 = vadd.f32 %v3049, %v3050
  %v3052 = vsel %vm1985, %v2784, 0.0
  %v3053 = vadd.f32 %v3051, %v3052
  %v3054 = vsel %vm1985, %v2785, 0.0
  %v3055 = vadd.f32 %v3053, %v3054
  %v3056 = vsel %vm1985, %v2786, 0.0
  %v3057 = vadd.f32 %v3055, %v3056
  %v3058 = vsel %vm1985, %v2787, 0.0
  %v3059 = vadd.f32 %v3057, %v3058
  %v3060 = vsel %vm1985, %v2788, 0.0
  %v3061 = vadd.f32 %v3059, %v3060
  %v3062 = vsel %vm1985, %v2789, 0.0
  %v3063 = vadd.f32 %v3061, %v3062
  %v3064 = vsel %vm1985, %v2790, 0.0
  %v3065 = vadd.f32 %v3063, %v3064
  %v3066 = vsel %vm1985, %v2791, 0.0
  %v3067 = vadd.f32 %v3065, %v3066
  %v3068 = vsel %vm1985, %v2792, 0.0
  %v3069 = vadd.f32 %v3067, %v3068
  %v3070 = vsel %vm1985, %v2793, 0.0
  %v3071 = vadd.f32 %v3069, %v3070
  %v3072 = vsel %vm1985, %v2794, 0.0
  %v3073 = vadd.f32 %v3071, %v3072
  %v3074 = vsel %vm1985, %v2795, 0.0
  %v3075 = vadd.f32 %v3073, %v3074
  %v3076 = vsel %vm1985, %v2796, 0.0
  %v3077 = vadd.f32 %v3075, %v3076
  %v3078 = vsel %vm1985, %v2797, 0.0
  %v3079 = vadd.f32 %v3077, %v3078
  %v3080 = vsel %vm1985, %v2798, 0.0
  %v3081 = vadd.f32 %v3079, %v3080
  %v3082 = vsel %vm1985, %v2799, 0.0
  %v3083 = vadd.f32 %v3081, %v3082
  %v3084 = vsel %vm1985, %v2800, 0.0
  %v3085 = vadd.f32 %v3083, %v3084
  %v3086 = vsel %vm1985, %v2801, 0.0
  %v3087 = vadd.f32 %v3085, %v3086
  %v3088 = vsel %vm1985, %v2802, 0.0
  %v3089 = vadd.f32 %v3087, %v3088
  %v3090 = vsel %vm1985, %v2803, 0.0
  %v3091 = vadd.f32 %v3089, %v3090
  %v3092 = vsel %vm1985, %v2804, 0.0
  %v3093 = vadd.f32 %v3091, %v3092
  %v3094 = vsel %vm1985, %v2805, 0.0
  %v3095 = vadd.f32 %v3093, %v3094
  %v3096 = vsel %vm1985, %v2806, 0.0
  %v3097 = vadd.f32 %v3095, %v3096
  %v3098 = vsel %vm1985, %v2807, 0.0
  %v3099 = vadd.f32 %v3097, %v3098
  %v3100 = vsel %vm1985, %v2808, 0.0
  %v3101 = vadd.f32 %v3099, %v3100
  %v3102 = vsel %vm1985, %v2809, 0.0
  %v3103 = vadd.f32 %v3101, %v3102
  %v3104 = vsel %vm1985, %v2810, 0.0
  %v3105 = vadd.f32 %v3103, %v3104
  %v3106 = vsel %vm1985, %v2811, 0.0
  %v3107 = vadd.f32 %v3105, %v3106
  %v3108 = vsel %vm1985, %v2812, 0.0
  %v3109 = vadd.f32 %v3107, %v3108
  %v3110 = vsel %vm1985, %v2813, 0.0
  %v3111 = vadd.f32 %v3109, %v3110
  %v3112 = vsel %vm1985, %v2814, 0.0
  %v3113 = vadd.f32 %v3111, %v3112
  %v3114 = vsel %vm1985, %v2815, 0.0
  %v3115 = vadd.f32 %v3113, %v3114
  %v3116 = vsel %vm1985, %v2816, 0.0
  %v3117 = vadd.f32 %v3115, %v3116
  %v3118 = vsel %vm1985, %v2817, 0.0
  %v3119 = vadd.f32 %v3117, %v3118
  %v3120 = vsel %vm1985, %v2818, 0.0
  %v3121 = vadd.f32 %v3119, %v3120
  %v3122 = vsel %vm1985, %v2819, 0.0
  %v3123 = vadd.f32 %v3121, %v3122
  %v3124 = vsel %vm1985, %v2820, 0.0
  %v3125 = vadd.f32 %v3123, %v3124
  %v3126 = vsel %vm1985, %v2821, 0.0
  %v3127 = vadd.f32 %v3125, %v3126
  %v3128 = vsel %vm1985, %v2822, 0.0
  %v3129 = vadd.f32 %v3127, %v3128
  %v3130 = vsel %vm1985, %v2823, 0.0
  %v3131 = vadd.f32 %v3129, %v3130
  %v3132 = vsel %vm1985, %v2824, 0.0
  %v3133 = vadd.f32 %v3131, %v3132
  %v3134 = vsel %vm1985, %v2825, 0.0
  %v3135 = vadd.f32 %v3133, %v3134
  %v3136 = vsel %vm1985, %v2826, 0.0
  %v3137 = vadd.f32 %v3135, %v3136
  %v3138 = vsel %vm1985, %v2827, 0.0
  %v3139 = vadd.f32 %v3137, %v3138
  %v3140 = vsel %vm1985, %v2828, 0.0
  %v3141 = vadd.f32 %v3139, %v3140
  %v3142 = vsel %vm1985, %v2829, 0.0
  %v3143 = vadd.f32 %v3141, %v3142
  %v3144 = vsel %vm1985, %v2830, 0.0
  %v3145 = vadd.f32 %v3143, %v3144
  %v3146 = vsel %vm1985, %v2831, 0.0
  %v3147 = vadd.f32 %v3145, %v3146
  %v3148 = vsel %vm1985, %v2832, 0.0
  %v3149 = vadd.f32 %v3147, %v3148
  %v3150 = vsel %vm1985, %v2833, 0.0
  %v3151 = vadd.f32 %v3149, %v3150
  %v3152 = vsel %vm1985, %v2834, 0.0
  %v3153 = vadd.f32 %v3151, %v3152
  %v3154 = vsel %vm1985, %v2835, 0.0
  %v3155 = vadd.f32 %v3153, %v3154
  %v3156 = vsel %vm1985, %v2836, 0.0
  %v3157 = vadd.f32 %v3155, %v3156
  %v3158 = vsel %vm1985, %v2837, 0.0
  %v3159 = vadd.f32 %v3157, %v3158
  %v3160 = vsel %vm1985, %v2838, 0.0
  %v3161 = vadd.f32 %v3159, %v3160
  %v3162 = vsel %vm1985, %v2839, 0.0
  %v3163 = vadd.f32 %v3161, %v3162
  %v3164 = vsel %vm1985, %v2840, 0.0
  %v3165 = vadd.f32 %v3163, %v3164
  %v3166 = vsel %vm1985, %v2841, 0.0
  %v3167 = vadd.f32 %v3165, %v3166
  %v3168 = vsel %vm1985, %v2842, 0.0
  %v3169 = vadd.f32 %v3167, %v3168
  %v3170 = vsel %vm1985, %v2843, 0.0
  %v3171 = vadd.f32 %v3169, %v3170
  %v3172 = vsel %vm1985, %v2844, 0.0
  %v3173 = vadd.f32 %v3171, %v3172
  %v3174 = vsel %vm1985, %v2845, 0.0
  %v3175 = vadd.f32 %v3173, %v3174
  %v3176 = vsel %vm1985, %v2846, 0.0
  %v3177 = vadd.f32 %v3175, %v3176
  %v3178 = vsel %vm1985, %v2847, 0.0
  %v3179 = vadd.f32 %v3177, %v3178
  %v3180 = vsel %vm1985, %v2848, 0.0
  %v3181 = vadd.f32 %v3179, %v3180
  %v3182 = vsel %vm1985, %v2849, 0.0
  %v3183 = vadd.f32 %v3181, %v3182
  %v3184 = vsel %vm1985, %v2850, 0.0
  %v3185 = vadd.f32 %v3183, %v3184
  %v3186 = vsel %vm1985, %v2851, 0.0
  %v3187 = vadd.f32 %v3185, %v3186
  %v3188 = vsel %vm1985, %v2852, 0.0
  %v3189 = vadd.f32 %v3187, %v3188
  %v3190 = vsel %vm1985, %v2853, 0.0
  %v3191 = vadd.f32 %v3189, %v3190
  %v3192 = vsel %vm1985, %v2854, 0.0
  %v3193 = vadd.f32 %v3191, %v3192
  %v3194 = vsel %vm1985, %v2855, 0.0
  %v3195 = vadd.f32 %v3193, %v3194
  %v3196 = vsel %vm1985, %v2856, 0.0
  %v3197 = vadd.f32 %v3195, %v3196
  %v3198 = vsel %vm1985, %v2857, 0.0
  %v3199 = vadd.f32 %v3197, %v3198
  %v3200 = vsel %vm1985, %v2858, 0.0
  %v3201 = vadd.f32 %v3199, %v3200
  %v3202 = vsel %vm1985, %v2859, 0.0
  %v3203 = vadd.f32 %v3201, %v3202
  %v3204 = vsel %vm1985, %v2860, 0.0
  %v3205 = vadd.f32 %v3203, %v3204
  %v3206 = vsel %vm1985, %v2861, 0.0
  %v3207 = vadd.f32 %v3205, %v3206
  %v3208 = vsel %vm1985, %v2862, 0.0
  %v3209 = vadd.f32 %v3207, %v3208
  %v3210 = vsel %vm1985, %v2863, 0.0
  %v3211 = vadd.f32 %v3209, %v3210
  %v3212 = vsel %vm1985, %v2864, 0.0
  %v3213 = vadd.f32 %v3211, %v3212
  %v3214 = vsel %vm1985, %v2865, 0.0
  %v3215 = vadd.f32 %v3213, %v3214
  %v3216 = vsel %vm1985, %v2866, 0.0
  %v3217 = vadd.f32 %v3215, %v3216
  %v3218 = vsel %vm1985, %v2867, 0.0
  %v3219 = vadd.f32 %v3217, %v3218
  %v3220 = vsel %vm1985, %v2868, 0.0
  %v3221 = vadd.f32 %v3219, %v3220
  %v3222 = vsel %vm1985, %v2869, 0.0
  %v3223 = vadd.f32 %v3221, %v3222
  %v3224 = vsel %vm1985, %v2870, 0.0
  %v3225 = vadd.f32 %v3223, %v3224
  %v3226 = vsel %vm1985, %v2871, 0.0
  %v3227 = vadd.f32 %v3225, %v3226
  %v3228 = vsel %vm1985, %v2872, 0.0
  %v3229 = vadd.f32 %v3227, %v3228
  %v3230 = vsel %vm1985, %v2873, 0.0
  %v3231 = vadd.f32 %v3229, %v3230
  %v3232 = vsel %vm1985, %v2874, 0.0
  %v3233 = vadd.f32 %v3231, %v3232
  %v3234 = vsel %vm1985, %v2875, 0.0
  %v3235 = vadd.f32 %v3233, %v3234
  %v3236 = vsel %vm1985, %v2876, 0.0
  %v3237 = vadd.f32 %v3235, %v3236
  %v3238 = vsel %vm1985, %v2877, 0.0
  %v3239 = vadd.f32 %v3237, %v3238
  %v3240 = vsel %vm1985, %v2878, 0.0
  %v3241 = vadd.f32 %v3239, %v3240
  %v3242 = vsel %vm1985, %v2879, 0.0
  %v3243 = vadd.f32 %v3241, %v3242
  %v3244 = vsel %vm1985, %v2880, 0.0
  %v3245 = vadd.f32 %v3243, %v3244
  %v3246 = vsel %vm1985, %v2881, 0.0
  %v3247 = vadd.f32 %v3245, %v3246
  %v3248 = vsel %vm1985, %v2882, 0.0
  %v3249 = vadd.f32 %v3247, %v3248
  %v3250 = vsel %vm1985, %v2883, 0.0
  %v3251 = vadd.f32 %v3249, %v3250
  %v3252 = vsel %vm1985, %v2884, 0.0
  %v3253 = vadd.f32 %v3251, %v3252
  %v3254 = vsel %vm1985, %v2885, 0.0
  %v3255 = vadd.f32 %v3253, %v3254
  %v3256 = vsel %vm1985, %v2886, 0.0
  %v3257 = vadd.f32 %v3255, %v3256
  %v3258 = vsel %vm1985, %v2887, 0.0
  %v3259 = vadd.f32 %v3257, %v3258
  %v3260 = vsel %vm1985, %v2888, 0.0
  %v3261 = vadd.f32 %v3259, %v3260
  %v3262 = vsel %vm1985, %v2889, 0.0
  %v3263 = vadd.f32 %v3261, %v3262
  %v3264 = vsel %vm1985, %v2890, 0.0
  %v3265 = vadd.f32 %v3263, %v3264
  %v3266 = vsel %vm1985, %v2891, 0.0
  %v3267 = vadd.f32 %v3265, %v3266
  %v3268 = vsel %vm1985, %v2892, 0.0
  %v3269 = vadd.f32 %v3267, %v3268
  %v3270 = vsel %vm1985, %v2893, 0.0
  %v3271 = vadd.f32 %v3269, %v3270
  %v3272 = vsel %vm1985, %v2894, 0.0
  %v3273 = vadd.f32 %v3271, %v3272
  %v3274 = vsel %vm1985, %v2895, 0.0
  %v3275 = vadd.f32 %v3273, %v3274
  %v3276 = vsel %vm1985, %v2896, 0.0
  %v3277 = vadd.f32 %v3275, %v3276
  %v3278 = vsel %vm1985, %v2897, 0.0
  %v3279 = vadd.f32 %v3277, %v3278
  %v3280 = vsel %vm1985, %v2898, 0.0
  %v3281 = vadd.f32 %v3279, %v3280
  %v3282 = vsel %vm1985, %v2899, 0.0
  %v3283 = vadd.f32 %v3281, %v3282
  %v3284 = vsel %vm1985, %v2900, 0.0
  %v3285 = vadd.f32 %v3283, %v3284
  %v3286 = vsel %vm1985, %v2901, 0.0
  %v3287 = vadd.f32 %v3285, %v3286
  %v3288 = vsel %vm1985, %v2902, 0.0
  %v3289 = vadd.f32 %v3287, %v3288
  %v3290 = vsel %vm1985, %v2903, 0.0
  %v3291 = vadd.f32 %v3289, %v3290
  %v3292 = vsel %vm1985, %v2904, 0.0
  %v3293 = vadd.f32 %v3291, %v3292
  %v3294 = vsel %vm1985, %v2905, 0.0
  %v3295 = vadd.f32 %v3293, %v3294
  %v3296 = vsel %vm1985, %v2906, 0.0
  %v3297 = vadd.f32 %v3295, %v3296
  %v3298 = vsel %vm1985, %v2907, 0.0
  %v3299 = vadd.f32 %v3297, %v3298
  %v3300 = vsel %vm1985, %v2908, 0.0
  %v3301 = vadd.f32 %v3299, %v3300
  %v3302 = vsel %vm1985, %v2909, 0.0
  %v3303 = vadd.f32 %v3301, %v3302
  %v3304 = vsel %vm1985, %v2910, 0.0
  %v3305 = vadd.f32 %v3303, %v3304
  %v3306 = vsel %vm1985, %v2911, 0.0
  %v3307 = vadd.f32 %v3305, %v3306
  %v3308 = vsel %vm1985, %v2912, 0.0
  %v3309 = vadd.f32 %v3307, %v3308
  %v3310 = vsel %vm1985, %v2913, 0.0
  %v3311 = vadd.f32 %v3309, %v3310
  %v3312 = vsel %vm1985, %v2914, 0.0
  %v3313 = vadd.f32 %v3311, %v3312
  %v3314 = vsel %vm1985, %v2915, 0.0
  %v3315 = vadd.f32 %v3313, %v3314
  %v3316 = vsel %vm1985, %v2916, 0.0
  %v3317 = vadd.f32 %v3315, %v3316
  %v3318 = vsel %vm1985, %v2917, 0.0
  %v3319 = vadd.f32 %v3317, %v3318
  %v3320 = vsel %vm1985, %v2918, 0.0
  %v3321 = vadd.f32 %v3319, %v3320
  %v3322 = vsel %vm1985, %v2919, 0.0
  %v3323 = vadd.f32 %v3321, %v3322
  %v3324 = vsel %vm1985, %v2920, 0.0
  %v3325 = vadd.f32 %v3323, %v3324
  %v3326 = vsel %vm1985, %v2921, 0.0
  %v3327 = vadd.f32 %v3325, %v3326
  %v3328 = vsel %vm1985, %v2922, 0.0
  %v3329 = vadd.f32 %v3327, %v3328
  %v3330 = vsel %vm1985, %v2923, 0.0
  %v3331 = vadd.f32 %v3329, %v3330
  %v3332 = vsel %vm1985, %v2924, 0.0
  %v3333 = vadd.f32 %v3331, %v3332
  %v3334 = vsel %vm1985, %v2925, 0.0
  %v3335 = vadd.f32 %v3333, %v3334
  %v3336 = vsel %vm1985, %v2926, 0.0
  %v3337 = vadd.f32 %v3335, %v3336
  %v3338 = vsel %vm1985, %v2927, 0.0
  %v3339 = vadd.f32 %v3337, %v3338
  %v3340 = vsel %vm1985, %v2928, 0.0
  %v3341 = vadd.f32 %v3339, %v3340
  %v3342 = vsel %vm1985, %v2929, 0.0
  %v3343 = vadd.f32 %v3341, %v3342
  %v3344 = vsel %vm1985, %v2930, 0.0
  %v3345 = vadd.f32 %v3343, %v3344
  %v3346 = vsel %vm1985, %v2931, 0.0
  %v3347 = vadd.f32 %v3345, %v3346
  %v3348 = vsel %vm1985, %v2932, 0.0
  %v3349 = vadd.f32 %v3347, %v3348
  %v3350 = vsel %vm1985, %v2933, 0.0
  %v3351 = vadd.f32 %v3349, %v3350
  %v3352 = vsel %vm1985, %v2934, 0.0
  %v3353 = vadd.f32 %v3351, %v3352
  %v3354 = vsel %vm1985, %v2935, 0.0
  %v3355 = vadd.f32 %v3353, %v3354
  %v3356 = vsel %vm1985, %v2936, 0.0
  %v3357 = vadd.f32 %v3355, %v3356
  %v3358 = vsel %vm1985, %v2937, 0.0
  %v3359 = vadd.f32 %v3357, %v3358
  %v3360 = vsel %vm1985, %v2938, 0.0
  %v3361 = vadd.f32 %v3359, %v3360
  %v3362 = vsel %vm1985, %v2939, 0.0
  %v3363 = vadd.f32 %v3361, %v3362
  %v3364 = vsel %vm1985, %v2940, 0.0
  %v3365 = vadd.f32 %v3363, %v3364
  %v3366 = vsel %vm1985, %v2941, 0.0
  %v3367 = vadd.f32 %v3365, %v3366
  %v3368 = vsel %vm1985, %v2942, 0.0
  %v3369 = vadd.f32 %v3367, %v3368
  %v3370 = vsel %vm1985, %v2943, 0.0
  %v3371 = vadd.f32 %v3369, %v3370
  %v3372 = vsel %vm1985, %v2944, 0.0
  %v3373 = vadd.f32 %v3371, %v3372
  %v3374 = vsel %vm1985, %v2945, 0.0
  %v3375 = vadd.f32 %v3373, %v3374
  %v3376 = vsel %vm1985, %v2946, 0.0
  %v3377 = vadd.f32 %v3375, %v3376
  %v3378 = vsel %vm1985, %v2947, 0.0
  %v3379 = vadd.f32 %v3377, %v3378
  %v3380 = vsel %vm1985, %v2948, 0.0
  %v3381 = vadd.f32 %v3379, %v3380
  %v3382 = vsel %vm1985, %v2949, 0.0
  %v3383 = vadd.f32 %v3381, %v3382
  %v3384 = vsel %vm1985, %v2950, 0.0
  %v3385 = vadd.f32 %v3383, %v3384
  %v3386 = vsel %vm1985, %v2951, 0.0
  %v3387 = vadd.f32 %v3385, %v3386
  %v3388 = vsel %vm1985, %v2952, 0.0
  %v3389 = vadd.f32 %v3387, %v3388
  %v3390 = vsel %vm1985, %v2953, 0.0
  %v3391 = vadd.f32 %v3389, %v3390
  %v3392 = vsel %vm1985, %v2954, 0.0
  %v3393 = vadd.f32 %v3391, %v3392
  %v3394 = vsel %vm1985, %v2955, 0.0
  %v3395 = vadd.f32 %v3393, %v3394
  %v3396 = vsel %vm1985, %v2956, 0.0
  %v3397 = vadd.f32 %v3395, %v3396
  %v3398 = vsel %vm1985, %v2957, 0.0
  %v3399 = vadd.f32 %v3397, %v3398
  %v3400 = vsel %vm1985, %v2958, 0.0
  %v3401 = vadd.f32 %v3399, %v3400
  %v3402 = vsel %vm1985, %v2959, 0.0
  %v3403 = vadd.f32 %v3401, %v3402
  %v3404 = vsel %vm1985, %v2960, 0.0
  %v3405 = vadd.f32 %v3403, %v3404
  %v3406 = vsel %vm1985, %v2961, 0.0
  %v3407 = vadd.f32 %v3405, %v3406
  %v3408 = vsel %vm1985, %v2962, 0.0
  %v3409 = vadd.f32 %v3407, %v3408
  %v3410 = vsel %vm1985, %v2963, 0.0
  %v3411 = vadd.f32 %v3409, %v3410
  %v3412 = vsel %vm1985, %v2964, 0.0
  %v3413 = vadd.f32 %v3411, %v3412
  %v3414 = vsel %vm1985, %v2965, 0.0
  %v3415 = vadd.f32 %v3413, %v3414
  %v3416 = vsel %vm1985, %v2966, 0.0
  %v3417 = vadd.f32 %v3415, %v3416
  %v3418 = vsel %vm1985, %v2967, 0.0
  %v3419 = vadd.f32 %v3417, %v3418
  %v3420 = vsel %vm1985, %v2968, 0.0
  %v3421 = vadd.f32 %v3419, %v3420
  %v3422 = vsel %vm1985, %v2969, 0.0
  %v3423 = vadd.f32 %v3421, %v3422
  %v3424 = vsel %vm1985, %v2970, 0.0
  %v3425 = vadd.f32 %v3423, %v3424
  %v3426 = vsel %vm1985, %v2971, 0.0
  %v3427 = vadd.f32 %v3425, %v3426
  %v3428 = vsel %vm1985, %v2972, 0.0
  %v3429 = vadd.f32 %v3427, %v3428
  %v3430 = vsel %vm1985, %v2973, 0.0
  %v3431 = vadd.f32 %v3429, %v3430
  %v3432 = vsel %vm1985, %v2974, 0.0
  %v3433 = vadd.f32 %v3431, %v3432
  %v3434 = vsel %vm1985, %v2975, 0.0
  %v3435 = vadd.f32 %v3433, %v3434
  %v3436 = vsel %vm1985, %v2976, 0.0
  %v3437 = vadd.f32 %v3435, %v3436
  %v3438 = vsel %vm1985, %v2977, 0.0
  %v3439 = vadd.f32 %v3437, %v3438
  %v3440 = vsel %vm1985, %v2978, 0.0
  %v3441 = vadd.f32 %v3439, %v3440
  %v3442 = vsel %vm1985, %v2979, 0.0
  %v3443 = vadd.f32 %v3441, %v3442
  %v3444 = vsel %vm1985, %v2980, 0.0
  %v3445 = vadd.f32 %v3443, %v3444
  %v3446 = vsel %vm1985, %v2981, 0.0
  %v3447 = vadd.f32 %v3445, %v3446
  %v3448 = vsel %vm1985, %v2982, 0.0
  %v3449 = vadd.f32 %v3447, %v3448
  %v3450 = vsel %vm1985, %v2983, 0.0
  %v3451 = vadd.f32 %v3449, %v3450
  %v3452 = vsel %vm1985, %v2984, 0.0
  %v3453 = vadd.f32 %v3451, %v3452
  %v3454 = vsel %vm1985, %v2985, 0.0
  %v3455 = vadd.f32 %v3453, %v3454
  %v3456 = vsel %vm1985, %v2986, 0.0
  %v3457 = vadd.f32 %v3455, %v3456
  %v3458 = vsel %vm1985, %v2987, 0.0
  %v3459 = vadd.f32 %v3457, %v3458
  %v3460 = vsel %vm1985, %v2988, 0.0
  %v3461 = vadd.f32 %v3459, %v3460
  %v3462 = vsel %vm1985, %v2989, 0.0
  %v3463 = vadd.f32 %v3461, %v3462
  %v3464 = vsel %vm1985, %v2990, 0.0
  %v3465 = vadd.f32 %v3463, %v3464
  %v3466 = vsel %vm1985, %v2991, 0.0
  %v3467 = vadd.f32 %v3465, %v3466
  %v3468 = vsel %vm1985, %v2992, 0.0
  %v3469 = vadd.f32 %v3467, %v3468
  %v3470 = vsel %vm1985, %v2993, 0.0
  %v3471 = vadd.f32 %v3469, %v3470
  %v3472 = vsel %vm1985, %v2994, 0.0
  %v3473 = vadd.f32 %v3471, %v3472
  %v3474 = vsel %vm1985, %v2995, 0.0
  %v3475 = vadd.f32 %v3473, %v3474
  %v3476 = vsel %vm1985, %v2996, 0.0
  %v3477 = vadd.f32 %v3475, %v3476
  %v3478 = vsel %vm1985, %v2997, 0.0
  %v3479 = vadd.f32 %v3477, %v3478
  %v3480 = vsel %vm1985, %v2998, 0.0
  %v3481 = vadd.f32 %v3479, %v3480
  %v3482 = vsel %vm1985, %v2999, 0.0
  %v3483 = vadd.f32 %v3481, %v3482
  %v3484 = vsel %vm1985, %v3000, 0.0
  %v3485 = vadd.f32 %v3483, %v3484
  %v3486 = vsel %vm1985, %v3001, 0.0
  %v3487 = vadd.f32 %v3485, %v3486
  %v3488 = vsel %vm1985, %v3002, 0.0
  %v3489 = vadd.f32 %v3487, %v3488
  %v3490 = vsel %vm1985, %v3003, 0.0
  %v3491 = vadd.f32 %v3489, %v3490
  %v3492 = vsel %vm1985, %v3004, 0.0
  %v3493 = vadd.f32 %v3491, %v3492
  %v3494 = vsel %vm1985, %v3005, 0.0
  %v3495 = vadd.f32 %v3493, %v3494
  %v3496 = vsel %vm1985, %v3006, 0.0
  %v3497 = vadd.f32 %v3495, %v3496
  %v3498 = vsel %vm1985, %v3007, 0.0
  %v3499 = vadd.f32 %v3497, %v3498
  %v3500 = vsel %vm1985, %v3008, 0.0
  %v3501 = vadd.f32 %v3499, %v3500
  %v3502 = vsel %vm1985, %v3009, 0.0
  %v3503 = vadd.f32 %v3501, %v3502
  %v3504 = vsel %vm1985, %v3010, 0.0
  %v3505 = vadd.f32 %v3503, %v3504
  %v3506 = vsel %vm1985, %v3011, 0.0
  %v3507 = vadd.f32 %v3505, %v3506
  %v3508 = vsel %vm1985, %v3012, 0.0
  %v3509 = vadd.f32 %v3507, %v3508
  %v3510 = vsel %vm1985, %v3013, 0.0
  %v3511 = vadd.f32 %v3509, %v3510
  %v3512 = vsel %vm1985, %v3014, 0.0
  %v3513 = vadd.f32 %v3511, %v3512
  %v3514 = vsel %vm1985, %v3015, 0.0
  %v3515 = vadd.f32 %v3513, %v3514
  %v3516 = vsel %vm1985, %v3016, 0.0
  %v3517 = vadd.f32 %v3515, %v3516
  %v3518 = vsel %vm1985, %v3017, 0.0
  %v3519 = vadd.f32 %v3517, %v3518
  %v3520 = vsel %vm1985, %v3018, 0.0
  %v3521 = vadd.f32 %v3519, %v3520
  %v3522 = vsel %vm1985, %v3019, 0.0
  %v3523 = vadd.f32 %v3521, %v3522
  %v3524 = vsel %vm1985, %v3020, 0.0
  %v3525 = vadd.f32 %v3523, %v3524
  %v3526 = vsel %vm1985, %v3021, 0.0
  %v3527 = vadd.f32 %v3525, %v3526
  %v3528 = vsel %vm1985, %v3022, 0.0
  %v3529 = vadd.f32 %v3527, %v3528
  %v3530 = vsel %vm1985, %v3023, 0.0
  %v3531 = vadd.f32 %v3529, %v3530
  %v3532 = vsel %vm1985, %v3024, 0.0
  %v3533 = vadd.f32 %v3531, %v3532
  %v3534 = vsel %vm1985, %v3025, 0.0
  %v3535 = vadd.f32 %v3533, %v3534
  %v3536 = vsel %vm1985, %v3026, 0.0
  %v3537 = vadd.f32 %v3535, %v3536
  %v3538 = vrot.slane %v3537, 4
  %v3539 = vadd.f32 %v3537, %v3538
  %v3540 = vrot.slane %v3539, 2
  %v3541 = vadd.f32 %v3539, %v3540
  %v3542 = vrot.slane %v3541, 1
  %v3543 = vadd.f32 %v3541, %v3542
  %v3544 = vadd.f32 %v2770, %v3543
  %3545 = vst.msk [vmem:[%s4] sm:$0x1] %vm2768, %v3544
  // Predicated region
  $region14: #{generator_forward.12} parent=0 // pred_check
    _
  $region15: #{generator_forward.12} parent=0 // pred_check_branch
    %3547 = sbr.rel (0) target = $region17
  $region16: #{generator_forward.12} parent=0 // pred_region
    _
  $region17: #{generator_forward.12} parent=0 // pred_fallthru
    _
  // Predicated region
  $region18: #{generator_forward.12} parent=0 // pred_check
    _
  $region19: #{generator_forward.12} parent=0 // pred_check_branch
    %3549 = sbr.rel (0) target = $region21
  $region20: #{generator_forward.12} parent=0 // pred_region
    _
  $region21: #{generator_forward.12} parent=0 // pred_fallthru
    _
  // Predicated region
  $region22: #{generator_forward.12} parent=0 // pred_check
    _
  $region23: #{generator_forward.12} parent=0 // pred_check_branch
    %3551 = sbr.rel (0) target = $region25
  $region24: #{generator_forward.12} parent=0 // pred_region
    _
  $region25: #{generator_forward.12} parent=0 // pred_fallthru
    _
  // Predicated region
  $region26: #{generator_forward.12} parent=0 // pred_check
    _
  $region27: #{generator_forward.12} parent=0 // pred_check_branch
    %3553 = sbr.rel (0) target = $region29
  $region28: #{generator_forward.12} parent=0 // pred_region
    _
  $region29: #{generator_forward.12} parent=0 // pred_fallthru
    _
  // Predicated region
  $region30: #{generator_forward.12} parent=0 // pred_check
    _
  $region31: #{generator_forward.12} parent=0 // pred_check_branch
    %3555 = sbr.rel (0) target = $region33
  $region32: #{generator_forward.12} parent=0 // pred_region
    _
  $region33: #{generator_forward.12} parent=0 // pred_fallthru
    _
  // Predicated region
  $region34: #{generator_forward.12} parent=0 // pred_check
    _
  $region35: #{generator_forward.12} parent=0 // pred_check_branch
    %3557 = sbr.rel (0) target = $region37
  $region36: #{generator_forward.12} parent=0 // pred_region
    _
  $region37: #{generator_forward.12} parent=0 // pred_fallthru
    _

// kernel: generator_forward.13
$region0: #{generator_forward.13}
  #allocation0 [shape = 'u32[]', space=smem, size = 0x4, offset = 0x4, fixed_abs, tag = 'smem constant byte address 0x4 - core index']
  #allocation1 [shape = 'u32[72,128]{1,0:T(1,128)}', space=vmem, size = 0x9000, scoped, tag = 'internal scratch']
  %s0 = inlined_call_operand.vmem [shape: bf16[8192,36], index: 0, kind: input, shape index: {}]
  %s1 = inlined_call_operand.vmem [shape: bf16[36,12], index: 1, kind: input, shape index: {}]
  %s2 = inlined_call_operand.vmem [shape: f32[8192,12], index: 2, kind: output, shape index: {}]
  %s3 = sld [smem:[#allocation0]]
  $region41: #{generator_forward.13} parent=0
    _
  %s5 = ssub.s32 1, %s3
  %s6 = scalar_select 0, %s5, %s3
  loop: start=0, step=1, limit=6
  $region2: #{generator_forward.13} parent=0 // loop_pre_header
    _
  $region3: #{generator_forward.13} parent=0 // loop_header
    %s8 = sphi 0, %s12
    %p9 = scmp.ge.s32.totalorder %s8, 6
    %s18 = sphi 0, %s20
    %s21 = sphi 0, %s18
    %s22 = sphi 0, %s21
    %s38 = sphi 0, %s22
    %s42 = sphi 0, %s42
    %s44 = sphi 0, %s42
    %s45 = sphi 0, %s44
    %s59 = sphi 0, %s45
    %s65 = sphi 0, %s67
    %s68 = sphi 0, %s65
    %s69 = sphi 0, %s68
    %s85 = sphi 0, %s69
  $region4: #{generator_forward.13} parent=0 // loop_header_branch
    %11 = sbr.rel (%p9) target = $region8
  $region5: #{generator_forward.13} parent=0 // loop_body
    %s13 = ssub.s32 %s8, 1
    %s14 = ssub.s32 %s8, 2
    %s15 = sadd.s32 %s8, 1
    %s16 = ssub.s32 %s8, %s15
    %p17 = scmp.eq.s32.totalorder %s16, 0
    %s19 = sadd.s32 %s18, 1
    %s20 = scalar_select %p17, %s18, %s19
    %p23 = pneg %p17
    %p24 = scmp.eq.s32.totalorder %s8, 3
    %p25 = por %p23, %p24
    %p26 = scmp.ne.s32.totalorder %s18, %s21
    %p27 = scmp.eq.s32.totalorder %s8, 0
    %p28 = por %p26, %p27
    %p29 = scmp.ne.s32.totalorder %s18, %s21
    %p30 = scmp.eq.s32.totalorder %s13, 3
    %p31 = por %p29, %p30
    %p32 = scmp.ne.s32.totalorder %s21, %s22
    %p33 = scmp.eq.s32.totalorder %s13, 0
    %p34 = por %p32, %p33
    %p35 = scmp.ne.s32.totalorder %s21, %s22
    %p36 = scmp.eq.s32.totalorder %s14, 3
    %p37 = por %p35, %p36
    %p39 = scmp.ne.s32.totalorder %s22, %s38
    %p40 = scmp.eq.s32.totalorder %s14, 0
    %p41 = por %p39, %p40
    %s43 = sadd.s32 %s42, 1
    %p46 = scmp.eq.s32.totalorder %s8, 3
    %p47 = scmp.ne.s32.totalorder %s42, %s44
    %p48 = scmp.eq.s32.totalorder %s8, 0
    %p49 = por %p47, %p48
    %p50 = scmp.ne.s32.totalorder %s42, %s44
    %p51 = scmp.eq.s32.totalorder %s13, 3
    %p52 = por %p50, %p51
    %p53 = scmp.ne.s32.totalorder %s44, %s45
    %p54 = scmp.eq.s32.totalorder %s13, 0
    %p55 = por %p53, %p54
    %p56 = scmp.ne.s32.totalorder %s44, %s45
    %p57 = scmp.eq.s32.totalorder %s14, 3
    %p58 = por %p56, %p57
    %p60 = scmp.ne.s32.totalorder %s45, %s59
    %p61 = scmp.eq.s32.totalorder %s14, 0
    %p62 = por %p60, %p61
    %s63 = ssub.s32 %s8, %s15
    %p64 = scmp.eq.s32.totalorder %s63, 0
    %s66 = sadd.s32 %s65, 1
    %s67 = scalar_select %p64, %s65, %s66
    %p70 = pneg %p64
    %p71 = scmp.eq.s32.totalorder %s8, 3
    %p72 = por %p70, %p71
    %p73 = scmp.ne.s32.totalorder %s65, %s68
    %p74 = scmp.eq.s32.totalorder %s8, 0
    %p75 = por %p73, %p74
    %p76 = scmp.ne.s32.totalorder %s65, %s68
    %p77 = scmp.eq.s32.totalorder %s13, 3
    %p78 = por %p76, %p77
    %p79 = scmp.ne.s32.totalorder %s68, %s69
    %p80 = scmp.eq.s32.totalorder %s13, 0
    %p81 = por %p79, %p80
    %p82 = scmp.ne.s32.totalorder %s68, %s69
    %p83 = scmp.eq.s32.totalorder %s14, 3
    %p84 = por %p82, %p83
    %p86 = scmp.ne.s32.totalorder %s69, %s85
    %p87 = scmp.eq.s32.totalorder %s14, 0
    %p88 = por %p86, %p87
    %p89 = scmp.le.s32.totalorder 1, %s8
    %p90 = scmp.lt.s32.totalorder %s8, 5
    %p91 = pnand %p89, %p90
    %p92 = pneg %p91
    // Predicated region
    $region9: #{generator_forward.13} parent=5 // pred_check
      _
    $region10: #{generator_forward.13} parent=5 // pred_check_branch
      %94 = sbr.rel (%p91) target = $region12
    $region11: #{generator_forward.13} parent=5 // pred_region
      %s95 = ssub.s32 %s8, 1
      // Predicated region
      $region13: #{generator_forward.13} parent=11 // pred_check
        %p96 = pneg %p55
      $region14: #{generator_forward.13} parent=11 // pred_check_branch
        %98 = sbr.rel (%p96) target = $region16
      $region15: #{generator_forward.13} parent=11 // pred_region
        _
      $region16: #{generator_forward.13} parent=11 // pred_fallthru
        _
    $region12: #{generator_forward.13} parent=5 // pred_fallthru
      _
    %p99 = scmp.lt.s32.totalorder %s8, 4
    // Predicated region
    $region17: #{generator_forward.13} parent=5 // pred_check
      %p100 = pneg %p99
    $region18: #{generator_forward.13} parent=5 // pred_check_branch
      %102 = sbr.rel (%p100) target = $region20
    $region19: #{generator_forward.13} parent=5 // pred_region
      // Predicated region
      $region21: #{generator_forward.13} parent=19 // pred_check
        %p103 = pneg %p28
      $region22: #{generator_forward.13} parent=19 // pred_check_branch
        %105 = sbr.rel (%p103) target = $region24
      $region23: #{generator_forward.13} parent=19 // pred_region
        %s106 = smul.u32 256, %s8
        %p107 = scmp.lt.s32.totalorder %s106, 1023
        %s108 = scalar_select %p107, %s106, 1023
        %s109 = smul.addr %s108, 4
        %s110 = scalar_lea.vmem %s0, %s109
        %s111 = smul.u32 256, %s8
      $region24: #{generator_forward.13} parent=19 // pred_fallthru
        _
    $region20: #{generator_forward.13} parent=5 // pred_fallthru
      _
    %p112 = scmp.le.s32.totalorder 1, %s8
    %p113 = scmp.lt.s32.totalorder %s8, 5
    %p114 = pnand %p112, %p113
    %p115 = pneg %p114
    // Predicated region
    $region25: #{generator_forward.13} parent=5 // pred_check
      _
    $region26: #{generator_forward.13} parent=5 // pred_check_branch
      %117 = sbr.rel (%p114) target = $region28
    $region27: #{generator_forward.13} parent=5 // pred_region
      %s118 = ssub.s32 %s8, 1
      %s119 = smul.u32 256, %s13
      %p120 = scmp.lt.s32.totalorder %s119, 1023
      %s121 = scalar_select %p120, %s119, 1023
      %s122 = smul.addr %s121, 4
      %s123 = scalar_lea.vmem %s0, %s122
      %p124 = pneg %p34
      %p125 = pneg %p31
      %p126 = pneg %p55
      %p127 = pneg %p52
      %p128 = pneg %p81
      %p129 = pneg %p78
      %s130 = smul.u32 256, %s13
      %p131 = scmp.lt.s32.totalorder %s130, 1023
      %s132 = scalar_select %p131, %s130, 1023
      %s133 = smul.addr %s132, 8
      %s134 = scalar_lea.vmem %s2, %s133
      %s135 = smul.u32 256, %s13
      %p136 = scmp.lt.s32.totalorder %s135, 1023
      %s137 = scalar_select %p136, %s135, 1023
      %s138 = smul.addr %s137, 4
      %s139 = scalar_lea.vmem %s0, %s138
      %s140 = smul.u32 256, %s13
      %s141 = smul.u32 256, %s13
      %p142 = scmp.lt.s32.totalorder %s141, 1023
      %s143 = scalar_select %p142, %s141, 1023
      %s144 = smul.addr %s143, 8
      %s145 = scalar_lea.vmem %s2, %s144
      %s146 = smul.u32 256, %s13
      %v148 = vld [vmem:[%s139] sm:$0xf]
      %v149 = vld [vmem:[%s139 + $0x4] sm:$0xf]
      %v150 = vld [vmem:[%s139 + $0x8] sm:$0xf]
      %v151 = vld [vmem:[%s139 + $0xc] sm:$0xf]
      %v152 = vld [vmem:[%s139 + $0x10] sm:$0xf]
      %v153 = vld [vmem:[%s139 + $0x14] sm:$0xf]
      %v154 = vld [vmem:[%s139 + $0x18] sm:$0xf]
      %v155 = vld [vmem:[%s139 + $0x1c] sm:$0xf]
      %v156 = vld [vmem:[%s139 + $0x20] sm:$0xf]
      %v157 = vld [vmem:[%s139 + $0x24] sm:$0xf]
      %v158 = vld [vmem:[%s139 + $0x28] sm:$0xf]
      %v159 = vld [vmem:[%s139 + $0x2c] sm:$0xf]
      %v160 = vld [vmem:[%s139 + $0x30] sm:$0xf]
      %v161 = vld [vmem:[%s139 + $0x34] sm:$0xf]
      %v162 = vld [vmem:[%s139 + $0x38] sm:$0xf]
      %v163 = vld [vmem:[%s139 + $0x3c] sm:$0xf]
      %v164 = vld [vmem:[%s139 + $0x40] sm:$0xf]
      %v165 = vld [vmem:[%s139 + $0x44] sm:$0xf]
      %v166 = vld [vmem:[%s139 + $0x48] sm:$0xf]
      %v167 = vld [vmem:[%s139 + $0x4c] sm:$0xf]
      %v168 = vld [vmem:[%s139 + $0x50] sm:$0xf]
      %v169 = vld [vmem:[%s139 + $0x54] sm:$0xf]
      %v170 = vld [vmem:[%s139 + $0x58] sm:$0xf]
      %v171 = vld [vmem:[%s139 + $0x5c] sm:$0xf]
      %v172 = vld [vmem:[%s139 + $0x60] sm:$0xf]
      %v173 = vld [vmem:[%s139 + $0x64] sm:$0xf]
      %v174 = vld [vmem:[%s139 + $0x68] sm:$0xf]
      %v175 = vld [vmem:[%s139 + $0x6c] sm:$0xf]
      %v176 = vld [vmem:[%s139 + $0x70] sm:$0xf]
      %v177 = vld [vmem:[%s139 + $0x74] sm:$0xf]
      %v178 = vld [vmem:[%s139 + $0x78] sm:$0xf]
      %v179 = vld [vmem:[%s139 + $0x7c] sm:$0xf]
      %v180 = vld [vmem:[%s139 + $0x80] sm:$0xf]
      %v181 = vld [vmem:[%s139 + $0x84] sm:$0xf]
      %v182 = vld [vmem:[%s139 + $0x88] sm:$0xf]
      %v183 = vld [vmem:[%s139 + $0x8c] sm:$0xf]
      %v184 = vld [vmem:[%s139 + $0x90] sm:$0xf]
      %v185 = vld [vmem:[%s139 + $0x94] sm:$0xf]
      %v186 = vld [vmem:[%s139 + $0x98] sm:$0xf]
      %v187 = vld [vmem:[%s139 + $0x9c] sm:$0xf]
      %v188 = vld [vmem:[%s139 + $0xa0] sm:$0xf]
      %v189 = vld [vmem:[%s139 + $0xa4] sm:$0xf]
      %v190 = vld [vmem:[%s139 + $0xa8] sm:$0xf]
      %v191 = vld [vmem:[%s139 + $0xac] sm:$0xf]
      %v192 = vld [vmem:[%s139 + $0xb0] sm:$0xf]
      %v193 = vld [vmem:[%s139 + $0xb4] sm:$0xf]
      %v194 = vld [vmem:[%s139 + $0xb8] sm:$0xf]
      %v195 = vld [vmem:[%s139 + $0xbc] sm:$0xf]
      %v196 = vld [vmem:[%s139 + $0xc0] sm:$0xf]
      %v197 = vld [vmem:[%s139 + $0xc4] sm:$0xf]
      %v198 = vld [vmem:[%s139 + $0xc8] sm:$0xf]
      %v199 = vld [vmem:[%s139 + $0xcc] sm:$0xf]
      %v200 = vld [vmem:[%s139 + $0xd0] sm:$0xf]
      %v201 = vld [vmem:[%s139 + $0xd4] sm:$0xf]
      %v202 = vld [vmem:[%s139 + $0xd8] sm:$0xf]
      %v203 = vld [vmem:[%s139 + $0xdc] sm:$0xf]
      %v204 = vld [vmem:[%s139 + $0xe0] sm:$0xf]
      %v205 = vld [vmem:[%s139 + $0xe4] sm:$0xf]
      %v206 = vld [vmem:[%s139 + $0xe8] sm:$0xf]
      %v207 = vld [vmem:[%s139 + $0xec] sm:$0xf]
      %v208 = vld [vmem:[%s139 + $0xf0] sm:$0xf]
      %v209 = vld [vmem:[%s139 + $0xf4] sm:$0xf]
      %v210 = vld [vmem:[%s139 + $0xf8] sm:$0xf]
      %v211 = vld [vmem:[%s139 + $0xfc] sm:$0xf]
      %v212 = vld [vmem:[%s139 + $0x100] sm:$0xf]
      %v213 = vld [vmem:[%s139 + $0x104] sm:$0xf]
      %v214 = vld [vmem:[%s139 + $0x108] sm:$0xf]
      %v215 = vld [vmem:[%s139 + $0x10c] sm:$0xf]
      %v216 = vld [vmem:[%s139 + $0x110] sm:$0xf]
      %v217 = vld [vmem:[%s139 + $0x114] sm:$0xf]
      %v218 = vld [vmem:[%s139 + $0x118] sm:$0xf]
      %v219 = vld [vmem:[%s139 + $0x11c] sm:$0xf]
      %v220 = vld [vmem:[%s139 + $0x120] sm:$0xf]
      %v221 = vld [vmem:[%s139 + $0x124] sm:$0xf]
      %v222 = vld [vmem:[%s139 + $0x128] sm:$0xf]
      %v223 = vld [vmem:[%s139 + $0x12c] sm:$0xf]
      %v224 = vld [vmem:[%s139 + $0x130] sm:$0xf]
      %v225 = vld [vmem:[%s139 + $0x134] sm:$0xf]
      %v226 = vld [vmem:[%s139 + $0x138] sm:$0xf]
      %v227 = vld [vmem:[%s139 + $0x13c] sm:$0xf]
      %v228 = vld [vmem:[%s139 + $0x140] sm:$0xf]
      %v229 = vld [vmem:[%s139 + $0x144] sm:$0xf]
      %v230 = vld [vmem:[%s139 + $0x148] sm:$0xf]
      %v231 = vld [vmem:[%s139 + $0x14c] sm:$0xf]
      %v232 = vld [vmem:[%s139 + $0x150] sm:$0xf]
      %v233 = vld [vmem:[%s139 + $0x154] sm:$0xf]
      %v234 = vld [vmem:[%s139 + $0x158] sm:$0xf]
      %v235 = vld [vmem:[%s139 + $0x15c] sm:$0xf]
      %v236 = vld [vmem:[%s139 + $0x160] sm:$0xf]
      %v237 = vld [vmem:[%s139 + $0x164] sm:$0xf]
      %v238 = vld [vmem:[%s139 + $0x168] sm:$0xf]
      %v239 = vld [vmem:[%s139 + $0x16c] sm:$0xf]
      %v240 = vld [vmem:[%s139 + $0x170] sm:$0xf]
      %v241 = vld [vmem:[%s139 + $0x174] sm:$0xf]
      %v242 = vld [vmem:[%s139 + $0x178] sm:$0xf]
      %v243 = vld [vmem:[%s139 + $0x17c] sm:$0xf]
      %v244 = vld [vmem:[%s139 + $0x180] sm:$0xf]
      %v245 = vld [vmem:[%s139 + $0x184] sm:$0xf]
      %v246 = vld [vmem:[%s139 + $0x188] sm:$0xf]
      %v247 = vld [vmem:[%s139 + $0x18c] sm:$0xf]
      %v248 = vld [vmem:[%s139 + $0x190] sm:$0xf]
      %v249 = vld [vmem:[%s139 + $0x194] sm:$0xf]
      %v250 = vld [vmem:[%s139 + $0x198] sm:$0xf]
      %v251 = vld [vmem:[%s139 + $0x19c] sm:$0xf]
      %v252 = vld [vmem:[%s139 + $0x1a0] sm:$0xf]
      %v253 = vld [vmem:[%s139 + $0x1a4] sm:$0xf]
      %v254 = vld [vmem:[%s139 + $0x1a8] sm:$0xf]
      %v255 = vld [vmem:[%s139 + $0x1ac] sm:$0xf]
      %v256 = vld [vmem:[%s139 + $0x1b0] sm:$0xf]
      %v257 = vld [vmem:[%s139 + $0x1b4] sm:$0xf]
      %v258 = vld [vmem:[%s139 + $0x1b8] sm:$0xf]
      %v259 = vld [vmem:[%s139 + $0x1bc] sm:$0xf]
      %v260 = vld [vmem:[%s139 + $0x1c0] sm:$0xf]
      %v261 = vld [vmem:[%s139 + $0x1c4] sm:$0xf]
      %v262 = vld [vmem:[%s139 + $0x1c8] sm:$0xf]
      %v263 = vld [vmem:[%s139 + $0x1cc] sm:$0xf]
      %v264 = vld [vmem:[%s139 + $0x1d0] sm:$0xf]
      %v265 = vld [vmem:[%s139 + $0x1d4] sm:$0xf]
      %v266 = vld [vmem:[%s139 + $0x1d8] sm:$0xf]
      %v267 = vld [vmem:[%s139 + $0x1dc] sm:$0xf]
      %v268 = vld [vmem:[%s139 + $0x1e0] sm:$0xf]
      %v269 = vld [vmem:[%s139 + $0x1e4] sm:$0xf]
      %v270 = vld [vmem:[%s139 + $0x1e8] sm:$0xf]
      %v271 = vld [vmem:[%s139 + $0x1ec] sm:$0xf]
      %v272 = vld [vmem:[%s139 + $0x1f0] sm:$0xf]
      %v273 = vld [vmem:[%s139 + $0x1f4] sm:$0xf]
      %v274 = vld [vmem:[%s139 + $0x1f8] sm:$0xf]
      %v275 = vld [vmem:[%s139 + $0x1fc] sm:$0xf]
      %v276 = vld [vmem:[%s139 + $0x200] sm:$0xf]
      %v277 = vld [vmem:[%s139 + $0x204] sm:$0xf]
      %v278 = vld [vmem:[%s139 + $0x208] sm:$0xf]
      %v279 = vld [vmem:[%s139 + $0x20c] sm:$0xf]
      %v280 = vld [vmem:[%s139 + $0x210] sm:$0xf]
      %v281 = vld [vmem:[%s139 + $0x214] sm:$0xf]
      %v282 = vld [vmem:[%s139 + $0x218] sm:$0xf]
      %v283 = vld [vmem:[%s139 + $0x21c] sm:$0xf]
      %v284 = vld [vmem:[%s139 + $0x220] sm:$0xf]
      %v285 = vld [vmem:[%s139 + $0x224] sm:$0xf]
      %v286 = vld [vmem:[%s139 + $0x228] sm:$0xf]
      %v287 = vld [vmem:[%s139 + $0x22c] sm:$0xf]
      %v288 = vld [vmem:[%s139 + $0x230] sm:$0xf]
      %v289 = vld [vmem:[%s139 + $0x234] sm:$0xf]
      %v290 = vld [vmem:[%s139 + $0x238] sm:$0xf]
      %v291 = vld [vmem:[%s139 + $0x23c] sm:$0xf]
      %v292 = vld [vmem:[%s139 + $0x240] sm:$0xf]
      %v293 = vld [vmem:[%s139 + $0x244] sm:$0xf]
      %v294 = vld [vmem:[%s139 + $0x248] sm:$0xf]
      %v295 = vld [vmem:[%s139 + $0x24c] sm:$0xf]
      %v296 = vld [vmem:[%s139 + $0x250] sm:$0xf]
      %v297 = vld [vmem:[%s139 + $0x254] sm:$0xf]
      %v298 = vld [vmem:[%s139 + $0x258] sm:$0xf]
      %v299 = vld [vmem:[%s139 + $0x25c] sm:$0xf]
      %v300 = vld [vmem:[%s139 + $0x260] sm:$0xf]
      %v301 = vld [vmem:[%s139 + $0x264] sm:$0xf]
      %v302 = vld [vmem:[%s139 + $0x268] sm:$0xf]
      %v303 = vld [vmem:[%s139 + $0x26c] sm:$0xf]
      %v304 = vld [vmem:[%s139 + $0x270] sm:$0xf]
      %v305 = vld [vmem:[%s139 + $0x274] sm:$0xf]
      %v306 = vld [vmem:[%s139 + $0x278] sm:$0xf]
      %v307 = vld [vmem:[%s139 + $0x27c] sm:$0xf]
      %v308 = vld [vmem:[%s139 + $0x280] sm:$0xf]
      %v309 = vld [vmem:[%s139 + $0x284] sm:$0xf]
      %v310 = vld [vmem:[%s139 + $0x288] sm:$0xf]
      %v311 = vld [vmem:[%s139 + $0x28c] sm:$0xf]
      %v312 = vld [vmem:[%s139 + $0x290] sm:$0xf]
      %v313 = vld [vmem:[%s139 + $0x294] sm:$0xf]
      %v314 = vld [vmem:[%s139 + $0x298] sm:$0xf]
      %v315 = vld [vmem:[%s139 + $0x29c] sm:$0xf]
      %v316 = vld [vmem:[%s139 + $0x2a0] sm:$0xf]
      %v317 = vld [vmem:[%s139 + $0x2a4] sm:$0xf]
      %v318 = vld [vmem:[%s139 + $0x2a8] sm:$0xf]
      %v319 = vld [vmem:[%s139 + $0x2ac] sm:$0xf]
      %v320 = vld [vmem:[%s139 + $0x2b0] sm:$0xf]
      %v321 = vld [vmem:[%s139 + $0x2b4] sm:$0xf]
      %v322 = vld [vmem:[%s139 + $0x2b8] sm:$0xf]
      %v323 = vld [vmem:[%s139 + $0x2bc] sm:$0xf]
      %v324 = vld [vmem:[%s139 + $0x2c0] sm:$0xf]
      %v325 = vld [vmem:[%s139 + $0x2c4] sm:$0xf]
      %v326 = vld [vmem:[%s139 + $0x2c8] sm:$0xf]
      %v327 = vld [vmem:[%s139 + $0x2cc] sm:$0xf]
      %v328 = vld [vmem:[%s139 + $0x2d0] sm:$0xf]
      %v329 = vld [vmem:[%s139 + $0x2d4] sm:$0xf]
      %v330 = vld [vmem:[%s139 + $0x2d8] sm:$0xf]
      %v331 = vld [vmem:[%s139 + $0x2dc] sm:$0xf]
      %v332 = vld [vmem:[%s139 + $0x2e0] sm:$0xf]
      %v333 = vld [vmem:[%s139 + $0x2e4] sm:$0xf]
      %v334 = vld [vmem:[%s139 + $0x2e8] sm:$0xf]
      %v335 = vld [vmem:[%s139 + $0x2ec] sm:$0xf]
      %v336 = vld [vmem:[%s139 + $0x2f0] sm:$0xf]
      %v337 = vld [vmem:[%s139 + $0x2f4] sm:$0xf]
      %v338 = vld [vmem:[%s139 + $0x2f8] sm:$0xf]
      %v339 = vld [vmem:[%s139 + $0x2fc] sm:$0xf]
      %v340 = vld [vmem:[%s139 + $0x300] sm:$0xf]
      %v341 = vld [vmem:[%s139 + $0x304] sm:$0xf]
      %v342 = vld [vmem:[%s139 + $0x308] sm:$0xf]
      %v343 = vld [vmem:[%s139 + $0x30c] sm:$0xf]
      %v344 = vld [vmem:[%s139 + $0x310] sm:$0xf]
      %v345 = vld [vmem:[%s139 + $0x314] sm:$0xf]
      %v346 = vld [vmem:[%s139 + $0x318] sm:$0xf]
      %v347 = vld [vmem:[%s139 + $0x31c] sm:$0xf]
      %v348 = vld [vmem:[%s139 + $0x320] sm:$0xf]
      %v349 = vld [vmem:[%s139 + $0x324] sm:$0xf]
      %v350 = vld [vmem:[%s139 + $0x328] sm:$0xf]
      %v351 = vld [vmem:[%s139 + $0x32c] sm:$0xf]
      %v352 = vld [vmem:[%s139 + $0x330] sm:$0xf]
      %v353 = vld [vmem:[%s139 + $0x334] sm:$0xf]
      %v354 = vld [vmem:[%s139 + $0x338] sm:$0xf]
      %v355 = vld [vmem:[%s139 + $0x33c] sm:$0xf]
      %v356 = vld [vmem:[%s139 + $0x340] sm:$0xf]
      %v357 = vld [vmem:[%s139 + $0x344] sm:$0xf]
      %v358 = vld [vmem:[%s139 + $0x348] sm:$0xf]
      %v359 = vld [vmem:[%s139 + $0x34c] sm:$0xf]
      %v360 = vld [vmem:[%s139 + $0x350] sm:$0xf]
      %v361 = vld [vmem:[%s139 + $0x354] sm:$0xf]
      %v362 = vld [vmem:[%s139 + $0x358] sm:$0xf]
      %v363 = vld [vmem:[%s139 + $0x35c] sm:$0xf]
      %v364 = vld [vmem:[%s139 + $0x360] sm:$0xf]
      %v365 = vld [vmem:[%s139 + $0x364] sm:$0xf]
      %v366 = vld [vmem:[%s139 + $0x368] sm:$0xf]
      %v367 = vld [vmem:[%s139 + $0x36c] sm:$0xf]
      %v368 = vld [vmem:[%s139 + $0x370] sm:$0xf]
      %v369 = vld [vmem:[%s139 + $0x374] sm:$0xf]
      %v370 = vld [vmem:[%s139 + $0x378] sm:$0xf]
      %v371 = vld [vmem:[%s139 + $0x37c] sm:$0xf]
      %v372 = vld [vmem:[%s139 + $0x380] sm:$0xf]
      %v373 = vld [vmem:[%s139 + $0x384] sm:$0xf]
      %v374 = vld [vmem:[%s139 + $0x388] sm:$0xf]
      %v375 = vld [vmem:[%s139 + $0x38c] sm:$0xf]
      %v376 = vld [vmem:[%s139 + $0x390] sm:$0xf]
      %v377 = vld [vmem:[%s139 + $0x394] sm:$0xf]
      %v378 = vld [vmem:[%s139 + $0x398] sm:$0xf]
      %v379 = vld [vmem:[%s139 + $0x39c] sm:$0xf]
      %v380 = vld [vmem:[%s139 + $0x3a0] sm:$0xf]
      %v381 = vld [vmem:[%s139 + $0x3a4] sm:$0xf]
      %v382 = vld [vmem:[%s139 + $0x3a8] sm:$0xf]
      %v383 = vld [vmem:[%s139 + $0x3ac] sm:$0xf]
      %v384 = vld [vmem:[%s139 + $0x3b0] sm:$0xf]
      %v385 = vld [vmem:[%s139 + $0x3b4] sm:$0xf]
      %v386 = vld [vmem:[%s139 + $0x3b8] sm:$0xf]
      %v387 = vld [vmem:[%s139 + $0x3bc] sm:$0xf]
      %v388 = vld [vmem:[%s139 + $0x3c0] sm:$0xf]
      %v389 = vld [vmem:[%s139 + $0x3c4] sm:$0xf]
      %v390 = vld [vmem:[%s139 + $0x3c8] sm:$0xf]
      %v391 = vld [vmem:[%s139 + $0x3cc] sm:$0xf]
      %v392 = vld [vmem:[%s139 + $0x3d0] sm:$0xf]
      %v393 = vld [vmem:[%s139 + $0x3d4] sm:$0xf]
      %v394 = vld [vmem:[%s139 + $0x3d8] sm:$0xf]
      %v395 = vld [vmem:[%s139 + $0x3dc] sm:$0xf]
      %v396 = vld [vmem:[%s139 + $0x3e0] sm:$0xf]
      %v397 = vld [vmem:[%s139 + $0x3e4] sm:$0xf]
      %v398 = vld [vmem:[%s139 + $0x3e8] sm:$0xf]
      %v399 = vld [vmem:[%s139 + $0x3ec] sm:$0xf]
      %v400 = vld [vmem:[%s139 + $0x3f0] sm:$0xf]
      %v401 = vld [vmem:[%s139 + $0x3f4] sm:$0xf]
      %v402 = vld [vmem:[%s139 + $0x3f8] sm:$0xf]
      %v403 = vld [vmem:[%s139 + $0x3fc] sm:$0xf]
      %v404 = vld [vmem:[%s1] sm:$0xf]
      %v405 = vld [vmem:[%s1 + $0x4] sm:$0xf]
      %v406 = vld [vmem:[%s1 + $0x8] sm:$0xf]
      %v407 = vld [vmem:[%s1 + $0xc] sm:$0xf]
      %v408 = vld [vmem:[%s1 + $0x10] sm:$0x3]
      %v665 = vunpack.c.l.b16 %v148
      %v666 = vunpack.c.l.b16 %v149
      %v667 = vunpack.c.l.b16 %v150
      %v668 = vunpack.c.l.b16 %v151
      %v669 = vunpack.c.l.b16 %v152
      %v670 = vunpack.c.l.b16 %v153
      %v671 = vunpack.c.l.b16 %v154
      %v672 = vunpack.c.l.b16 %v155
      %v673 = vunpack.c.l.b16 %v156
      %v674 = vunpack.c.l.b16 %v157
      %v675 = vunpack.c.l.b16 %v158
      %v676 = vunpack.c.l.b16 %v159
      %v677 = vunpack.c.l.b16 %v160
      %v678 = vunpack.c.l.b16 %v161
      %v679 = vunpack.c.l.b16 %v162
      %v680 = vunpack.c.l.b16 %v163
      %v681 = vunpack.c.l.b16 %v164
      %v682 = vunpack.c.l.b16 %v165
      %v683 = vunpack.c.l.b16 %v166
      %v684 = vunpack.c.l.b16 %v167
      %v685 = vunpack.c.l.b16 %v168
      %v686 = vunpack.c.l.b16 %v169
      %v687 = vunpack.c.l.b16 %v170
      %v688 = vunpack.c.l.b16 %v171
      %v689 = vunpack.c.l.b16 %v172
      %v690 = vunpack.c.l.b16 %v173
      %v691 = vunpack.c.l.b16 %v174
      %v692 = vunpack.c.l.b16 %v175
      %v693 = vunpack.c.l.b16 %v176
      %v694 = vunpack.c.l.b16 %v177
      %v695 = vunpack.c.l.b16 %v178
      %v696 = vunpack.c.l.b16 %v179
      %v697 = vunpack.c.l.b16 %v180
      %v698 = vunpack.c.l.b16 %v181
      %v699 = vunpack.c.l.b16 %v182
      %v700 = vunpack.c.l.b16 %v183
      %v701 = vunpack.c.l.b16 %v184
      %v702 = vunpack.c.l.b16 %v185
      %v703 = vunpack.c.l.b16 %v186
      %v704 = vunpack.c.l.b16 %v187
      %v705 = vunpack.c.l.b16 %v188
      %v706 = vunpack.c.l.b16 %v189
      %v707 = vunpack.c.l.b16 %v190
      %v708 = vunpack.c.l.b16 %v191
      %v709 = vunpack.c.l.b16 %v192
      %v710 = vunpack.c.l.b16 %v193
      %v711 = vunpack.c.l.b16 %v194
      %v712 = vunpack.c.l.b16 %v195
      %v713 = vunpack.c.l.b16 %v196
      %v714 = vunpack.c.l.b16 %v197
      %v715 = vunpack.c.l.b16 %v198
      %v716 = vunpack.c.l.b16 %v199
      %v717 = vunpack.c.l.b16 %v200
      %v718 = vunpack.c.l.b16 %v201
      %v719 = vunpack.c.l.b16 %v202
      %v720 = vunpack.c.l.b16 %v203
      %v721 = vunpack.c.l.b16 %v204
      %v722 = vunpack.c.l.b16 %v205
      %v723 = vunpack.c.l.b16 %v206
      %v724 = vunpack.c.l.b16 %v207
      %v725 = vunpack.c.l.b16 %v208
      %v726 = vunpack.c.l.b16 %v209
      %v727 = vunpack.c.l.b16 %v210
      %v728 = vunpack.c.l.b16 %v211
      %v729 = vunpack.c.l.b16 %v212
      %v730 = vunpack.c.l.b16 %v213
      %v731 = vunpack.c.l.b16 %v214
      %v732 = vunpack.c.l.b16 %v215
      %v733 = vunpack.c.l.b16 %v216
      %v734 = vunpack.c.l.b16 %v217
      %v735 = vunpack.c.l.b16 %v218
      %v736 = vunpack.c.l.b16 %v219
      %v737 = vunpack.c.l.b16 %v220
      %v738 = vunpack.c.l.b16 %v221
      %v739 = vunpack.c.l.b16 %v222
      %v740 = vunpack.c.l.b16 %v223
      %v741 = vunpack.c.l.b16 %v224
      %v742 = vunpack.c.l.b16 %v225
      %v743 = vunpack.c.l.b16 %v226
      %v744 = vunpack.c.l.b16 %v227
      %v745 = vunpack.c.l.b16 %v228
      %v746 = vunpack.c.l.b16 %v229
      %v747 = vunpack.c.l.b16 %v230
      %v748 = vunpack.c.l.b16 %v231
      %v749 = vunpack.c.l.b16 %v232
      %v750 = vunpack.c.l.b16 %v233
      %v751 = vunpack.c.l.b16 %v234
      %v752 = vunpack.c.l.b16 %v235
      %v753 = vunpack.c.l.b16 %v236
      %v754 = vunpack.c.l.b16 %v237
      %v755 = vunpack.c.l.b16 %v238
      %v756 = vunpack.c.l.b16 %v239
      %v757 = vunpack.c.l.b16 %v240
      %v758 = vunpack.c.l.b16 %v241
      %v759 = vunpack.c.l.b16 %v242
      %v760 = vunpack.c.l.b16 %v243
      %v761 = vunpack.c.l.b16 %v244
      %v762 = vunpack.c.l.b16 %v245
      %v763 = vunpack.c.l.b16 %v246
      %v764 = vunpack.c.l.b16 %v247
      %v765 = vunpack.c.l.b16 %v248
      %v766 = vunpack.c.l.b16 %v249
      %v767 = vunpack.c.l.b16 %v250
      %v768 = vunpack.c.l.b16 %v251
      %v769 = vunpack.c.l.b16 %v252
      %v770 = vunpack.c.l.b16 %v253
      %v771 = vunpack.c.l.b16 %v254
      %v772 = vunpack.c.l.b16 %v255
      %v773 = vunpack.c.l.b16 %v256
      %v774 = vunpack.c.l.b16 %v257
      %v775 = vunpack.c.l.b16 %v258
      %v776 = vunpack.c.l.b16 %v259
      %v777 = vunpack.c.l.b16 %v260
      %v778 = vunpack.c.l.b16 %v261
      %v779 = vunpack.c.l.b16 %v262
      %v780 = vunpack.c.l.b16 %v263
      %v781 = vunpack.c.l.b16 %v264
      %v782 = vunpack.c.l.b16 %v265
      %v783 = vunpack.c.l.b16 %v266
      %v784 = vunpack.c.l.b16 %v267
      %v785 = vunpack.c.l.b16 %v268
      %v786 = vunpack.c.l.b16 %v269
      %v787 = vunpack.c.l.b16 %v270
      %v788 = vunpack.c.l.b16 %v271
      %v789 = vunpack.c.l.b16 %v272
      %v790 = vunpack.c.l.b16 %v273
      %v791 = vunpack.c.l.b16 %v274
      %v792 = vunpack.c.l.b16 %v275
      %v793 = vunpack.c.l.b16 %v276
      %v794 = vunpack.c.l.b16 %v277
      %v795 = vunpack.c.l.b16 %v278
      %v796 = vunpack.c.l.b16 %v279
      %v797 = vunpack.c.l.b16 %v280
      %v798 = vunpack.c.l.b16 %v281
      %v799 = vunpack.c.l.b16 %v282
      %v800 = vunpack.c.l.b16 %v283
      %v801 = vunpack.c.l.b16 %v284
      %v802 = vunpack.c.l.b16 %v285
      %v803 = vunpack.c.l.b16 %v286
      %v804 = vunpack.c.l.b16 %v287
      %v805 = vunpack.c.l.b16 %v288
      %v806 = vunpack.c.l.b16 %v289
      %v807 = vunpack.c.l.b16 %v290
      %v808 = vunpack.c.l.b16 %v291
      %v809 = vunpack.c.l.b16 %v292
      %v810 = vunpack.c.l.b16 %v293
      %v811 = vunpack.c.l.b16 %v294
      %v812 = vunpack.c.l.b16 %v295
      %v813 = vunpack.c.l.b16 %v296
      %v814 = vunpack.c.l.b16 %v297
      %v815 = vunpack.c.l.b16 %v298
      %v816 = vunpack.c.l.b16 %v299
      %v817 = vunpack.c.l.b16 %v300
      %v818 = vunpack.c.l.b16 %v301
      %v819 = vunpack.c.l.b16 %v302
      %v820 = vunpack.c.l.b16 %v303
      %v821 = vunpack.c.l.b16 %v304
      %v822 = vunpack.c.l.b16 %v305
      %v823 = vunpack.c.l.b16 %v306
      %v824 = vunpack.c.l.b16 %v307
      %v825 = vunpack.c.l.b16 %v308
      %v826 = vunpack.c.l.b16 %v309
      %v827 = vunpack.c.l.b16 %v310
      %v828 = vunpack.c.l.b16 %v311
      %v829 = vunpack.c.l.b16 %v312
      %v830 = vunpack.c.l.b16 %v313
      %v831 = vunpack.c.l.b16 %v314
      %v832 = vunpack.c.l.b16 %v315
      %v833 = vunpack.c.l.b16 %v316
      %v834 = vunpack.c.l.b16 %v317
      %v835 = vunpack.c.l.b16 %v318
      %v836 = vunpack.c.l.b16 %v319
      %v837 = vunpack.c.l.b16 %v320
      %v838 = vunpack.c.l.b16 %v321
      %v839 = vunpack.c.l.b16 %v322
      %v840 = vunpack.c.l.b16 %v323
      %v841 = vunpack.c.l.b16 %v324
      %v842 = vunpack.c.l.b16 %v325
      %v843 = vunpack.c.l.b16 %v326
      %v844 = vunpack.c.l.b16 %v327
      %v845 = vunpack.c.l.b16 %v328
      %v846 = vunpack.c.l.b16 %v329
      %v847 = vunpack.c.l.b16 %v330
      %v848 = vunpack.c.l.b16 %v331
      %v849 = vunpack.c.l.b16 %v332
      %v850 = vunpack.c.l.b16 %v333
      %v851 = vunpack.c.l.b16 %v334
      %v852 = vunpack.c.l.b16 %v335
      %v853 = vunpack.c.l.b16 %v336
      %v854 = vunpack.c.l.b16 %v337
      %v855 = vunpack.c.l.b16 %v338
      %v856 = vunpack.c.l.b16 %v339
      %v857 = vunpack.c.l.b16 %v340
      %v858 = vunpack.c.l.b16 %v341
      %v859 = vunpack.c.l.b16 %v342
      %v860 = vunpack.c.l.b16 %v343
      %v861 = vunpack.c.l.b16 %v344
      %v862 = vunpack.c.l.b16 %v345
      %v863 = vunpack.c.l.b16 %v346
      %v864 = vunpack.c.l.b16 %v347
      %v865 = vunpack.c.l.b16 %v348
      %v866 = vunpack.c.l.b16 %v349
      %v867 = vunpack.c.l.b16 %v350
      %v868 = vunpack.c.l.b16 %v351
      %v869 = vunpack.c.l.b16 %v352
      %v870 = vunpack.c.l.b16 %v353
      %v871 = vunpack.c.l.b16 %v354
      %v872 = vunpack.c.l.b16 %v355
      %v873 = vunpack.c.l.b16 %v356
      %v874 = vunpack.c.l.b16 %v357
      %v875 = vunpack.c.l.b16 %v358
      %v876 = vunpack.c.l.b16 %v359
      %v877 = vunpack.c.l.b16 %v360
      %v878 = vunpack.c.l.b16 %v361
      %v879 = vunpack.c.l.b16 %v362
      %v880 = vunpack.c.l.b16 %v363
      %v881 = vunpack.c.l.b16 %v364
      %v882 = vunpack.c.l.b16 %v365
      %v883 = vunpack.c.l.b16 %v366
      %v884 = vunpack.c.l.b16 %v367
      %v885 = vunpack.c.l.b16 %v368
      %v886 = vunpack.c.l.b16 %v369
      %v887 = vunpack.c.l.b16 %v370
      %v888 = vunpack.c.l.b16 %v371
      %v889 = vunpack.c.l.b16 %v372
      %v890 = vunpack.c.l.b16 %v373
      %v891 = vunpack.c.l.b16 %v374
      %v892 = vunpack.c.l.b16 %v375
      %v893 = vunpack.c.l.b16 %v376
      %v894 = vunpack.c.l.b16 %v377
      %v895 = vunpack.c.l.b16 %v378
      %v896 = vunpack.c.l.b16 %v379
      %v897 = vunpack.c.l.b16 %v380
      %v898 = vunpack.c.l.b16 %v381
      %v899 = vunpack.c.l.b16 %v382
      %v900 = vunpack.c.l.b16 %v383
      %v901 = vunpack.c.l.b16 %v384
      %v902 = vunpack.c.l.b16 %v385
      %v903 = vunpack.c.l.b16 %v386
      %v904 = vunpack.c.l.b16 %v387
      %v905 = vunpack.c.l.b16 %v388
      %v906 = vunpack.c.l.b16 %v389
      %v907 = vunpack.c.l.b16 %v390
      %v908 = vunpack.c.l.b16 %v391
      %v909 = vunpack.c.l.b16 %v392
      %v910 = vunpack.c.l.b16 %v393
      %v911 = vunpack.c.l.b16 %v394
      %v912 = vunpack.c.l.b16 %v395
      %v913 = vunpack.c.l.b16 %v396
      %v914 = vunpack.c.l.b16 %v397
      %v915 = vunpack.c.l.b16 %v398
      %v916 = vunpack.c.l.b16 %v399
      %v917 = vunpack.c.l.b16 %v400
      %v918 = vunpack.c.l.b16 %v401
      %v919 = vunpack.c.l.b16 %v402
      %v920 = vunpack.c.l.b16 %v403
      %v921 = vpack.c.b16 %v666, %v665
      %v922 = vpack.c.b16 %v668, %v667
      %v923 = vpack.c.b16 %v670, %v669
      %v924 = vpack.c.b16 %v672, %v671
      %v925 = vpack.c.b16 %v674, %v673
      %v926 = vpack.c.b16 %v676, %v675
      %v927 = vpack.c.b16 %v678, %v677
      %v928 = vpack.c.b16 %v680, %v679
      %v929 = vpack.c.b16 %v682, %v681
      %v930 = vpack.c.b16 %v684, %v683
      %v931 = vpack.c.b16 %v686, %v685
      %v932 = vpack.c.b16 %v688, %v687
      %v933 = vpack.c.b16 %v690, %v689
      %v934 = vpack.c.b16 %v692, %v691
      %v935 = vpack.c.b16 %v694, %v693
      %v936 = vpack.c.b16 %v696, %v695
      %v937 = vpack.c.b16 %v698, %v697
      %v938 = vpack.c.b16 %v700, %v699
      %v939 = vpack.c.b16 %v702, %v701
      %v940 = vpack.c.b16 %v704, %v703
      %v941 = vpack.c.b16 %v706, %v705
      %v942 = vpack.c.b16 %v708, %v707
      %v943 = vpack.c.b16 %v710, %v709
      %v944 = vpack.c.b16 %v712, %v711
      %v945 = vpack.c.b16 %v714, %v713
      %v946 = vpack.c.b16 %v716, %v715
      %v947 = vpack.c.b16 %v718, %v717
      %v948 = vpack.c.b16 %v720, %v719
      %v949 = vpack.c.b16 %v722, %v721
      %v950 = vpack.c.b16 %v724, %v723
      %v951 = vpack.c.b16 %v726, %v725
      %v952 = vpack.c.b16 %v728, %v727
      %v953 = vpack.c.b16 %v730, %v729
      %v954 = vpack.c.b16 %v732, %v731
      %v955 = vpack.c.b16 %v734, %v733
      %v956 = vpack.c.b16 %v736, %v735
      %v957 = vpack.c.b16 %v738, %v737
      %v958 = vpack.c.b16 %v740, %v739
      %v959 = vpack.c.b16 %v742, %v741
      %v960 = vpack.c.b16 %v744, %v743
      %v961 = vpack.c.b16 %v746, %v745
      %v962 = vpack.c.b16 %v748, %v747
      %v963 = vpack.c.b16 %v750, %v749
      %v964 = vpack.c.b16 %v752, %v751
      %v965 = vpack.c.b16 %v754, %v753
      %v966 = vpack.c.b16 %v756, %v755
      %v967 = vpack.c.b16 %v758, %v757
      %v968 = vpack.c.b16 %v760, %v759
      %v969 = vpack.c.b16 %v762, %v761
      %v970 = vpack.c.b16 %v764, %v763
      %v971 = vpack.c.b16 %v766, %v765
      %v972 = vpack.c.b16 %v768, %v767
      %v973 = vpack.c.b16 %v770, %v769
      %v974 = vpack.c.b16 %v772, %v771
      %v975 = vpack.c.b16 %v774, %v773
      %v976 = vpack.c.b16 %v776, %v775
      %v977 = vpack.c.b16 %v778, %v777
      %v978 = vpack.c.b16 %v780, %v779
      %v979 = vpack.c.b16 %v782, %v781
      %v980 = vpack.c.b16 %v784, %v783
      %v981 = vpack.c.b16 %v786, %v785
      %v982 = vpack.c.b16 %v788, %v787
      %v983 = vpack.c.b16 %v790, %v789
      %v984 = vpack.c.b16 %v792, %v791
      %v985 = vpack.c.b16 %v794, %v793
      %v986 = vpack.c.b16 %v796, %v795
      %v987 = vpack.c.b16 %v798, %v797
      %v988 = vpack.c.b16 %v800, %v799
      %v989 = vpack.c.b16 %v802, %v801
      %v990 = vpack.c.b16 %v804, %v803
      %v991 = vpack.c.b16 %v806, %v805
      %v992 = vpack.c.b16 %v808, %v807
      %v993 = vpack.c.b16 %v810, %v809
      %v994 = vpack.c.b16 %v812, %v811
      %v995 = vpack.c.b16 %v814, %v813
      %v996 = vpack.c.b16 %v816, %v815
      %v997 = vpack.c.b16 %v818, %v817
      %v998 = vpack.c.b16 %v820, %v819
      %v999 = vpack.c.b16 %v822, %v821
      %v1000 = vpack.c.b16 %v824, %v823
      %v1001 = vpack.c.b16 %v826, %v825
      %v1002 = vpack.c.b16 %v828, %v827
      %v1003 = vpack.c.b16 %v830, %v829
      %v1004 = vpack.c.b16 %v832, %v831
      %v1005 = vpack.c.b16 %v834, %v833
      %v1006 = vpack.c.b16 %v836, %v835
      %v1007 = vpack.c.b16 %v838, %v837
      %v1008 = vpack.c.b16 %v840, %v839
      %v1009 = vpack.c.b16 %v842, %v841
      %v1010 = vpack.c.b16 %v844, %v843
      %v1011 = vpack.c.b16 %v846, %v845
      %v1012 = vpack.c.b16 %v848, %v847
      %v1013 = vpack.c.b16 %v850, %v849
      %v1014 = vpack.c.b16 %v852, %v851
      %v1015 = vpack.c.b16 %v854, %v853
      %v1016 = vpack.c.b16 %v856, %v855
      %v1017 = vpack.c.b16 %v858, %v857
      %v1018 = vpack.c.b16 %v860, %v859
      %v1019 = vpack.c.b16 %v862, %v861
      %v1020 = vpack.c.b16 %v864, %v863
      %v1021 = vpack.c.b16 %v866, %v865
      %v1022 = vpack.c.b16 %v868, %v867
      %v1023 = vpack.c.b16 %v870, %v869
      %v1024 = vpack.c.b16 %v872, %v871
      %v1025 = vpack.c.b16 %v874, %v873
      %v1026 = vpack.c.b16 %v876, %v875
      %v1027 = vpack.c.b16 %v878, %v877
      %v1028 = vpack.c.b16 %v880, %v879
      %v1029 = vpack.c.b16 %v882, %v881
      %v1030 = vpack.c.b16 %v884, %v883
      %v1031 = vpack.c.b16 %v886, %v885
      %v1032 = vpack.c.b16 %v888, %v887
      %v1033 = vpack.c.b16 %v890, %v889
      %v1034 = vpack.c.b16 %v892, %v891
      %v1035 = vpack.c.b16 %v894, %v893
      %v1036 = vpack.c.b16 %v896, %v895
      %v1037 = vpack.c.b16 %v898, %v897
      %v1038 = vpack.c.b16 %v900, %v899
      %v1039 = vpack.c.b16 %v902, %v901
      %v1040 = vpack.c.b16 %v904, %v903
      %v1041 = vpack.c.b16 %v906, %v905
      %v1042 = vpack.c.b16 %v908, %v907
      %v1043 = vpack.c.b16 %v910, %v909
      %v1044 = vpack.c.b16 %v912, %v911
      %v1045 = vpack.c.b16 %v914, %v913
      %v1046 = vpack.c.b16 %v916, %v915
      %v1047 = vpack.c.b16 %v918, %v917
      %v1048 = vpack.c.b16 %v920, %v919
      %v1054 = vunpack.c.l.b16 %v404
      %v1055 = vunpack.c.l.b16 %v405
      %v1056 = vunpack.c.l.b16 %v406
      %v1057 = vunpack.c.l.b16 %v407
      %v1058 = vunpack.c.l.b16 %v408
      %v1059 = vpack.c.b16 %v1055, %v1054
      %v1060 = vpack.c.b16 %v1057, %v1056
      %v1061 = vpack.c.b16 %v1058, %v1058
      %vm1064 = vcmask 293888
      %v1066 = vsel %vm1064, %v921, 0
      %v1069 = vsel %vm1064, %v922, 0
      %v1072 = vsel %vm1064, %v923, 0
      %v1075 = vsel %vm1064, %v924, 0
      %v1078 = vsel %vm1064, %v925, 0
      %v1081 = vsel %vm1064, %v926, 0
      %v1084 = vsel %vm1064, %v927, 0
      %v1087 = vsel %vm1064, %v928, 0
      %v1090 = vsel %vm1064, %v929, 0
      %v1093 = vsel %vm1064, %v930, 0
      %v1096 = vsel %vm1064, %v931, 0
      %v1099 = vsel %vm1064, %v932, 0
      %v1102 = vsel %vm1064, %v933, 0
      %v1105 = vsel %vm1064, %v934, 0
      %v1108 = vsel %vm1064, %v935, 0
      %v1111 = vsel %vm1064, %v936, 0
      %v1114 = vsel %vm1064, %v937, 0
      %v1117 = vsel %vm1064, %v938, 0
      %v1120 = vsel %vm1064, %v939, 0
      %v1123 = vsel %vm1064, %v940, 0
      %v1126 = vsel %vm1064, %v941, 0
      %v1129 = vsel %vm1064, %v942, 0
      %v1132 = vsel %vm1064, %v943, 0
      %v1135 = vsel %vm1064, %v944, 0
      %v1138 = vsel %vm1064, %v945, 0
      %v1141 = vsel %vm1064, %v946, 0
      %v1144 = vsel %vm1064, %v947, 0
      %v1147 = vsel %vm1064, %v948, 0
      %v1150 = vsel %vm1064, %v949, 0
      %v1153 = vsel %vm1064, %v950, 0
      %v1156 = vsel %vm1064, %v951, 0
      %v1159 = vsel %vm1064, %v952, 0
      %v1162 = vsel %vm1064, %v953, 0
      %v1165 = vsel %vm1064, %v954, 0
      %v1168 = vsel %vm1064, %v955, 0
      %v1171 = vsel %vm1064, %v956, 0
      %v1174 = vsel %vm1064, %v957, 0
      %v1177 = vsel %vm1064, %v958, 0
      %v1180 = vsel %vm1064, %v959, 0
      %v1183 = vsel %vm1064, %v960, 0
      %v1186 = vsel %vm1064, %v961, 0
      %v1189 = vsel %vm1064, %v962, 0
      %v1192 = vsel %vm1064, %v963, 0
      %v1195 = vsel %vm1064, %v964, 0
      %v1198 = vsel %vm1064, %v965, 0
      %v1201 = vsel %vm1064, %v966, 0
      %v1204 = vsel %vm1064, %v967, 0
      %v1207 = vsel %vm1064, %v968, 0
      %v1210 = vsel %vm1064, %v969, 0
      %v1213 = vsel %vm1064, %v970, 0
      %v1216 = vsel %vm1064, %v971, 0
      %v1219 = vsel %vm1064, %v972, 0
      %v1222 = vsel %vm1064, %v973, 0
      %v1225 = vsel %vm1064, %v974, 0
      %v1228 = vsel %vm1064, %v975, 0
      %v1231 = vsel %vm1064, %v976, 0
      %v1234 = vsel %vm1064, %v977, 0
      %v1237 = vsel %vm1064, %v978, 0
      %v1240 = vsel %vm1064, %v979, 0
      %v1243 = vsel %vm1064, %v980, 0
      %v1246 = vsel %vm1064, %v981, 0
      %v1249 = vsel %vm1064, %v982, 0
      %v1252 = vsel %vm1064, %v983, 0
      %v1255 = vsel %vm1064, %v984, 0
      %v1258 = vsel %vm1064, %v985, 0
      %v1261 = vsel %vm1064, %v986, 0
      %v1264 = vsel %vm1064, %v987, 0
      %v1267 = vsel %vm1064, %v988, 0
      %v1270 = vsel %vm1064, %v989, 0
      %v1273 = vsel %vm1064, %v990, 0
      %v1276 = vsel %vm1064, %v991, 0
      %v1279 = vsel %vm1064, %v992, 0
      %v1282 = vsel %vm1064, %v993, 0
      %v1285 = vsel %vm1064, %v994, 0
      %v1288 = vsel %vm1064, %v995, 0
      %v1291 = vsel %vm1064, %v996, 0
      %v1294 = vsel %vm1064, %v997, 0
      %v1297 = vsel %vm1064, %v998, 0
      %v1300 = vsel %vm1064, %v999, 0
      %v1303 = vsel %vm1064, %v1000, 0
      %v1306 = vsel %vm1064, %v1001, 0
      %v1309 = vsel %vm1064, %v1002, 0
      %v1312 = vsel %vm1064, %v1003, 0
      %v1315 = vsel %vm1064, %v1004, 0
      %v1318 = vsel %vm1064, %v1005, 0
      %v1321 = vsel %vm1064, %v1006, 0
      %v1324 = vsel %vm1064, %v1007, 0
      %v1327 = vsel %vm1064, %v1008, 0
      %v1330 = vsel %vm1064, %v1009, 0
      %v1333 = vsel %vm1064, %v1010, 0
      %v1336 = vsel %vm1064, %v1011, 0
      %v1339 = vsel %vm1064, %v1012, 0
      %v1342 = vsel %vm1064, %v1013, 0
      %v1345 = vsel %vm1064, %v1014, 0
      %v1348 = vsel %vm1064, %v1015, 0
      %v1351 = vsel %vm1064, %v1016, 0
      %v1354 = vsel %vm1064, %v1017, 0
      %v1357 = vsel %vm1064, %v1018, 0
      %v1360 = vsel %vm1064, %v1019, 0
      %v1363 = vsel %vm1064, %v1020, 0
      %v1366 = vsel %vm1064, %v1021, 0
      %v1369 = vsel %vm1064, %v1022, 0
      %v1372 = vsel %vm1064, %v1023, 0
      %v1375 = vsel %vm1064, %v1024, 0
      %v1378 = vsel %vm1064, %v1025, 0
      %v1381 = vsel %vm1064, %v1026, 0
      %v1384 = vsel %vm1064, %v1027, 0
      %v1387 = vsel %vm1064, %v1028, 0
      %v1390 = vsel %vm1064, %v1029, 0
      %v1393 = vsel %vm1064, %v1030, 0
      %v1396 = vsel %vm1064, %v1031, 0
      %v1399 = vsel %vm1064, %v1032, 0
      %v1402 = vsel %vm1064, %v1033, 0
      %v1405 = vsel %vm1064, %v1034, 0
      %v1408 = vsel %vm1064, %v1035, 0
      %v1411 = vsel %vm1064, %v1036, 0
      %v1414 = vsel %vm1064, %v1037, 0
      %v1417 = vsel %vm1064, %v1038, 0
      %v1420 = vsel %vm1064, %v1039, 0
      %v1423 = vsel %vm1064, %v1040, 0
      %v1426 = vsel %vm1064, %v1041, 0
      %v1429 = vsel %vm1064, %v1042, 0
      %v1432 = vsel %vm1064, %v1043, 0
      %v1435 = vsel %vm1064, %v1044, 0
      %v1438 = vsel %vm1064, %v1045, 0
      %v1441 = vsel %vm1064, %v1046, 0
      %v1444 = vsel %vm1064, %v1047, 0
      %v1447 = vsel %vm1064, %v1048, 0
      %vm1449 = vcmask 1041408
      %v1451 = vsel %vm1449, %v1061, 0
      %1453 = vmatpush.bf16.msra.mxu0 0
      %1454 = vmatpush.bf16.msra.mxu0 0
      %1455 = vmatpush.bf16.msra.mxu0 0
      %1456 = vmatpush.bf16.msra.mxu0 0
      %1457 = vmatpush.bf16.msra.mxu0 0
      %1458 = vmatpush.bf16.msra.mxu0 %v1451
      %1459 = vmatpush.bf16.msra.mxu0 %v1060
      %1460 = vmatpush.bf16.msra.mxu0 %v1059
      %1461 = vmatmul.bf16.gmra.mxu0 %v1066
      %v1462 = vpop.f32.mrf.mxu0
      %v1463 = vadd.f32 0.0, %v1462
      %v1464 = vpop.f32.mrf.mxu0
      %v1465 = vadd.f32 0.0, %v1464
      %1466 = vmatmul.bf16.gmra.mxu0 %v1069
      %v1467 = vpop.f32.mrf.mxu0
      %v1468 = vadd.f32 0.0, %v1467
      %v1469 = vpop.f32.mrf.mxu0
      %v1470 = vadd.f32 0.0, %v1469
      %1471 = vmatmul.bf16.gmra.mxu0 %v1072
      %v1472 = vpop.f32.mrf.mxu0
      %v1473 = vadd.f32 0.0, %v1472
      %v1474 = vpop.f32.mrf.mxu0
      %v1475 = vadd.f32 0.0, %v1474
      %1476 = vmatmul.bf16.gmra.mxu0 %v1075
      %v1477 = vpop.f32.mrf.mxu0
      %v1478 = vadd.f32 0.0, %v1477
      %v1479 = vpop.f32.mrf.mxu0
      %v1480 = vadd.f32 0.0, %v1479
      %1481 = vmatmul.bf16.gmra.mxu0 %v1078
      %v1482 = vpop.f32.mrf.mxu0
      %v1483 = vadd.f32 0.0, %v1482
      %v1484 = vpop.f32.mrf.mxu0
      %v1485 = vadd.f32 0.0, %v1484
      %1486 = vmatmul.bf16.gmra.mxu0 %v1081
      %v1487 = vpop.f32.mrf.mxu0
      %v1488 = vadd.f32 0.0, %v1487
      %v1489 = vpop.f32.mrf.mxu0
      %v1490 = vadd.f32 0.0, %v1489
      %1491 = vmatmul.bf16.gmra.mxu0 %v1084
      %v1492 = vpop.f32.mrf.mxu0
      %v1493 = vadd.f32 0.0, %v1492
      %v1494 = vpop.f32.mrf.mxu0
      %v1495 = vadd.f32 0.0, %v1494
      %1496 = vmatmul.bf16.gmra.mxu0 %v1087
      %v1497 = vpop.f32.mrf.mxu0
      %v1498 = vadd.f32 0.0, %v1497
      %v1499 = vpop.f32.mrf.mxu0
      %v1500 = vadd.f32 0.0, %v1499
      %1501 = vmatmul.bf16.gmra.mxu0 %v1090
      %v1502 = vpop.f32.mrf.mxu0
      %v1503 = vadd.f32 0.0, %v1502
      %v1504 = vpop.f32.mrf.mxu0
      %v1505 = vadd.f32 0.0, %v1504
      %1506 = vmatmul.bf16.gmra.mxu0 %v1093
      %v1507 = vpop.f32.mrf.mxu0
      %v1508 = vadd.f32 0.0, %v1507
      %v1509 = vpop.f32.mrf.mxu0
      %v1510 = vadd.f32 0.0, %v1509
      %1511 = vmatmul.bf16.gmra.mxu0 %v1096
      %v1512 = vpop.f32.mrf.mxu0
      %v1513 = vadd.f32 0.0, %v1512
      %v1514 = vpop.f32.mrf.mxu0
      %v1515 = vadd.f32 0.0, %v1514
      %1516 = vmatmul.bf16.gmra.mxu0 %v1099
      %v1517 = vpop.f32.mrf.mxu0
      %v1518 = vadd.f32 0.0, %v1517
      %v1519 = vpop.f32.mrf.mxu0
      %v1520 = vadd.f32 0.0, %v1519
      %1521 = vmatmul.bf16.gmra.mxu0 %v1102
      %v1522 = vpop.f32.mrf.mxu0
      %v1523 = vadd.f32 0.0, %v1522
      %v1524 = vpop.f32.mrf.mxu0
      %v1525 = vadd.f32 0.0, %v1524
      %1526 = vmatmul.bf16.gmra.mxu0 %v1105
      %v1527 = vpop.f32.mrf.mxu0
      %v1528 = vadd.f32 0.0, %v1527
      %v1529 = vpop.f32.mrf.mxu0
      %v1530 = vadd.f32 0.0, %v1529
      %1531 = vmatmul.bf16.gmra.mxu0 %v1108
      %v1532 = vpop.f32.mrf.mxu0
      %v1533 = vadd.f32 0.0, %v1532
      %v1534 = vpop.f32.mrf.mxu0
      %v1535 = vadd.f32 0.0, %v1534
      %1536 = vmatmul.bf16.gmra.mxu0 %v1111
      %v1537 = vpop.f32.mrf.mxu0
      %v1538 = vadd.f32 0.0, %v1537
      %v1539 = vpop.f32.mrf.mxu0
      %v1540 = vadd.f32 0.0, %v1539
      %1541 = vmatmul.bf16.gmra.mxu0 %v1114
      %v1542 = vpop.f32.mrf.mxu0
      %v1543 = vadd.f32 0.0, %v1542
      %v1544 = vpop.f32.mrf.mxu0
      %v1545 = vadd.f32 0.0, %v1544
      %1546 = vmatmul.bf16.gmra.mxu0 %v1117
      %v1547 = vpop.f32.mrf.mxu0
      %v1548 = vadd.f32 0.0, %v1547
      %v1549 = vpop.f32.mrf.mxu0
      %v1550 = vadd.f32 0.0, %v1549
      %1551 = vmatmul.bf16.gmra.mxu0 %v1120
      %v1552 = vpop.f32.mrf.mxu0
      %v1553 = vadd.f32 0.0, %v1552
      %v1554 = vpop.f32.mrf.mxu0
      %v1555 = vadd.f32 0.0, %v1554
      %1556 = vmatmul.bf16.gmra.mxu0 %v1123
      %v1557 = vpop.f32.mrf.mxu0
      %v1558 = vadd.f32 0.0, %v1557
      %v1559 = vpop.f32.mrf.mxu0
      %v1560 = vadd.f32 0.0, %v1559
      %1561 = vmatmul.bf16.gmra.mxu0 %v1126
      %v1562 = vpop.f32.mrf.mxu0
      %v1563 = vadd.f32 0.0, %v1562
      %v1564 = vpop.f32.mrf.mxu0
      %v1565 = vadd.f32 0.0, %v1564
      %1566 = vmatmul.bf16.gmra.mxu0 %v1129
      %v1567 = vpop.f32.mrf.mxu0
      %v1568 = vadd.f32 0.0, %v1567
      %v1569 = vpop.f32.mrf.mxu0
      %v1570 = vadd.f32 0.0, %v1569
      %1571 = vmatmul.bf16.gmra.mxu0 %v1132
      %v1572 = vpop.f32.mrf.mxu0
      %v1573 = vadd.f32 0.0, %v1572
      %v1574 = vpop.f32.mrf.mxu0
      %v1575 = vadd.f32 0.0, %v1574
      %1576 = vmatmul.bf16.gmra.mxu0 %v1135
      %v1577 = vpop.f32.mrf.mxu0
      %v1578 = vadd.f32 0.0, %v1577
      %v1579 = vpop.f32.mrf.mxu0
      %v1580 = vadd.f32 0.0, %v1579
      %1581 = vmatmul.bf16.gmra.mxu0 %v1138
      %v1582 = vpop.f32.mrf.mxu0
      %v1583 = vadd.f32 0.0, %v1582
      %v1584 = vpop.f32.mrf.mxu0
      %v1585 = vadd.f32 0.0, %v1584
      %1586 = vmatmul.bf16.gmra.mxu0 %v1141
      %v1587 = vpop.f32.mrf.mxu0
      %v1588 = vadd.f32 0.0, %v1587
      %v1589 = vpop.f32.mrf.mxu0
      %v1590 = vadd.f32 0.0, %v1589
      %1591 = vmatmul.bf16.gmra.mxu0 %v1144
      %v1592 = vpop.f32.mrf.mxu0
      %v1593 = vadd.f32 0.0, %v1592
      %v1594 = vpop.f32.mrf.mxu0
      %v1595 = vadd.f32 0.0, %v1594
      %1596 = vmatmul.bf16.gmra.mxu0 %v1147
      %v1597 = vpop.f32.mrf.mxu0
      %v1598 = vadd.f32 0.0, %v1597
      %v1599 = vpop.f32.mrf.mxu0
      %v1600 = vadd.f32 0.0, %v1599
      %1601 = vmatmul.bf16.gmra.mxu0 %v1150
      %v1602 = vpop.f32.mrf.mxu0
      %v1603 = vadd.f32 0.0, %v1602
      %v1604 = vpop.f32.mrf.mxu0
      %v1605 = vadd.f32 0.0, %v1604
      %1606 = vmatmul.bf16.gmra.mxu0 %v1153
      %v1607 = vpop.f32.mrf.mxu0
      %v1608 = vadd.f32 0.0, %v1607
      %v1609 = vpop.f32.mrf.mxu0
      %v1610 = vadd.f32 0.0, %v1609
      %1611 = vmatmul.bf16.gmra.mxu0 %v1156
      %v1612 = vpop.f32.mrf.mxu0
      %v1613 = vadd.f32 0.0, %v1612
      %v1614 = vpop.f32.mrf.mxu0
      %v1615 = vadd.f32 0.0, %v1614
      %1616 = vmatmul.bf16.gmra.mxu0 %v1159
      %v1617 = vpop.f32.mrf.mxu0
      %v1618 = vadd.f32 0.0, %v1617
      %v1619 = vpop.f32.mrf.mxu0
      %v1620 = vadd.f32 0.0, %v1619
      %1621 = vmatmul.bf16.gmra.mxu0 %v1162
      %v1622 = vpop.f32.mrf.mxu0
      %v1623 = vadd.f32 0.0, %v1622
      %v1624 = vpop.f32.mrf.mxu0
      %v1625 = vadd.f32 0.0, %v1624
      %1626 = vmatmul.bf16.gmra.mxu0 %v1165
      %v1627 = vpop.f32.mrf.mxu0
      %v1628 = vadd.f32 0.0, %v1627
      %v1629 = vpop.f32.mrf.mxu0
      %v1630 = vadd.f32 0.0, %v1629
      %1631 = vmatmul.bf16.gmra.mxu0 %v1168
      %v1632 = vpop.f32.mrf.mxu0
      %v1633 = vadd.f32 0.0, %v1632
      %v1634 = vpop.f32.mrf.mxu0
      %v1635 = vadd.f32 0.0, %v1634
      %1636 = vmatmul.bf16.gmra.mxu0 %v1171
      %v1637 = vpop.f32.mrf.mxu0
      %v1638 = vadd.f32 0.0, %v1637
      %v1639 = vpop.f32.mrf.mxu0
      %v1640 = vadd.f32 0.0, %v1639
      %1641 = vmatmul.bf16.gmra.mxu0 %v1174
      %v1642 = vpop.f32.mrf.mxu0
      %v1643 = vadd.f32 0.0, %v1642
      %v1644 = vpop.f32.mrf.mxu0
      %v1645 = vadd.f32 0.0, %v1644
      %1646 = vmatmul.bf16.gmra.mxu0 %v1177
      %v1647 = vpop.f32.mrf.mxu0
      %v1648 = vadd.f32 0.0, %v1647
      %v1649 = vpop.f32.mrf.mxu0
      %v1650 = vadd.f32 0.0, %v1649
      %1651 = vmatmul.bf16.gmra.mxu0 %v1180
      %v1652 = vpop.f32.mrf.mxu0
      %v1653 = vadd.f32 0.0, %v1652
      %v1654 = vpop.f32.mrf.mxu0
      %v1655 = vadd.f32 0.0, %v1654
      %1656 = vmatmul.bf16.gmra.mxu0 %v1183
      %v1657 = vpop.f32.mrf.mxu0
      %v1658 = vadd.f32 0.0, %v1657
      %v1659 = vpop.f32.mrf.mxu0
      %v1660 = vadd.f32 0.0, %v1659
      %1661 = vmatmul.bf16.gmra.mxu0 %v1186
      %v1662 = vpop.f32.mrf.mxu0
      %v1663 = vadd.f32 0.0, %v1662
      %v1664 = vpop.f32.mrf.mxu0
      %v1665 = vadd.f32 0.0, %v1664
      %1666 = vmatmul.bf16.gmra.mxu0 %v1189
      %v1667 = vpop.f32.mrf.mxu0
      %v1668 = vadd.f32 0.0, %v1667
      %v1669 = vpop.f32.mrf.mxu0
      %v1670 = vadd.f32 0.0, %v1669
      %1671 = vmatmul.bf16.gmra.mxu0 %v1192
      %v1672 = vpop.f32.mrf.mxu0
      %v1673 = vadd.f32 0.0, %v1672
      %v1674 = vpop.f32.mrf.mxu0
      %v1675 = vadd.f32 0.0, %v1674
      %1676 = vmatmul.bf16.gmra.mxu0 %v1195
      %v1677 = vpop.f32.mrf.mxu0
      %v1678 = vadd.f32 0.0, %v1677
      %v1679 = vpop.f32.mrf.mxu0
      %v1680 = vadd.f32 0.0, %v1679
      %1681 = vmatmul.bf16.gmra.mxu0 %v1198
      %v1682 = vpop.f32.mrf.mxu0
      %v1683 = vadd.f32 0.0, %v1682
      %v1684 = vpop.f32.mrf.mxu0
      %v1685 = vadd.f32 0.0, %v1684
      %1686 = vmatmul.bf16.gmra.mxu0 %v1201
      %v1687 = vpop.f32.mrf.mxu0
      %v1688 = vadd.f32 0.0, %v1687
      %v1689 = vpop.f32.mrf.mxu0
      %v1690 = vadd.f32 0.0, %v1689
      %1691 = vmatmul.bf16.gmra.mxu0 %v1204
      %v1692 = vpop.f32.mrf.mxu0
      %v1693 = vadd.f32 0.0, %v1692
      %v1694 = vpop.f32.mrf.mxu0
      %v1695 = vadd.f32 0.0, %v1694
      %1696 = vmatmul.bf16.gmra.mxu0 %v1207
      %v1697 = vpop.f32.mrf.mxu0
      %v1698 = vadd.f32 0.0, %v1697
      %v1699 = vpop.f32.mrf.mxu0
      %v1700 = vadd.f32 0.0, %v1699
      %1701 = vmatmul.bf16.gmra.mxu0 %v1210
      %v1702 = vpop.f32.mrf.mxu0
      %v1703 = vadd.f32 0.0, %v1702
      %v1704 = vpop.f32.mrf.mxu0
      %v1705 = vadd.f32 0.0, %v1704
      %1706 = vmatmul.bf16.gmra.mxu0 %v1213
      %v1707 = vpop.f32.mrf.mxu0
      %v1708 = vadd.f32 0.0, %v1707
      %v1709 = vpop.f32.mrf.mxu0
      %v1710 = vadd.f32 0.0, %v1709
      %1711 = vmatmul.bf16.gmra.mxu0 %v1216
      %v1712 = vpop.f32.mrf.mxu0
      %v1713 = vadd.f32 0.0, %v1712
      %v1714 = vpop.f32.mrf.mxu0
      %v1715 = vadd.f32 0.0, %v1714
      %1716 = vmatmul.bf16.gmra.mxu0 %v1219
      %v1717 = vpop.f32.mrf.mxu0
      %v1718 = vadd.f32 0.0, %v1717
      %v1719 = vpop.f32.mrf.mxu0
      %v1720 = vadd.f32 0.0, %v1719
      %1721 = vmatmul.bf16.gmra.mxu0 %v1222
      %v1722 = vpop.f32.mrf.mxu0
      %v1723 = vadd.f32 0.0, %v1722
      %v1724 = vpop.f32.mrf.mxu0
      %v1725 = vadd.f32 0.0, %v1724
      %1726 = vmatmul.bf16.gmra.mxu0 %v1225
      %v1727 = vpop.f32.mrf.mxu0
      %v1728 = vadd.f32 0.0, %v1727
      %v1729 = vpop.f32.mrf.mxu0
      %v1730 = vadd.f32 0.0, %v1729
      %1731 = vmatmul.bf16.gmra.mxu0 %v1228
      %v1732 = vpop.f32.mrf.mxu0
      %v1733 = vadd.f32 0.0, %v1732
      %v1734 = vpop.f32.mrf.mxu0
      %v1735 = vadd.f32 0.0, %v1734
      %1736 = vmatmul.bf16.gmra.mxu0 %v1231
      %v1737 = vpop.f32.mrf.mxu0
      %v1738 = vadd.f32 0.0, %v1737
      %v1739 = vpop.f32.mrf.mxu0
      %v1740 = vadd.f32 0.0, %v1739
      %1741 = vmatmul.bf16.gmra.mxu0 %v1234
      %v1742 = vpop.f32.mrf.mxu0
      %v1743 = vadd.f32 0.0, %v1742
      %v1744 = vpop.f32.mrf.mxu0
      %v1745 = vadd.f32 0.0, %v1744
      %1746 = vmatmul.bf16.gmra.mxu0 %v1237
      %v1747 = vpop.f32.mrf.mxu0
      %v1748 = vadd.f32 0.0, %v1747
      %v1749 = vpop.f32.mrf.mxu0
      %v1750 = vadd.f32 0.0, %v1749
      %1751 = vmatmul.bf16.gmra.mxu0 %v1240
      %v1752 = vpop.f32.mrf.mxu0
      %v1753 = vadd.f32 0.0, %v1752
      %v1754 = vpop.f32.mrf.mxu0
      %v1755 = vadd.f32 0.0, %v1754
      %1756 = vmatmul.bf16.gmra.mxu0 %v1243
      %v1757 = vpop.f32.mrf.mxu0
      %v1758 = vadd.f32 0.0, %v1757
      %v1759 = vpop.f32.mrf.mxu0
      %v1760 = vadd.f32 0.0, %v1759
      %1761 = vmatmul.bf16.gmra.mxu0 %v1246
      %v1762 = vpop.f32.mrf.mxu0
      %v1763 = vadd.f32 0.0, %v1762
      %v1764 = vpop.f32.mrf.mxu0
      %v1765 = vadd.f32 0.0, %v1764
      %1766 = vmatmul.bf16.gmra.mxu0 %v1249
      %v1767 = vpop.f32.mrf.mxu0
      %v1768 = vadd.f32 0.0, %v1767
      %v1769 = vpop.f32.mrf.mxu0
      %v1770 = vadd.f32 0.0, %v1769
      %1771 = vmatmul.bf16.gmra.mxu0 %v1252
      %v1772 = vpop.f32.mrf.mxu0
      %v1773 = vadd.f32 0.0, %v1772
      %v1774 = vpop.f32.mrf.mxu0
      %v1775 = vadd.f32 0.0, %v1774
      %1776 = vmatmul.bf16.gmra.mxu0 %v1255
      %v1777 = vpop.f32.mrf.mxu0
      %v1778 = vadd.f32 0.0, %v1777
      %v1779 = vpop.f32.mrf.mxu0
      %v1780 = vadd.f32 0.0, %v1779
      %1781 = vmatmul.bf16.gmra.mxu0 %v1258
      %v1782 = vpop.f32.mrf.mxu0
      %v1783 = vadd.f32 0.0, %v1782
      %v1784 = vpop.f32.mrf.mxu0
      %v1785 = vadd.f32 0.0, %v1784
      %1786 = vmatmul.bf16.gmra.mxu0 %v1261
      %v1787 = vpop.f32.mrf.mxu0
      %v1788 = vadd.f32 0.0, %v1787
      %v1789 = vpop.f32.mrf.mxu0
      %v1790 = vadd.f32 0.0, %v1789
      %1791 = vmatmul.bf16.gmra.mxu0 %v1264
      %v1792 = vpop.f32.mrf.mxu0
      %v1793 = vadd.f32 0.0, %v1792
      %v1794 = vpop.f32.mrf.mxu0
      %v1795 = vadd.f32 0.0, %v1794
      %1796 = vmatmul.bf16.gmra.mxu0 %v1267
      %v1797 = vpop.f32.mrf.mxu0
      %v1798 = vadd.f32 0.0, %v1797
      %v1799 = vpop.f32.mrf.mxu0
      %v1800 = vadd.f32 0.0, %v1799
      %1801 = vmatmul.bf16.gmra.mxu0 %v1270
      %v1802 = vpop.f32.mrf.mxu0
      %v1803 = vadd.f32 0.0, %v1802
      %v1804 = vpop.f32.mrf.mxu0
      %v1805 = vadd.f32 0.0, %v1804
      %1806 = vmatmul.bf16.gmra.mxu0 %v1273
      %v1807 = vpop.f32.mrf.mxu0
      %v1808 = vadd.f32 0.0, %v1807
      %v1809 = vpop.f32.mrf.mxu0
      %v1810 = vadd.f32 0.0, %v1809
      %1811 = vmatmul.bf16.gmra.mxu0 %v1276
      %v1812 = vpop.f32.mrf.mxu0
      %v1813 = vadd.f32 0.0, %v1812
      %v1814 = vpop.f32.mrf.mxu0
      %v1815 = vadd.f32 0.0, %v1814
      %1816 = vmatmul.bf16.gmra.mxu0 %v1279
      %v1817 = vpop.f32.mrf.mxu0
      %v1818 = vadd.f32 0.0, %v1817
      %v1819 = vpop.f32.mrf.mxu0
      %v1820 = vadd.f32 0.0, %v1819
      %1821 = vmatmul.bf16.gmra.mxu0 %v1282
      %v1822 = vpop.f32.mrf.mxu0
      %v1823 = vadd.f32 0.0, %v1822
      %v1824 = vpop.f32.mrf.mxu0
      %v1825 = vadd.f32 0.0, %v1824
      %1826 = vmatmul.bf16.gmra.mxu0 %v1285
      %v1827 = vpop.f32.mrf.mxu0
      %v1828 = vadd.f32 0.0, %v1827
      %v1829 = vpop.f32.mrf.mxu0
      %v1830 = vadd.f32 0.0, %v1829
      %1831 = vmatmul.bf16.gmra.mxu0 %v1288
      %v1832 = vpop.f32.mrf.mxu0
      %v1833 = vadd.f32 0.0, %v1832
      %v1834 = vpop.f32.mrf.mxu0
      %v1835 = vadd.f32 0.0, %v1834
      %1836 = vmatmul.bf16.gmra.mxu0 %v1291
      %v1837 = vpop.f32.mrf.mxu0
      %v1838 = vadd.f32 0.0, %v1837
      %v1839 = vpop.f32.mrf.mxu0
      %v1840 = vadd.f32 0.0, %v1839
      %1841 = vmatmul.bf16.gmra.mxu0 %v1294
      %v1842 = vpop.f32.mrf.mxu0
      %v1843 = vadd.f32 0.0, %v1842
      %v1844 = vpop.f32.mrf.mxu0
      %v1845 = vadd.f32 0.0, %v1844
      %1846 = vmatmul.bf16.gmra.mxu0 %v1297
      %v1847 = vpop.f32.mrf.mxu0
      %v1848 = vadd.f32 0.0, %v1847
      %v1849 = vpop.f32.mrf.mxu0
      %v1850 = vadd.f32 0.0, %v1849
      %1851 = vmatmul.bf16.gmra.mxu0 %v1300
      %v1852 = vpop.f32.mrf.mxu0
      %v1853 = vadd.f32 0.0, %v1852
      %v1854 = vpop.f32.mrf.mxu0
      %v1855 = vadd.f32 0.0, %v1854
      %1856 = vmatmul.bf16.gmra.mxu0 %v1303
      %v1857 = vpop.f32.mrf.mxu0
      %v1858 = vadd.f32 0.0, %v1857
      %v1859 = vpop.f32.mrf.mxu0
      %v1860 = vadd.f32 0.0, %v1859
      %1861 = vmatmul.bf16.gmra.mxu0 %v1306
      %v1862 = vpop.f32.mrf.mxu0
      %v1863 = vadd.f32 0.0, %v1862
      %v1864 = vpop.f32.mrf.mxu0
      %v1865 = vadd.f32 0.0, %v1864
      %1866 = vmatmul.bf16.gmra.mxu0 %v1309
      %v1867 = vpop.f32.mrf.mxu0
      %v1868 = vadd.f32 0.0, %v1867
      %v1869 = vpop.f32.mrf.mxu0
      %v1870 = vadd.f32 0.0, %v1869
      %1871 = vmatmul.bf16.gmra.mxu0 %v1312
      %v1872 = vpop.f32.mrf.mxu0
      %v1873 = vadd.f32 0.0, %v1872
      %v1874 = vpop.f32.mrf.mxu0
      %v1875 = vadd.f32 0.0, %v1874
      %1876 = vmatmul.bf16.gmra.mxu0 %v1315
      %v1877 = vpop.f32.mrf.mxu0
      %v1878 = vadd.f32 0.0, %v1877
      %v1879 = vpop.f32.mrf.mxu0
      %v1880 = vadd.f32 0.0, %v1879
      %1881 = vmatmul.bf16.gmra.mxu0 %v1318
      %v1882 = vpop.f32.mrf.mxu0
      %v1883 = vadd.f32 0.0, %v1882
      %v1884 = vpop.f32.mrf.mxu0
      %v1885 = vadd.f32 0.0, %v1884
      %1886 = vmatmul.bf16.gmra.mxu0 %v1321
      %v1887 = vpop.f32.mrf.mxu0
      %v1888 = vadd.f32 0.0, %v1887
      %v1889 = vpop.f32.mrf.mxu0
      %v1890 = vadd.f32 0.0, %v1889
      %1891 = vmatmul.bf16.gmra.mxu0 %v1324
      %v1892 = vpop.f32.mrf.mxu0
      %v1893 = vadd.f32 0.0, %v1892
      %v1894 = vpop.f32.mrf.mxu0
      %v1895 = vadd.f32 0.0, %v1894
      %1896 = vmatmul.bf16.gmra.mxu0 %v1327
      %v1897 = vpop.f32.mrf.mxu0
      %v1898 = vadd.f32 0.0, %v1897
      %v1899 = vpop.f32.mrf.mxu0
      %v1900 = vadd.f32 0.0, %v1899
      %1901 = vmatmul.bf16.gmra.mxu0 %v1330
      %v1902 = vpop.f32.mrf.mxu0
      %v1903 = vadd.f32 0.0, %v1902
      %v1904 = vpop.f32.mrf.mxu0
      %v1905 = vadd.f32 0.0, %v1904
      %1906 = vmatmul.bf16.gmra.mxu0 %v1333
      %v1907 = vpop.f32.mrf.mxu0
      %v1908 = vadd.f32 0.0, %v1907
      %v1909 = vpop.f32.mrf.mxu0
      %v1910 = vadd.f32 0.0, %v1909
      %1911 = vmatmul.bf16.gmra.mxu0 %v1336
      %v1912 = vpop.f32.mrf.mxu0
      %v1913 = vadd.f32 0.0, %v1912
      %v1914 = vpop.f32.mrf.mxu0
      %v1915 = vadd.f32 0.0, %v1914
      %1916 = vmatmul.bf16.gmra.mxu0 %v1339
      %v1917 = vpop.f32.mrf.mxu0
      %v1918 = vadd.f32 0.0, %v1917
      %v1919 = vpop.f32.mrf.mxu0
      %v1920 = vadd.f32 0.0, %v1919
      %1921 = vmatmul.bf16.gmra.mxu0 %v1342
      %v1922 = vpop.f32.mrf.mxu0
      %v1923 = vadd.f32 0.0, %v1922
      %v1924 = vpop.f32.mrf.mxu0
      %v1925 = vadd.f32 0.0, %v1924
      %1926 = vmatmul.bf16.gmra.mxu0 %v1345
      %v1927 = vpop.f32.mrf.mxu0
      %v1928 = vadd.f32 0.0, %v1927
      %v1929 = vpop.f32.mrf.mxu0
      %v1930 = vadd.f32 0.0, %v1929
      %1931 = vmatmul.bf16.gmra.mxu0 %v1348
      %v1932 = vpop.f32.mrf.mxu0
      %v1933 = vadd.f32 0.0, %v1932
      %v1934 = vpop.f32.mrf.mxu0
      %v1935 = vadd.f32 0.0, %v1934
      %1936 = vmatmul.bf16.gmra.mxu0 %v1351
      %v1937 = vpop.f32.mrf.mxu0
      %v1938 = vadd.f32 0.0, %v1937
      %v1939 = vpop.f32.mrf.mxu0
      %v1940 = vadd.f32 0.0, %v1939
      %1941 = vmatmul.bf16.gmra.mxu0 %v1354
      %v1942 = vpop.f32.mrf.mxu0
      %v1943 = vadd.f32 0.0, %v1942
      %v1944 = vpop.f32.mrf.mxu0
      %v1945 = vadd.f32 0.0, %v1944
      %1946 = vmatmul.bf16.gmra.mxu0 %v1357
      %v1947 = vpop.f32.mrf.mxu0
      %v1948 = vadd.f32 0.0, %v1947
      %v1949 = vpop.f32.mrf.mxu0
      %v1950 = vadd.f32 0.0, %v1949
      %1951 = vmatmul.bf16.gmra.mxu0 %v1360
      %v1952 = vpop.f32.mrf.mxu0
      %v1953 = vadd.f32 0.0, %v1952
      %v1954 = vpop.f32.mrf.mxu0
      %v1955 = vadd.f32 0.0, %v1954
      %1956 = vmatmul.bf16.gmra.mxu0 %v1363
      %v1957 = vpop.f32.mrf.mxu0
      %v1958 = vadd.f32 0.0, %v1957
      %v1959 = vpop.f32.mrf.mxu0
      %v1960 = vadd.f32 0.0, %v1959
      %1961 = vmatmul.bf16.gmra.mxu0 %v1366
      %v1962 = vpop.f32.mrf.mxu0
      %v1963 = vadd.f32 0.0, %v1962
      %v1964 = vpop.f32.mrf.mxu0
      %v1965 = vadd.f32 0.0, %v1964
      %1966 = vmatmul.bf16.gmra.mxu0 %v1369
      %v1967 = vpop.f32.mrf.mxu0
      %v1968 = vadd.f32 0.0, %v1967
      %v1969 = vpop.f32.mrf.mxu0
      %v1970 = vadd.f32 0.0, %v1969
      %1971 = vmatmul.bf16.gmra.mxu0 %v1372
      %v1972 = vpop.f32.mrf.mxu0
      %v1973 = vadd.f32 0.0, %v1972
      %v1974 = vpop.f32.mrf.mxu0
      %v1975 = vadd.f32 0.0, %v1974
      %1976 = vmatmul.bf16.gmra.mxu0 %v1375
      %v1977 = vpop.f32.mrf.mxu0
      %v1978 = vadd.f32 0.0, %v1977
      %v1979 = vpop.f32.mrf.mxu0
      %v1980 = vadd.f32 0.0, %v1979
      %1981 = vmatmul.bf16.gmra.mxu0 %v1378
      %v1982 = vpop.f32.mrf.mxu0
      %v1983 = vadd.f32 0.0, %v1982
      %v1984 = vpop.f32.mrf.mxu0
      %v1985 = vadd.f32 0.0, %v1984
      %1986 = vmatmul.bf16.gmra.mxu0 %v1381
      %v1987 = vpop.f32.mrf.mxu0
      %v1988 = vadd.f32 0.0, %v1987
      %v1989 = vpop.f32.mrf.mxu0
      %v1990 = vadd.f32 0.0, %v1989
      %1991 = vmatmul.bf16.gmra.mxu0 %v1384
      %v1992 = vpop.f32.mrf.mxu0
      %v1993 = vadd.f32 0.0, %v1992
      %v1994 = vpop.f32.mrf.mxu0
      %v1995 = vadd.f32 0.0, %v1994
      %1996 = vmatmul.bf16.gmra.mxu0 %v1387
      %v1997 = vpop.f32.mrf.mxu0
      %v1998 = vadd.f32 0.0, %v1997
      %v1999 = vpop.f32.mrf.mxu0
      %v2000 = vadd.f32 0.0, %v1999
      %2001 = vmatmul.bf16.gmra.mxu0 %v1390
      %v2002 = vpop.f32.mrf.mxu0
      %v2003 = vadd.f32 0.0, %v2002
      %v2004 = vpop.f32.mrf.mxu0
      %v2005 = vadd.f32 0.0, %v2004
      %2006 = vmatmul.bf16.gmra.mxu0 %v1393
      %v2007 = vpop.f32.mrf.mxu0
      %v2008 = vadd.f32 0.0, %v2007
      %v2009 = vpop.f32.mrf.mxu0
      %v2010 = vadd.f32 0.0, %v2009
      %2011 = vmatmul.bf16.gmra.mxu0 %v1396
      %v2012 = vpop.f32.mrf.mxu0
      %v2013 = vadd.f32 0.0, %v2012
      %v2014 = vpop.f32.mrf.mxu0
      %v2015 = vadd.f32 0.0, %v2014
      %2016 = vmatmul.bf16.gmra.mxu0 %v1399
      %v2017 = vpop.f32.mrf.mxu0
      %v2018 = vadd.f32 0.0, %v2017
      %v2019 = vpop.f32.mrf.mxu0
      %v2020 = vadd.f32 0.0, %v2019
      %2021 = vmatmul.bf16.gmra.mxu0 %v1402
      %v2022 = vpop.f32.mrf.mxu0
      %v2023 = vadd.f32 0.0, %v2022
      %v2024 = vpop.f32.mrf.mxu0
      %v2025 = vadd.f32 0.0, %v2024
      %2026 = vmatmul.bf16.gmra.mxu0 %v1405
      %v2027 = vpop.f32.mrf.mxu0
      %v2028 = vadd.f32 0.0, %v2027
      %v2029 = vpop.f32.mrf.mxu0
      %v2030 = vadd.f32 0.0, %v2029
      %2031 = vmatmul.bf16.gmra.mxu0 %v1408
      %v2032 = vpop.f32.mrf.mxu0
      %v2033 = vadd.f32 0.0, %v2032
      %v2034 = vpop.f32.mrf.mxu0
      %v2035 = vadd.f32 0.0, %v2034
      %2036 = vmatmul.bf16.gmra.mxu0 %v1411
      %v2037 = vpop.f32.mrf.mxu0
      %v2038 = vadd.f32 0.0, %v2037
      %v2039 = vpop.f32.mrf.mxu0
      %v2040 = vadd.f32 0.0, %v2039
      %2041 = vmatmul.bf16.gmra.mxu0 %v1414
      %v2042 = vpop.f32.mrf.mxu0
      %v2043 = vadd.f32 0.0, %v2042
      %v2044 = vpop.f32.mrf.mxu0
      %v2045 = vadd.f32 0.0, %v2044
      %2046 = vmatmul.bf16.gmra.mxu0 %v1417
      %v2047 = vpop.f32.mrf.mxu0
      %v2048 = vadd.f32 0.0, %v2047
      %v2049 = vpop.f32.mrf.mxu0
      %v2050 = vadd.f32 0.0, %v2049
      %2051 = vmatmul.bf16.gmra.mxu0 %v1420
      %v2052 = vpop.f32.mrf.mxu0
      %v2053 = vadd.f32 0.0, %v2052
      %v2054 = vpop.f32.mrf.mxu0
      %v2055 = vadd.f32 0.0, %v2054
      %2056 = vmatmul.bf16.gmra.mxu0 %v1423
      %v2057 = vpop.f32.mrf.mxu0
      %v2058 = vadd.f32 0.0, %v2057
      %v2059 = vpop.f32.mrf.mxu0
      %v2060 = vadd.f32 0.0, %v2059
      %2061 = vmatmul.bf16.gmra.mxu0 %v1426
      %v2062 = vpop.f32.mrf.mxu0
      %v2063 = vadd.f32 0.0, %v2062
      %v2064 = vpop.f32.mrf.mxu0
      %v2065 = vadd.f32 0.0, %v2064
      %2066 = vmatmul.bf16.gmra.mxu0 %v1429
      %v2067 = vpop.f32.mrf.mxu0
      %v2068 = vadd.f32 0.0, %v2067
      %v2069 = vpop.f32.mrf.mxu0
      %v2070 = vadd.f32 0.0, %v2069
      %2071 = vmatmul.bf16.gmra.mxu0 %v1432
      %v2072 = vpop.f32.mrf.mxu0
      %v2073 = vadd.f32 0.0, %v2072
      %v2074 = vpop.f32.mrf.mxu0
      %v2075 = vadd.f32 0.0, %v2074
      %2076 = vmatmul.bf16.gmra.mxu0 %v1435
      %v2077 = vpop.f32.mrf.mxu0
      %v2078 = vadd.f32 0.0, %v2077
      %v2079 = vpop.f32.mrf.mxu0
      %v2080 = vadd.f32 0.0, %v2079
      %2081 = vmatmul.bf16.gmra.mxu0 %v1438
      %v2082 = vpop.f32.mrf.mxu0
      %v2083 = vadd.f32 0.0, %v2082
      %v2084 = vpop.f32.mrf.mxu0
      %v2085 = vadd.f32 0.0, %v2084
      %2086 = vmatmul.bf16.gmra.mxu0 %v1441
      %v2087 = vpop.f32.mrf.mxu0
      %v2088 = vadd.f32 0.0, %v2087
      %v2089 = vpop.f32.mrf.mxu0
      %v2090 = vadd.f32 0.0, %v2089
      %2091 = vmatmul.bf16.gmra.mxu0 %v1444
      %v2092 = vpop.f32.mrf.mxu0
      %v2093 = vadd.f32 0.0, %v2092
      %v2094 = vpop.f32.mrf.mxu0
      %v2095 = vadd.f32 0.0, %v2094
      %2096 = vmatmul.bf16.gmra.mxu0 %v1447
      %v2097 = vpop.f32.mrf.mxu0
      %v2098 = vadd.f32 0.0, %v2097
      %v2099 = vpop.f32.mrf.mxu0
      %v2100 = vadd.f32 0.0, %v2099
      %2101 = vdwg.mxu0
      %v2102 = vtanh.pop %v1463
      %v2103 = vtanh.pop %v1465
      %v2104 = vtanh.pop %v1468
      %v2105 = vtanh.pop %v1470
      %v2106 = vtanh.pop %v1473
      %v2107 = vtanh.pop %v1475
      %v2108 = vtanh.pop %v1478
      %v2109 = vtanh.pop %v1480
      %v2110 = vtanh.pop %v1483
      %v2111 = vtanh.pop %v1485
      %v2112 = vtanh.pop %v1488
      %v2113 = vtanh.pop %v1490
      %v2114 = vtanh.pop %v1493
      %v2115 = vtanh.pop %v1495
      %v2116 = vtanh.pop %v1498
      %v2117 = vtanh.pop %v1500
      %v2118 = vtanh.pop %v1503
      %v2119 = vtanh.pop %v1505
      %v2120 = vtanh.pop %v1508
      %v2121 = vtanh.pop %v1510
      %v2122 = vtanh.pop %v1513
      %v2123 = vtanh.pop %v1515
      %v2124 = vtanh.pop %v1518
      %v2125 = vtanh.pop %v1520
      %v2126 = vtanh.pop %v1523
      %v2127 = vtanh.pop %v1525
      %v2128 = vtanh.pop %v1528
      %v2129 = vtanh.pop %v1530
      %v2130 = vtanh.pop %v1533
      %v2131 = vtanh.pop %v1535
      %v2132 = vtanh.pop %v1538
      %v2133 = vtanh.pop %v1540
      %v2134 = vtanh.pop %v1543
      %v2135 = vtanh.pop %v1545
      %v2136 = vtanh.pop %v1548
      %v2137 = vtanh.pop %v1550
      %v2138 = vtanh.pop %v1553
      %v2139 = vtanh.pop %v1555
      %v2140 = vtanh.pop %v1558
      %v2141 = vtanh.pop %v1560
      %v2142 = vtanh.pop %v1563
      %v2143 = vtanh.pop %v1565
      %v2144 = vtanh.pop %v1568
      %v2145 = vtanh.pop %v1570
      %v2146 = vtanh.pop %v1573
      %v2147 = vtanh.pop %v1575
      %v2148 = vtanh.pop %v1578
      %v2149 = vtanh.pop %v1580
      %v2150 = vtanh.pop %v1583
      %v2151 = vtanh.pop %v1585
      %v2152 = vtanh.pop %v1588
      %v2153 = vtanh.pop %v1590
      %v2154 = vtanh.pop %v1593
      %v2155 = vtanh.pop %v1595
      %v2156 = vtanh.pop %v1598
      %v2157 = vtanh.pop %v1600
      %v2158 = vtanh.pop %v1603
      %v2159 = vtanh.pop %v1605
      %v2160 = vtanh.pop %v1608
      %v2161 = vtanh.pop %v1610
      %v2162 = vtanh.pop %v1613
      %v2163 = vtanh.pop %v1615
      %v2164 = vtanh.pop %v1618
      %v2165 = vtanh.pop %v1620
      %v2166 = vtanh.pop %v1623
      %v2167 = vtanh.pop %v1625
      %v2168 = vtanh.pop %v1628
      %v2169 = vtanh.pop %v1630
      %v2170 = vtanh.pop %v1633
      %v2171 = vtanh.pop %v1635
      %v2172 = vtanh.pop %v1638
      %v2173 = vtanh.pop %v1640
      %v2174 = vtanh.pop %v1643
      %v2175 = vtanh.pop %v1645
      %v2176 = vtanh.pop %v1648
      %v2177 = vtanh.pop %v1650
      %v2178 = vtanh.pop %v1653
      %v2179 = vtanh.pop %v1655
      %v2180 = vtanh.pop %v1658
      %v2181 = vtanh.pop %v1660
      %v2182 = vtanh.pop %v1663
      %v2183 = vtanh.pop %v1665
      %v2184 = vtanh.pop %v1668
      %v2185 = vtanh.pop %v1670
      %v2186 = vtanh.pop %v1673
      %v2187 = vtanh.pop %v1675
      %v2188 = vtanh.pop %v1678
      %v2189 = vtanh.pop %v1680
      %v2190 = vtanh.pop %v1683
      %v2191 = vtanh.pop %v1685
      %v2192 = vtanh.pop %v1688
      %v2193 = vtanh.pop %v1690
      %v2194 = vtanh.pop %v1693
      %v2195 = vtanh.pop %v1695
      %v2196 = vtanh.pop %v1698
      %v2197 = vtanh.pop %v1700
      %v2198 = vtanh.pop %v1703
      %v2199 = vtanh.pop %v1705
      %v2200 = vtanh.pop %v1708
      %v2201 = vtanh.pop %v1710
      %v2202 = vtanh.pop %v1713
      %v2203 = vtanh.pop %v1715
      %v2204 = vtanh.pop %v1718
      %v2205 = vtanh.pop %v1720
      %v2206 = vtanh.pop %v1723
      %v2207 = vtanh.pop %v1725
      %v2208 = vtanh.pop %v1728
      %v2209 = vtanh.pop %v1730
      %v2210 = vtanh.pop %v1733
      %v2211 = vtanh.pop %v1735
      %v2212 = vtanh.pop %v1738
      %v2213 = vtanh.pop %v1740
      %v2214 = vtanh.pop %v1743
      %v2215 = vtanh.pop %v1745
      %v2216 = vtanh.pop %v1748
      %v2217 = vtanh.pop %v1750
      %v2218 = vtanh.pop %v1753
      %v2219 = vtanh.pop %v1755
      %v2220 = vtanh.pop %v1758
      %v2221 = vtanh.pop %v1760
      %v2222 = vtanh.pop %v1763
      %v2223 = vtanh.pop %v1765
      %v2224 = vtanh.pop %v1768
      %v2225 = vtanh.pop %v1770
      %v2226 = vtanh.pop %v1773
      %v2227 = vtanh.pop %v1775
      %v2228 = vtanh.pop %v1778
      %v2229 = vtanh.pop %v1780
      %v2230 = vtanh.pop %v1783
      %v2231 = vtanh.pop %v1785
      %v2232 = vtanh.pop %v1788
      %v2233 = vtanh.pop %v1790
      %v2234 = vtanh.pop %v1793
      %v2235 = vtanh.pop %v1795
      %v2236 = vtanh.pop %v1798
      %v2237 = vtanh.pop %v1800
      %v2238 = vtanh.pop %v1803
      %v2239 = vtanh.pop %v1805
      %v2240 = vtanh.pop %v1808
      %v2241 = vtanh.pop %v1810
      %v2242 = vtanh.pop %v1813
      %v2243 = vtanh.pop %v1815
      %v2244 = vtanh.pop %v1818
      %v2245 = vtanh.pop %v1820
      %v2246 = vtanh.pop %v1823
      %v2247 = vtanh.pop %v1825
      %v2248 = vtanh.pop %v1828
      %v2249 = vtanh.pop %v1830
      %v2250 = vtanh.pop %v1833
      %v2251 = vtanh.pop %v1835
      %v2252 = vtanh.pop %v1838
      %v2253 = vtanh.pop %v1840
      %v2254 = vtanh.pop %v1843
      %v2255 = vtanh.pop %v1845
      %v2256 = vtanh.pop %v1848
      %v2257 = vtanh.pop %v1850
      %v2258 = vtanh.pop %v1853
      %v2259 = vtanh.pop %v1855
      %v2260 = vtanh.pop %v1858
      %v2261 = vtanh.pop %v1860
      %v2262 = vtanh.pop %v1863
      %v2263 = vtanh.pop %v1865
      %v2264 = vtanh.pop %v1868
      %v2265 = vtanh.pop %v1870
      %v2266 = vtanh.pop %v1873
      %v2267 = vtanh.pop %v1875
      %v2268 = vtanh.pop %v1878
      %v2269 = vtanh.pop %v1880
      %v2270 = vtanh.pop %v1883
      %v2271 = vtanh.pop %v1885
      %v2272 = vtanh.pop %v1888
      %v2273 = vtanh.pop %v1890
      %v2274 = vtanh.pop %v1893
      %v2275 = vtanh.pop %v1895
      %v2276 = vtanh.pop %v1898
      %v2277 = vtanh.pop %v1900
      %v2278 = vtanh.pop %v1903
      %v2279 = vtanh.pop %v1905
      %v2280 = vtanh.pop %v1908
      %v2281 = vtanh.pop %v1910
      %v2282 = vtanh.pop %v1913
      %v2283 = vtanh.pop %v1915
      %v2284 = vtanh.pop %v1918
      %v2285 = vtanh.pop %v1920
      %v2286 = vtanh.pop %v1923
      %v2287 = vtanh.pop %v1925
      %v2288 = vtanh.pop %v1928
      %v2289 = vtanh.pop %v1930
      %v2290 = vtanh.pop %v1933
      %v2291 = vtanh.pop %v1935
      %v2292 = vtanh.pop %v1938
      %v2293 = vtanh.pop %v1940
      %v2294 = vtanh.pop %v1943
      %v2295 = vtanh.pop %v1945
      %v2296 = vtanh.pop %v1948
      %v2297 = vtanh.pop %v1950
      %v2298 = vtanh.pop %v1953
      %v2299 = vtanh.pop %v1955
      %v2300 = vtanh.pop %v1958
      %v2301 = vtanh.pop %v1960
      %v2302 = vtanh.pop %v1963
      %v2303 = vtanh.pop %v1965
      %v2304 = vtanh.pop %v1968
      %v2305 = vtanh.pop %v1970
      %v2306 = vtanh.pop %v1973
      %v2307 = vtanh.pop %v1975
      %v2308 = vtanh.pop %v1978
      %v2309 = vtanh.pop %v1980
      %v2310 = vtanh.pop %v1983
      %v2311 = vtanh.pop %v1985
      %v2312 = vtanh.pop %v1988
      %v2313 = vtanh.pop %v1990
      %v2314 = vtanh.pop %v1993
      %v2315 = vtanh.pop %v1995
      %v2316 = vtanh.pop %v1998
      %v2317 = vtanh.pop %v2000
      %v2318 = vtanh.pop %v2003
      %v2319 = vtanh.pop %v2005
      %v2320 = vtanh.pop %v2008
      %v2321 = vtanh.pop %v2010
      %v2322 = vtanh.pop %v2013
      %v2323 = vtanh.pop %v2015
      %v2324 = vtanh.pop %v2018
      %v2325 = vtanh.pop %v2020
      %v2326 = vtanh.pop %v2023
      %v2327 = vtanh.pop %v2025
      %v2328 = vtanh.pop %v2028
      %v2329 = vtanh.pop %v2030
      %v2330 = vtanh.pop %v2033
      %v2331 = vtanh.pop %v2035
      %v2332 = vtanh.pop %v2038
      %v2333 = vtanh.pop %v2040
      %v2334 = vtanh.pop %v2043
      %v2335 = vtanh.pop %v2045
      %v2336 = vtanh.pop %v2048
      %v2337 = vtanh.pop %v2050
      %v2338 = vtanh.pop %v2053
      %v2339 = vtanh.pop %v2055
      %v2340 = vtanh.pop %v2058
      %v2341 = vtanh.pop %v2060
      %v2342 = vtanh.pop %v2063
      %v2343 = vtanh.pop %v2065
      %v2344 = vtanh.pop %v2068
      %v2345 = vtanh.pop %v2070
      %v2346 = vtanh.pop %v2073
      %v2347 = vtanh.pop %v2075
      %v2348 = vtanh.pop %v2078
      %v2349 = vtanh.pop %v2080
      %v2350 = vtanh.pop %v2083
      %v2351 = vtanh.pop %v2085
      %v2352 = vtanh.pop %v2088
      %v2353 = vtanh.pop %v2090
      %v2354 = vtanh.pop %v2093
      %v2355 = vtanh.pop %v2095
      %v2356 = vtanh.pop %v2098
      %v2357 = vtanh.pop %v2100
      %vm2358 = vcmask 97280
      %2359 = vst.msk [vmem:[%s145] sm:$0xff] %vm2358, %v2102
      %2360 = vst.msk [vmem:[%s145 + $0x8] sm:$0xff] %vm2358, %v2103
      %2361 = vst.msk [vmem:[%s145 + $0x10] sm:$0xff] %vm2358, %v2104
      %2362 = vst.msk [vmem:[%s145 + $0x18] sm:$0xff] %vm2358, %v2105
      %2363 = vst.msk [vmem:[%s145 + $0x20] sm:$0xff] %vm2358, %v2106
      %2364 = vst.msk [vmem:[%s145 + $0x28] sm:$0xff] %vm2358, %v2107
      %2365 = vst.msk [vmem:[%s145 + $0x30] sm:$0xff] %vm2358, %v2108
      %2366 = vst.msk [vmem:[%s145 + $0x38] sm:$0xff] %vm2358, %v2109
      %2367 = vst.msk [vmem:[%s145 + $0x40] sm:$0xff] %vm2358, %v2110
      %2368 = vst.msk [vmem:[%s145 + $0x48] sm:$0xff] %vm2358, %v2111
      %2369 = vst.msk [vmem:[%s145 + $0x50] sm:$0xff] %vm2358, %v2112
      %2370 = vst.msk [vmem:[%s145 + $0x58] sm:$0xff] %vm2358, %v2113
      %2371 = vst.msk [vmem:[%s145 + $0x60] sm:$0xff] %vm2358, %v2114
      %2372 = vst.msk [vmem:[%s145 + $0x68] sm:$0xff] %vm2358, %v2115
      %2373 = vst.msk [vmem:[%s145 + $0x70] sm:$0xff] %vm2358, %v2116
      %2374 = vst.msk [vmem:[%s145 + $0x78] sm:$0xff] %vm2358, %v2117
      %2375 = vst.msk [vmem:[%s145 + $0x80] sm:$0xff] %vm2358, %v2118
      %2376 = vst.msk [vmem:[%s145 + $0x88] sm:$0xff] %vm2358, %v2119
      %2377 = vst.msk [vmem:[%s145 + $0x90] sm:$0xff] %vm2358, %v2120
      %2378 = vst.msk [vmem:[%s145 + $0x98] sm:$0xff] %vm2358, %v2121
      %2379 = vst.msk [vmem:[%s145 + $0xa0] sm:$0xff] %vm2358, %v2122
      %2380 = vst.msk [vmem:[%s145 + $0xa8] sm:$0xff] %vm2358, %v2123
      %2381 = vst.msk [vmem:[%s145 + $0xb0] sm:$0xff] %vm2358, %v2124
      %2382 = vst.msk [vmem:[%s145 + $0xb8] sm:$0xff] %vm2358, %v2125
      %2383 = vst.msk [vmem:[%s145 + $0xc0] sm:$0xff] %vm2358, %v2126
      %2384 = vst.msk [vmem:[%s145 + $0xc8] sm:$0xff] %vm2358, %v2127
      %2385 = vst.msk [vmem:[%s145 + $0xd0] sm:$0xff] %vm2358, %v2128
      %2386 = vst.msk [vmem:[%s145 + $0xd8] sm:$0xff] %vm2358, %v2129
      %2387 = vst.msk [vmem:[%s145 + $0xe0] sm:$0xff] %vm2358, %v2130
      %2388 = vst.msk [vmem:[%s145 + $0xe8] sm:$0xff] %vm2358, %v2131
      %2389 = vst.msk [vmem:[%s145 + $0xf0] sm:$0xff] %vm2358, %v2132
      %2390 = vst.msk [vmem:[%s145 + $0xf8] sm:$0xff] %vm2358, %v2133
      %2391 = vst.msk [vmem:[%s145 + $0x100] sm:$0xff] %vm2358, %v2134
      %2392 = vst.msk [vmem:[%s145 + $0x108] sm:$0xff] %vm2358, %v2135
      %2393 = vst.msk [vmem:[%s145 + $0x110] sm:$0xff] %vm2358, %v2136
      %2394 = vst.msk [vmem:[%s145 + $0x118] sm:$0xff] %vm2358, %v2137
      %2395 = vst.msk [vmem:[%s145 + $0x120] sm:$0xff] %vm2358, %v2138
      %2396 = vst.msk [vmem:[%s145 + $0x128] sm:$0xff] %vm2358, %v2139
      %2397 = vst.msk [vmem:[%s145 + $0x130] sm:$0xff] %vm2358, %v2140
      %2398 = vst.msk [vmem:[%s145 + $0x138] sm:$0xff] %vm2358, %v2141
      %2399 = vst.msk [vmem:[%s145 + $0x140] sm:$0xff] %vm2358, %v2142
      %2400 = vst.msk [vmem:[%s145 + $0x148] sm:$0xff] %vm2358, %v2143
      %2401 = vst.msk [vmem:[%s145 + $0x150] sm:$0xff] %vm2358, %v2144
      %2402 = vst.msk [vmem:[%s145 + $0x158] sm:$0xff] %vm2358, %v2145
      %2403 = vst.msk [vmem:[%s145 + $0x160] sm:$0xff] %vm2358, %v2146
      %2404 = vst.msk [vmem:[%s145 + $0x168] sm:$0xff] %vm2358, %v2147
      %2405 = vst.msk [vmem:[%s145 + $0x170] sm:$0xff] %vm2358, %v2148
      %2406 = vst.msk [vmem:[%s145 + $0x178] sm:$0xff] %vm2358, %v2149
      %2407 = vst.msk [vmem:[%s145 + $0x180] sm:$0xff] %vm2358, %v2150
      %2408 = vst.msk [vmem:[%s145 + $0x188] sm:$0xff] %vm2358, %v2151
      %2409 = vst.msk [vmem:[%s145 + $0x190] sm:$0xff] %vm2358, %v2152
      %2410 = vst.msk [vmem:[%s145 + $0x198] sm:$0xff] %vm2358, %v2153
      %2411 = vst.msk [vmem:[%s145 + $0x1a0] sm:$0xff] %vm2358, %v2154
      %2412 = vst.msk [vmem:[%s145 + $0x1a8] sm:$0xff] %vm2358, %v2155
      %2413 = vst.msk [vmem:[%s145 + $0x1b0] sm:$0xff] %vm2358, %v2156
      %2414 = vst.msk [vmem:[%s145 + $0x1b8] sm:$0xff] %vm2358, %v2157
      %2415 = vst.msk [vmem:[%s145 + $0x1c0] sm:$0xff] %vm2358, %v2158
      %2416 = vst.msk [vmem:[%s145 + $0x1c8] sm:$0xff] %vm2358, %v2159
      %2417 = vst.msk [vmem:[%s145 + $0x1d0] sm:$0xff] %vm2358, %v2160
      %2418 = vst.msk [vmem:[%s145 + $0x1d8] sm:$0xff] %vm2358, %v2161
      %2419 = vst.msk [vmem:[%s145 + $0x1e0] sm:$0xff] %vm2358, %v2162
      %2420 = vst.msk [vmem:[%s145 + $0x1e8] sm:$0xff] %vm2358, %v2163
      %2421 = vst.msk [vmem:[%s145 + $0x1f0] sm:$0xff] %vm2358, %v2164
      %2422 = vst.msk [vmem:[%s145 + $0x1f8] sm:$0xff] %vm2358, %v2165
      %2423 = vst.msk [vmem:[%s145 + $0x200] sm:$0xff] %vm2358, %v2166
      %2424 = vst.msk [vmem:[%s145 + $0x208] sm:$0xff] %vm2358, %v2167
      %2425 = vst.msk [vmem:[%s145 + $0x210] sm:$0xff] %vm2358, %v2168
      %2426 = vst.msk [vmem:[%s145 + $0x218] sm:$0xff] %vm2358, %v2169
      %2427 = vst.msk [vmem:[%s145 + $0x220] sm:$0xff] %vm2358, %v2170
      %2428 = vst.msk [vmem:[%s145 + $0x228] sm:$0xff] %vm2358, %v2171
      %2429 = vst.msk [vmem:[%s145 + $0x230] sm:$0xff] %vm2358, %v2172
      %2430 = vst.msk [vmem:[%s145 + $0x238] sm:$0xff] %vm2358, %v2173
      %2431 = vst.msk [vmem:[%s145 + $0x240] sm:$0xff] %vm2358, %v2174
      %2432 = vst.msk [vmem:[%s145 + $0x248] sm:$0xff] %vm2358, %v2175
      %2433 = vst.msk [vmem:[%s145 + $0x250] sm:$0xff] %vm2358, %v2176
      %2434 = vst.msk [vmem:[%s145 + $0x258] sm:$0xff] %vm2358, %v2177
      %2435 = vst.msk [vmem:[%s145 + $0x260] sm:$0xff] %vm2358, %v2178
      %2436 = vst.msk [vmem:[%s145 + $0x268] sm:$0xff] %vm2358, %v2179
      %2437 = vst.msk [vmem:[%s145 + $0x270] sm:$0xff] %vm2358, %v2180
      %2438 = vst.msk [vmem:[%s145 + $0x278] sm:$0xff] %vm2358, %v2181
      %2439 = vst.msk [vmem:[%s145 + $0x280] sm:$0xff] %vm2358, %v2182
      %2440 = vst.msk [vmem:[%s145 + $0x288] sm:$0xff] %vm2358, %v2183
      %2441 = vst.msk [vmem:[%s145 + $0x290] sm:$0xff] %vm2358, %v2184
      %2442 = vst.msk [vmem:[%s145 + $0x298] sm:$0xff] %vm2358, %v2185
      %2443 = vst.msk [vmem:[%s145 + $0x2a0] sm:$0xff] %vm2358, %v2186
      %2444 = vst.msk [vmem:[%s145 + $0x2a8] sm:$0xff] %vm2358, %v2187
      %2445 = vst.msk [vmem:[%s145 + $0x2b0] sm:$0xff] %vm2358, %v2188
      %2446 = vst.msk [vmem:[%s145 + $0x2b8] sm:$0xff] %vm2358, %v2189
      %2447 = vst.msk [vmem:[%s145 + $0x2c0] sm:$0xff] %vm2358, %v2190
      %2448 = vst.msk [vmem:[%s145 + $0x2c8] sm:$0xff] %vm2358, %v2191
      %2449 = vst.msk [vmem:[%s145 + $0x2d0] sm:$0xff] %vm2358, %v2192
      %2450 = vst.msk [vmem:[%s145 + $0x2d8] sm:$0xff] %vm2358, %v2193
      %2451 = vst.msk [vmem:[%s145 + $0x2e0] sm:$0xff] %vm2358, %v2194
      %2452 = vst.msk [vmem:[%s145 + $0x2e8] sm:$0xff] %vm2358, %v2195
      %2453 = vst.msk [vmem:[%s145 + $0x2f0] sm:$0xff] %vm2358, %v2196
      %2454 = vst.msk [vmem:[%s145 + $0x2f8] sm:$0xff] %vm2358, %v2197
      %2455 = vst.msk [vmem:[%s145 + $0x300] sm:$0xff] %vm2358, %v2198
      %2456 = vst.msk [vmem:[%s145 + $0x308] sm:$0xff] %vm2358, %v2199
      %2457 = vst.msk [vmem:[%s145 + $0x310] sm:$0xff] %vm2358, %v2200
      %2458 = vst.msk [vmem:[%s145 + $0x318] sm:$0xff] %vm2358, %v2201
      %2459 = vst.msk [vmem:[%s145 + $0x320] sm:$0xff] %vm2358, %v2202
      %2460 = vst.msk [vmem:[%s145 + $0x328] sm:$0xff] %vm2358, %v2203
      %2461 = vst.msk [vmem:[%s145 + $0x330] sm:$0xff] %vm2358, %v2204
      %2462 = vst.msk [vmem:[%s145 + $0x338] sm:$0xff] %vm2358, %v2205
      %2463 = vst.msk [vmem:[%s145 + $0x340] sm:$0xff] %vm2358, %v2206
      %2464 = vst.msk [vmem:[%s145 + $0x348] sm:$0xff] %vm2358, %v2207
      %2465 = vst.msk [vmem:[%s145 + $0x350] sm:$0xff] %vm2358, %v2208
      %2466 = vst.msk [vmem:[%s145 + $0x358] sm:$0xff] %vm2358, %v2209
      %2467 = vst.msk [vmem:[%s145 + $0x360] sm:$0xff] %vm2358, %v2210
      %2468 = vst.msk [vmem:[%s145 + $0x368] sm:$0xff] %vm2358, %v2211
      %2469 = vst.msk [vmem:[%s145 + $0x370] sm:$0xff] %vm2358, %v2212
      %2470 = vst.msk [vmem:[%s145 + $0x378] sm:$0xff] %vm2358, %v2213
      %2471 = vst.msk [vmem:[%s145 + $0x380] sm:$0xff] %vm2358, %v2214
      %2472 = vst.msk [vmem:[%s145 + $0x388] sm:$0xff] %vm2358, %v2215
      %2473 = vst.msk [vmem:[%s145 + $0x390] sm:$0xff] %vm2358, %v2216
      %2474 = vst.msk [vmem:[%s145 + $0x398] sm:$0xff] %vm2358, %v2217
      %2475 = vst.msk [vmem:[%s145 + $0x3a0] sm:$0xff] %vm2358, %v2218
      %2476 = vst.msk [vmem:[%s145 + $0x3a8] sm:$0xff] %vm2358, %v2219
      %2477 = vst.msk [vmem:[%s145 + $0x3b0] sm:$0xff] %vm2358, %v2220
      %2478 = vst.msk [vmem:[%s145 + $0x3b8] sm:$0xff] %vm2358, %v2221
      %2479 = vst.msk [vmem:[%s145 + $0x3c0] sm:$0xff] %vm2358, %v2222
      %2480 = vst.msk [vmem:[%s145 + $0x3c8] sm:$0xff] %vm2358, %v2223
      %2481 = vst.msk [vmem:[%s145 + $0x3d0] sm:$0xff] %vm2358, %v2224
      %2482 = vst.msk [vmem:[%s145 + $0x3d8] sm:$0xff] %vm2358, %v2225
      %2483 = vst.msk [vmem:[%s145 + $0x3e0] sm:$0xff] %vm2358, %v2226
      %2484 = vst.msk [vmem:[%s145 + $0x3e8] sm:$0xff] %vm2358, %v2227
      %2485 = vst.msk [vmem:[%s145 + $0x3f0] sm:$0xff] %vm2358, %v2228
      %2486 = vst.msk [vmem:[%s145 + $0x3f8] sm:$0xff] %vm2358, %v2229
      %2487 = vst.msk [vmem:[%s145 + $0x400] sm:$0xff] %vm2358, %v2230
      %2488 = vst.msk [vmem:[%s145 + $0x408] sm:$0xff] %vm2358, %v2231
      %2489 = vst.msk [vmem:[%s145 + $0x410] sm:$0xff] %vm2358, %v2232
      %2490 = vst.msk [vmem:[%s145 + $0x418] sm:$0xff] %vm2358, %v2233
      %2491 = vst.msk [vmem:[%s145 + $0x420] sm:$0xff] %vm2358, %v2234
      %2492 = vst.msk [vmem:[%s145 + $0x428] sm:$0xff] %vm2358, %v2235
      %2493 = vst.msk [vmem:[%s145 + $0x430] sm:$0xff] %vm2358, %v2236
      %2494 = vst.msk [vmem:[%s145 + $0x438] sm:$0xff] %vm2358, %v2237
      %2495 = vst.msk [vmem:[%s145 + $0x440] sm:$0xff] %vm2358, %v2238
      %2496 = vst.msk [vmem:[%s145 + $0x448] sm:$0xff] %vm2358, %v2239
      %2497 = vst.msk [vmem:[%s145 + $0x450] sm:$0xff] %vm2358, %v2240
      %2498 = vst.msk [vmem:[%s145 + $0x458] sm:$0xff] %vm2358, %v2241
      %2499 = vst.msk [vmem:[%s145 + $0x460] sm:$0xff] %vm2358, %v2242
      %2500 = vst.msk [vmem:[%s145 + $0x468] sm:$0xff] %vm2358, %v2243
      %2501 = vst.msk [vmem:[%s145 + $0x470] sm:$0xff] %vm2358, %v2244
      %2502 = vst.msk [vmem:[%s145 + $0x478] sm:$0xff] %vm2358, %v2245
      %2503 = vst.msk [vmem:[%s145 + $0x480] sm:$0xff] %vm2358, %v2246
      %2504 = vst.msk [vmem:[%s145 + $0x488] sm:$0xff] %vm2358, %v2247
      %2505 = vst.msk [vmem:[%s145 + $0x490] sm:$0xff] %vm2358, %v2248
      %2506 = vst.msk [vmem:[%s145 + $0x498] sm:$0xff] %vm2358, %v2249
      %2507 = vst.msk [vmem:[%s145 + $0x4a0] sm:$0xff] %vm2358, %v2250
      %2508 = vst.msk [vmem:[%s145 + $0x4a8] sm:$0xff] %vm2358, %v2251
      %2509 = vst.msk [vmem:[%s145 + $0x4b0] sm:$0xff] %vm2358, %v2252
      %2510 = vst.msk [vmem:[%s145 + $0x4b8] sm:$0xff] %vm2358, %v2253
      %2511 = vst.msk [vmem:[%s145 + $0x4c0] sm:$0xff] %vm2358, %v2254
      %2512 = vst.msk [vmem:[%s145 + $0x4c8] sm:$0xff] %vm2358, %v2255
      %2513 = vst.msk [vmem:[%s145 + $0x4d0] sm:$0xff] %vm2358, %v2256
      %2514 = vst.msk [vmem:[%s145 + $0x4d8] sm:$0xff] %vm2358, %v2257
      %2515 = vst.msk [vmem:[%s145 + $0x4e0] sm:$0xff] %vm2358, %v2258
      %2516 = vst.msk [vmem:[%s145 + $0x4e8] sm:$0xff] %vm2358, %v2259
      %2517 = vst.msk [vmem:[%s145 + $0x4f0] sm:$0xff] %vm2358, %v2260
      %2518 = vst.msk [vmem:[%s145 + $0x4f8] sm:$0xff] %vm2358, %v2261
      %2519 = vst.msk [vmem:[%s145 + $0x500] sm:$0xff] %vm2358, %v2262
      %2520 = vst.msk [vmem:[%s145 + $0x508] sm:$0xff] %vm2358, %v2263
      %2521 = vst.msk [vmem:[%s145 + $0x510] sm:$0xff] %vm2358, %v2264
      %2522 = vst.msk [vmem:[%s145 + $0x518] sm:$0xff] %vm2358, %v2265
      %2523 = vst.msk [vmem:[%s145 + $0x520] sm:$0xff] %vm2358, %v2266
      %2524 = vst.msk [vmem:[%s145 + $0x528] sm:$0xff] %vm2358, %v2267
      %2525 = vst.msk [vmem:[%s145 + $0x530] sm:$0xff] %vm2358, %v2268
      %2526 = vst.msk [vmem:[%s145 + $0x538] sm:$0xff] %vm2358, %v2269
      %2527 = vst.msk [vmem:[%s145 + $0x540] sm:$0xff] %vm2358, %v2270
      %2528 = vst.msk [vmem:[%s145 + $0x548] sm:$0xff] %vm2358, %v2271
      %2529 = vst.msk [vmem:[%s145 + $0x550] sm:$0xff] %vm2358, %v2272
      %2530 = vst.msk [vmem:[%s145 + $0x558] sm:$0xff] %vm2358, %v2273
      %2531 = vst.msk [vmem:[%s145 + $0x560] sm:$0xff] %vm2358, %v2274
      %2532 = vst.msk [vmem:[%s145 + $0x568] sm:$0xff] %vm2358, %v2275
      %2533 = vst.msk [vmem:[%s145 + $0x570] sm:$0xff] %vm2358, %v2276
      %2534 = vst.msk [vmem:[%s145 + $0x578] sm:$0xff] %vm2358, %v2277
      %2535 = vst.msk [vmem:[%s145 + $0x580] sm:$0xff] %vm2358, %v2278
      %2536 = vst.msk [vmem:[%s145 + $0x588] sm:$0xff] %vm2358, %v2279
      %2537 = vst.msk [vmem:[%s145 + $0x590] sm:$0xff] %vm2358, %v2280
      %2538 = vst.msk [vmem:[%s145 + $0x598] sm:$0xff] %vm2358, %v2281
      %2539 = vst.msk [vmem:[%s145 + $0x5a0] sm:$0xff] %vm2358, %v2282
      %2540 = vst.msk [vmem:[%s145 + $0x5a8] sm:$0xff] %vm2358, %v2283
      %2541 = vst.msk [vmem:[%s145 + $0x5b0] sm:$0xff] %vm2358, %v2284
      %2542 = vst.msk [vmem:[%s145 + $0x5b8] sm:$0xff] %vm2358, %v2285
      %2543 = vst.msk [vmem:[%s145 + $0x5c0] sm:$0xff] %vm2358, %v2286
      %2544 = vst.msk [vmem:[%s145 + $0x5c8] sm:$0xff] %vm2358, %v2287
      %2545 = vst.msk [vmem:[%s145 + $0x5d0] sm:$0xff] %vm2358, %v2288
      %2546 = vst.msk [vmem:[%s145 + $0x5d8] sm:$0xff] %vm2358, %v2289
      %2547 = vst.msk [vmem:[%s145 + $0x5e0] sm:$0xff] %vm2358, %v2290
      %2548 = vst.msk [vmem:[%s145 + $0x5e8] sm:$0xff] %vm2358, %v2291
      %2549 = vst.msk [vmem:[%s145 + $0x5f0] sm:$0xff] %vm2358, %v2292
      %2550 = vst.msk [vmem:[%s145 + $0x5f8] sm:$0xff] %vm2358, %v2293
      %2551 = vst.msk [vmem:[%s145 + $0x600] sm:$0xff] %vm2358, %v2294
      %2552 = vst.msk [vmem:[%s145 + $0x608] sm:$0xff] %vm2358, %v2295
      %2553 = vst.msk [vmem:[%s145 + $0x610] sm:$0xff] %vm2358, %v2296
      %2554 = vst.msk [vmem:[%s145 + $0x618] sm:$0xff] %vm2358, %v2297
      %2555 = vst.msk [vmem:[%s145 + $0x620] sm:$0xff] %vm2358, %v2298
      %2556 = vst.msk [vmem:[%s145 + $0x628] sm:$0xff] %vm2358, %v2299
      %2557 = vst.msk [vmem:[%s145 + $0x630] sm:$0xff] %vm2358, %v2300
      %2558 = vst.msk [vmem:[%s145 + $0x638] sm:$0xff] %vm2358, %v2301
      %2559 = vst.msk [vmem:[%s145 + $0x640] sm:$0xff] %vm2358, %v2302
      %2560 = vst.msk [vmem:[%s145 + $0x648] sm:$0xff] %vm2358, %v2303
      %2561 = vst.msk [vmem:[%s145 + $0x650] sm:$0xff] %vm2358, %v2304
      %2562 = vst.msk [vmem:[%s145 + $0x658] sm:$0xff] %vm2358, %v2305
      %2563 = vst.msk [vmem:[%s145 + $0x660] sm:$0xff] %vm2358, %v2306
      %2564 = vst.msk [vmem:[%s145 + $0x668] sm:$0xff] %vm2358, %v2307
      %2565 = vst.msk [vmem:[%s145 + $0x670] sm:$0xff] %vm2358, %v2308
      %2566 = vst.msk [vmem:[%s145 + $0x678] sm:$0xff] %vm2358, %v2309
      %2567 = vst.msk [vmem:[%s145 + $0x680] sm:$0xff] %vm2358, %v2310
      %2568 = vst.msk [vmem:[%s145 + $0x688] sm:$0xff] %vm2358, %v2311
      %2569 = vst.msk [vmem:[%s145 + $0x690] sm:$0xff] %vm2358, %v2312
      %2570 = vst.msk [vmem:[%s145 + $0x698] sm:$0xff] %vm2358, %v2313
      %2571 = vst.msk [vmem:[%s145 + $0x6a0] sm:$0xff] %vm2358, %v2314
      %2572 = vst.msk [vmem:[%s145 + $0x6a8] sm:$0xff] %vm2358, %v2315
      %2573 = vst.msk [vmem:[%s145 + $0x6b0] sm:$0xff] %vm2358, %v2316
      %2574 = vst.msk [vmem:[%s145 + $0x6b8] sm:$0xff] %vm2358, %v2317
      %2575 = vst.msk [vmem:[%s145 + $0x6c0] sm:$0xff] %vm2358, %v2318
      %2576 = vst.msk [vmem:[%s145 + $0x6c8] sm:$0xff] %vm2358, %v2319
      %2577 = vst.msk [vmem:[%s145 + $0x6d0] sm:$0xff] %vm2358, %v2320
      %2578 = vst.msk [vmem:[%s145 + $0x6d8] sm:$0xff] %vm2358, %v2321
      %2579 = vst.msk [vmem:[%s145 + $0x6e0] sm:$0xff] %vm2358, %v2322
      %2580 = vst.msk [vmem:[%s145 + $0x6e8] sm:$0xff] %vm2358, %v2323
      %2581 = vst.msk [vmem:[%s145 + $0x6f0] sm:$0xff] %vm2358, %v2324
      %2582 = vst.msk [vmem:[%s145 + $0x6f8] sm:$0xff] %vm2358, %v2325
      %2583 = vst.msk [vmem:[%s145 + $0x700] sm:$0xff] %vm2358, %v2326
      %2584 = vst.msk [vmem:[%s145 + $0x708] sm:$0xff] %vm2358, %v2327
      %2585 = vst.msk [vmem:[%s145 + $0x710] sm:$0xff] %vm2358, %v2328
      %2586 = vst.msk [vmem:[%s145 + $0x718] sm:$0xff] %vm2358, %v2329
      %2587 = vst.msk [vmem:[%s145 + $0x720] sm:$0xff] %vm2358, %v2330
      %2588 = vst.msk [vmem:[%s145 + $0x728] sm:$0xff] %vm2358, %v2331
      %2589 = vst.msk [vmem:[%s145 + $0x730] sm:$0xff] %vm2358, %v2332
      %2590 = vst.msk [vmem:[%s145 + $0x738] sm:$0xff] %vm2358, %v2333
      %2591 = vst.msk [vmem:[%s145 + $0x740] sm:$0xff] %vm2358, %v2334
      %2592 = vst.msk [vmem:[%s145 + $0x748] sm:$0xff] %vm2358, %v2335
      %2593 = vst.msk [vmem:[%s145 + $0x750] sm:$0xff] %vm2358, %v2336
      %2594 = vst.msk [vmem:[%s145 + $0x758] sm:$0xff] %vm2358, %v2337
      %2595 = vst.msk [vmem:[%s145 + $0x760] sm:$0xff] %vm2358, %v2338
      %2596 = vst.msk [vmem:[%s145 + $0x768] sm:$0xff] %vm2358, %v2339
      %2597 = vst.msk [vmem:[%s145 + $0x770] sm:$0xff] %vm2358, %v2340
      %2598 = vst.msk [vmem:[%s145 + $0x778] sm:$0xff] %vm2358, %v2341
      %2599 = vst.msk [vmem:[%s145 + $0x780] sm:$0xff] %vm2358, %v2342
      %2600 = vst.msk [vmem:[%s145 + $0x788] sm:$0xff] %vm2358, %v2343
      %2601 = vst.msk [vmem:[%s145 + $0x790] sm:$0xff] %vm2358, %v2344
      %2602 = vst.msk [vmem:[%s145 + $0x798] sm:$0xff] %vm2358, %v2345
      %2603 = vst.msk [vmem:[%s145 + $0x7a0] sm:$0xff] %vm2358, %v2346
      %2604 = vst.msk [vmem:[%s145 + $0x7a8] sm:$0xff] %vm2358, %v2347
      %2605 = vst.msk [vmem:[%s145 + $0x7b0] sm:$0xff] %vm2358, %v2348
      %2606 = vst.msk [vmem:[%s145 + $0x7b8] sm:$0xff] %vm2358, %v2349
      %2607 = vst.msk [vmem:[%s145 + $0x7c0] sm:$0xff] %vm2358, %v2350
      %2608 = vst.msk [vmem:[%s145 + $0x7c8] sm:$0xff] %vm2358, %v2351
      %2609 = vst.msk [vmem:[%s145 + $0x7d0] sm:$0xff] %vm2358, %v2352
      %2610 = vst.msk [vmem:[%s145 + $0x7d8] sm:$0xff] %vm2358, %v2353
      %2611 = vst.msk [vmem:[%s145 + $0x7e0] sm:$0xff] %vm2358, %v2354
      %2612 = vst.msk [vmem:[%s145 + $0x7e8] sm:$0xff] %vm2358, %v2355
      %2613 = vst.msk [vmem:[%s145 + $0x7f0] sm:$0xff] %vm2358, %v2356
      %2614 = vst.msk [vmem:[%s145 + $0x7f8] sm:$0xff] %vm2358, %v2357
      %s2615 = smul.u32 256, %s13
      %p2616 = scmp.lt.s32.totalorder %s2615, 1023
      %s2617 = scalar_select %p2616, %s2615, 1023
      %s2618 = smul.addr %s2617, 8
      %s2619 = scalar_lea.vmem %s2, %s2618
      // Predicated region
      $region29: #{generator_forward.13} parent=27 // pred_check
        %p2620 = pneg %p78
      $region30: #{generator_forward.13} parent=27 // pred_check_branch
        %2622 = sbr.rel (%p2620) target = $region32
      $region31: #{generator_forward.13} parent=27 // pred_region
        %s2623 = smul.u32 256, %s13
      $region32: #{generator_forward.13} parent=27 // pred_fallthru
        _
    $region28: #{generator_forward.13} parent=5 // pred_fallthru
      _
    %p2624 = scmp.le.s32.totalorder 2, %s8
    // Predicated region
    $region33: #{generator_forward.13} parent=5 // pred_check
      %p2625 = pneg %p2624
    $region34: #{generator_forward.13} parent=5 // pred_check_branch
      %2627 = sbr.rel (%p2625) target = $region36
    $region35: #{generator_forward.13} parent=5 // pred_region
      %s2628 = ssub.s32 %s8, 2
      // Predicated region
      $region37: #{generator_forward.13} parent=35 // pred_check
        %p2629 = pneg %p84
      $region38: #{generator_forward.13} parent=35 // pred_check_branch
        %2631 = sbr.rel (%p2629) target = $region40
      $region39: #{generator_forward.13} parent=35 // pred_region
        %s2632 = smul.u32 256, %s14
        %p2633 = scmp.lt.s32.totalorder %s2632, 1023
        %s2634 = scalar_select %p2633, %s2632, 1023
        %s2635 = smul.addr %s2634, 8
        %s2636 = scalar_lea.vmem %s2, %s2635
      $region40: #{generator_forward.13} parent=35 // pred_fallthru
        _
    $region36: #{generator_forward.13} parent=5 // pred_fallthru
      _
  $region6: #{generator_forward.13} parent=0 // loop_footer
    %s12 = sadd.s32 1, %s8
  $region7: #{generator_forward.13} parent=0 // loop_footer_branch
    %7 = sbr.rel target = $region3
  $region8: #{generator_forward.13} parent=0 // loop_exit
    _

</llo_original>
